<compile_context>
chip_gen: v7x
topology: tpu7x:2x2x1
jax: 0.10.0
libtpu: 0.0.40
codegen_flags: <defaults>
</compile_context>

<pallas_src>
import jax
import jax.numpy as jnp
from jax import lax
from jax.experimental import pallas as pl
from jax.experimental.pallas import tpu as pltpu

_VMEM = pl.BlockSpec(memory_space=pltpu.MemorySpace.VMEM)
_CP = 128   # padded per-tap channel width for the conv2/conv3 im2col


# ----------------------------- fused Pallas kernel ---------------------------

def _fused_hybrid_cnn_kernel(
    x_ref,                      # (B_blk, HW, K1p)   bf16  conv1 im2col patches
    w1_ref, w2_ref, w3_ref,     # bf16 conv weights (K / channel zero-padded)
    ca1w1_ref, ca1w2_ref,       # f32 channel-attention MLP weights (block1)
    ca3w1_ref, ca3w2_ref,       # f32 channel-attention MLP weights (block3)
    v64_ref, v128_ref, v256_ref,  # packed per-channel vectors (f32)
    o_ref,                      # (B_blk, 2, 2, 256) f32
    pad2_ref, pad3_ref,         # (B_blk, H+2, W+2, 128) f32 padded activations
    patch_ref,                  # (B_blk*HW, 9*128)  bf16 shared im2col scratch
):
    B_blk, HW, _ = x_ref.shape
    H = pad2_ref.shape[1] - 2
    W = pad2_ref.shape[2] - 2
    M = B_blk * HW

    def conv3x3_relu(y, pad_ref, w_ref, b):
        # SAME 3x3 conv.  Write the (channel-zero-padded) activation into the
        # padded scratch interior with a full-lane store, zero the spatial halo
        # with four thin stores, then build the (M, 9*_CP) im2col matrix
        # tap-by-tap at 128-aligned lane offsets and run one deep-K bf16 MXU
        # matmul with f32 accumulation.
        cin = y.shape[-1]
        y4 = y.reshape(B_blk, H, W, cin)
        if cin < _CP:
            # Padded channels carry zero weights; keep them zero so nothing
            # non-finite can leak into the matmul.
            y4 = jnp.concatenate(
                [y4, jnp.zeros((B_blk, H, W, _CP - cin), y4.dtype)], axis=-1)
        zrow = jnp.zeros((B_blk, 1, W + 2, _CP), jnp.float32)
        zcol = jnp.zeros((B_blk, H + 2, 1, _CP), jnp.float32)
        pad_ref[:, 0:1, :, :] = zrow
        pad_ref[:, H + 1:H + 2, :, :] = zrow
        pad_ref[:, :, 0:1, :] = zcol
        pad_ref[:, :, W + 1:W + 2, :] = zcol
        pad_ref[:, 1:H + 1, 1:W + 1, :] = y4
        for dh in range(3):
            for dw in range(3):
                t = dh * 3 + dw
                patch_ref[:, t * _CP:(t + 1) * _CP] = (
                    pad_ref[:, dh:dh + H, dw:dw + W, :]
                    .astype(jnp.bfloat16).reshape(M, _CP))
        acc = jnp.dot(patch_ref[...], w_ref[...],
                      preferred_element_type=jnp.float32)
        return jnp.maximum(acc + b, 0.0)

    def channel_attn(y, w1, b1, w2, b2):
        # Batched over the block: one (2*B_blk, C) matmul pair for avg & max.
        C = y.shape[-1]
        y3 = y.reshape(B_blk, HW, C)
        pooled = jnp.concatenate(
            [jnp.mean(y3, axis=1), jnp.max(y3, axis=1)], axis=0)   # (2*B_blk, C)
        h = jnp.maximum(
            jnp.dot(pooled, w1, preferred_element_type=jnp.float32) + b1, 0.0)
        g = jax.nn.sigmoid(
            jnp.dot(h, w2, preferred_element_type=jnp.float32) + b2)
        gate = g[:B_blk] + g[B_blk:]       # sigmoid(fc(avg)) + sigmoid(fc(max))
        return (y3 * gate[:, None, :]).reshape(M, C)

    def spatial_attn(y, scale, shift, wc, bc):
        xn = y * scale + shift                                     # folded BN
        # 1x1 conv with Cout=1 as VPU multiply + lane reduction (no MXU trip).
        logit = jnp.sum(xn * wc, axis=-1, keepdims=True) + bc
        return xn * jax.nn.sigmoid(logit)

    # ---- block1: conv1 (precomputed im2col) + ReLU -> CA -> SA (Dropout2d = id)
    y = jnp.dot(x_ref[...].reshape(M, x_ref.shape[-1]), w1_ref[...],
                preferred_element_type=jnp.float32)
    y = jnp.maximum(y + v64_ref[0:1, :], 0.0)                      # (M, 64)
    r1 = ca1w1_ref.shape[-1]
    y = channel_attn(y, ca1w1_ref[...], v64_ref[1:2, 0:r1],
                     ca1w2_ref[...], v64_ref[2:3, :])
    y = spatial_attn(y, v64_ref[3:4, :], v64_ref[4:5, :],
                     v64_ref[5:6, :], v64_ref[6:7, 0:1])

    # ---- block2: conv2 + ReLU -> folded BatchNorm epilogue
    y = conv3x3_relu(y, pad2_ref, w2_ref, v128_ref[0:1, :])        # (M, 128)
    y = y * v128_ref[1:2, :] + v128_ref[2:3, :]

    # ---- block3: conv3 + ReLU -> CA -> SA
    y = conv3x3_relu(y, pad3_ref, w3_ref, v256_ref[0:1, :])        # (M, 256)
    r3 = ca3w1_ref.shape[-1]
    y = channel_attn(y, ca3w1_ref[...], v256_ref[1:2, 0:r3],
                     ca3w2_ref[...], v256_ref[2:3, :])
    y = spatial_attn(y, v256_ref[3:4, :], v256_ref[4:5, :],
                     v256_ref[5:6, :], v256_ref[6:7, 0:1])

    # ---- AdaptiveAvgPool2d((2, 2))  (H, W divisible by 2)
    C3 = y.shape[-1]
    p = jnp.mean(y.reshape(B_blk * 2, H // 2, W, C3), axis=1)      # (B*2, W, C)
    p = jnp.mean(p.reshape(B_blk * 4, W // 2, C3), axis=1)         # (B*4, C)
    o_ref[...] = p.reshape(B_blk, 2, 2, C3)


# ----------------------------- wrapper ----------------------------------------

def hybrid_cnn_forward(x_nchw, p):
    # Layout: NCHW (PyTorch) -> NHWC once at the boundary.
    x = jnp.transpose(x_nchw.astype(jnp.float32), (0, 2, 3, 1))
    B, H, W, Cin = x.shape
    assert H % 2 == 0 and W % 2 == 0, "AdaptiveAvgPool2d((2,2)) path needs even H, W"
    HW = H * W

    def fold_bn(g, bt, m, v):
        s = g * lax.rsqrt(v + 1e-5)
        return s, bt - m * s

    def pack_rows(rows, width):
        out = []
        for r in rows:
            r = jnp.asarray(r, jnp.float32).reshape(-1)
            out.append(jnp.pad(r, (0, width - r.shape[0])))
        return jnp.stack(out)

    w1, b1 = p["conv1"]
    w2, b2 = p["conv2"]
    w3, b3 = p["conv3"]
    ca1_w1, ca1_b1, ca1_w2, ca1_b2 = p["ca1"]
    ca3_w1, ca3_b1, ca3_w2, ca3_b2 = p["ca3"]
    g1, t1, m1, v1, wc1, bc1 = p["sa1"]
    g3, t3, m3, v3, wc3, bc3 = p["sa3"]
    gb2, tb2, mb2, vb2 = p["bn2"]

    C1 = w1.shape[3]          # 64
    C2 = w2.shape[3]          # 128
    C3 = w3.shape[3]          # 256
    assert w2.shape[2] <= _CP and w3.shape[2] <= _CP

    # conv1 im2col precomputed outside the kernel (lane-dense input DMA,
    # K padded to a 128-lane multiple).
    K1 = 9 * Cin
    K1p = max(_CP, -(-K1 // _CP) * _CP)
    xp = jnp.pad(x, ((0, 0), (1, 1), (1, 1), (0, 0)))
    taps = [xp[:, dh:dh + H, dw:dw + W, :] for dh in range(3) for dw in range(3)]
    patches1 = jnp.concatenate(taps, axis=-1).reshape(B, HW, K1)
    patches1 = jnp.pad(patches1, ((0, 0), (0, 0), (0, K1p - K1))).astype(jnp.bfloat16)

    # Conv weights: (3,3,Ci,Co) -> (K, Co) bf16 with zero-padded K / channels so
    # every im2col tap is a full 128-lane vreg.
    w1p = jnp.pad(w1.reshape(K1, C1), ((0, K1p - K1), (0, 0))).astype(jnp.bfloat16)

    def pack_conv(w):
        ci, co = w.shape[2], w.shape[3]
        wp = jnp.zeros((9, _CP, co), jnp.float32)
        wp = wp.at[:, :ci, :].set(w.reshape(9, ci, co))
        return wp.reshape(9 * _CP, co).astype(jnp.bfloat16)

    w2p, w3p = pack_conv(w2), pack_conv(w3)

    sa1_s, sa1_h = fold_bn(g1, t1, m1, v1)
    sa3_s, sa3_h = fold_bn(g3, t3, m3, v3)
    bn2_s, bn2_h = fold_bn(gb2, tb2, mb2, vb2)

    # Pack the ~20 tiny per-channel vectors into three stacked arrays.
    vecs64 = pack_rows([b1, ca1_b1, ca1_b2, sa1_s, sa1_h, wc1, bc1], C1)
    vecs128 = pack_rows([b2, bn2_s, bn2_h], C2)
    vecs256 = pack_rows([b3, ca3_b1, ca3_b2, sa3_s, sa3_h, wc3, bc3], C3)

    # Batch blocking: push matmul M towards 256 while keeping >= 2 grid steps so
    # v7x's two TensorCores both get work via the "parallel" axis.
    b_blk = max(1, 256 // HW)
    if B >= 2:
        b_blk = min(b_blk, (B + 1) // 2)
    b_blk = min(b_blk, B)
    n_blocks = pl.cdiv(B, b_blk)
    B_pad = n_blocks * b_blk
    if B_pad != B:
        patches1 = jnp.pad(patches1, ((0, B_pad - B), (0, 0), (0, 0)))

    args = (patches1, w1p, w2p, w3p,
            jnp.asarray(ca1_w1, jnp.float32), jnp.asarray(ca1_w2, jnp.float32),
            jnp.asarray(ca3_w1, jnp.float32), jnp.asarray(ca3_w2, jnp.float32),
            vecs64, vecs128, vecs256)

    grid_spec = pltpu.PrefetchScalarGridSpec(
        num_scalar_prefetch=0,
        grid=(n_blocks,),
        in_specs=[pl.BlockSpec((b_blk, HW, K1p), lambda i: (i, 0, 0))]
        + [_VMEM] * (len(args) - 1),
        out_specs=pl.BlockSpec((b_blk, 2, 2, C3), lambda i: (i, 0, 0, 0)),
        scratch_shapes=[
            pltpu.VMEM((b_blk, H + 2, W + 2, _CP), jnp.float32),
            pltpu.VMEM((b_blk, H + 2, W + 2, _CP), jnp.float32),
            pltpu.VMEM((b_blk * HW, 9 * _CP), jnp.bfloat16),
        ],
    )
    pooled = pl.pallas_call(
        _fused_hybrid_cnn_kernel,
        out_shape=jax.ShapeDtypeStruct((B_pad, 2, 2, C3), jnp.float32),
        grid_spec=grid_spec,
        compiler_params=pltpu.CompilerParams(
            dimension_semantics=("parallel",)),
    )(*args)[:B]

    # Match PyTorch NCHW flatten order: (B, 2, 2, C) -> (B, C, 2, 2) -> (B, 4C).
    return jnp.transpose(pooled, (0, 3, 1, 2)).reshape(B, -1)


# ----------------------------- params -----------------------------------------

def init_params(n_in, seed=42):
    keys = iter(jax.random.split(jax.random.PRNGKey(seed), 64))

    def nrm(shape, scale=0.1):
        return (scale * jax.random.normal(next(keys), shape)).astype(jnp.float32)

    def bn_params(c):
        g = (1.0 + 0.1 * jax.random.normal(next(keys), (1, c))).astype(jnp.float32)
        b = nrm((1, c))
        m = nrm((1, c))
        v = (0.5 + jnp.abs(jax.random.normal(next(keys), (1, c)))).astype(jnp.float32)
        return (g, b, m, v)

    def ca_params(c, r=4):
        return (nrm((c, c // r)), nrm((1, c // r)), nrm((c // r, c)), nrm((1, c)))

    def sa_params(c):
        return bn_params(c) + (nrm((c, 1)), nrm((1, 1)))

    return {
        "conv1": (nrm((3, 3, n_in, 64)), nrm((1, 64))),
        "ca1": ca_params(64),
        "sa1": sa_params(64),
        "conv2": (nrm((3, 3, 64, 128)), nrm((1, 128))),
        "bn2": bn_params(128),
        "conv3": (nrm((3, 3, 128, 256)), nrm((1, 256))),
        "ca3": ca_params(256),
        "sa3": sa_params(256),
    }


# ----------------------------- pure-JAX reference ------------------------------

def _reference_forward(x_nchw, p):
    x = jnp.transpose(x_nchw.astype(jnp.float32), (0, 2, 3, 1))

    def conv(x, w, b):
        y = lax.conv_general_dilated(x, w, (1, 1), "SAME",
                                     dimension_numbers=("NHWC", "HWIO", "NHWC"))
        return jax.nn.relu(y + b.reshape(1, 1, 1, -1))

    def ca(x, w1, b1, w2, b2):
        avg = jnp.mean(x, axis=(1, 2))
        mx = jnp.max(x, axis=(1, 2))

        def fc(v):
            return jax.nn.sigmoid(jax.nn.relu(v @ w1 + b1) @ w2 + b2)

        return x * (fc(avg) + fc(mx))[:, None, None, :]

    def bn(x, g, bt, m, v):
        s = g.reshape(1, 1, 1, -1) * lax.rsqrt(v.reshape(1, 1, 1, -1) + 1e-5)
        return (x - m.reshape(1, 1, 1, -1)) * s + bt.reshape(1, 1, 1, -1)

    def sa(x, g, bt, m, v, wc, bc):
        xn = bn(x, g, bt, m, v)
        attn = jax.nn.sigmoid(jnp.einsum("bhwc,co->bhwo", xn, wc) + bc.reshape(1, 1, 1, -1))
        return xn * attn

    x = conv(x, *p["conv1"]); x = ca(x, *p["ca1"]); x = sa(x, *p["sa1"])
    x = conv(x, *p["conv2"]); x = bn(x, *p["bn2"])
    x = conv(x, *p["conv3"]); x = ca(x, *p["ca3"]); x = sa(x, *p["sa3"])
    B, H, W, C = x.shape
    pooled = jnp.mean(x.reshape(B, 2, H // 2, 2, W // 2, C), axis=(2, 4))
    return jnp.transpose(pooled, (0, 3, 1, 2)).reshape(B, -1)


# ----------------------------- main --------------------------------------------

if __name__ == "__main__":
    # Small map (module is "optimized for small maps"); B=5 exercises batch
    # blocking (B_blk > 1), the grid >= 2 constraint, and batch padding.
    B, C_IN, H, W = 5, 4, 8, 8
    x = jax.random.normal(jax.random.PRNGKey(0), (B, C_IN, H, W), jnp.float32)
    params = init_params(C_IN)

    out = jax.jit(hybrid_cnn_forward)(x, params)
    out = jax.block_until_ready(out)

    assert out.shape == (B, 256 * 2 * 2), out.shape
    ref = _reference_forward(x, params)
    assert bool(jnp.all(jnp.isfinite(out)))
    assert bool(jnp.allclose(out, ref, rtol=2e-2, atol=2e-2)), \
        float(jnp.max(jnp.abs(out - ref)))
    print("KERNEL_OK")
</pallas_src>

<mosaic_0001>
module attributes {stable_mosaic.version = 11 : i64} {
  func.func @_fused_hybrid_cnn_kernel(%arg0: i32, %arg1: memref<3x64x128xbf16, #tpu.memory_space<vmem>>, %arg2: memref<128x64xbf16, #tpu.memory_space<vmem>>, %arg3: memref<1152x128xbf16, #tpu.memory_space<vmem>>, %arg4: memref<1152x256xbf16, #tpu.memory_space<vmem>>, %arg5: memref<64x16xf32, #tpu.memory_space<vmem>>, %arg6: memref<16x64xf32, #tpu.memory_space<vmem>>, %arg7: memref<256x64xf32, #tpu.memory_space<vmem>>, %arg8: memref<64x256xf32, #tpu.memory_space<vmem>>, %arg9: memref<7x64xf32, #tpu.memory_space<vmem>>, %arg10: memref<3x128xf32, #tpu.memory_space<vmem>>, %arg11: memref<7x256xf32, #tpu.memory_space<vmem>>, %arg12: memref<3x2x2x256xf32, #tpu.memory_space<vmem>>, %arg13: memref<3x10x10x128xf32, #tpu.memory_space<vmem>>, %arg14: memref<3x10x10x128xf32, #tpu.memory_space<vmem>>, %arg15: memref<192x1152xbf16, #tpu.memory_space<vmem>>) attributes {dimension_semantics = [#tpu.dimension_semantics<parallel>], iteration_bounds = array<i64: 2>, scalar_prefetch = 0 : i64, scratch_operands = 3 : i64, tpu.core_type = #tpu.core_type<tc>, window_params = [{transform_indices = @transform_0, window_bounds = array<i64: 3, 64, 128>}, {pipeline_mode = #tpu.pipeline_mode<synchronous>, transform_indices = @transform_1, window_bounds = array<i64: 128, 64>}, {pipeline_mode = #tpu.pipeline_mode<synchronous>, transform_indices = @transform_2, window_bounds = array<i64: 1152, 128>}, {pipeline_mode = #tpu.pipeline_mode<synchronous>, transform_indices = @transform_3, window_bounds = array<i64: 1152, 256>}, {pipeline_mode = #tpu.pipeline_mode<synchronous>, transform_indices = @transform_4, window_bounds = array<i64: 64, 16>}, {pipeline_mode = #tpu.pipeline_mode<synchronous>, transform_indices = @transform_5, window_bounds = array<i64: 16, 64>}, {pipeline_mode = #tpu.pipeline_mode<synchronous>, transform_indices = @transform_6, window_bounds = array<i64: 256, 64>}, {pipeline_mode = #tpu.pipeline_mode<synchronous>, transform_indices = @transform_7, window_bounds = array<i64: 64, 256>}, {pipeline_mode = #tpu.pipeline_mode<synchronous>, transform_indices = @transform_8, window_bounds = array<i64: 7, 64>}, {pipeline_mode = #tpu.pipeline_mode<synchronous>, transform_indices = @transform_9, window_bounds = array<i64: 3, 128>}, {pipeline_mode = #tpu.pipeline_mode<synchronous>, transform_indices = @transform_10, window_bounds = array<i64: 7, 256>}, {transform_indices = @transform_11, window_bounds = array<i64: 3, 2, 2, 256>}]} {
    %c0 = arith.constant 0 : index
    %c0_0 = arith.constant 0 : index
    %c0_1 = arith.constant 0 : index
    %0 = vector.load %arg1[%c0, %c0_0, %c0_1] : memref<3x64x128xbf16, #tpu.memory_space<vmem>>, vector<3x64x128xbf16>
    %1 = vector.shape_cast %0 : vector<3x64x128xbf16> to vector<192x128xbf16>
    %c0_2 = arith.constant 0 : index
    %c0_3 = arith.constant 0 : index
    %2 = vector.load %arg2[%c0_2, %c0_3] : memref<128x64xbf16, #tpu.memory_space<vmem>>, vector<128x64xbf16>
    %cst = arith.constant dense<0.000000e+00> : vector<192x64xf32>
    %3 = tpu.matmul %1, %2, %cst {dimension_numbers = #tpu.dot_dimension_numbers<[1], [0], [0], [1], [0, 0, 1, 1], [], []>} : vector<192x128xbf16>, vector<128x64xbf16>, vector<192x64xf32> -> vector<192x64xf32>
    %c0_4 = arith.constant 0 : index
    %c0_5 = arith.constant 0 : index
    %4 = vector.load %arg9[%c0_4, %c0_5] : memref<7x64xf32, #tpu.memory_space<vmem>>, vector<1x64xf32>
    %5 = vector.broadcast %4 : vector<1x64xf32> to vector<192x64xf32>
    %6 = arith.addf %3, %5 : vector<192x64xf32>
    %cst_6 = arith.constant 0.000000e+00 : f32
    %7 = vector.broadcast %cst_6 : f32 to vector<192x64xf32>
    %8 = arith.maximumf %6, %7 : vector<192x64xf32>
    %c0_7 = arith.constant 0 : index
    %c0_8 = arith.constant 0 : index
    %9 = vector.load %arg5[%c0_7, %c0_8] : memref<64x16xf32, #tpu.memory_space<vmem>>, vector<64x16xf32>
    %c1 = arith.constant 1 : index
    %c0_9 = arith.constant 0 : index
    %10 = vector.load %arg9[%c1, %c0_9] : memref<7x64xf32, #tpu.memory_space<vmem>>, vector<1x16xf32>
    %c0_10 = arith.constant 0 : index
    %c0_11 = arith.constant 0 : index
    %11 = vector.load %arg6[%c0_10, %c0_11] : memref<16x64xf32, #tpu.memory_space<vmem>>, vector<16x64xf32>
    %c2 = arith.constant 2 : index
    %c0_12 = arith.constant 0 : index
    %12 = vector.load %arg9[%c2, %c0_12] : memref<7x64xf32, #tpu.memory_space<vmem>>, vector<1x64xf32>
    %13 = vector.shape_cast %8 : vector<192x64xf32> to vector<3x64x64xf32>
    %cst_13 = arith.constant dense<0.000000e+00> : vector<3x64xf32>
    %14 = vector.multi_reduction <add>, %13, %cst_13 [1] : vector<3x64x64xf32> to vector<3x64xf32>
    %cst_14 = arith.constant 6.400000e+01 : f32
    %15 = vector.broadcast %cst_14 : f32 to vector<3x64xf32>
    %16 = arith.divf %14, %15 : vector<3x64xf32>
    %cst_15 = arith.constant dense<0xFF800000> : vector<3x64xf32>
    %17 = vector.multi_reduction <maximumf>, %13, %cst_15 [1] : vector<3x64x64xf32> to vector<3x64xf32>
    %18 = tpu.concatenate %16, %17 in 0 : vector<3x64xf32>, vector<3x64xf32> -> vector<6x64xf32>
    %cst_16 = arith.constant dense<0.000000e+00> : vector<6x16xf32>
    %19 = tpu.matmul %18, %9, %cst_16 {dimension_numbers = #tpu.dot_dimension_numbers<[1], [0], [0], [1], [0, 0, 1, 1], [], []>} : vector<6x64xf32>, vector<64x16xf32>, vector<6x16xf32> -> vector<6x16xf32>
    %20 = vector.broadcast %10 : vector<1x16xf32> to vector<6x16xf32>
    %21 = arith.addf %19, %20 : vector<6x16xf32>
    %cst_17 = arith.constant 0.000000e+00 : f32
    %22 = vector.broadcast %cst_17 : f32 to vector<6x16xf32>
    %23 = arith.maximumf %21, %22 : vector<6x16xf32>
    %cst_18 = arith.constant dense<0.000000e+00> : vector<6x64xf32>
    %24 = tpu.matmul %23, %11, %cst_18 {dimension_numbers = #tpu.dot_dimension_numbers<[1], [0], [0], [1], [0, 0, 1, 1], [], []>} : vector<6x16xf32>, vector<16x64xf32>, vector<6x64xf32> -> vector<6x64xf32>
    %25 = vector.broadcast %12 : vector<1x64xf32> to vector<6x64xf32>
    %26 = arith.addf %24, %25 : vector<6x64xf32>
    %27 = arith.negf %26 : vector<6x64xf32>
    %28 = math.exp %27 : vector<6x64xf32>
    %cst_19 = arith.constant 1.000000e+00 : f32
    %29 = vector.broadcast %cst_19 : f32 to vector<6x64xf32>
    %30 = arith.addf %29, %28 : vector<6x64xf32>
    %31 = arith.divf %29, %30 : vector<6x64xf32>
    %32 = vector.extract_strided_slice %31 {offsets = [0, 0], sizes = [3, 64], strides = [1, 1]} : vector<6x64xf32> to vector<3x64xf32>
    %33 = vector.extract_strided_slice %31 {offsets = [3, 0], sizes = [3, 64], strides = [1, 1]} : vector<6x64xf32> to vector<3x64xf32>
    %34 = arith.addf %32, %33 : vector<3x64xf32>
    %35 = vector.shape_cast %34 : vector<3x64xf32> to vector<3x1x64xf32>
    %36 = vector.broadcast %35 : vector<3x1x64xf32> to vector<3x64x64xf32>
    %37 = arith.mulf %13, %36 : vector<3x64x64xf32>
    %38 = vector.shape_cast %37 : vector<3x64x64xf32> to vector<192x64xf32>
    %c3 = arith.constant 3 : index
    %c0_20 = arith.constant 0 : index
    %39 = vector.load %arg9[%c3, %c0_20] : memref<7x64xf32, #tpu.memory_space<vmem>>, vector<1x64xf32>
    %c4 = arith.constant 4 : index
    %c0_21 = arith.constant 0 : index
    %40 = vector.load %arg9[%c4, %c0_21] : memref<7x64xf32, #tpu.memory_space<vmem>>, vector<1x64xf32>
    %c5 = arith.constant 5 : index
    %c0_22 = arith.constant 0 : index
    %41 = vector.load %arg9[%c5, %c0_22] : memref<7x64xf32, #tpu.memory_space<vmem>>, vector<1x64xf32>
    %c6 = arith.constant 6 : index
    %c0_23 = arith.constant 0 : index
    %42 = vector.load %arg9[%c6, %c0_23] : memref<7x64xf32, #tpu.memory_space<vmem>>, vector<1x1xf32>
    %43 = vector.broadcast %39 : vector<1x64xf32> to vector<192x64xf32>
    %44 = arith.mulf %38, %43 : vector<192x64xf32>
    %45 = vector.broadcast %40 : vector<1x64xf32> to vector<192x64xf32>
    %46 = arith.addf %44, %45 : vector<192x64xf32>
    %47 = vector.broadcast %41 : vector<1x64xf32> to vector<192x64xf32>
    %48 = arith.mulf %46, %47 : vector<192x64xf32>
    %cst_24 = arith.constant dense<0.000000e+00> : vector<192xf32>
    %49 = vector.multi_reduction <add>, %48, %cst_24 [1] : vector<192x64xf32> to vector<192xf32>
    %50 = vector.shape_cast %49 : vector<192xf32> to vector<192x1xf32>
    %51 = vector.broadcast %42 : vector<1x1xf32> to vector<192x1xf32>
    %52 = arith.addf %50, %51 : vector<192x1xf32>
    %53 = arith.negf %52 : vector<192x1xf32>
    %54 = math.exp %53 : vector<192x1xf32>
    %cst_25 = arith.constant 1.000000e+00 : f32
    %55 = vector.broadcast %cst_25 : f32 to vector<192x1xf32>
    %56 = arith.addf %55, %54 : vector<192x1xf32>
    %57 = arith.divf %55, %56 : vector<192x1xf32>
    %58 = vector.broadcast %57 : vector<192x1xf32> to vector<192x64xf32>
    %59 = arith.mulf %46, %58 : vector<192x64xf32>
    %c0_26 = arith.constant 0 : index
    %c0_27 = arith.constant 0 : index
    %60 = vector.load %arg10[%c0_26, %c0_27] : memref<3x128xf32, #tpu.memory_space<vmem>>, vector<1x128xf32>
    %61 = vector.shape_cast %59 : vector<192x64xf32> to vector<3x8x8x64xf32>
    %cst_28 = arith.constant 0.000000e+00 : f32
    %62 = vector.broadcast %cst_28 : f32 to vector<3x8x8x64xf32>
    %63 = tpu.concatenate %61, %62 in 3 : vector<3x8x8x64xf32>, vector<3x8x8x64xf32> -> vector<3x8x8x128xf32>
    %cst_29 = arith.constant 0.000000e+00 : f32
    %64 = vector.broadcast %cst_29 : f32 to vector<3x1x10x128xf32>
    %cst_30 = arith.constant 0.000000e+00 : f32
    %65 = vector.broadcast %cst_30 : f32 to vector<3x10x1x128xf32>
    %c0_31 = arith.constant 0 : index
    %c0_32 = arith.constant 0 : index
    %c0_33 = arith.constant 0 : index
    %c0_34 = arith.constant 0 : index
    %66 = vector.load %arg13[%c0_31, %c0_32, %c0_33, %c0_34] : memref<3x10x10x128xf32, #tpu.memory_space<vmem>>, vector<3x1x10x128xf32>
    tpu.vector_store %arg13[%c0_31, %c0_32, %c0_33, %c0_34], %64 {strides = array<i32>} : memref<3x10x10x128xf32, #tpu.memory_space<vmem>>, vector<3x1x10x128xf32>,
    %c0_35 = arith.constant 0 : index
    %c9 = arith.constant 9 : index
    %c0_36 = arith.constant 0 : index
    %c0_37 = arith.constant 0 : index
    %67 = vector.load %arg13[%c0_35, %c9, %c0_36, %c0_37] : memref<3x10x10x128xf32, #tpu.memory_space<vmem>>, vector<3x1x10x128xf32>
    tpu.vector_store %arg13[%c0_35, %c9, %c0_36, %c0_37], %64 {strides = array<i32>} : memref<3x10x10x128xf32, #tpu.memory_space<vmem>>, vector<3x1x10x128xf32>,
    %c0_38 = arith.constant 0 : index
    %c0_39 = arith.constant 0 : index
    %c0_40 = arith.constant 0 : index
    %c0_41 = arith.constant 0 : index
    %68 = vector.load %arg13[%c0_38, %c0_39, %c0_40, %c0_41] : memref<3x10x10x128xf32, #tpu.memory_space<vmem>>, vector<3x10x1x128xf32>
    tpu.vector_store %arg13[%c0_38, %c0_39, %c0_40, %c0_41], %65 {strides = array<i32>} : memref<3x10x10x128xf32, #tpu.memory_space<vmem>>, vector<3x10x1x128xf32>,
    %c0_42 = arith.constant 0 : index
    %c0_43 = arith.constant 0 : index
    %c9_44 = arith.constant 9 : index
    %c0_45 = arith.constant 0 : index
    %69 = vector.load %arg13[%c0_42, %c0_43, %c9_44, %c0_45] : memref<3x10x10x128xf32, #tpu.memory_space<vmem>>, vector<3x10x1x128xf32>
    tpu.vector_store %arg13[%c0_42, %c0_43, %c9_44, %c0_45], %65 {strides = array<i32>} : memref<3x10x10x128xf32, #tpu.memory_space<vmem>>, vector<3x10x1x128xf32>,
    %c0_46 = arith.constant 0 : index
    %c1_47 = arith.constant 1 : index
    %c1_48 = arith.constant 1 : index
    %c0_49 = arith.constant 0 : index
    %70 = vector.load %arg13[%c0_46, %c1_47, %c1_48, %c0_49] : memref<3x10x10x128xf32, #tpu.memory_space<vmem>>, vector<3x8x8x128xf32>
    tpu.vector_store %arg13[%c0_46, %c1_47, %c1_48, %c0_49], %63 {strides = array<i32>} : memref<3x10x10x128xf32, #tpu.memory_space<vmem>>, vector<3x8x8x128xf32>,
    %c0_50 = arith.constant 0 : index
    %c0_51 = arith.constant 0 : index
    %c0_52 = arith.constant 0 : index
    %c0_53 = arith.constant 0 : index
    %71 = vector.load %arg13[%c0_50, %c0_51, %c0_52, %c0_53] : memref<3x10x10x128xf32, #tpu.memory_space<vmem>>, vector<3x8x8x128xf32>
    %72 = arith.truncf %71 : vector<3x8x8x128xf32> to vector<3x8x8x128xbf16>
    %73 = vector.shape_cast %72 : vector<3x8x8x128xbf16> to vector<192x128xbf16>
    %c0_54 = arith.constant 0 : index
    %c0_55 = arith.constant 0 : index
    %74 = vector.load %arg15[%c0_54, %c0_55] : memref<192x1152xbf16, #tpu.memory_space<vmem>>, vector<192x128xbf16>
    tpu.vector_store %arg15[%c0_54, %c0_55], %73 {strides = array<i32>} : memref<192x1152xbf16, #tpu.memory_space<vmem>>, vector<192x128xbf16>,
    %c0_56 = arith.constant 0 : index
    %c0_57 = arith.constant 0 : index
    %c1_58 = arith.constant 1 : index
    %c0_59 = arith.constant 0 : index
    %75 = vector.load %arg13[%c0_56, %c0_57, %c1_58, %c0_59] : memref<3x10x10x128xf32, #tpu.memory_space<vmem>>, vector<3x8x8x128xf32>
    %76 = arith.truncf %75 : vector<3x8x8x128xf32> to vector<3x8x8x128xbf16>
    %77 = vector.shape_cast %76 : vector<3x8x8x128xbf16> to vector<192x128xbf16>
    %c0_60 = arith.constant 0 : index
    %c128 = arith.constant 128 : index
    %78 = vector.load %arg15[%c0_60, %c128] : memref<192x1152xbf16, #tpu.memory_space<vmem>>, vector<192x128xbf16>
    tpu.vector_store %arg15[%c0_60, %c128], %77 {strides = array<i32>} : memref<192x1152xbf16, #tpu.memory_space<vmem>>, vector<192x128xbf16>,
    %c0_61 = arith.constant 0 : index
    %c0_62 = arith.constant 0 : index
    %c2_63 = arith.constant 2 : index
    %c0_64 = arith.constant 0 : index
    %79 = vector.load %arg13[%c0_61, %c0_62, %c2_63, %c0_64] : memref<3x10x10x128xf32, #tpu.memory_space<vmem>>, vector<3x8x8x128xf32>
    %80 = arith.truncf %79 : vector<3x8x8x128xf32> to vector<3x8x8x128xbf16>
    %81 = vector.shape_cast %80 : vector<3x8x8x128xbf16> to vector<192x128xbf16>
    %c0_65 = arith.constant 0 : index
    %c256 = arith.constant 256 : index
    %82 = vector.load %arg15[%c0_65, %c256] : memref<192x1152xbf16, #tpu.memory_space<vmem>>, vector<192x128xbf16>
    tpu.vector_store %arg15[%c0_65, %c256], %81 {strides = array<i32>} : memref<192x1152xbf16, #tpu.memory_space<vmem>>, vector<192x128xbf16>,
    %c0_66 = arith.constant 0 : index
    %c1_67 = arith.constant 1 : index
    %c0_68 = arith.constant 0 : index
    %c0_69 = arith.constant 0 : index
    %83 = vector.load %arg13[%c0_66, %c1_67, %c0_68, %c0_69] : memref<3x10x10x128xf32, #tpu.memory_space<vmem>>, vector<3x8x8x128xf32>
    %84 = arith.truncf %83 : vector<3x8x8x128xf32> to vector<3x8x8x128xbf16>
    %85 = vector.shape_cast %84 : vector<3x8x8x128xbf16> to vector<192x128xbf16>
    %c0_70 = arith.constant 0 : index
    %c384 = arith.constant 384 : index
    %86 = vector.load %arg15[%c0_70, %c384] : memref<192x1152xbf16, #tpu.memory_space<vmem>>, vector<192x128xbf16>
    tpu.vector_store %arg15[%c0_70, %c384], %85 {strides = array<i32>} : memref<192x1152xbf16, #tpu.memory_space<vmem>>, vector<192x128xbf16>,
    %c0_71 = arith.constant 0 : index
    %c1_72 = arith.constant 1 : index
    %c1_73 = arith.constant 1 : index
    %c0_74 = arith.constant 0 : index
    %87 = vector.load %arg13[%c0_71, %c1_72, %c1_73, %c0_74] : memref<3x10x10x128xf32, #tpu.memory_space<vmem>>, vector<3x8x8x128xf32>
    %88 = arith.truncf %87 : vector<3x8x8x128xf32> to vector<3x8x8x128xbf16>
    %89 = vector.shape_cast %88 : vector<3x8x8x128xbf16> to vector<192x128xbf16>
    %c0_75 = arith.constant 0 : index
    %c512 = arith.constant 512 : index
    %90 = vector.load %arg15[%c0_75, %c512] : memref<192x1152xbf16, #tpu.memory_space<vmem>>, vector<192x128xbf16>
    tpu.vector_store %arg15[%c0_75, %c512], %89 {strides = array<i32>} : memref<192x1152xbf16, #tpu.memory_space<vmem>>, vector<192x128xbf16>,
    %c0_76 = arith.constant 0 : index
    %c1_77 = arith.constant 1 : index
    %c2_78 = arith.constant 2 : index
    %c0_79 = arith.constant 0 : index
    %91 = vector.load %arg13[%c0_76, %c1_77, %c2_78, %c0_79] : memref<3x10x10x128xf32, #tpu.memory_space<vmem>>, vector<3x8x8x128xf32>
    %92 = arith.truncf %91 : vector<3x8x8x128xf32> to vector<3x8x8x128xbf16>
    %93 = vector.shape_cast %92 : vector<3x8x8x128xbf16> to vector<192x128xbf16>
    %c0_80 = arith.constant 0 : index
    %c640 = arith.constant 640 : index
    %94 = vector.load %arg15[%c0_80, %c640] : memref<192x1152xbf16, #tpu.memory_space<vmem>>, vector<192x128xbf16>
    tpu.vector_store %arg15[%c0_80, %c640], %93 {strides = array<i32>} : memref<192x1152xbf16, #tpu.memory_space<vmem>>, vector<192x128xbf16>,
    %c0_81 = arith.constant 0 : index
    %c2_82 = arith.constant 2 : index
    %c0_83 = arith.constant 0 : index
    %c0_84 = arith.constant 0 : index
    %95 = vector.load %arg13[%c0_81, %c2_82, %c0_83, %c0_84] : memref<3x10x10x128xf32, #tpu.memory_space<vmem>>, vector<3x8x8x128xf32>
    %96 = arith.truncf %95 : vector<3x8x8x128xf32> to vector<3x8x8x128xbf16>
    %97 = vector.shape_cast %96 : vector<3x8x8x128xbf16> to vector<192x128xbf16>
    %c0_85 = arith.constant 0 : index
    %c768 = arith.constant 768 : index
    %98 = vector.load %arg15[%c0_85, %c768] : memref<192x1152xbf16, #tpu.memory_space<vmem>>, vector<192x128xbf16>
    tpu.vector_store %arg15[%c0_85, %c768], %97 {strides = array<i32>} : memref<192x1152xbf16, #tpu.memory_space<vmem>>, vector<192x128xbf16>,
    %c0_86 = arith.constant 0 : index
    %c2_87 = arith.constant 2 : index
    %c1_88 = arith.constant 1 : index
    %c0_89 = arith.constant 0 : index
    %99 = vector.load %arg13[%c0_86, %c2_87, %c1_88, %c0_89] : memref<3x10x10x128xf32, #tpu.memory_space<vmem>>, vector<3x8x8x128xf32>
    %100 = arith.truncf %99 : vector<3x8x8x128xf32> to vector<3x8x8x128xbf16>
    %101 = vector.shape_cast %100 : vector<3x8x8x128xbf16> to vector<192x128xbf16>
    %c0_90 = arith.constant 0 : index
    %c896 = arith.constant 896 : index
    %102 = vector.load %arg15[%c0_90, %c896] : memref<192x1152xbf16, #tpu.memory_space<vmem>>, vector<192x128xbf16>
    tpu.vector_store %arg15[%c0_90, %c896], %101 {strides = array<i32>} : memref<192x1152xbf16, #tpu.memory_space<vmem>>, vector<192x128xbf16>,
    %c0_91 = arith.constant 0 : index
    %c2_92 = arith.constant 2 : index
    %c2_93 = arith.constant 2 : index
    %c0_94 = arith.constant 0 : index
    %103 = vector.load %arg13[%c0_91, %c2_92, %c2_93, %c0_94] : memref<3x10x10x128xf32, #tpu.memory_space<vmem>>, vector<3x8x8x128xf32>
    %104 = arith.truncf %103 : vector<3x8x8x128xf32> to vector<3x8x8x128xbf16>
    %105 = vector.shape_cast %104 : vector<3x8x8x128xbf16> to vector<192x128xbf16>
    %c0_95 = arith.constant 0 : index
    %c1024 = arith.constant 1024 : index
    %106 = vector.load %arg15[%c0_95, %c1024] : memref<192x1152xbf16, #tpu.memory_space<vmem>>, vector<192x128xbf16>
    tpu.vector_store %arg15[%c0_95, %c1024], %105 {strides = array<i32>} : memref<192x1152xbf16, #tpu.memory_space<vmem>>, vector<192x128xbf16>,
    %c0_96 = arith.constant 0 : index
    %c0_97 = arith.constant 0 : index
    %107 = vector.load %arg15[%c0_96, %c0_97] : memref<192x1152xbf16, #tpu.memory_space<vmem>>, vector<192x1152xbf16>
    %c0_98 = arith.constant 0 : index
    %c0_99 = arith.constant 0 : index
    %108 = vector.load %arg3[%c0_98, %c0_99] : memref<1152x128xbf16, #tpu.memory_space<vmem>>, vector<1152x128xbf16>
    %cst_100 = arith.constant dense<0.000000e+00> : vector<192x128xf32>
    %109 = tpu.matmul %107, %108, %cst_100 {dimension_numbers = #tpu.dot_dimension_numbers<[1], [0], [0], [1], [0, 0, 1, 1], [], []>} : vector<192x1152xbf16>, vector<1152x128xbf16>, vector<192x128xf32> -> vector<192x128xf32>
    %110 = vector.broadcast %60 : vector<1x128xf32> to vector<192x128xf32>
    %111 = arith.addf %109, %110 : vector<192x128xf32>
    %cst_101 = arith.constant 0.000000e+00 : f32
    %112 = vector.broadcast %cst_101 : f32 to vector<192x128xf32>
    %113 = arith.maximumf %111, %112 : vector<192x128xf32>
    %c1_102 = arith.constant 1 : index
    %c0_103 = arith.constant 0 : index
    %114 = vector.load %arg10[%c1_102, %c0_103] : memref<3x128xf32, #tpu.memory_space<vmem>>, vector<1x128xf32>
    %115 = vector.broadcast %114 : vector<1x128xf32> to vector<192x128xf32>
    %116 = arith.mulf %113, %115 : vector<192x128xf32>
    %c2_104 = arith.constant 2 : index
    %c0_105 = arith.constant 0 : index
    %117 = vector.load %arg10[%c2_104, %c0_105] : memref<3x128xf32, #tpu.memory_space<vmem>>, vector<1x128xf32>
    %118 = vector.broadcast %117 : vector<1x128xf32> to vector<192x128xf32>
    %119 = arith.addf %116, %118 : vector<192x128xf32>
    %c0_106 = arith.constant 0 : index
    %c0_107 = arith.constant 0 : index
    %120 = vector.load %arg11[%c0_106, %c0_107] : memref<7x256xf32, #tpu.memory_space<vmem>>, vector<1x256xf32>
    %121 = vector.shape_cast %119 : vector<192x128xf32> to vector<3x8x8x128xf32>
    %cst_108 = arith.constant 0.000000e+00 : f32
    %122 = vector.broadcast %cst_108 : f32 to vector<3x1x10x128xf32>
    %cst_109 = arith.constant 0.000000e+00 : f32
    %123 = vector.broadcast %cst_109 : f32 to vector<3x10x1x128xf32>
    %c0_110 = arith.constant 0 : index
    %c0_111 = arith.constant 0 : index
    %c0_112 = arith.constant 0 : index
    %c0_113 = arith.constant 0 : index
    %124 = vector.load %arg14[%c0_110, %c0_111, %c0_112, %c0_113] : memref<3x10x10x128xf32, #tpu.memory_space<vmem>>, vector<3x1x10x128xf32>
    tpu.vector_store %arg14[%c0_110, %c0_111, %c0_112, %c0_113], %122 {strides = array<i32>} : memref<3x10x10x128xf32, #tpu.memory_space<vmem>>, vector<3x1x10x128xf32>,
    %c0_114 = arith.constant 0 : index
    %c9_115 = arith.constant 9 : index
    %c0_116 = arith.constant 0 : index
    %c0_117 = arith.constant 0 : index
    %125 = vector.load %arg14[%c0_114, %c9_115, %c0_116, %c0_117] : memref<3x10x10x128xf32, #tpu.memory_space<vmem>>, vector<3x1x10x128xf32>
    tpu.vector_store %arg14[%c0_114, %c9_115, %c0_116, %c0_117], %122 {strides = array<i32>} : memref<3x10x10x128xf32, #tpu.memory_space<vmem>>, vector<3x1x10x128xf32>,
    %c0_118 = arith.constant 0 : index
    %c0_119 = arith.constant 0 : index
    %c0_120 = arith.constant 0 : index
    %c0_121 = arith.constant 0 : index
    %126 = vector.load %arg14[%c0_118, %c0_119, %c0_120, %c0_121] : memref<3x10x10x128xf32, #tpu.memory_space<vmem>>, vector<3x10x1x128xf32>
    tpu.vector_store %arg14[%c0_118, %c0_119, %c0_120, %c0_121], %123 {strides = array<i32>} : memref<3x10x10x128xf32, #tpu.memory_space<vmem>>, vector<3x10x1x128xf32>,
    %c0_122 = arith.constant 0 : index
    %c0_123 = arith.constant 0 : index
    %c9_124 = arith.constant 9 : index
    %c0_125 = arith.constant 0 : index
    %127 = vector.load %arg14[%c0_122, %c0_123, %c9_124, %c0_125] : memref<3x10x10x128xf32, #tpu.memory_space<vmem>>, vector<3x10x1x128xf32>
    tpu.vector_store %arg14[%c0_122, %c0_123, %c9_124, %c0_125], %123 {strides = array<i32>} : memref<3x10x10x128xf32, #tpu.memory_space<vmem>>, vector<3x10x1x128xf32>,
    %c0_126 = arith.constant 0 : index
    %c1_127 = arith.constant 1 : index
    %c1_128 = arith.constant 1 : index
    %c0_129 = arith.constant 0 : index
    %128 = vector.load %arg14[%c0_126, %c1_127, %c1_128, %c0_129] : memref<3x10x10x128xf32, #tpu.memory_space<vmem>>, vector<3x8x8x128xf32>
    tpu.vector_store %arg14[%c0_126, %c1_127, %c1_128, %c0_129], %121 {strides = array<i32>} : memref<3x10x10x128xf32, #tpu.memory_space<vmem>>, vector<3x8x8x128xf32>,
    %c0_130 = arith.constant 0 : index
    %c0_131 = arith.constant 0 : index
    %c0_132 = arith.constant 0 : index
    %c0_133 = arith.constant 0 : index
    %129 = vector.load %arg14[%c0_130, %c0_131, %c0_132, %c0_133] : memref<3x10x10x128xf32, #tpu.memory_space<vmem>>, vector<3x8x8x128xf32>
    %130 = arith.truncf %129 : vector<3x8x8x128xf32> to vector<3x8x8x128xbf16>
    %131 = vector.shape_cast %130 : vector<3x8x8x128xbf16> to vector<192x128xbf16>
    %c0_134 = arith.constant 0 : index
    %c0_135 = arith.constant 0 : index
    %132 = vector.load %arg15[%c0_134, %c0_135] : memref<192x1152xbf16, #tpu.memory_space<vmem>>, vector<192x128xbf16>
    tpu.vector_store %arg15[%c0_134, %c0_135], %131 {strides = array<i32>} : memref<192x1152xbf16, #tpu.memory_space<vmem>>, vector<192x128xbf16>,
    %c0_136 = arith.constant 0 : index
    %c0_137 = arith.constant 0 : index
    %c1_138 = arith.constant 1 : index
    %c0_139 = arith.constant 0 : index
    %133 = vector.load %arg14[%c0_136, %c0_137, %c1_138, %c0_139] : memref<3x10x10x128xf32, #tpu.memory_space<vmem>>, vector<3x8x8x128xf32>
    %134 = arith.truncf %133 : vector<3x8x8x128xf32> to vector<3x8x8x128xbf16>
    %135 = vector.shape_cast %134 : vector<3x8x8x128xbf16> to vector<192x128xbf16>
    %c0_140 = arith.constant 0 : index
    %c128_141 = arith.constant 128 : index
    %136 = vector.load %arg15[%c0_140, %c128_141] : memref<192x1152xbf16, #tpu.memory_space<vmem>>, vector<192x128xbf16>
    tpu.vector_store %arg15[%c0_140, %c128_141], %135 {strides = array<i32>} : memref<192x1152xbf16, #tpu.memory_space<vmem>>, vector<192x128xbf16>,
    %c0_142 = arith.constant 0 : index
    %c0_143 = arith.constant 0 : index
    %c2_144 = arith.constant 2 : index
    %c0_145 = arith.constant 0 : index
    %137 = vector.load %arg14[%c0_142, %c0_143, %c2_144, %c0_145] : memref<3x10x10x128xf32, #tpu.memory_space<vmem>>, vector<3x8x8x128xf32>
    %138 = arith.truncf %137 : vector<3x8x8x128xf32> to vector<3x8x8x128xbf16>
    %139 = vector.shape_cast %138 : vector<3x8x8x128xbf16> to vector<192x128xbf16>
    %c0_146 = arith.constant 0 : index
    %c256_147 = arith.constant 256 : index
    %140 = vector.load %arg15[%c0_146, %c256_147] : memref<192x1152xbf16, #tpu.memory_space<vmem>>, vector<192x128xbf16>
    tpu.vector_store %arg15[%c0_146, %c256_147], %139 {strides = array<i32>} : memref<192x1152xbf16, #tpu.memory_space<vmem>>, vector<192x128xbf16>,
    %c0_148 = arith.constant 0 : index
    %c1_149 = arith.constant 1 : index
    %c0_150 = arith.constant 0 : index
    %c0_151 = arith.constant 0 : index
    %141 = vector.load %arg14[%c0_148, %c1_149, %c0_150, %c0_151] : memref<3x10x10x128xf32, #tpu.memory_space<vmem>>, vector<3x8x8x128xf32>
    %142 = arith.truncf %141 : vector<3x8x8x128xf32> to vector<3x8x8x128xbf16>
    %143 = vector.shape_cast %142 : vector<3x8x8x128xbf16> to vector<192x128xbf16>
    %c0_152 = arith.constant 0 : index
    %c384_153 = arith.constant 384 : index
    %144 = vector.load %arg15[%c0_152, %c384_153] : memref<192x1152xbf16, #tpu.memory_space<vmem>>, vector<192x128xbf16>
    tpu.vector_store %arg15[%c0_152, %c384_153], %143 {strides = array<i32>} : memref<192x1152xbf16, #tpu.memory_space<vmem>>, vector<192x128xbf16>,
    %c0_154 = arith.constant 0 : index
    %c1_155 = arith.constant 1 : index
    %c1_156 = arith.constant 1 : index
    %c0_157 = arith.constant 0 : index
    %145 = vector.load %arg14[%c0_154, %c1_155, %c1_156, %c0_157] : memref<3x10x10x128xf32, #tpu.memory_space<vmem>>, vector<3x8x8x128xf32>
    %146 = arith.truncf %145 : vector<3x8x8x128xf32> to vector<3x8x8x128xbf16>
    %147 = vector.shape_cast %146 : vector<3x8x8x128xbf16> to vector<192x128xbf16>
    %c0_158 = arith.constant 0 : index
    %c512_159 = arith.constant 512 : index
    %148 = vector.load %arg15[%c0_158, %c512_159] : memref<192x1152xbf16, #tpu.memory_space<vmem>>, vector<192x128xbf16>
    tpu.vector_store %arg15[%c0_158, %c512_159], %147 {strides = array<i32>} : memref<192x1152xbf16, #tpu.memory_space<vmem>>, vector<192x128xbf16>,
    %c0_160 = arith.constant 0 : index
    %c1_161 = arith.constant 1 : index
    %c2_162 = arith.constant 2 : index
    %c0_163 = arith.constant 0 : index
    %149 = vector.load %arg14[%c0_160, %c1_161, %c2_162, %c0_163] : memref<3x10x10x128xf32, #tpu.memory_space<vmem>>, vector<3x8x8x128xf32>
    %150 = arith.truncf %149 : vector<3x8x8x128xf32> to vector<3x8x8x128xbf16>
    %151 = vector.shape_cast %150 : vector<3x8x8x128xbf16> to vector<192x128xbf16>
    %c0_164 = arith.constant 0 : index
    %c640_165 = arith.constant 640 : index
    %152 = vector.load %arg15[%c0_164, %c640_165] : memref<192x1152xbf16, #tpu.memory_space<vmem>>, vector<192x128xbf16>
    tpu.vector_store %arg15[%c0_164, %c640_165], %151 {strides = array<i32>} : memref<192x1152xbf16, #tpu.memory_space<vmem>>, vector<192x128xbf16>,
    %c0_166 = arith.constant 0 : index
    %c2_167 = arith.constant 2 : index
    %c0_168 = arith.constant 0 : index
    %c0_169 = arith.constant 0 : index
    %153 = vector.load %arg14[%c0_166, %c2_167, %c0_168, %c0_169] : memref<3x10x10x128xf32, #tpu.memory_space<vmem>>, vector<3x8x8x128xf32>
    %154 = arith.truncf %153 : vector<3x8x8x128xf32> to vector<3x8x8x128xbf16>
    %155 = vector.shape_cast %154 : vector<3x8x8x128xbf16> to vector<192x128xbf16>
    %c0_170 = arith.constant 0 : index
    %c768_171 = arith.constant 768 : index
    %156 = vector.load %arg15[%c0_170, %c768_171] : memref<192x1152xbf16, #tpu.memory_space<vmem>>, vector<192x128xbf16>
    tpu.vector_store %arg15[%c0_170, %c768_171], %155 {strides = array<i32>} : memref<192x1152xbf16, #tpu.memory_space<vmem>>, vector<192x128xbf16>,
    %c0_172 = arith.constant 0 : index
    %c2_173 = arith.constant 2 : index
    %c1_174 = arith.constant 1 : index
    %c0_175 = arith.constant 0 : index
    %157 = vector.load %arg14[%c0_172, %c2_173, %c1_174, %c0_175] : memref<3x10x10x128xf32, #tpu.memory_space<vmem>>, vector<3x8x8x128xf32>
    %158 = arith.truncf %157 : vector<3x8x8x128xf32> to vector<3x8x8x128xbf16>
    %159 = vector.shape_cast %158 : vector<3x8x8x128xbf16> to vector<192x128xbf16>
    %c0_176 = arith.constant 0 : index
    %c896_177 = arith.constant 896 : index
    %160 = vector.load %arg15[%c0_176, %c896_177] : memref<192x1152xbf16, #tpu.memory_space<vmem>>, vector<192x128xbf16>
    tpu.vector_store %arg15[%c0_176, %c896_177], %159 {strides = array<i32>} : memref<192x1152xbf16, #tpu.memory_space<vmem>>, vector<192x128xbf16>,
    %c0_178 = arith.constant 0 : index
    %c2_179 = arith.constant 2 : index
    %c2_180 = arith.constant 2 : index
    %c0_181 = arith.constant 0 : index
    %161 = vector.load %arg14[%c0_178, %c2_179, %c2_180, %c0_181] : memref<3x10x10x128xf32, #tpu.memory_space<vmem>>, vector<3x8x8x128xf32>
    %162 = arith.truncf %161 : vector<3x8x8x128xf32> to vector<3x8x8x128xbf16>
    %163 = vector.shape_cast %162 : vector<3x8x8x128xbf16> to vector<192x128xbf16>
    %c0_182 = arith.constant 0 : index
    %c1024_183 = arith.constant 1024 : index
    %164 = vector.load %arg15[%c0_182, %c1024_183] : memref<192x1152xbf16, #tpu.memory_space<vmem>>, vector<192x128xbf16>
    tpu.vector_store %arg15[%c0_182, %c1024_183], %163 {strides = array<i32>} : memref<192x1152xbf16, #tpu.memory_space<vmem>>, vector<192x128xbf16>,
    %c0_184 = arith.constant 0 : index
    %c0_185 = arith.constant 0 : index
    %165 = vector.load %arg15[%c0_184, %c0_185] : memref<192x1152xbf16, #tpu.memory_space<vmem>>, vector<192x1152xbf16>
    %c0_186 = arith.constant 0 : index
    %c0_187 = arith.constant 0 : index
    %166 = vector.load %arg4[%c0_186, %c0_187] : memref<1152x256xbf16, #tpu.memory_space<vmem>>, vector<1152x256xbf16>
    %cst_188 = arith.constant dense<0.000000e+00> : vector<192x256xf32>
    %167 = tpu.matmul %165, %166, %cst_188 {dimension_numbers = #tpu.dot_dimension_numbers<[1], [0], [0], [1], [0, 0, 1, 1], [], []>} : vector<192x1152xbf16>, vector<1152x256xbf16>, vector<192x256xf32> -> vector<192x256xf32>
    %168 = vector.broadcast %120 : vector<1x256xf32> to vector<192x256xf32>
    %169 = arith.addf %167, %168 : vector<192x256xf32>
    %cst_189 = arith.constant 0.000000e+00 : f32
    %170 = vector.broadcast %cst_189 : f32 to vector<192x256xf32>
    %171 = arith.maximumf %169, %170 : vector<192x256xf32>
    %c0_190 = arith.constant 0 : index
    %c0_191 = arith.constant 0 : index
    %172 = vector.load %arg7[%c0_190, %c0_191] : memref<256x64xf32, #tpu.memory_space<vmem>>, vector<256x64xf32>
    %c1_192 = arith.constant 1 : index
    %c0_193 = arith.constant 0 : index
    %173 = vector.load %arg11[%c1_192, %c0_193] : memref<7x256xf32, #tpu.memory_space<vmem>>, vector<1x64xf32>
    %c0_194 = arith.constant 0 : index
    %c0_195 = arith.constant 0 : index
    %174 = vector.load %arg8[%c0_194, %c0_195] : memref<64x256xf32, #tpu.memory_space<vmem>>, vector<64x256xf32>
    %c2_196 = arith.constant 2 : index
    %c0_197 = arith.constant 0 : index
    %175 = vector.load %arg11[%c2_196, %c0_197] : memref<7x256xf32, #tpu.memory_space<vmem>>, vector<1x256xf32>
    %176 = vector.shape_cast %171 : vector<192x256xf32> to vector<3x64x256xf32>
    %cst_198 = arith.constant dense<0.000000e+00> : vector<3x256xf32>
    %177 = vector.multi_reduction <add>, %176, %cst_198 [1] : vector<3x64x256xf32> to vector<3x256xf32>
    %cst_199 = arith.constant 6.400000e+01 : f32
    %178 = vector.broadcast %cst_199 : f32 to vector<3x256xf32>
    %179 = arith.divf %177, %178 : vector<3x256xf32>
    %cst_200 = arith.constant dense<0xFF800000> : vector<3x256xf32>
    %180 = vector.multi_reduction <maximumf>, %176, %cst_200 [1] : vector<3x64x256xf32> to vector<3x256xf32>
    %181 = tpu.concatenate %179, %180 in 0 : vector<3x256xf32>, vector<3x256xf32> -> vector<6x256xf32>
    %cst_201 = arith.constant dense<0.000000e+00> : vector<6x64xf32>
    %182 = tpu.matmul %181, %172, %cst_201 {dimension_numbers = #tpu.dot_dimension_numbers<[1], [0], [0], [1], [0, 0, 1, 1], [], []>} : vector<6x256xf32>, vector<256x64xf32>, vector<6x64xf32> -> vector<6x64xf32>
    %183 = vector.broadcast %173 : vector<1x64xf32> to vector<6x64xf32>
    %184 = arith.addf %182, %183 : vector<6x64xf32>
    %cst_202 = arith.constant 0.000000e+00 : f32
    %185 = vector.broadcast %cst_202 : f32 to vector<6x64xf32>
    %186 = arith.maximumf %184, %185 : vector<6x64xf32>
    %cst_203 = arith.constant dense<0.000000e+00> : vector<6x256xf32>
    %187 = tpu.matmul %186, %174, %cst_203 {dimension_numbers = #tpu.dot_dimension_numbers<[1], [0], [0], [1], [0, 0, 1, 1], [], []>} : vector<6x64xf32>, vector<64x256xf32>, vector<6x256xf32> -> vector<6x256xf32>
    %188 = vector.broadcast %175 : vector<1x256xf32> to vector<6x256xf32>
    %189 = arith.addf %187, %188 : vector<6x256xf32>
    %190 = arith.negf %189 : vector<6x256xf32>
    %191 = math.exp %190 : vector<6x256xf32>
    %cst_204 = arith.constant 1.000000e+00 : f32
    %192 = vector.broadcast %cst_204 : f32 to vector<6x256xf32>
    %193 = arith.addf %192, %191 : vector<6x256xf32>
    %194 = arith.divf %192, %193 : vector<6x256xf32>
    %195 = vector.extract_strided_slice %194 {offsets = [0, 0], sizes = [3, 256], strides = [1, 1]} : vector<6x256xf32> to vector<3x256xf32>
    %196 = vector.extract_strided_slice %194 {offsets = [3, 0], sizes = [3, 256], strides = [1, 1]} : vector<6x256xf32> to vector<3x256xf32>
    %197 = arith.addf %195, %196 : vector<3x256xf32>
    %198 = vector.shape_cast %197 : vector<3x256xf32> to vector<3x1x256xf32>
    %199 = vector.broadcast %198 : vector<3x1x256xf32> to vector<3x64x256xf32>
    %200 = arith.mulf %176, %199 : vector<3x64x256xf32>
    %201 = vector.shape_cast %200 : vector<3x64x256xf32> to vector<192x256xf32>
    %c3_205 = arith.constant 3 : index
    %c0_206 = arith.constant 0 : index
    %202 = vector.load %arg11[%c3_205, %c0_206] : memref<7x256xf32, #tpu.memory_space<vmem>>, vector<1x256xf32>
    %c4_207 = arith.constant 4 : index
    %c0_208 = arith.constant 0 : index
    %203 = vector.load %arg11[%c4_207, %c0_208] : memref<7x256xf32, #tpu.memory_space<vmem>>, vector<1x256xf32>
    %c5_209 = arith.constant 5 : index
    %c0_210 = arith.constant 0 : index
    %204 = vector.load %arg11[%c5_209, %c0_210] : memref<7x256xf32, #tpu.memory_space<vmem>>, vector<1x256xf32>
    %c6_211 = arith.constant 6 : index
    %c0_212 = arith.constant 0 : index
    %205 = vector.load %arg11[%c6_211, %c0_212] : memref<7x256xf32, #tpu.memory_space<vmem>>, vector<1x1xf32>
    %206 = vector.broadcast %202 : vector<1x256xf32> to vector<192x256xf32>
    %207 = arith.mulf %201, %206 : vector<192x256xf32>
    %208 = vector.broadcast %203 : vector<1x256xf32> to vector<192x256xf32>
    %209 = arith.addf %207, %208 : vector<192x256xf32>
    %210 = vector.broadcast %204 : vector<1x256xf32> to vector<192x256xf32>
    %211 = arith.mulf %209, %210 : vector<192x256xf32>
    %cst_213 = arith.constant dense<0.000000e+00> : vector<192xf32>
    %212 = vector.multi_reduction <add>, %211, %cst_213 [1] : vector<192x256xf32> to vector<192xf32>
    %213 = vector.shape_cast %212 : vector<192xf32> to vector<192x1xf32>
    %214 = vector.broadcast %205 : vector<1x1xf32> to vector<192x1xf32>
    %215 = arith.addf %213, %214 : vector<192x1xf32>
    %216 = arith.negf %215 : vector<192x1xf32>
    %217 = math.exp %216 : vector<192x1xf32>
    %cst_214 = arith.constant 1.000000e+00 : f32
    %218 = vector.broadcast %cst_214 : f32 to vector<192x1xf32>
    %219 = arith.addf %218, %217 : vector<192x1xf32>
    %220 = arith.divf %218, %219 : vector<192x1xf32>
    %221 = vector.broadcast %220 : vector<192x1xf32> to vector<192x256xf32>
    %222 = arith.mulf %209, %221 : vector<192x256xf32>
    %223 = vector.shape_cast %222 : vector<192x256xf32> to vector<6x4x8x256xf32>
    %cst_215 = arith.constant dense<0.000000e+00> : vector<6x8x256xf32>
    %224 = vector.multi_reduction <add>, %223, %cst_215 [1] : vector<6x4x8x256xf32> to vector<6x8x256xf32>
    %cst_216 = arith.constant 4.000000e+00 : f32
    %225 = vector.broadcast %cst_216 : f32 to vector<6x8x256xf32>
    %226 = arith.divf %224, %225 : vector<6x8x256xf32>
    %227 = vector.shape_cast %226 : vector<6x8x256xf32> to vector<12x4x256xf32>
    %cst_217 = arith.constant dense<0.000000e+00> : vector<12x256xf32>
    %228 = vector.multi_reduction <add>, %227, %cst_217 [1] : vector<12x4x256xf32> to vector<12x256xf32>
    %cst_218 = arith.constant 4.000000e+00 : f32
    %229 = vector.broadcast %cst_218 : f32 to vector<12x256xf32>
    %230 = arith.divf %228, %229 : vector<12x256xf32>
    %231 = vector.shape_cast %230 : vector<12x256xf32> to vector<3x2x2x256xf32>
    %c0_219 = arith.constant 0 : index
    %c0_220 = arith.constant 0 : index
    %c0_221 = arith.constant 0 : index
    %c0_222 = arith.constant 0 : index
    %232 = vector.load %arg12[%c0_219, %c0_220, %c0_221, %c0_222] : memref<3x2x2x256xf32, #tpu.memory_space<vmem>>, vector<3x2x2x256xf32>
    tpu.vector_store %arg12[%c0_219, %c0_220, %c0_221, %c0_222], %231 {strides = array<i32>} : memref<3x2x2x256xf32, #tpu.memory_space<vmem>>, vector<3x2x2x256xf32>,
    return
  }
  func.func @transform_0(%arg0: i32) -> (i32, i32, i32) {
    %c0_i32 = arith.constant 0 : i32
    %c0_i32_0 = arith.constant 0 : i32
    %c0_i32_1 = arith.constant 0 : i32
    return %arg0, %c0_i32, %c0_i32_0 : i32, i32, i32
  }
  func.func @transform_1(%arg0: i32) -> (i32, i32) {
    %c0_i32 = arith.constant 0 : i32
    %c0_i32_0 = arith.constant 0 : i32
    %c0_i32_1 = arith.constant 0 : i32
    return %c0_i32, %c0_i32_0 : i32, i32
  }
  func.func @transform_2(%arg0: i32) -> (i32, i32) {
    %c0_i32 = arith.constant 0 : i32
    %c0_i32_0 = arith.constant 0 : i32
    %c0_i32_1 = arith.constant 0 : i32
    return %c0_i32, %c0_i32_0 : i32, i32
  }
  func.func @transform_3(%arg0: i32) -> (i32, i32) {
    %c0_i32 = arith.constant 0 : i32
    %c0_i32_0 = arith.constant 0 : i32
    %c0_i32_1 = arith.constant 0 : i32
    return %c0_i32, %c0_i32_0 : i32, i32
  }
  func.func @transform_4(%arg0: i32) -> (i32, i32) {
    %c0_i32 = arith.constant 0 : i32
    %c0_i32_0 = arith.constant 0 : i32
    %c0_i32_1 = arith.constant 0 : i32
    return %c0_i32, %c0_i32_0 : i32, i32
  }
  func.func @transform_5(%arg0: i32) -> (i32, i32) {
    %c0_i32 = arith.constant 0 : i32
    %c0_i32_0 = arith.constant 0 : i32
    %c0_i32_1 = arith.constant 0 : i32
    return %c0_i32, %c0_i32_0 : i32, i32
  }
  func.func @transform_6(%arg0: i32) -> (i32, i32) {
    %c0_i32 = arith.constant 0 : i32
    %c0_i32_0 = arith.constant 0 : i32
    %c0_i32_1 = arith.constant 0 : i32
    return %c0_i32, %c0_i32_0 : i32, i32
  }
  func.func @transform_7(%arg0: i32) -> (i32, i32) {
    %c0_i32 = arith.constant 0 : i32
    %c0_i32_0 = arith.constant 0 : i32
    %c0_i32_1 = arith.constant 0 : i32
    return %c0_i32, %c0_i32_0 : i32, i32
  }
  func.func @transform_8(%arg0: i32) -> (i32, i32) {
    %c0_i32 = arith.constant 0 : i32
    %c0_i32_0 = arith.constant 0 : i32
    %c0_i32_1 = arith.constant 0 : i32
    return %c0_i32, %c0_i32_0 : i32, i32
  }
  func.func @transform_9(%arg0: i32) -> (i32, i32) {
    %c0_i32 = arith.constant 0 : i32
    %c0_i32_0 = arith.constant 0 : i32
    %c0_i32_1 = arith.constant 0 : i32
    return %c0_i32, %c0_i32_0 : i32, i32
  }
  func.func @transform_10(%arg0: i32) -> (i32, i32) {
    %c0_i32 = arith.constant 0 : i32
    %c0_i32_0 = arith.constant 0 : i32
    %c0_i32_1 = arith.constant 0 : i32
    return %c0_i32, %c0_i32_0 : i32, i32
  }
  func.func @transform_11(%arg0: i32) -> (i32, i32, i32, i32) {
    %c0_i32 = arith.constant 0 : i32
    %c0_i32_0 = arith.constant 0 : i32
    %c0_i32_1 = arith.constant 0 : i32
    %c0_i32_2 = arith.constant 0 : i32
    return %arg0, %c0_i32, %c0_i32_0, %c0_i32_1 : i32, i32, i32, i32
  }
}

</mosaic_0001>

<llo_original>
// kernel: hybrid_cnn_forward.1
$region0: #{hybrid_cnn_forward.1}
  #allocation0 [shape = 'u32[]', space=smem, size = 0x4, offset = 0x4, fixed_abs, tag = 'smem constant byte address 0x4 - core index']
  #allocation1 [shape = 'u32[144,128]{1,0:T(1,128)}', space=vmem, size = 0x12000, scoped, tag = 'internal scratch']
  #allocation2 [shape = 'f32[3,10,10,128]{3,2,1,0:T(8,128)}', space=vmem, size = 0x3c000, scoped, tag = 'scratch operand']
  #allocation3 [shape = 'f32[3,10,10,128]{3,2,1,0:T(8,128)}', space=vmem, size = 0x3c000, scoped, tag = 'scratch operand']
  #allocation4 [shape = 'bf16[192,1152]{1,0:T(16,128)(2,1)}', space=vmem, size = 0x6c000, scoped, tag = 'scratch operand']
  %s0 = inlined_call_operand.vmem [shape: bf16[6,64,128], index: 0, kind: input, shape index: {}]
  %s1 = inlined_call_operand.vmem [shape: bf16[128,64], index: 1, kind: input, shape index: {}]
  %s2 = inlined_call_operand.vmem [shape: bf16[1152,128], index: 2, kind: input, shape index: {}]
  %s3 = inlined_call_operand.vmem [shape: bf16[1152,256], index: 3, kind: input, shape index: {}]
  %s4 = inlined_call_operand.vmem [shape: f32[64,16], index: 4, kind: input, shape index: {}]
  %s5 = inlined_call_operand.vmem [shape: f32[16,64], index: 5, kind: input, shape index: {}]
  %s6 = inlined_call_operand.vmem [shape: f32[256,64], index: 6, kind: input, shape index: {}]
  %s7 = inlined_call_operand.vmem [shape: f32[64,256], index: 7, kind: input, shape index: {}]
  %s8 = inlined_call_operand.vmem [shape: f32[7,64], index: 8, kind: input, shape index: {}]
  %s9 = inlined_call_operand.vmem [shape: f32[3,128], index: 9, kind: input, shape index: {}]
  %s10 = inlined_call_operand.vmem [shape: f32[7,256], index: 10, kind: input, shape index: {}]
  %s11 = inlined_call_operand.vmem [shape: f32[6,2,2,256], index: 11, kind: output, shape index: {}]
  %s12 = sld [smem:[#allocation0]]
  $region77: #{hybrid_cnn_forward.1} parent=0
    _
  %s14 = ssub.s32 1, %s12
  %s15 = scalar_select 0, %s14, %s12
  loop: start=0, step=1, limit=4
  $region2: #{hybrid_cnn_forward.1} parent=0 // loop_pre_header
    _
  $region3: #{hybrid_cnn_forward.1} parent=0 // loop_header
    %s17 = sphi 0, %s21
    %p18 = scmp.ge.s32.totalorder %s17, 4
    %s27 = sphi 0, %s29
    %s30 = sphi 0, %s27
    %s31 = sphi 0, %s30
    %s47 = sphi 0, %s31
    %s51 = sphi 0, %s51
    %s53 = sphi 0, %s51
    %s54 = sphi 0, %s53
    %s68 = sphi 0, %s54
    %s72 = sphi 0, %s72
    %s74 = sphi 0, %s72
    %s75 = sphi 0, %s74
    %s89 = sphi 0, %s75
    %s93 = sphi 0, %s93
    %s95 = sphi 0, %s93
    %s96 = sphi 0, %s95
    %s110 = sphi 0, %s96
    %s114 = sphi 0, %s114
    %s116 = sphi 0, %s114
    %s117 = sphi 0, %s116
    %s131 = sphi 0, %s117
    %s135 = sphi 0, %s135
    %s137 = sphi 0, %s135
    %s138 = sphi 0, %s137
    %s152 = sphi 0, %s138
    %s156 = sphi 0, %s156
    %s158 = sphi 0, %s156
    %s159 = sphi 0, %s158
    %s173 = sphi 0, %s159
    %s177 = sphi 0, %s177
    %s179 = sphi 0, %s177
    %s180 = sphi 0, %s179
    %s194 = sphi 0, %s180
    %s198 = sphi 0, %s198
    %s200 = sphi 0, %s198
    %s201 = sphi 0, %s200
    %s215 = sphi 0, %s201
    %s219 = sphi 0, %s219
    %s221 = sphi 0, %s219
    %s222 = sphi 0, %s221
    %s236 = sphi 0, %s222
    %s240 = sphi 0, %s240
    %s242 = sphi 0, %s240
    %s243 = sphi 0, %s242
    %s257 = sphi 0, %s243
    %s263 = sphi 0, %s265
    %s266 = sphi 0, %s263
    %s267 = sphi 0, %s266
    %s283 = sphi 0, %s267
  $region4: #{hybrid_cnn_forward.1} parent=0 // loop_header_branch
    %20 = sbr.rel (%p18) target = $region8
  $region5: #{hybrid_cnn_forward.1} parent=0 // loop_body
    %s22 = ssub.s32 %s17, 1
    %s23 = ssub.s32 %s17, 2
    %s24 = sadd.s32 %s17, 1
    %s25 = ssub.s32 %s17, %s24
    %p26 = scmp.eq.s32.totalorder %s25, 0
    %s28 = sadd.s32 %s27, 1
    %s29 = scalar_select %p26, %s27, %s28
    %p32 = pneg %p26
    %p33 = scmp.eq.s32.totalorder %s17, 1
    %p34 = por %p32, %p33
    %p35 = scmp.ne.s32.totalorder %s27, %s30
    %p36 = scmp.eq.s32.totalorder %s17, 0
    %p37 = por %p35, %p36
    %p38 = scmp.ne.s32.totalorder %s27, %s30
    %p39 = scmp.eq.s32.totalorder %s22, 1
    %p40 = por %p38, %p39
    %p41 = scmp.ne.s32.totalorder %s30, %s31
    %p42 = scmp.eq.s32.totalorder %s22, 0
    %p43 = por %p41, %p42
    %p44 = scmp.ne.s32.totalorder %s30, %s31
    %p45 = scmp.eq.s32.totalorder %s23, 1
    %p46 = por %p44, %p45
    %p48 = scmp.ne.s32.totalorder %s31, %s47
    %p49 = scmp.eq.s32.totalorder %s23, 0
    %p50 = por %p48, %p49
    %s52 = sadd.s32 %s51, 1
    %p55 = scmp.eq.s32.totalorder %s17, 1
    %p56 = scmp.ne.s32.totalorder %s51, %s53
    %p57 = scmp.eq.s32.totalorder %s17, 0
    %p58 = por %p56, %p57
    %p59 = scmp.ne.s32.totalorder %s51, %s53
    %p60 = scmp.eq.s32.totalorder %s22, 1
    %p61 = por %p59, %p60
    %p62 = scmp.ne.s32.totalorder %s53, %s54
    %p63 = scmp.eq.s32.totalorder %s22, 0
    %p64 = por %p62, %p63
    %p65 = scmp.ne.s32.totalorder %s53, %s54
    %p66 = scmp.eq.s32.totalorder %s23, 1
    %p67 = por %p65, %p66
    %p69 = scmp.ne.s32.totalorder %s54, %s68
    %p70 = scmp.eq.s32.totalorder %s23, 0
    %p71 = por %p69, %p70
    %s73 = sadd.s32 %s72, 1
    %p76 = scmp.eq.s32.totalorder %s17, 1
    %p77 = scmp.ne.s32.totalorder %s72, %s74
    %p78 = scmp.eq.s32.totalorder %s17, 0
    %p79 = por %p77, %p78
    %p80 = scmp.ne.s32.totalorder %s72, %s74
    %p81 = scmp.eq.s32.totalorder %s22, 1
    %p82 = por %p80, %p81
    %p83 = scmp.ne.s32.totalorder %s74, %s75
    %p84 = scmp.eq.s32.totalorder %s22, 0
    %p85 = por %p83, %p84
    %p86 = scmp.ne.s32.totalorder %s74, %s75
    %p87 = scmp.eq.s32.totalorder %s23, 1
    %p88 = por %p86, %p87
    %p90 = scmp.ne.s32.totalorder %s75, %s89
    %p91 = scmp.eq.s32.totalorder %s23, 0
    %p92 = por %p90, %p91
    %s94 = sadd.s32 %s93, 1
    %p97 = scmp.eq.s32.totalorder %s17, 1
    %p98 = scmp.ne.s32.totalorder %s93, %s95
    %p99 = scmp.eq.s32.totalorder %s17, 0
    %p100 = por %p98, %p99
    %p101 = scmp.ne.s32.totalorder %s93, %s95
    %p102 = scmp.eq.s32.totalorder %s22, 1
    %p103 = por %p101, %p102
    %p104 = scmp.ne.s32.totalorder %s95, %s96
    %p105 = scmp.eq.s32.totalorder %s22, 0
    %p106 = por %p104, %p105
    %p107 = scmp.ne.s32.totalorder %s95, %s96
    %p108 = scmp.eq.s32.totalorder %s23, 1
    %p109 = por %p107, %p108
    %p111 = scmp.ne.s32.totalorder %s96, %s110
    %p112 = scmp.eq.s32.totalorder %s23, 0
    %p113 = por %p111, %p112
    %s115 = sadd.s32 %s114, 1
    %p118 = scmp.eq.s32.totalorder %s17, 1
    %p119 = scmp.ne.s32.totalorder %s114, %s116
    %p120 = scmp.eq.s32.totalorder %s17, 0
    %p121 = por %p119, %p120
    %p122 = scmp.ne.s32.totalorder %s114, %s116
    %p123 = scmp.eq.s32.totalorder %s22, 1
    %p124 = por %p122, %p123
    %p125 = scmp.ne.s32.totalorder %s116, %s117
    %p126 = scmp.eq.s32.totalorder %s22, 0
    %p127 = por %p125, %p126
    %p128 = scmp.ne.s32.totalorder %s116, %s117
    %p129 = scmp.eq.s32.totalorder %s23, 1
    %p130 = por %p128, %p129
    %p132 = scmp.ne.s32.totalorder %s117, %s131
    %p133 = scmp.eq.s32.totalorder %s23, 0
    %p134 = por %p132, %p133
    %s136 = sadd.s32 %s135, 1
    %p139 = scmp.eq.s32.totalorder %s17, 1
    %p140 = scmp.ne.s32.totalorder %s135, %s137
    %p141 = scmp.eq.s32.totalorder %s17, 0
    %p142 = por %p140, %p141
    %p143 = scmp.ne.s32.totalorder %s135, %s137
    %p144 = scmp.eq.s32.totalorder %s22, 1
    %p145 = por %p143, %p144
    %p146 = scmp.ne.s32.totalorder %s137, %s138
    %p147 = scmp.eq.s32.totalorder %s22, 0
    %p148 = por %p146, %p147
    %p149 = scmp.ne.s32.totalorder %s137, %s138
    %p150 = scmp.eq.s32.totalorder %s23, 1
    %p151 = por %p149, %p150
    %p153 = scmp.ne.s32.totalorder %s138, %s152
    %p154 = scmp.eq.s32.totalorder %s23, 0
    %p155 = por %p153, %p154
    %s157 = sadd.s32 %s156, 1
    %p160 = scmp.eq.s32.totalorder %s17, 1
    %p161 = scmp.ne.s32.totalorder %s156, %s158
    %p162 = scmp.eq.s32.totalorder %s17, 0
    %p163 = por %p161, %p162
    %p164 = scmp.ne.s32.totalorder %s156, %s158
    %p165 = scmp.eq.s32.totalorder %s22, 1
    %p166 = por %p164, %p165
    %p167 = scmp.ne.s32.totalorder %s158, %s159
    %p168 = scmp.eq.s32.totalorder %s22, 0
    %p169 = por %p167, %p168
    %p170 = scmp.ne.s32.totalorder %s158, %s159
    %p171 = scmp.eq.s32.totalorder %s23, 1
    %p172 = por %p170, %p171
    %p174 = scmp.ne.s32.totalorder %s159, %s173
    %p175 = scmp.eq.s32.totalorder %s23, 0
    %p176 = por %p174, %p175
    %s178 = sadd.s32 %s177, 1
    %p181 = scmp.eq.s32.totalorder %s17, 1
    %p182 = scmp.ne.s32.totalorder %s177, %s179
    %p183 = scmp.eq.s32.totalorder %s17, 0
    %p184 = por %p182, %p183
    %p185 = scmp.ne.s32.totalorder %s177, %s179
    %p186 = scmp.eq.s32.totalorder %s22, 1
    %p187 = por %p185, %p186
    %p188 = scmp.ne.s32.totalorder %s179, %s180
    %p189 = scmp.eq.s32.totalorder %s22, 0
    %p190 = por %p188, %p189
    %p191 = scmp.ne.s32.totalorder %s179, %s180
    %p192 = scmp.eq.s32.totalorder %s23, 1
    %p193 = por %p191, %p192
    %p195 = scmp.ne.s32.totalorder %s180, %s194
    %p196 = scmp.eq.s32.totalorder %s23, 0
    %p197 = por %p195, %p196
    %s199 = sadd.s32 %s198, 1
    %p202 = scmp.eq.s32.totalorder %s17, 1
    %p203 = scmp.ne.s32.totalorder %s198, %s200
    %p204 = scmp.eq.s32.totalorder %s17, 0
    %p205 = por %p203, %p204
    %p206 = scmp.ne.s32.totalorder %s198, %s200
    %p207 = scmp.eq.s32.totalorder %s22, 1
    %p208 = por %p206, %p207
    %p209 = scmp.ne.s32.totalorder %s200, %s201
    %p210 = scmp.eq.s32.totalorder %s22, 0
    %p211 = por %p209, %p210
    %p212 = scmp.ne.s32.totalorder %s200, %s201
    %p213 = scmp.eq.s32.totalorder %s23, 1
    %p214 = por %p212, %p213
    %p216 = scmp.ne.s32.totalorder %s201, %s215
    %p217 = scmp.eq.s32.totalorder %s23, 0
    %p218 = por %p216, %p217
    %s220 = sadd.s32 %s219, 1
    %p223 = scmp.eq.s32.totalorder %s17, 1
    %p224 = scmp.ne.s32.totalorder %s219, %s221
    %p225 = scmp.eq.s32.totalorder %s17, 0
    %p226 = por %p224, %p225
    %p227 = scmp.ne.s32.totalorder %s219, %s221
    %p228 = scmp.eq.s32.totalorder %s22, 1
    %p229 = por %p227, %p228
    %p230 = scmp.ne.s32.totalorder %s221, %s222
    %p231 = scmp.eq.s32.totalorder %s22, 0
    %p232 = por %p230, %p231
    %p233 = scmp.ne.s32.totalorder %s221, %s222
    %p234 = scmp.eq.s32.totalorder %s23, 1
    %p235 = por %p233, %p234
    %p237 = scmp.ne.s32.totalorder %s222, %s236
    %p238 = scmp.eq.s32.totalorder %s23, 0
    %p239 = por %p237, %p238
    %s241 = sadd.s32 %s240, 1
    %p244 = scmp.eq.s32.totalorder %s17, 1
    %p245 = scmp.ne.s32.totalorder %s240, %s242
    %p246 = scmp.eq.s32.totalorder %s17, 0
    %p247 = por %p245, %p246
    %p248 = scmp.ne.s32.totalorder %s240, %s242
    %p249 = scmp.eq.s32.totalorder %s22, 1
    %p250 = por %p248, %p249
    %p251 = scmp.ne.s32.totalorder %s242, %s243
    %p252 = scmp.eq.s32.totalorder %s22, 0
    %p253 = por %p251, %p252
    %p254 = scmp.ne.s32.totalorder %s242, %s243
    %p255 = scmp.eq.s32.totalorder %s23, 1
    %p256 = por %p254, %p255
    %p258 = scmp.ne.s32.totalorder %s243, %s257
    %p259 = scmp.eq.s32.totalorder %s23, 0
    %p260 = por %p258, %p259
    %s261 = ssub.s32 %s17, %s24
    %p262 = scmp.eq.s32.totalorder %s261, 0
    %s264 = sadd.s32 %s263, 1
    %s265 = scalar_select %p262, %s263, %s264
    %p268 = pneg %p262
    %p269 = scmp.eq.s32.totalorder %s17, 1
    %p270 = por %p268, %p269
    %p271 = scmp.ne.s32.totalorder %s263, %s266
    %p272 = scmp.eq.s32.totalorder %s17, 0
    %p273 = por %p271, %p272
    %p274 = scmp.ne.s32.totalorder %s263, %s266
    %p275 = scmp.eq.s32.totalorder %s22, 1
    %p276 = por %p274, %p275
    %p277 = scmp.ne.s32.totalorder %s266, %s267
    %p278 = scmp.eq.s32.totalorder %s22, 0
    %p279 = por %p277, %p278
    %p280 = scmp.ne.s32.totalorder %s266, %s267
    %p281 = scmp.eq.s32.totalorder %s23, 1
    %p282 = por %p280, %p281
    %p284 = scmp.ne.s32.totalorder %s267, %s283
    %p285 = scmp.eq.s32.totalorder %s23, 0
    %p286 = por %p284, %p285
    %p287 = scmp.le.s32.totalorder 1, %s17
    %p288 = scmp.lt.s32.totalorder %s17, 3
    %p289 = pnand %p287, %p288
    %p290 = pneg %p289
    // Predicated region
    $region9: #{hybrid_cnn_forward.1} parent=5 // pred_check
      _
    $region10: #{hybrid_cnn_forward.1} parent=5 // pred_check_branch
      %292 = sbr.rel (%p289) target = $region12
    $region11: #{hybrid_cnn_forward.1} parent=5 // pred_region
      %s293 = ssub.s32 %s17, 1
      // Predicated region
      $region13: #{hybrid_cnn_forward.1} parent=11 // pred_check
        %p294 = pneg %p64
      $region14: #{hybrid_cnn_forward.1} parent=11 // pred_check_branch
        %296 = sbr.rel (%p294) target = $region16
      $region15: #{hybrid_cnn_forward.1} parent=11 // pred_region
        _
      $region16: #{hybrid_cnn_forward.1} parent=11 // pred_fallthru
        _
      // Predicated region
      $region17: #{hybrid_cnn_forward.1} parent=11 // pred_check
        %p297 = pneg %p85
      $region18: #{hybrid_cnn_forward.1} parent=11 // pred_check_branch
        %299 = sbr.rel (%p297) target = $region20
      $region19: #{hybrid_cnn_forward.1} parent=11 // pred_region
        _
      $region20: #{hybrid_cnn_forward.1} parent=11 // pred_fallthru
        _
      // Predicated region
      $region21: #{hybrid_cnn_forward.1} parent=11 // pred_check
        %p300 = pneg %p106
      $region22: #{hybrid_cnn_forward.1} parent=11 // pred_check_branch
        %302 = sbr.rel (%p300) target = $region24
      $region23: #{hybrid_cnn_forward.1} parent=11 // pred_region
        _
      $region24: #{hybrid_cnn_forward.1} parent=11 // pred_fallthru
        _
      // Predicated region
      $region25: #{hybrid_cnn_forward.1} parent=11 // pred_check
        %p303 = pneg %p127
      $region26: #{hybrid_cnn_forward.1} parent=11 // pred_check_branch
        %305 = sbr.rel (%p303) target = $region28
      $region27: #{hybrid_cnn_forward.1} parent=11 // pred_region
        _
      $region28: #{hybrid_cnn_forward.1} parent=11 // pred_fallthru
        _
      // Predicated region
      $region29: #{hybrid_cnn_forward.1} parent=11 // pred_check
        %p306 = pneg %p148
      $region30: #{hybrid_cnn_forward.1} parent=11 // pred_check_branch
        %308 = sbr.rel (%p306) target = $region32
      $region31: #{hybrid_cnn_forward.1} parent=11 // pred_region
        _
      $region32: #{hybrid_cnn_forward.1} parent=11 // pred_fallthru
        _
      // Predicated region
      $region33: #{hybrid_cnn_forward.1} parent=11 // pred_check
        %p309 = pneg %p169
      $region34: #{hybrid_cnn_forward.1} parent=11 // pred_check_branch
        %311 = sbr.rel (%p309) target = $region36
      $region35: #{hybrid_cnn_forward.1} parent=11 // pred_region
        _
      $region36: #{hybrid_cnn_forward.1} parent=11 // pred_fallthru
        _
      // Predicated region
      $region37: #{hybrid_cnn_forward.1} parent=11 // pred_check
        %p312 = pneg %p190
      $region38: #{hybrid_cnn_forward.1} parent=11 // pred_check_branch
        %314 = sbr.rel (%p312) target = $region40
      $region39: #{hybrid_cnn_forward.1} parent=11 // pred_region
        _
      $region40: #{hybrid_cnn_forward.1} parent=11 // pred_fallthru
        _
      // Predicated region
      $region41: #{hybrid_cnn_forward.1} parent=11 // pred_check
        %p315 = pneg %p211
      $region42: #{hybrid_cnn_forward.1} parent=11 // pred_check_branch
        %317 = sbr.rel (%p315) target = $region44
      $region43: #{hybrid_cnn_forward.1} parent=11 // pred_region
        _
      $region44: #{hybrid_cnn_forward.1} parent=11 // pred_fallthru
        _
      // Predicated region
      $region45: #{hybrid_cnn_forward.1} parent=11 // pred_check
        %p318 = pneg %p232
      $region46: #{hybrid_cnn_forward.1} parent=11 // pred_check_branch
        %320 = sbr.rel (%p318) target = $region48
      $region47: #{hybrid_cnn_forward.1} parent=11 // pred_region
        _
      $region48: #{hybrid_cnn_forward.1} parent=11 // pred_fallthru
        _
      // Predicated region
      $region49: #{hybrid_cnn_forward.1} parent=11 // pred_check
        %p321 = pneg %p253
      $region50: #{hybrid_cnn_forward.1} parent=11 // pred_check_branch
        %323 = sbr.rel (%p321) target = $region52
      $region51: #{hybrid_cnn_forward.1} parent=11 // pred_region
        _
      $region52: #{hybrid_cnn_forward.1} parent=11 // pred_fallthru
        _
    $region12: #{hybrid_cnn_forward.1} parent=5 // pred_fallthru
      _
    %p324 = scmp.lt.s32.totalorder %s17, 2
    // Predicated region
    $region53: #{hybrid_cnn_forward.1} parent=5 // pred_check
      %p325 = pneg %p324
    $region54: #{hybrid_cnn_forward.1} parent=5 // pred_check_branch
      %327 = sbr.rel (%p325) target = $region56
    $region55: #{hybrid_cnn_forward.1} parent=5 // pred_region
      // Predicated region
      $region57: #{hybrid_cnn_forward.1} parent=55 // pred_check
        %p328 = pneg %p37
      $region58: #{hybrid_cnn_forward.1} parent=55 // pred_check_branch
        %330 = sbr.rel (%p328) target = $region60
      $region59: #{hybrid_cnn_forward.1} parent=55 // pred_region
        %s331 = smul.u32 3, %s17
        %p332 = scmp.lt.s32.totalorder %s331, 5
        %s333 = scalar_select %p332, %s331, 5
        %s334 = smul.addr %s333, 8
        %s335 = smul.addr %s334, 4
        %s336 = scalar_lea.vmem %s0, %s335
        %s337 = smul.u32 3, %s17
      $region60: #{hybrid_cnn_forward.1} parent=55 // pred_fallthru
        _
    $region56: #{hybrid_cnn_forward.1} parent=5 // pred_fallthru
      _
    %p338 = scmp.le.s32.totalorder 1, %s17
    %p339 = scmp.lt.s32.totalorder %s17, 3
    %p340 = pnand %p338, %p339
    %p341 = pneg %p340
    // Predicated region
    $region61: #{hybrid_cnn_forward.1} parent=5 // pred_check
      _
    $region62: #{hybrid_cnn_forward.1} parent=5 // pred_check_branch
      %343 = sbr.rel (%p340) target = $region64
    $region63: #{hybrid_cnn_forward.1} parent=5 // pred_region
      %s344 = ssub.s32 %s17, 1
      %s345 = smul.u32 3, %s22
      %p346 = scmp.lt.s32.totalorder %s345, 5
      %s347 = scalar_select %p346, %s345, 5
      %s348 = smul.addr %s347, 8
      %s349 = smul.addr %s348, 4
      %s350 = scalar_lea.vmem %s0, %s349
      %p351 = pneg %p43
      %p352 = pneg %p40
      %p353 = pneg %p64
      %p354 = pneg %p61
      %p355 = pneg %p85
      %p356 = pneg %p82
      %p357 = pneg %p106
      %p358 = pneg %p103
      %p359 = pneg %p127
      %p360 = pneg %p124
      %p361 = pneg %p148
      %p362 = pneg %p145
      %p363 = pneg %p169
      %p364 = pneg %p166
      %p365 = pneg %p190
      %p366 = pneg %p187
      %p367 = pneg %p211
      %p368 = pneg %p208
      %p369 = pneg %p232
      %p370 = pneg %p229
      %p371 = pneg %p253
      %p372 = pneg %p250
      %p373 = pneg %p279
      %p374 = pneg %p276
      %s375 = smul.u32 3, %s22
      %p376 = scmp.lt.s32.totalorder %s375, 5
      %s377 = scalar_select %p376, %s375, 5
      %s378 = smul.addr %s377, 4
      %s379 = smul.addr %s378, 2
      %s380 = scalar_lea.vmem %s11, %s379
      %s381 = smul.u32 3, %s22
      %p382 = scmp.lt.s32.totalorder %s381, 5
      %s383 = scalar_select %p382, %s381, 5
      %s384 = smul.addr %s383, 8
      %s385 = smul.addr %s384, 4
      %s386 = scalar_lea.vmem %s0, %s385
      %s387 = smul.u32 3, %s22
      %s388 = smul.u32 3, %s22
      %p389 = scmp.lt.s32.totalorder %s388, 5
      %s390 = scalar_select %p389, %s388, 5
      %s391 = smul.addr %s390, 4
      %s392 = smul.addr %s391, 2
      %s393 = scalar_lea.vmem %s11, %s392
      %s394 = smul.u32 3, %s22
      %v396 = vld [vmem:[%s386] sm:$0xf]
      %v397 = vld [vmem:[%s386 + $0x4] sm:$0xf]
      %v398 = vld [vmem:[%s386 + $0x8] sm:$0xf]
      %v399 = vld [vmem:[%s386 + $0xc] sm:$0xf]
      %v400 = vld [vmem:[%s386 + $0x10] sm:$0xf]
      %v401 = vld [vmem:[%s386 + $0x14] sm:$0xf]
      %v402 = vld [vmem:[%s386 + $0x18] sm:$0xf]
      %v403 = vld [vmem:[%s386 + $0x1c] sm:$0xf]
      %v404 = vld [vmem:[%s386 + $0x20] sm:$0xf]
      %v405 = vld [vmem:[%s386 + $0x24] sm:$0xf]
      %v406 = vld [vmem:[%s386 + $0x28] sm:$0xf]
      %v407 = vld [vmem:[%s386 + $0x2c] sm:$0xf]
      %v408 = vld [vmem:[%s386 + $0x30] sm:$0xf]
      %v409 = vld [vmem:[%s386 + $0x34] sm:$0xf]
      %v410 = vld [vmem:[%s386 + $0x38] sm:$0xf]
      %v411 = vld [vmem:[%s386 + $0x3c] sm:$0xf]
      %v412 = vld [vmem:[%s386 + $0x40] sm:$0xf]
      %v413 = vld [vmem:[%s386 + $0x44] sm:$0xf]
      %v414 = vld [vmem:[%s386 + $0x48] sm:$0xf]
      %v415 = vld [vmem:[%s386 + $0x4c] sm:$0xf]
      %v416 = vld [vmem:[%s386 + $0x50] sm:$0xf]
      %v417 = vld [vmem:[%s386 + $0x54] sm:$0xf]
      %v418 = vld [vmem:[%s386 + $0x58] sm:$0xf]
      %v419 = vld [vmem:[%s386 + $0x5c] sm:$0xf]
      %v420 = vld [vmem:[%s1] sm:$0xf]
      %v421 = vld [vmem:[%s1 + $0x4] sm:$0xf]
      %v422 = vld [vmem:[%s1 + $0x8] sm:$0xf]
      %v423 = vld [vmem:[%s1 + $0xc] sm:$0xf]
      %v424 = vld [vmem:[%s1 + $0x10] sm:$0xf]
      %v425 = vld [vmem:[%s1 + $0x14] sm:$0xf]
      %v426 = vld [vmem:[%s1 + $0x18] sm:$0xf]
      %v427 = vld [vmem:[%s1 + $0x1c] sm:$0xf]
      %v428 = vld [vmem:[%s1 + $0x20] sm:$0xf]
      %v429 = vld [vmem:[%s1 + $0x24] sm:$0xf]
      %v430 = vld [vmem:[%s1 + $0x28] sm:$0xf]
      %v431 = vld [vmem:[%s1 + $0x2c] sm:$0xf]
      %v432 = vld [vmem:[%s1 + $0x30] sm:$0xf]
      %v433 = vld [vmem:[%s1 + $0x34] sm:$0xf]
      %v434 = vld [vmem:[%s1 + $0x38] sm:$0xf]
      %v435 = vld [vmem:[%s1 + $0x3c] sm:$0xf]
      %v436 = vld [vmem:[%s8] sm:$0x1]
      %v437 = vlaneseq
      %v438 = vshrl.u32 %v437, 7
      %v439 = vsub.s32 0, %v438
      %v440 = vrot.slane %v436, %v439
      %v465 = vunpack.c.l.b16 %v396
      %v466 = vunpack.c.l.b16 %v397
      %v467 = vunpack.c.l.b16 %v398
      %v468 = vunpack.c.l.b16 %v399
      %v469 = vunpack.c.l.b16 %v400
      %v470 = vunpack.c.l.b16 %v401
      %v471 = vunpack.c.l.b16 %v402
      %v472 = vunpack.c.l.b16 %v403
      %v473 = vunpack.c.l.b16 %v404
      %v474 = vunpack.c.l.b16 %v405
      %v475 = vunpack.c.l.b16 %v406
      %v476 = vunpack.c.l.b16 %v407
      %v477 = vunpack.c.l.b16 %v408
      %v478 = vunpack.c.l.b16 %v409
      %v479 = vunpack.c.l.b16 %v410
      %v480 = vunpack.c.l.b16 %v411
      %v481 = vunpack.c.l.b16 %v412
      %v482 = vunpack.c.l.b16 %v413
      %v483 = vunpack.c.l.b16 %v414
      %v484 = vunpack.c.l.b16 %v415
      %v485 = vunpack.c.l.b16 %v416
      %v486 = vunpack.c.l.b16 %v417
      %v487 = vunpack.c.l.b16 %v418
      %v488 = vunpack.c.l.b16 %v419
      %v489 = vpack.c.b16 %v466, %v465
      %v490 = vpack.c.b16 %v468, %v467
      %v491 = vpack.c.b16 %v470, %v469
      %v492 = vpack.c.b16 %v472, %v471
      %v493 = vpack.c.b16 %v474, %v473
      %v494 = vpack.c.b16 %v476, %v475
      %v495 = vpack.c.b16 %v478, %v477
      %v496 = vpack.c.b16 %v480, %v479
      %v497 = vpack.c.b16 %v482, %v481
      %v498 = vpack.c.b16 %v484, %v483
      %v499 = vpack.c.b16 %v486, %v485
      %v500 = vpack.c.b16 %v488, %v487
      %v529 = vunpack.c.l.b16 %v420
      %v530 = vunpack.c.l.b16 %v421
      %v531 = vunpack.c.l.b16 %v422
      %v532 = vunpack.c.l.b16 %v423
      %v533 = vunpack.c.l.b16 %v424
      %v534 = vunpack.c.l.b16 %v425
      %v535 = vunpack.c.l.b16 %v426
      %v536 = vunpack.c.l.b16 %v427
      %v537 = vunpack.c.l.b16 %v428
      %v538 = vunpack.c.l.b16 %v429
      %v539 = vunpack.c.l.b16 %v430
      %v540 = vunpack.c.l.b16 %v431
      %v541 = vunpack.c.l.b16 %v432
      %v542 = vunpack.c.l.b16 %v433
      %v543 = vunpack.c.l.b16 %v434
      %v544 = vunpack.c.l.b16 %v435
      %v545 = vpack.c.b16 %v530, %v529
      %v546 = vpack.c.b16 %v532, %v531
      %v547 = vpack.c.b16 %v534, %v533
      %v548 = vpack.c.b16 %v536, %v535
      %v549 = vpack.c.b16 %v538, %v537
      %v550 = vpack.c.b16 %v540, %v539
      %v551 = vpack.c.b16 %v542, %v541
      %v552 = vpack.c.b16 %v544, %v543
      %561 = vmatprep.subr.bf16.mxu0 0
      %562 = vmatpush1.bf16.msra.mxu0 %v545
      %563 = vmatprep.subr.bf16.mxu0 0
      %564 = vmatpush1.bf16.msra.mxu0 %v546
      %565 = vmatprep.subr.bf16.mxu0 0
      %566 = vmatpush1.bf16.msra.mxu0 %v547
      %567 = vmatprep.subr.bf16.mxu0 0
      %568 = vmatpush1.bf16.msra.mxu0 %v548
      %569 = vmatprep.subr.bf16.mxu0 0
      %570 = vmatpush1.bf16.msra.mxu0 %v549
      %571 = vmatprep.subr.bf16.mxu0 0
      %572 = vmatpush1.bf16.msra.mxu0 %v550
      %573 = vmatprep.subr.bf16.mxu0 0
      %574 = vmatpush1.bf16.msra.mxu0 %v551
      %575 = vmatprep.subr.bf16.mxu0 0
      %576 = vmatpush1.bf16.msra.mxu0 %v552
      %577 = vmatprep.subr.bf16.mxu0 0
      %578 = vmatpush1.bf16.msra.mxu0 0
      %579 = vmatprep.subr.bf16.mxu0 0
      %580 = vmatpush1.bf16.msra.mxu0 0
      %581 = vmatprep.subr.bf16.mxu0 0
      %582 = vmatpush1.bf16.msra.mxu0 0
      %583 = vmatprep.subr.bf16.mxu0 0
      %584 = vmatpush1.bf16.msra.mxu0 0
      %585 = vmatprep.subr.bf16.mxu0 0
      %586 = vmatpush1.bf16.msra.mxu0 0
      %587 = vmatprep.subr.bf16.mxu0 0
      %588 = vmatpush1.bf16.msra.mxu0 0
      %589 = vmatprep.subr.bf16.mxu0 0
      %590 = vmatpush1.bf16.msra.mxu0 0
      %591 = vmatprep.subr.bf16.mxu0 0
      %592 = vmatpush1.bf16.msra.mxu0 0
      %593 = vmatprep.mubr.bf16.mxu0 0
      %594 = vmatmul.mubr.bf16.gmra.mrb[0].mxu0 %v489
      %v595 = vpop.f32.mrb[0].mxu0
      %v596 = vadd.f32 %v440, %v595
      %v597 = vpop.f32.mrb[0].mxu0
      %v598 = vpop.f32.mrb[0].mxu0
      %v599 = vadd.f32 %v440, %v598
      %v600 = vpop.f32.mrb[0].mxu0
      %601 = vmatprep.mubr.bf16.mxu0 0
      %602 = vmatmul.mubr.bf16.gmra.mrb[0].mxu0 %v490
      %v603 = vpop.f32.mrb[0].mxu0
      %v604 = vadd.f32 %v440, %v603
      %v605 = vpop.f32.mrb[0].mxu0
      %v606 = vpop.f32.mrb[0].mxu0
      %v607 = vadd.f32 %v440, %v606
      %v608 = vpop.f32.mrb[0].mxu0
      %609 = vmatprep.mubr.bf16.mxu0 0
      %610 = vmatmul.mubr.bf16.gmra.mrb[0].mxu0 %v491
      %v611 = vpop.f32.mrb[0].mxu0
      %v612 = vadd.f32 %v440, %v611
      %v613 = vpop.f32.mrb[0].mxu0
      %v614 = vpop.f32.mrb[0].mxu0
      %v615 = vadd.f32 %v440, %v614
      %v616 = vpop.f32.mrb[0].mxu0
      %617 = vmatprep.mubr.bf16.mxu0 0
      %618 = vmatmul.mubr.bf16.gmra.mrb[0].mxu0 %v492
      %v619 = vpop.f32.mrb[0].mxu0
      %v620 = vadd.f32 %v440, %v619
      %v621 = vpop.f32.mrb[0].mxu0
      %v622 = vpop.f32.mrb[0].mxu0
      %v623 = vadd.f32 %v440, %v622
      %v624 = vpop.f32.mrb[0].mxu0
      %625 = vmatprep.mubr.bf16.mxu0 0
      %626 = vmatmul.mubr.bf16.gmra.mrb[0].mxu0 %v493
      %v627 = vpop.f32.mrb[0].mxu0
      %v628 = vadd.f32 %v440, %v627
      %v629 = vpop.f32.mrb[0].mxu0
      %v630 = vpop.f32.mrb[0].mxu0
      %v631 = vadd.f32 %v440, %v630
      %v632 = vpop.f32.mrb[0].mxu0
      %633 = vmatprep.mubr.bf16.mxu0 0
      %634 = vmatmul.mubr.bf16.gmra.mrb[0].mxu0 %v494
      %v635 = vpop.f32.mrb[0].mxu0
      %v636 = vadd.f32 %v440, %v635
      %v637 = vpop.f32.mrb[0].mxu0
      %v638 = vpop.f32.mrb[0].mxu0
      %v639 = vadd.f32 %v440, %v638
      %v640 = vpop.f32.mrb[0].mxu0
      %641 = vmatprep.mubr.bf16.mxu0 0
      %642 = vmatmul.mubr.bf16.gmra.mrb[0].mxu0 %v495
      %v643 = vpop.f32.mrb[0].mxu0
      %v644 = vadd.f32 %v440, %v643
      %v645 = vpop.f32.mrb[0].mxu0
      %v646 = vpop.f32.mrb[0].mxu0
      %v647 = vadd.f32 %v440, %v646
      %v648 = vpop.f32.mrb[0].mxu0
      %649 = vmatprep.mubr.bf16.mxu0 0
      %650 = vmatmul.mubr.bf16.gmra.mrb[0].mxu0 %v496
      %v651 = vpop.f32.mrb[0].mxu0
      %v652 = vadd.f32 %v440, %v651
      %v653 = vpop.f32.mrb[0].mxu0
      %v654 = vpop.f32.mrb[0].mxu0
      %v655 = vadd.f32 %v440, %v654
      %v656 = vpop.f32.mrb[0].mxu0
      %657 = vmatprep.mubr.bf16.mxu0 0
      %658 = vmatmul.mubr.bf16.gmra.mrb[0].mxu0 %v497
      %v659 = vpop.f32.mrb[0].mxu0
      %v660 = vadd.f32 %v440, %v659
      %v661 = vpop.f32.mrb[0].mxu0
      %v662 = vpop.f32.mrb[0].mxu0
      %v663 = vadd.f32 %v440, %v662
      %v664 = vpop.f32.mrb[0].mxu0
      %665 = vmatprep.mubr.bf16.mxu0 0
      %666 = vmatmul.mubr.bf16.gmra.mrb[0].mxu0 %v498
      %v667 = vpop.f32.mrb[0].mxu0
      %v668 = vadd.f32 %v440, %v667
      %v669 = vpop.f32.mrb[0].mxu0
      %v670 = vpop.f32.mrb[0].mxu0
      %v671 = vadd.f32 %v440, %v670
      %v672 = vpop.f32.mrb[0].mxu0
      %673 = vmatprep.mubr.bf16.mxu0 0
      %674 = vmatmul.mubr.bf16.gmra.mrb[0].mxu0 %v499
      %v675 = vpop.f32.mrb[0].mxu0
      %v676 = vadd.f32 %v440, %v675
      %v677 = vpop.f32.mrb[0].mxu0
      %v678 = vpop.f32.mrb[0].mxu0
      %v679 = vadd.f32 %v440, %v678
      %v680 = vpop.f32.mrb[0].mxu0
      %681 = vmatprep.mubr.bf16.mxu0 0
      %682 = vmatmul.mubr.bf16.gmra.mrb[0].mxu0 %v500
      %v683 = vpop.f32.mrb[0].mxu0
      %v684 = vadd.f32 %v440, %v683
      %v685 = vpop.f32.mrb[0].mxu0
      %v686 = vpop.f32.mrb[0].mxu0
      %v687 = vadd.f32 %v440, %v686
      %v688 = vpop.f32.mrb[0].mxu0
      %689 = vdwg.mxu0
      %v690 = vmax.f32 %v596, 0.0
      %v691 = vmax.f32 %v599, 0.0
      %v692 = vmax.f32 %v604, 0.0
      %v693 = vmax.f32 %v607, 0.0
      %v694 = vmax.f32 %v612, 0.0
      %v695 = vmax.f32 %v615, 0.0
      %v696 = vmax.f32 %v620, 0.0
      %v697 = vmax.f32 %v623, 0.0
      %v698 = vmax.f32 %v628, 0.0
      %v699 = vmax.f32 %v631, 0.0
      %v700 = vmax.f32 %v636, 0.0
      %v701 = vmax.f32 %v639, 0.0
      %v702 = vmax.f32 %v644, 0.0
      %v703 = vmax.f32 %v647, 0.0
      %v704 = vmax.f32 %v652, 0.0
      %v705 = vmax.f32 %v655, 0.0
      %v706 = vmax.f32 %v660, 0.0
      %v707 = vmax.f32 %v663, 0.0
      %v708 = vmax.f32 %v668, 0.0
      %v709 = vmax.f32 %v671, 0.0
      %v710 = vmax.f32 %v676, 0.0
      %v711 = vmax.f32 %v679, 0.0
      %v712 = vmax.f32 %v684, 0.0
      %v713 = vmax.f32 %v687, 0.0
      %v714 = vld [vmem:[%s4] sm:$0xff]
      %v715 = vld [vmem:[%s4 + $0x8] sm:$0xff]
      %v716 = vld [vmem:[%s4 + $0x10] sm:$0xff]
      %v717 = vld [vmem:[%s4 + $0x18] sm:$0xff]
      %v718 = vld [vmem:[%s4 + $0x20] sm:$0xff]
      %v719 = vld [vmem:[%s4 + $0x28] sm:$0xff]
      %v720 = vld [vmem:[%s4 + $0x30] sm:$0xff]
      %v721 = vld [vmem:[%s4 + $0x38] sm:$0xff]
      %v722 = vld [vmem:[%s8 + $0x1] sm:$0x1]
      %v723 = vld [vmem:[%s5] sm:$0xff]
      %v724 = vld [vmem:[%s5 + $0x8] sm:$0xff]
      %v725 = vld [vmem:[%s8 + $0x2] sm:$0x1]
      %vm726 = vcmask 523264
      %v727 = vsel %vm726, %v690, 0.0
      %v728 = vsel %vm726, %v691, 0.0
      %v729 = vadd.f32 %v727, %v728
      %v730 = vsel %vm726, %v692, 0.0
      %v731 = vadd.f32 %v729, %v730
      %v732 = vsel %vm726, %v693, 0.0
      %v733 = vadd.f32 %v731, %v732
      %v734 = vsel %vm726, %v694, 0.0
      %v735 = vadd.f32 %v733, %v734
      %v736 = vsel %vm726, %v695, 0.0
      %v737 = vadd.f32 %v735, %v736
      %v738 = vsel %vm726, %v696, 0.0
      %v739 = vadd.f32 %v737, %v738
      %v740 = vsel %vm726, %v697, 0.0
      %v741 = vadd.f32 %v739, %v740
      %v742 = vrot.slane %v741, 4
      %v743 = vadd.f32 %v741, %v742
      %v744 = vrot.slane %v743, 2
      %v745 = vadd.f32 %v743, %v744
      %v746 = vrot.slane %v745, 1
      %v747 = vadd.f32 %v745, %v746
      %v748 = vsel %vm726, %v698, 0.0
      %v749 = vsel %vm726, %v699, 0.0
      %v750 = vadd.f32 %v748, %v749
      %v751 = vsel %vm726, %v700, 0.0
      %v752 = vadd.f32 %v750, %v751
      %v753 = vsel %vm726, %v701, 0.0
      %v754 = vadd.f32 %v752, %v753
      %v755 = vsel %vm726, %v702, 0.0
      %v756 = vadd.f32 %v754, %v755
      %v757 = vsel %vm726, %v703, 0.0
      %v758 = vadd.f32 %v756, %v757
      %v759 = vsel %vm726, %v704, 0.0
      %v760 = vadd.f32 %v758, %v759
      %v761 = vsel %vm726, %v705, 0.0
      %v762 = vadd.f32 %v760, %v761
      %v763 = vrot.slane %v762, 4
      %v764 = vadd.f32 %v762, %v763
      %v765 = vrot.slane %v764, 2
      %v766 = vadd.f32 %v764, %v765
      %v767 = vrot.slane %v766, 1
      %v768 = vadd.f32 %v766, %v767
      %v769 = vsel %vm726, %v706, 0.0
      %v770 = vsel %vm726, %v707, 0.0
      %v771 = vadd.f32 %v769, %v770
      %v772 = vsel %vm726, %v708, 0.0
      %v773 = vadd.f32 %v771, %v772
      %v774 = vsel %vm726, %v709, 0.0
      %v775 = vadd.f32 %v773, %v774
      %v776 = vsel %vm726, %v710, 0.0
      %v777 = vadd.f32 %v775, %v776
      %v778 = vsel %vm726, %v711, 0.0
      %v779 = vadd.f32 %v777, %v778
      %v780 = vsel %vm726, %v712, 0.0
      %v781 = vadd.f32 %v779, %v780
      %v782 = vsel %vm726, %v713, 0.0
      %v783 = vadd.f32 %v781, %v782
      %v784 = vrot.slane %v783, 4
      %v785 = vadd.f32 %v783, %v784
      %v786 = vrot.slane %v785, 2
      %v787 = vadd.f32 %v785, %v786
      %v788 = vrot.slane %v787, 1
      %v789 = vadd.f32 %v787, %v788
      %v790 = vrcp.pop 64.0
      %v791 = vmul.f32 %v747, %v790
      %v792 = vmul.f32 %v768, %v790
      %v793 = vmul.f32 %v789, %v790
      %v794 = vsel %vm726, %v690, -inf
      %v795 = vsel %vm726, %v691, -inf
      %v796 = vsel %vm726, %v692, -inf
      %v797 = vmax.f32 %v794, %v796
      %v798 = vsel %vm726, %v693, -inf
      %v799 = vmax.f32 %v795, %v798
      %v800 = vsel %vm726, %v694, -inf
      %v801 = vmax.f32 %v797, %v800
      %v802 = vsel %vm726, %v695, -inf
      %v803 = vmax.f32 %v799, %v802
      %v804 = vsel %vm726, %v696, -inf
      %v805 = vmax.f32 %v801, %v804
      %v806 = vsel %vm726, %v697, -inf
      %v807 = vmax.f32 %v803, %v806
      %v808 = vmax.f32 %v805, %v807
      %v809 = vrot.slane %v808, 4
      %v810 = vmax.f32 %v808, %v809
      %v811 = vrot.slane %v810, 2
      %v812 = vmax.f32 %v810, %v811
      %v813 = vrot.slane %v812, 1
      %v814 = vmax.f32 %v812, %v813
      %v815 = vsel %vm726, %v698, -inf
      %v816 = vsel %vm726, %v699, -inf
      %v817 = vsel %vm726, %v700, -inf
      %v818 = vmax.f32 %v815, %v817
      %v819 = vsel %vm726, %v701, -inf
      %v820 = vmax.f32 %v816, %v819
      %v821 = vsel %vm726, %v702, -inf
      %v822 = vmax.f32 %v818, %v821
      %v823 = vsel %vm726, %v703, -inf
      %v824 = vmax.f32 %v820, %v823
      %v825 = vsel %vm726, %v704, -inf
      %v826 = vmax.f32 %v822, %v825
      %v827 = vsel %vm726, %v705, -inf
      %v828 = vmax.f32 %v824, %v827
      %v829 = vmax.f32 %v826, %v828
      %v830 = vrot.slane %v829, 4
      %v831 = vmax.f32 %v829, %v830
      %v832 = vrot.slane %v831, 2
      %v833 = vmax.f32 %v831, %v832
      %v834 = vrot.slane %v833, 1
      %v835 = vmax.f32 %v833, %v834
      %v836 = vsel %vm726, %v706, -inf
      %v837 = vsel %vm726, %v707, -inf
      %v838 = vsel %vm726, %v708, -inf
      %v839 = vmax.f32 %v836, %v838
      %v840 = vsel %vm726, %v709, -inf
      %v841 = vmax.f32 %v837, %v840
      %v842 = vsel %vm726, %v710, -inf
      %v843 = vmax.f32 %v839, %v842
      %v844 = vsel %vm726, %v711, -inf
      %v845 = vmax.f32 %v841, %v844
      %v846 = vsel %vm726, %v712, -inf
      %v847 = vmax.f32 %v843, %v846
      %v848 = vsel %vm726, %v713, -inf
      %v849 = vmax.f32 %v845, %v848
      %v850 = vmax.f32 %v847, %v849
      %v851 = vrot.slane %v850, 4
      %v852 = vmax.f32 %v850, %v851
      %v853 = vrot.slane %v852, 2
      %v854 = vmax.f32 %v852, %v853
      %v855 = vrot.slane %v854, 1
      %v856 = vmax.f32 %v854, %v855
      %vm860 = vcmask 1041409
      %v861 = vsel %vm860, %v792, %v791
      %vm862 = vcmask 1042434
      %v863 = vsel %vm862, %v793, %v861
      %vm868 = vcmask 1044484
      %v869 = vsel %vm868, %v835, %v814
      %vm870 = vcmask 1045509
      %v871 = vsel %vm870, %v856, %v869
      %vm873 = vcmask 1042432
      %v874 = vsel %vm873, %v863, %v871
      %v875 = vlaneseq
      %v876 = vshrl.u32 %v875, 7
      %v877 = vsub.s32 0, %v876
      %v878 = vrot.slane %v722, %v877
      %v880 = vsel %vm726, %v874, 0
      %882 = vmatprep.subr.mxu0 0.0
      %883 = vmatpush1.msra.mxu0 %v714
      %884 = vmatprep.subr.mxu0 0.0
      %885 = vmatpush1.msra.mxu0 %v715
      %886 = vmatprep.subr.mxu0 0.0
      %887 = vmatpush1.msra.mxu0 %v716
      %888 = vmatprep.subr.mxu0 0.0
      %889 = vmatpush1.msra.mxu0 %v717
      %890 = vmatprep.subr.mxu0 0.0
      %891 = vmatpush1.msra.mxu0 %v718
      %892 = vmatprep.subr.mxu0 0.0
      %893 = vmatpush1.msra.mxu0 %v719
      %894 = vmatprep.subr.mxu0 0.0
      %895 = vmatpush1.msra.mxu0 %v720
      %896 = vmatprep.subr.mxu0 0.0
      %897 = vmatpush1.msra.mxu0 %v721
      %898 = vmatprep.subr.mxu0 0.0
      %899 = vmatpush1.msra.mxu0 0.0
      %900 = vmatprep.subr.mxu0 0.0
      %901 = vmatpush1.msra.mxu0 0.0
      %902 = vmatprep.subr.mxu0 0.0
      %903 = vmatpush1.msra.mxu0 0.0
      %904 = vmatprep.subr.mxu0 0.0
      %905 = vmatpush1.msra.mxu0 0.0
      %906 = vmatprep.subr.mxu0 0.0
      %907 = vmatpush1.msra.mxu0 0.0
      %908 = vmatprep.subr.mxu0 0.0
      %909 = vmatpush1.msra.mxu0 0.0
      %910 = vmatprep.subr.mxu0 0.0
      %911 = vmatpush1.msra.mxu0 0.0
      %912 = vmatprep.subr.mxu0 0.0
      %913 = vmatpush1.msra.mxu0 0.0
      %914 = vmatprep.subr.mxu0 0.0
      %915 = vmatpush1.msra.mxu0 0.0
      %916 = vmatprep.subr.mxu0 0.0
      %917 = vmatpush1.msra.mxu0 0.0
      %918 = vmatprep.subr.mxu0 0.0
      %919 = vmatpush1.msra.mxu0 0.0
      %920 = vmatprep.subr.mxu0 0.0
      %921 = vmatpush1.msra.mxu0 0.0
      %922 = vmatprep.subr.mxu0 0.0
      %923 = vmatpush1.msra.mxu0 0.0
      %924 = vmatprep.subr.mxu0 0.0
      %925 = vmatpush1.msra.mxu0 0.0
      %926 = vmatprep.subr.mxu0 0.0
      %927 = vmatpush1.msra.mxu0 0.0
      %928 = vmatprep.subr.mxu0 0.0
      %929 = vmatpush1.msra.mxu0 0.0
      %930 = vmatprep.subr.mxu0 0.0
      %931 = vmatpush1.msra.mxu0 0.0
      %932 = vmatprep.subr.mxu0 0.0
      %933 = vmatpush1.msra.mxu0 0.0
      %934 = vmatprep.subr.mxu0 0.0
      %935 = vmatpush1.msra.mxu0 0.0
      %936 = vmatprep.subr.mxu0 0.0
      %937 = vmatpush1.msra.mxu0 0.0
      %938 = vmatprep.subr.mxu0 0.0
      %939 = vmatpush1.msra.mxu0 0.0
      %940 = vmatprep.subr.mxu0 0.0
      %941 = vmatpush1.msra.mxu0 0.0
      %942 = vmatprep.subr.mxu0 0.0
      %943 = vmatpush1.msra.mxu0 0.0
      %944 = vmatprep.subr.mxu0 0.0
      %945 = vmatpush1.msra.mxu0 0.0
      %946 = vmatprep.mubr.f32.mxu0 0.0
      %947 = vmatmul.mubr.f32.gmra.mrb[0].mxu0 %v880
      %v948 = vpop.f32.mrb[0].mxu0
      %v949 = vadd.f32 %v878, %v948
      %v950 = vpop.f32.mrb[0].mxu0
      %951 = vdwg.mxu0
      %v952 = vmax.f32 %v949, 0.0
      %v953 = vlaneseq
      %v954 = vshrl.u32 %v953, 7
      %v955 = vsub.s32 0, %v954
      %v956 = vrot.slane %v725, %v955
      %vm957 = vcmask 130048
      %v959 = vsel %vm957, %v952, 0
      %961 = vmatprep.subr.mxu0 0.0
      %962 = vmatpush1.msra.mxu0 %v723
      %963 = vmatprep.subr.mxu0 0.0
      %964 = vmatpush1.msra.mxu0 %v724
      %965 = vmatprep.subr.mxu0 0.0
      %966 = vmatpush1.msra.mxu0 0.0
      %967 = vmatprep.subr.mxu0 0.0
      %968 = vmatpush1.msra.mxu0 0.0
      %969 = vmatprep.subr.mxu0 0.0
      %970 = vmatpush1.msra.mxu0 0.0
      %971 = vmatprep.subr.mxu0 0.0
      %972 = vmatpush1.msra.mxu0 0.0
      %973 = vmatprep.subr.mxu0 0.0
      %974 = vmatpush1.msra.mxu0 0.0
      %975 = vmatprep.subr.mxu0 0.0
      %976 = vmatpush1.msra.mxu0 0.0
      %977 = vmatprep.subr.mxu0 0.0
      %978 = vmatpush1.msra.mxu0 0.0
      %979 = vmatprep.subr.mxu0 0.0
      %980 = vmatpush1.msra.mxu0 0.0
      %981 = vmatprep.subr.mxu0 0.0
      %982 = vmatpush1.msra.mxu0 0.0
      %983 = vmatprep.subr.mxu0 0.0
      %984 = vmatpush1.msra.mxu0 0.0
      %985 = vmatprep.subr.mxu0 0.0
      %986 = vmatpush1.msra.mxu0 0.0
      %987 = vmatprep.subr.mxu0 0.0
      %988 = vmatpush1.msra.mxu0 0.0
      %989 = vmatprep.subr.mxu0 0.0
      %990 = vmatpush1.msra.mxu0 0.0
      %991 = vmatprep.subr.mxu0 0.0
      %992 = vmatpush1.msra.mxu0 0.0
      %993 = vmatprep.subr.mxu0 0.0
      %994 = vmatpush1.msra.mxu0 0.0
      %995 = vmatprep.subr.mxu0 0.0
      %996 = vmatpush1.msra.mxu0 0.0
      %997 = vmatprep.subr.mxu0 0.0
      %998 = vmatpush1.msra.mxu0 0.0
      %999 = vmatprep.subr.mxu0 0.0
      %1000 = vmatpush1.msra.mxu0 0.0
      %1001 = vmatprep.subr.mxu0 0.0
      %1002 = vmatpush1.msra.mxu0 0.0
      %1003 = vmatprep.subr.mxu0 0.0
      %1004 = vmatpush1.msra.mxu0 0.0
      %1005 = vmatprep.subr.mxu0 0.0
      %1006 = vmatpush1.msra.mxu0 0.0
      %1007 = vmatprep.subr.mxu0 0.0
      %1008 = vmatpush1.msra.mxu0 0.0
      %1009 = vmatprep.subr.mxu0 0.0
      %1010 = vmatpush1.msra.mxu0 0.0
      %1011 = vmatprep.subr.mxu0 0.0
      %1012 = vmatpush1.msra.mxu0 0.0
      %1013 = vmatprep.subr.mxu0 0.0
      %1014 = vmatpush1.msra.mxu0 0.0
      %1015 = vmatprep.subr.mxu0 0.0
      %1016 = vmatpush1.msra.mxu0 0.0
      %1017 = vmatprep.subr.mxu0 0.0
      %1018 = vmatpush1.msra.mxu0 0.0
      %1019 = vmatprep.subr.mxu0 0.0
      %1020 = vmatpush1.msra.mxu0 0.0
      %1021 = vmatprep.subr.mxu0 0.0
      %1022 = vmatpush1.msra.mxu0 0.0
      %1023 = vmatprep.subr.mxu0 0.0
      %1024 = vmatpush1.msra.mxu0 0.0
      %1025 = vmatprep.mubr.f32.mxu0 0.0
      %1026 = vmatmul.mubr.f32.gmra.mrb[0].mxu0 %v959
      %v1027 = vpop.f32.mrb[0].mxu0
      %v1028 = vadd.f32 %v956, %v1027
      %v1029 = vpop.f32.mrb[0].mxu0
      %1030 = vdwg.mxu0
      %v1031 = vxor.u32 %v1028, 2147483648
      %v1032 = vmul.f32 %v1031, 1.442695
      %v1033 = vpow.pop %v1032
      %v1034 = vadd.f32 %v1033, 1.0
      %v1035 = vrcp.pop %v1034
      %v1036 = vmul.f32 1.0, %v1035
      %v1038 = vrot.slane %v1036, 3
      %v1040 = vadd.f32 %v1036, %v1038
      %v1043 = vunpack.c.l.s4 1966171168
      %v1044 = vunpack.c.0.s8 %v1043
      %v1045 = vlaneseq
      %v1046 = vshrl.u32 %v1045, 7
      %v1047 = vsub.s32 %v1044, %v1046
      %v1048 = vrot.slane %v1040, %v1047
      %v1049 = vcombine.high %v1048, %v1048
      %v1051 = vunpack.c.l.s4 1966171168
      %v1052 = vunpack.c.0.s8 %v1051
      %v1053 = vlaneseq
      %v1054 = vshrl.u32 %v1053, 7
      %v1055 = vsub.s32 %v1052, %v1054
      %v1056 = vrot.slane %v1048, %v1055
      %v1058 = vunpack.c.l.s4 1966171168
      %v1059 = vunpack.c.0.s8 %v1058
      %v1060 = vlaneseq
      %v1061 = vshrl.u32 %v1060, 7
      %v1062 = vsub.s32 %v1059, %v1061
      %v1063 = vrot.slane %v1049, %v1062
      %v1064 = vcombine.high %v1056, %v1056
      %v1065 = vlaneseq
      %v1066 = vshrl.u32 %v1065, 7
      %v1067 = vsub.s32 0, %v1066
      %v1068 = vrot.slane %v1056, %v1067
      %v1069 = vlaneseq
      %v1070 = vshrl.u32 %v1069, 7
      %v1071 = vsub.s32 0, %v1070
      %v1072 = vrot.slane %v1063, %v1071
      %v1073 = vlaneseq
      %v1074 = vshrl.u32 %v1073, 7
      %v1075 = vsub.s32 0, %v1074
      %v1076 = vrot.slane %v1064, %v1075
      %v1080 = vmul.f32 %v690, %v1068
      %v1081 = vmul.f32 %v691, %v1068
      %v1082 = vmul.f32 %v692, %v1068
      %v1083 = vmul.f32 %v693, %v1068
      %v1084 = vmul.f32 %v694, %v1068
      %v1085 = vmul.f32 %v695, %v1068
      %v1086 = vmul.f32 %v696, %v1068
      %v1087 = vmul.f32 %v697, %v1068
      %v1088 = vmul.f32 %v698, %v1072
      %v1089 = vmul.f32 %v699, %v1072
      %v1090 = vmul.f32 %v700, %v1072
      %v1091 = vmul.f32 %v701, %v1072
      %v1092 = vmul.f32 %v702, %v1072
      %v1093 = vmul.f32 %v703, %v1072
      %v1094 = vmul.f32 %v704, %v1072
      %v1095 = vmul.f32 %v705, %v1072
      %v1096 = vmul.f32 %v706, %v1076
      %v1097 = vmul.f32 %v707, %v1076
      %v1098 = vmul.f32 %v708, %v1076
      %v1099 = vmul.f32 %v709, %v1076
      %v1100 = vmul.f32 %v710, %v1076
      %v1101 = vmul.f32 %v711, %v1076
      %v1102 = vmul.f32 %v712, %v1076
      %v1103 = vmul.f32 %v713, %v1076
      %v1104 = vld [vmem:[%s8 + $0x3] sm:$0x1]
      %v1105 = vld [vmem:[%s8 + $0x4] sm:$0x1]
      %v1106 = vld [vmem:[%s8 + $0x5] sm:$0x1]
      %v1107 = vld [vmem:[%s8 + $0x6] sm:$0x1]
      %v1108 = vlaneseq
      %v1109 = vshrl.u32 %v1108, 7
      %v1110 = vsub.s32 0, %v1109
      %v1111 = vrot.slane %v1104, %v1110
      %v1112 = vmul.f32 %v1080, %v1111
      %v1113 = vmul.f32 %v1081, %v1111
      %v1114 = vmul.f32 %v1082, %v1111
      %v1115 = vmul.f32 %v1083, %v1111
      %v1116 = vmul.f32 %v1084, %v1111
      %v1117 = vmul.f32 %v1085, %v1111
      %v1118 = vmul.f32 %v1086, %v1111
      %v1119 = vmul.f32 %v1087, %v1111
      %v1120 = vmul.f32 %v1088, %v1111
      %v1121 = vmul.f32 %v1089, %v1111
      %v1122 = vmul.f32 %v1090, %v1111
      %v1123 = vmul.f32 %v1091, %v1111
      %v1124 = vmul.f32 %v1092, %v1111
      %v1125 = vmul.f32 %v1093, %v1111
      %v1126 = vmul.f32 %v1094, %v1111
      %v1127 = vmul.f32 %v1095, %v1111
      %v1128 = vmul.f32 %v1096, %v1111
      %v1129 = vmul.f32 %v1097, %v1111
      %v1130 = vmul.f32 %v1098, %v1111
      %v1131 = vmul.f32 %v1099, %v1111
      %v1132 = vmul.f32 %v1100, %v1111
      %v1133 = vmul.f32 %v1101, %v1111
      %v1134 = vmul.f32 %v1102, %v1111
      %v1135 = vmul.f32 %v1103, %v1111
      %v1136 = vlaneseq
      %v1137 = vshrl.u32 %v1136, 7
      %v1138 = vsub.s32 0, %v1137
      %v1139 = vrot.slane %v1105, %v1138
      %v1140 = vadd.f32 %v1112, %v1139
      %v1141 = vadd.f32 %v1113, %v1139
      %v1142 = vadd.f32 %v1114, %v1139
      %v1143 = vadd.f32 %v1115, %v1139
      %v1144 = vadd.f32 %v1116, %v1139
      %v1145 = vadd.f32 %v1117, %v1139
      %v1146 = vadd.f32 %v1118, %v1139
      %v1147 = vadd.f32 %v1119, %v1139
      %v1148 = vadd.f32 %v1120, %v1139
      %v1149 = vadd.f32 %v1121, %v1139
      %v1150 = vadd.f32 %v1122, %v1139
      %v1151 = vadd.f32 %v1123, %v1139
      %v1152 = vadd.f32 %v1124, %v1139
      %v1153 = vadd.f32 %v1125, %v1139
      %v1154 = vadd.f32 %v1126, %v1139
      %v1155 = vadd.f32 %v1127, %v1139
      %v1156 = vadd.f32 %v1128, %v1139
      %v1157 = vadd.f32 %v1129, %v1139
      %v1158 = vadd.f32 %v1130, %v1139
      %v1159 = vadd.f32 %v1131, %v1139
      %v1160 = vadd.f32 %v1132, %v1139
      %v1161 = vadd.f32 %v1133, %v1139
      %v1162 = vadd.f32 %v1134, %v1139
      %v1163 = vadd.f32 %v1135, %v1139
      %v1164 = vlaneseq
      %v1165 = vshrl.u32 %v1164, 7
      %v1166 = vsub.s32 0, %v1165
      %v1167 = vrot.slane %v1106, %v1166
      %v1168 = vmul.f32 %v1140, %v1167
      %v1169 = vmul.f32 %v1141, %v1167
      %v1170 = vmul.f32 %v1142, %v1167
      %v1171 = vmul.f32 %v1143, %v1167
      %v1172 = vmul.f32 %v1144, %v1167
      %v1173 = vmul.f32 %v1145, %v1167
      %v1174 = vmul.f32 %v1146, %v1167
      %v1175 = vmul.f32 %v1147, %v1167
      %v1176 = vmul.f32 %v1148, %v1167
      %v1177 = vmul.f32 %v1149, %v1167
      %v1178 = vmul.f32 %v1150, %v1167
      %v1179 = vmul.f32 %v1151, %v1167
      %v1180 = vmul.f32 %v1152, %v1167
      %v1181 = vmul.f32 %v1153, %v1167
      %v1182 = vmul.f32 %v1154, %v1167
      %v1183 = vmul.f32 %v1155, %v1167
      %v1184 = vmul.f32 %v1156, %v1167
      %v1185 = vmul.f32 %v1157, %v1167
      %v1186 = vmul.f32 %v1158, %v1167
      %v1187 = vmul.f32 %v1159, %v1167
      %v1188 = vmul.f32 %v1160, %v1167
      %v1189 = vmul.f32 %v1161, %v1167
      %v1190 = vmul.f32 %v1162, %v1167
      %v1191 = vmul.f32 %v1163, %v1167
      %v1192 = vsel %vm726, %v1168, 0.0
      %1193 = vadd.xlane.f32.xlu0 %v1192
      %v1194 = vpop.xlane.xlu0 %1193
      %v1195 = vsel %vm726, %v1169, 0.0
      %1196 = vadd.xlane.f32.xlu0 %v1195
      %v1197 = vpop.xlane.xlu0 %1196
      %v1198 = vsel %vm726, %v1170, 0.0
      %1199 = vadd.xlane.f32.xlu0 %v1198
      %v1200 = vpop.xlane.xlu0 %1199
      %v1201 = vsel %vm726, %v1171, 0.0
      %1202 = vadd.xlane.f32.xlu0 %v1201
      %v1203 = vpop.xlane.xlu0 %1202
      %v1204 = vsel %vm726, %v1172, 0.0
      %1205 = vadd.xlane.f32.xlu0 %v1204
      %v1206 = vpop.xlane.xlu0 %1205
      %v1207 = vsel %vm726, %v1173, 0.0
      %1208 = vadd.xlane.f32.xlu0 %v1207
      %v1209 = vpop.xlane.xlu0 %1208
      %v1210 = vsel %vm726, %v1174, 0.0
      %1211 = vadd.xlane.f32.xlu0 %v1210
      %v1212 = vpop.xlane.xlu0 %1211
      %v1213 = vsel %vm726, %v1175, 0.0
      %1214 = vadd.xlane.f32.xlu0 %v1213
      %v1215 = vpop.xlane.xlu0 %1214
      %v1216 = vsel %vm726, %v1176, 0.0
      %1217 = vadd.xlane.f32.xlu0 %v1216
      %v1218 = vpop.xlane.xlu0 %1217
      %v1219 = vsel %vm726, %v1177, 0.0
      %1220 = vadd.xlane.f32.xlu0 %v1219
      %v1221 = vpop.xlane.xlu0 %1220
      %v1222 = vsel %vm726, %v1178, 0.0
      %1223 = vadd.xlane.f32.xlu0 %v1222
      %v1224 = vpop.xlane.xlu0 %1223
      %v1225 = vsel %vm726, %v1179, 0.0
      %1226 = vadd.xlane.f32.xlu0 %v1225
      %v1227 = vpop.xlane.xlu0 %1226
      %v1228 = vsel %vm726, %v1180, 0.0
      %1229 = vadd.xlane.f32.xlu0 %v1228
      %v1230 = vpop.xlane.xlu0 %1229
      %v1231 = vsel %vm726, %v1181, 0.0
      %1232 = vadd.xlane.f32.xlu0 %v1231
      %v1233 = vpop.xlane.xlu0 %1232
      %v1234 = vsel %vm726, %v1182, 0.0
      %1235 = vadd.xlane.f32.xlu0 %v1234
      %v1236 = vpop.xlane.xlu0 %1235
      %v1237 = vsel %vm726, %v1183, 0.0
      %1238 = vadd.xlane.f32.xlu0 %v1237
      %v1239 = vpop.xlane.xlu0 %1238
      %v1240 = vsel %vm726, %v1184, 0.0
      %1241 = vadd.xlane.f32.xlu0 %v1240
      %v1242 = vpop.xlane.xlu0 %1241
      %v1243 = vsel %vm726, %v1185, 0.0
      %1244 = vadd.xlane.f32.xlu0 %v1243
      %v1245 = vpop.xlane.xlu0 %1244
      %v1246 = vsel %vm726, %v1186, 0.0
      %1247 = vadd.xlane.f32.xlu0 %v1246
      %v1248 = vpop.xlane.xlu0 %1247
      %v1249 = vsel %vm726, %v1187, 0.0
      %1250 = vadd.xlane.f32.xlu0 %v1249
      %v1251 = vpop.xlane.xlu0 %1250
      %v1252 = vsel %vm726, %v1188, 0.0
      %1253 = vadd.xlane.f32.xlu0 %v1252
      %v1254 = vpop.xlane.xlu0 %1253
      %v1255 = vsel %vm726, %v1189, 0.0
      %1256 = vadd.xlane.f32.xlu0 %v1255
      %v1257 = vpop.xlane.xlu0 %1256
      %v1258 = vsel %vm726, %v1190, 0.0
      %1259 = vadd.xlane.f32.xlu0 %v1258
      %v1260 = vpop.xlane.xlu0 %1259
      %v1261 = vsel %vm726, %v1191, 0.0
      %1262 = vadd.xlane.f32.xlu0 %v1261
      %v1263 = vpop.xlane.xlu0 %1262
      %v1264 = vlaneseq
      %v1265 = vshrl.u32 %v1264, 7
      %v1266 = vsub.s32 0, %v1265
      %v1267 = vrot.slane %v1107, %v1266
      %v1268 = vadd.f32 %v1194, %v1267
      %v1269 = vadd.f32 %v1197, %v1267
      %v1270 = vadd.f32 %v1200, %v1267
      %v1271 = vadd.f32 %v1203, %v1267
      %v1272 = vadd.f32 %v1206, %v1267
      %v1273 = vadd.f32 %v1209, %v1267
      %v1274 = vadd.f32 %v1212, %v1267
      %v1275 = vadd.f32 %v1215, %v1267
      %v1276 = vadd.f32 %v1218, %v1267
      %v1277 = vadd.f32 %v1221, %v1267
      %v1278 = vadd.f32 %v1224, %v1267
      %v1279 = vadd.f32 %v1227, %v1267
      %v1280 = vadd.f32 %v1230, %v1267
      %v1281 = vadd.f32 %v1233, %v1267
      %v1282 = vadd.f32 %v1236, %v1267
      %v1283 = vadd.f32 %v1239, %v1267
      %v1284 = vadd.f32 %v1242, %v1267
      %v1285 = vadd.f32 %v1245, %v1267
      %v1286 = vadd.f32 %v1248, %v1267
      %v1287 = vadd.f32 %v1251, %v1267
      %v1288 = vadd.f32 %v1254, %v1267
      %v1289 = vadd.f32 %v1257, %v1267
      %v1290 = vadd.f32 %v1260, %v1267
      %v1291 = vadd.f32 %v1263, %v1267
      %v1292 = vxor.u32 %v1268, 2147483648
      %v1293 = vxor.u32 %v1269, 2147483648
      %v1294 = vxor.u32 %v1270, 2147483648
      %v1295 = vxor.u32 %v1271, 2147483648
      %v1296 = vxor.u32 %v1272, 2147483648
      %v1297 = vxor.u32 %v1273, 2147483648
      %v1298 = vxor.u32 %v1274, 2147483648
      %v1299 = vxor.u32 %v1275, 2147483648
      %v1300 = vxor.u32 %v1276, 2147483648
      %v1301 = vxor.u32 %v1277, 2147483648
      %v1302 = vxor.u32 %v1278, 2147483648
      %v1303 = vxor.u32 %v1279, 2147483648
      %v1304 = vxor.u32 %v1280, 2147483648
      %v1305 = vxor.u32 %v1281, 2147483648
      %v1306 = vxor.u32 %v1282, 2147483648
      %v1307 = vxor.u32 %v1283, 2147483648
      %v1308 = vxor.u32 %v1284, 2147483648
      %v1309 = vxor.u32 %v1285, 2147483648
      %v1310 = vxor.u32 %v1286, 2147483648
      %v1311 = vxor.u32 %v1287, 2147483648
      %v1312 = vxor.u32 %v1288, 2147483648
      %v1313 = vxor.u32 %v1289, 2147483648
      %v1314 = vxor.u32 %v1290, 2147483648
      %v1315 = vxor.u32 %v1291, 2147483648
      %v1316 = vmul.f32 %v1292, 1.442695
      %v1317 = vpow.pop %v1316
      %v1318 = vmul.f32 %v1293, 1.442695
      %v1319 = vpow.pop %v1318
      %v1320 = vmul.f32 %v1294, 1.442695
      %v1321 = vpow.pop %v1320
      %v1322 = vmul.f32 %v1295, 1.442695
      %v1323 = vpow.pop %v1322
      %v1324 = vmul.f32 %v1296, 1.442695
      %v1325 = vpow.pop %v1324
      %v1326 = vmul.f32 %v1297, 1.442695
      %v1327 = vpow.pop %v1326
      %v1328 = vmul.f32 %v1298, 1.442695
      %v1329 = vpow.pop %v1328
      %v1330 = vmul.f32 %v1299, 1.442695
      %v1331 = vpow.pop %v1330
      %v1332 = vmul.f32 %v1300, 1.442695
      %v1333 = vpow.pop %v1332
      %v1334 = vmul.f32 %v1301, 1.442695
      %v1335 = vpow.pop %v1334
      %v1336 = vmul.f32 %v1302, 1.442695
      %v1337 = vpow.pop %v1336
      %v1338 = vmul.f32 %v1303, 1.442695
      %v1339 = vpow.pop %v1338
      %v1340 = vmul.f32 %v1304, 1.442695
      %v1341 = vpow.pop %v1340
      %v1342 = vmul.f32 %v1305, 1.442695
      %v1343 = vpow.pop %v1342
      %v1344 = vmul.f32 %v1306, 1.442695
      %v1345 = vpow.pop %v1344
      %v1346 = vmul.f32 %v1307, 1.442695
      %v1347 = vpow.pop %v1346
      %v1348 = vmul.f32 %v1308, 1.442695
      %v1349 = vpow.pop %v1348
      %v1350 = vmul.f32 %v1309, 1.442695
      %v1351 = vpow.pop %v1350
      %v1352 = vmul.f32 %v1310, 1.442695
      %v1353 = vpow.pop %v1352
      %v1354 = vmul.f32 %v1311, 1.442695
      %v1355 = vpow.pop %v1354
      %v1356 = vmul.f32 %v1312, 1.442695
      %v1357 = vpow.pop %v1356
      %v1358 = vmul.f32 %v1313, 1.442695
      %v1359 = vpow.pop %v1358
      %v1360 = vmul.f32 %v1314, 1.442695
      %v1361 = vpow.pop %v1360
      %v1362 = vmul.f32 %v1315, 1.442695
      %v1363 = vpow.pop %v1362
      %v1364 = vadd.f32 %v1317, 1.0
      %v1365 = vadd.f32 %v1319, 1.0
      %v1366 = vadd.f32 %v1321, 1.0
      %v1367 = vadd.f32 %v1323, 1.0
      %v1368 = vadd.f32 %v1325, 1.0
      %v1369 = vadd.f32 %v1327, 1.0
      %v1370 = vadd.f32 %v1329, 1.0
      %v1371 = vadd.f32 %v1331, 1.0
      %v1372 = vadd.f32 %v1333, 1.0
      %v1373 = vadd.f32 %v1335, 1.0
      %v1374 = vadd.f32 %v1337, 1.0
      %v1375 = vadd.f32 %v1339, 1.0
      %v1376 = vadd.f32 %v1341, 1.0
      %v1377 = vadd.f32 %v1343, 1.0
      %v1378 = vadd.f32 %v1345, 1.0
      %v1379 = vadd.f32 %v1347, 1.0
      %v1380 = vadd.f32 %v1349, 1.0
      %v1381 = vadd.f32 %v1351, 1.0
      %v1382 = vadd.f32 %v1353, 1.0
      %v1383 = vadd.f32 %v1355, 1.0
      %v1384 = vadd.f32 %v1357, 1.0
      %v1385 = vadd.f32 %v1359, 1.0
      %v1386 = vadd.f32 %v1361, 1.0
      %v1387 = vadd.f32 %v1363, 1.0
      %v1388 = vrcp.pop %v1364
      %v1389 = vmul.f32 1.0, %v1388
      %v1390 = vrcp.pop %v1365
      %v1391 = vmul.f32 1.0, %v1390
      %v1392 = vrcp.pop %v1366
      %v1393 = vmul.f32 1.0, %v1392
      %v1394 = vrcp.pop %v1367
      %v1395 = vmul.f32 1.0, %v1394
      %v1396 = vrcp.pop %v1368
      %v1397 = vmul.f32 1.0, %v1396
      %v1398 = vrcp.pop %v1369
      %v1399 = vmul.f32 1.0, %v1398
      %v1400 = vrcp.pop %v1370
      %v1401 = vmul.f32 1.0, %v1400
      %v1402 = vrcp.pop %v1371
      %v1403 = vmul.f32 1.0, %v1402
      %v1404 = vrcp.pop %v1372
      %v1405 = vmul.f32 1.0, %v1404
      %v1406 = vrcp.pop %v1373
      %v1407 = vmul.f32 1.0, %v1406
      %v1408 = vrcp.pop %v1374
      %v1409 = vmul.f32 1.0, %v1408
      %v1410 = vrcp.pop %v1375
      %v1411 = vmul.f32 1.0, %v1410
      %v1412 = vrcp.pop %v1376
      %v1413 = vmul.f32 1.0, %v1412
      %v1414 = vrcp.pop %v1377
      %v1415 = vmul.f32 1.0, %v1414
      %v1416 = vrcp.pop %v1378
      %v1417 = vmul.f32 1.0, %v1416
      %v1418 = vrcp.pop %v1379
      %v1419 = vmul.f32 1.0, %v1418
      %v1420 = vrcp.pop %v1380
      %v1421 = vmul.f32 1.0, %v1420
      %v1422 = vrcp.pop %v1381
      %v1423 = vmul.f32 1.0, %v1422
      %v1424 = vrcp.pop %v1382
      %v1425 = vmul.f32 1.0, %v1424
      %v1426 = vrcp.pop %v1383
      %v1427 = vmul.f32 1.0, %v1426
      %v1428 = vrcp.pop %v1384
      %v1429 = vmul.f32 1.0, %v1428
      %v1430 = vrcp.pop %v1385
      %v1431 = vmul.f32 1.0, %v1430
      %v1432 = vrcp.pop %v1386
      %v1433 = vmul.f32 1.0, %v1432
      %v1434 = vrcp.pop %v1387
      %v1435 = vmul.f32 1.0, %v1434
      %1437 = vset.pattern.permute.xlu0 0
      %1438 = vperm.xlu0 %1437, %v1389
      %v1439 = vpop.permute.xlu0 %1438
      %1442 = vset.pattern.permute.xlu0 0
      %1443 = vperm.xlu0 %1442, %v1391
      %v1444 = vpop.permute.xlu0 %1443
      %1447 = vset.pattern.permute.xlu0 0
      %1448 = vperm.xlu0 %1447, %v1393
      %v1449 = vpop.permute.xlu0 %1448
      %1452 = vset.pattern.permute.xlu0 0
      %1453 = vperm.xlu0 %1452, %v1395
      %v1454 = vpop.permute.xlu0 %1453
      %1457 = vset.pattern.permute.xlu0 0
      %1458 = vperm.xlu0 %1457, %v1397
      %v1459 = vpop.permute.xlu0 %1458
      %1462 = vset.pattern.permute.xlu0 0
      %1463 = vperm.xlu0 %1462, %v1399
      %v1464 = vpop.permute.xlu0 %1463
      %1467 = vset.pattern.permute.xlu0 0
      %1468 = vperm.xlu0 %1467, %v1401
      %v1469 = vpop.permute.xlu0 %1468
      %1472 = vset.pattern.permute.xlu0 0
      %1473 = vperm.xlu0 %1472, %v1403
      %v1474 = vpop.permute.xlu0 %1473
      %1477 = vset.pattern.permute.xlu0 0
      %1478 = vperm.xlu0 %1477, %v1405
      %v1479 = vpop.permute.xlu0 %1478
      %1482 = vset.pattern.permute.xlu0 0
      %1483 = vperm.xlu0 %1482, %v1407
      %v1484 = vpop.permute.xlu0 %1483
      %1487 = vset.pattern.permute.xlu0 0
      %1488 = vperm.xlu0 %1487, %v1409
      %v1489 = vpop.permute.xlu0 %1488
      %1492 = vset.pattern.permute.xlu0 0
      %1493 = vperm.xlu0 %1492, %v1411
      %v1494 = vpop.permute.xlu0 %1493
      %1497 = vset.pattern.permute.xlu0 0
      %1498 = vperm.xlu0 %1497, %v1413
      %v1499 = vpop.permute.xlu0 %1498
      %1502 = vset.pattern.permute.xlu0 0
      %1503 = vperm.xlu0 %1502, %v1415
      %v1504 = vpop.permute.xlu0 %1503
      %1507 = vset.pattern.permute.xlu0 0
      %1508 = vperm.xlu0 %1507, %v1417
      %v1509 = vpop.permute.xlu0 %1508
      %1512 = vset.pattern.permute.xlu0 0
      %1513 = vperm.xlu0 %1512, %v1419
      %v1514 = vpop.permute.xlu0 %1513
      %1517 = vset.pattern.permute.xlu0 0
      %1518 = vperm.xlu0 %1517, %v1421
      %v1519 = vpop.permute.xlu0 %1518
      %1522 = vset.pattern.permute.xlu0 0
      %1523 = vperm.xlu0 %1522, %v1423
      %v1524 = vpop.permute.xlu0 %1523
      %1527 = vset.pattern.permute.xlu0 0
      %1528 = vperm.xlu0 %1527, %v1425
      %v1529 = vpop.permute.xlu0 %1528
      %1532 = vset.pattern.permute.xlu0 0
      %1533 = vperm.xlu0 %1532, %v1427
      %v1534 = vpop.permute.xlu0 %1533
      %1537 = vset.pattern.permute.xlu0 0
      %1538 = vperm.xlu0 %1537, %v1429
      %v1539 = vpop.permute.xlu0 %1538
      %1542 = vset.pattern.permute.xlu0 0
      %1543 = vperm.xlu0 %1542, %v1431
      %v1544 = vpop.permute.xlu0 %1543
      %1547 = vset.pattern.permute.xlu0 0
      %1548 = vperm.xlu0 %1547, %v1433
      %v1549 = vpop.permute.xlu0 %1548
      %1552 = vset.pattern.permute.xlu0 0
      %1553 = vperm.xlu0 %1552, %v1435
      %v1554 = vpop.permute.xlu0 %1553
      %v1556 = vmul.f32 %v1140, %v1439
      %v1557 = vmul.f32 %v1141, %v1444
      %v1558 = vmul.f32 %v1142, %v1449
      %v1559 = vmul.f32 %v1143, %v1454
      %v1560 = vmul.f32 %v1144, %v1459
      %v1561 = vmul.f32 %v1145, %v1464
      %v1562 = vmul.f32 %v1146, %v1469
      %v1563 = vmul.f32 %v1147, %v1474
      %v1564 = vmul.f32 %v1148, %v1479
      %v1565 = vmul.f32 %v1149, %v1484
      %v1566 = vmul.f32 %v1150, %v1489
      %v1567 = vmul.f32 %v1151, %v1494
      %v1568 = vmul.f32 %v1152, %v1499
      %v1569 = vmul.f32 %v1153, %v1504
      %v1570 = vmul.f32 %v1154, %v1509
      %v1571 = vmul.f32 %v1155, %v1514
      %v1572 = vmul.f32 %v1156, %v1519
      %v1573 = vmul.f32 %v1157, %v1524
      %v1574 = vmul.f32 %v1158, %v1529
      %v1575 = vmul.f32 %v1159, %v1534
      %v1576 = vmul.f32 %v1160, %v1539
      %v1577 = vmul.f32 %v1161, %v1544
      %v1578 = vmul.f32 %v1162, %v1549
      %v1579 = vmul.f32 %v1163, %v1554
      %v1580 = vld [vmem:[%s9] sm:$0x1]
      %v1581 = vsel %vm726, %v1556, 0.0
      %v1582 = vsel %vm726, %v1557, 0.0
      %v1583 = vsel %vm726, %v1558, 0.0
      %v1584 = vsel %vm726, %v1559, 0.0
      %v1585 = vsel %vm726, %v1560, 0.0
      %v1586 = vsel %vm726, %v1561, 0.0
      %v1587 = vsel %vm726, %v1562, 0.0
      %v1588 = vsel %vm726, %v1563, 0.0
      %v1589 = vsel %vm726, %v1564, 0.0
      %v1590 = vsel %vm726, %v1565, 0.0
      %v1591 = vsel %vm726, %v1566, 0.0
      %v1592 = vsel %vm726, %v1567, 0.0
      %v1593 = vsel %vm726, %v1568, 0.0
      %v1594 = vsel %vm726, %v1569, 0.0
      %v1595 = vsel %vm726, %v1570, 0.0
      %v1596 = vsel %vm726, %v1571, 0.0
      %v1597 = vsel %vm726, %v1572, 0.0
      %v1598 = vsel %vm726, %v1573, 0.0
      %v1599 = vsel %vm726, %v1574, 0.0
      %v1600 = vsel %vm726, %v1575, 0.0
      %v1601 = vsel %vm726, %v1576, 0.0
      %v1602 = vsel %vm726, %v1577, 0.0
      %v1603 = vsel %vm726, %v1578, 0.0
      %v1604 = vsel %vm726, %v1579, 0.0
      %1605 = vst [vmem:[#allocation2] sm:$0xff] 0.0
      %1606 = vst [vmem:[#allocation2 + $0x8] sm:$0x3] 0.0
      %1607 = vst [vmem:[#allocation2 + $0xa0] sm:$0xff] 0.0
      %1608 = vst [vmem:[#allocation2 + $0xa8] sm:$0x3] 0.0
      %1609 = vst [vmem:[#allocation2 + $0x140] sm:$0xff] 0.0
      %1610 = vst [vmem:[#allocation2 + $0x148] sm:$0x3] 0.0
      %s1611 = scalar_lea.vmem [#allocation2], 144
      %1612 = vst [vmem:[%s1611] sm:$0xff] 0.0
      %1613 = vst [vmem:[%s1611 + $0x8] sm:$0x3] 0.0
      %1614 = vst [vmem:[%s1611 + $0xa0] sm:$0xff] 0.0
      %1615 = vst [vmem:[%s1611 + $0xa8] sm:$0x3] 0.0
      %1616 = vst [vmem:[%s1611 + $0x140] sm:$0xff] 0.0
      %1617 = vst [vmem:[%s1611 + $0x148] sm:$0x3] 0.0
      %1618 = vst [vmem:[#allocation2] sm:$0x1] 0.0
      %1619 = vst [vmem:[#allocation2 + $0x10] sm:$0x1] 0.0
      %1620 = vst [vmem:[#allocation2 + $0x20] sm:$0x1] 0.0
      %1621 = vst [vmem:[#allocation2 + $0x30] sm:$0x1] 0.0
      %1622 = vst [vmem:[#allocation2 + $0x40] sm:$0x1] 0.0
      %1623 = vst [vmem:[#allocation2 + $0x50] sm:$0x1] 0.0
      %1624 = vst [vmem:[#allocation2 + $0x60] sm:$0x1] 0.0
      %1625 = vst [vmem:[#allocation2 + $0x70] sm:$0x1] 0.0
      %1626 = vst [vmem:[#allocation2 + $0x80] sm:$0x1] 0.0
      %1627 = vst [vmem:[#allocation2 + $0x90] sm:$0x1] 0.0
      %1628 = vst [vmem:[#allocation2 + $0xa0] sm:$0x1] 0.0
      %1629 = vst [vmem:[#allocation2 + $0xb0] sm:$0x1] 0.0
      %1630 = vst [vmem:[#allocation2 + $0xc0] sm:$0x1] 0.0
      %1631 = vst [vmem:[#allocation2 + $0xd0] sm:$0x1] 0.0
      %1632 = vst [vmem:[#allocation2 + $0xe0] sm:$0x1] 0.0
      %1633 = vst [vmem:[#allocation2 + $0xf0] sm:$0x1] 0.0
      %1634 = vst [vmem:[#allocation2 + $0x100] sm:$0x1] 0.0
      %1635 = vst [vmem:[#allocation2 + $0x110] sm:$0x1] 0.0
      %1636 = vst [vmem:[#allocation2 + $0x120] sm:$0x1] 0.0
      %1637 = vst [vmem:[#allocation2 + $0x130] sm:$0x1] 0.0
      %1638 = vst [vmem:[#allocation2 + $0x140] sm:$0x1] 0.0
      %1639 = vst [vmem:[#allocation2 + $0x150] sm:$0x1] 0.0
      %1640 = vst [vmem:[#allocation2 + $0x160] sm:$0x1] 0.0
      %1641 = vst [vmem:[#allocation2 + $0x170] sm:$0x1] 0.0
      %1642 = vst [vmem:[#allocation2 + $0x180] sm:$0x1] 0.0
      %1643 = vst [vmem:[#allocation2 + $0x190] sm:$0x1] 0.0
      %1644 = vst [vmem:[#allocation2 + $0x1a0] sm:$0x1] 0.0
      %1645 = vst [vmem:[#allocation2 + $0x1b0] sm:$0x1] 0.0
      %1646 = vst [vmem:[#allocation2 + $0x1c0] sm:$0x1] 0.0
      %1647 = vst [vmem:[#allocation2 + $0x1d0] sm:$0x1] 0.0
      %1648 = vst [vmem:[#allocation2 + $0x9] sm:$0x1] 0.0
      %1649 = vst [vmem:[#allocation2 + $0x19] sm:$0x1] 0.0
      %1650 = vst [vmem:[#allocation2 + $0x29] sm:$0x1] 0.0
      %1651 = vst [vmem:[#allocation2 + $0x39] sm:$0x1] 0.0
      %1652 = vst [vmem:[#allocation2 + $0x49] sm:$0x1] 0.0
      %1653 = vst [vmem:[#allocation2 + $0x59] sm:$0x1] 0.0
      %1654 = vst [vmem:[#allocation2 + $0x69] sm:$0x1] 0.0
      %1655 = vst [vmem:[#allocation2 + $0x79] sm:$0x1] 0.0
      %1656 = vst [vmem:[#allocation2 + $0x89] sm:$0x1] 0.0
      %1657 = vst [vmem:[#allocation2 + $0x99] sm:$0x1] 0.0
      %1658 = vst [vmem:[#allocation2 + $0xa9] sm:$0x1] 0.0
      %1659 = vst [vmem:[#allocation2 + $0xb9] sm:$0x1] 0.0
      %1660 = vst [vmem:[#allocation2 + $0xc9] sm:$0x1] 0.0
      %1661 = vst [vmem:[#allocation2 + $0xd9] sm:$0x1] 0.0
      %1662 = vst [vmem:[#allocation2 + $0xe9] sm:$0x1] 0.0
      %1663 = vst [vmem:[#allocation2 + $0xf9] sm:$0x1] 0.0
      %1664 = vst [vmem:[#allocation2 + $0x109] sm:$0x1] 0.0
      %1665 = vst [vmem:[#allocation2 + $0x119] sm:$0x1] 0.0
      %1666 = vst [vmem:[#allocation2 + $0x129] sm:$0x1] 0.0
      %1667 = vst [vmem:[#allocation2 + $0x139] sm:$0x1] 0.0
      %1668 = vst [vmem:[#allocation2 + $0x149] sm:$0x1] 0.0
      %1669 = vst [vmem:[#allocation2 + $0x159] sm:$0x1] 0.0
      %1670 = vst [vmem:[#allocation2 + $0x169] sm:$0x1] 0.0
      %1671 = vst [vmem:[#allocation2 + $0x179] sm:$0x1] 0.0
      %1672 = vst [vmem:[#allocation2 + $0x189] sm:$0x1] 0.0
      %1673 = vst [vmem:[#allocation2 + $0x199] sm:$0x1] 0.0
      %1674 = vst [vmem:[#allocation2 + $0x1a9] sm:$0x1] 0.0
      %1675 = vst [vmem:[#allocation2 + $0x1b9] sm:$0x1] 0.0
      %1676 = vst [vmem:[#allocation2 + $0x1c9] sm:$0x1] 0.0
      %1677 = vst [vmem:[#allocation2 + $0x1d9] sm:$0x1] 0.0
      %s1678 = scalar_lea.vmem [#allocation2], 16
      %1679 = vst [vmem:[%s1678 + $0x1] sm:$0xff] %v1581
      %1680 = vst [vmem:[%s1678 + $0x11] sm:$0xff] %v1582
      %1681 = vst [vmem:[%s1678 + $0x21] sm:$0xff] %v1583
      %1682 = vst [vmem:[%s1678 + $0x31] sm:$0xff] %v1584
      %1683 = vst [vmem:[%s1678 + $0x41] sm:$0xff] %v1585
      %1684 = vst [vmem:[%s1678 + $0x51] sm:$0xff] %v1586
      %1685 = vst [vmem:[%s1678 + $0x61] sm:$0xff] %v1587
      %1686 = vst [vmem:[%s1678 + $0x71] sm:$0xff] %v1588
      %1687 = vst [vmem:[%s1678 + $0xa1] sm:$0xff] %v1589
      %1688 = vst [vmem:[%s1678 + $0xb1] sm:$0xff] %v1590
      %1689 = vst [vmem:[%s1678 + $0xc1] sm:$0xff] %v1591
      %1690 = vst [vmem:[%s1678 + $0xd1] sm:$0xff] %v1592
      %1691 = vst [vmem:[%s1678 + $0xe1] sm:$0xff] %v1593
      %1692 = vst [vmem:[%s1678 + $0xf1] sm:$0xff] %v1594
      %1693 = vst [vmem:[%s1678 + $0x101] sm:$0xff] %v1595
      %1694 = vst [vmem:[%s1678 + $0x111] sm:$0xff] %v1596
      %1695 = vst [vmem:[%s1678 + $0x141] sm:$0xff] %v1597
      %1696 = vst [vmem:[%s1678 + $0x151] sm:$0xff] %v1598
      %1697 = vst [vmem:[%s1678 + $0x161] sm:$0xff] %v1599
      %1698 = vst [vmem:[%s1678 + $0x171] sm:$0xff] %v1600
      %1699 = vst [vmem:[%s1678 + $0x181] sm:$0xff] %v1601
      %1700 = vst [vmem:[%s1678 + $0x191] sm:$0xff] %v1602
      %1701 = vst [vmem:[%s1678 + $0x1a1] sm:$0xff] %v1603
      %1702 = vst [vmem:[%s1678 + $0x1b1] sm:$0xff] %v1604
      %v1703 = vld [vmem:[#allocation2] sm:$0xff]
      %v1704 = vld [vmem:[#allocation2 + $0x10] sm:$0xff]
      %v1705 = vld [vmem:[#allocation2 + $0x20] sm:$0xff]
      %v1706 = vld [vmem:[#allocation2 + $0x30] sm:$0xff]
      %v1707 = vld [vmem:[#allocation2 + $0x40] sm:$0xff]
      %v1708 = vld [vmem:[#allocation2 + $0x50] sm:$0xff]
      %v1709 = vld [vmem:[#allocation2 + $0x60] sm:$0xff]
      %v1710 = vld [vmem:[#allocation2 + $0x70] sm:$0xff]
      %v1711 = vld [vmem:[#allocation2 + $0xa0] sm:$0xff]
      %v1712 = vld [vmem:[#allocation2 + $0xb0] sm:$0xff]
      %v1713 = vld [vmem:[#allocation2 + $0xc0] sm:$0xff]
      %v1714 = vld [vmem:[#allocation2 + $0xd0] sm:$0xff]
      %v1715 = vld [vmem:[#allocation2 + $0xe0] sm:$0xff]
      %v1716 = vld [vmem:[#allocation2 + $0xf0] sm:$0xff]
      %v1717 = vld [vmem:[#allocation2 + $0x100] sm:$0xff]
      %v1718 = vld [vmem:[#allocation2 + $0x110] sm:$0xff]
      %v1719 = vld [vmem:[#allocation2 + $0x140] sm:$0xff]
      %v1720 = vld [vmem:[#allocation2 + $0x150] sm:$0xff]
      %v1721 = vld [vmem:[#allocation2 + $0x160] sm:$0xff]
      %v1722 = vld [vmem:[#allocation2 + $0x170] sm:$0xff]
      %v1723 = vld [vmem:[#allocation2 + $0x180] sm:$0xff]
      %v1724 = vld [vmem:[#allocation2 + $0x190] sm:$0xff]
      %v1725 = vld [vmem:[#allocation2 + $0x1a0] sm:$0xff]
      %v1726 = vld [vmem:[#allocation2 + $0x1b0] sm:$0xff]
      %v1727 = vpack.c.bf16 %v1703, %v1703
      %v1728 = vpack.c.bf16 %v1704, %v1704
      %v1729 = vpack.c.bf16 %v1705, %v1705
      %v1730 = vpack.c.bf16 %v1706, %v1706
      %v1731 = vpack.c.bf16 %v1707, %v1707
      %v1732 = vpack.c.bf16 %v1708, %v1708
      %v1733 = vpack.c.bf16 %v1709, %v1709
      %v1734 = vpack.c.bf16 %v1710, %v1710
      %v1735 = vpack.c.bf16 %v1711, %v1711
      %v1736 = vpack.c.bf16 %v1712, %v1712
      %v1737 = vpack.c.bf16 %v1713, %v1713
      %v1738 = vpack.c.bf16 %v1714, %v1714
      %v1739 = vpack.c.bf16 %v1715, %v1715
      %v1740 = vpack.c.bf16 %v1716, %v1716
      %v1741 = vpack.c.bf16 %v1717, %v1717
      %v1742 = vpack.c.bf16 %v1718, %v1718
      %v1743 = vpack.c.bf16 %v1719, %v1719
      %v1744 = vpack.c.bf16 %v1720, %v1720
      %v1745 = vpack.c.bf16 %v1721, %v1721
      %v1746 = vpack.c.bf16 %v1722, %v1722
      %v1747 = vpack.c.bf16 %v1723, %v1723
      %v1748 = vpack.c.bf16 %v1724, %v1724
      %v1749 = vpack.c.bf16 %v1725, %v1725
      %v1750 = vpack.c.bf16 %v1726, %v1726
      %v1775 = vunpack.c.l.b16 %v1727
      %v1776 = vunpack.c.l.b16 %v1728
      %v1777 = vunpack.c.l.b16 %v1729
      %v1778 = vunpack.c.l.b16 %v1730
      %v1779 = vunpack.c.l.b16 %v1731
      %v1780 = vunpack.c.l.b16 %v1732
      %v1781 = vunpack.c.l.b16 %v1733
      %v1782 = vunpack.c.l.b16 %v1734
      %v1783 = vunpack.c.l.b16 %v1735
      %v1784 = vunpack.c.l.b16 %v1736
      %v1785 = vunpack.c.l.b16 %v1737
      %v1786 = vunpack.c.l.b16 %v1738
      %v1787 = vunpack.c.l.b16 %v1739
      %v1788 = vunpack.c.l.b16 %v1740
      %v1789 = vunpack.c.l.b16 %v1741
      %v1790 = vunpack.c.l.b16 %v1742
      %v1791 = vunpack.c.l.b16 %v1743
      %v1792 = vunpack.c.l.b16 %v1744
      %v1793 = vunpack.c.l.b16 %v1745
      %v1794 = vunpack.c.l.b16 %v1746
      %v1795 = vunpack.c.l.b16 %v1747
      %v1796 = vunpack.c.l.b16 %v1748
      %v1797 = vunpack.c.l.b16 %v1749
      %v1798 = vunpack.c.l.b16 %v1750
      %v1799 = vpack.c.b16 %v1776, %v1775
      %v1800 = vpack.c.b16 %v1778, %v1777
      %v1801 = vpack.c.b16 %v1780, %v1779
      %v1802 = vpack.c.b16 %v1782, %v1781
      %v1803 = vpack.c.b16 %v1784, %v1783
      %v1804 = vpack.c.b16 %v1786, %v1785
      %v1805 = vpack.c.b16 %v1788, %v1787
      %v1806 = vpack.c.b16 %v1790, %v1789
      %v1807 = vpack.c.b16 %v1792, %v1791
      %v1808 = vpack.c.b16 %v1794, %v1793
      %v1809 = vpack.c.b16 %v1796, %v1795
      %v1810 = vpack.c.b16 %v1798, %v1797
      %1823 = vst [vmem:[#allocation4] sm:$0xff] %v1799
      %1824 = vst [vmem:[#allocation4 + $0x48] sm:$0xff] %v1800
      %1825 = vst [vmem:[#allocation4 + $0x90] sm:$0xff] %v1801
      %1826 = vst [vmem:[#allocation4 + $0xd8] sm:$0xff] %v1802
      %1827 = vst [vmem:[#allocation4 + $0x120] sm:$0xff] %v1803
      %1828 = vst [vmem:[#allocation4 + $0x168] sm:$0xff] %v1804
      %1829 = vst [vmem:[#allocation4 + $0x1b0] sm:$0xff] %v1805
      %1830 = vst [vmem:[#allocation4 + $0x1f8] sm:$0xff] %v1806
      %1831 = vst [vmem:[#allocation4 + $0x240] sm:$0xff] %v1807
      %1832 = vst [vmem:[#allocation4 + $0x288] sm:$0xff] %v1808
      %1833 = vst [vmem:[#allocation4 + $0x2d0] sm:$0xff] %v1809
      %1834 = vst [vmem:[#allocation4 + $0x318] sm:$0xff] %v1810
      %v1835 = vld [vmem:[#allocation2 + $0x1] sm:$0xff]
      %v1836 = vld [vmem:[#allocation2 + $0x11] sm:$0xff]
      %v1837 = vld [vmem:[#allocation2 + $0x21] sm:$0xff]
      %v1838 = vld [vmem:[#allocation2 + $0x31] sm:$0xff]
      %v1839 = vld [vmem:[#allocation2 + $0x41] sm:$0xff]
      %v1840 = vld [vmem:[#allocation2 + $0x51] sm:$0xff]
      %v1841 = vld [vmem:[#allocation2 + $0x61] sm:$0xff]
      %v1842 = vld [vmem:[#allocation2 + $0x71] sm:$0xff]
      %v1843 = vld [vmem:[#allocation2 + $0xa1] sm:$0xff]
      %v1844 = vld [vmem:[#allocation2 + $0xb1] sm:$0xff]
      %v1845 = vld [vmem:[#allocation2 + $0xc1] sm:$0xff]
      %v1846 = vld [vmem:[#allocation2 + $0xd1] sm:$0xff]
      %v1847 = vld [vmem:[#allocation2 + $0xe1] sm:$0xff]
      %v1848 = vld [vmem:[#allocation2 + $0xf1] sm:$0xff]
      %v1849 = vld [vmem:[#allocation2 + $0x101] sm:$0xff]
      %v1850 = vld [vmem:[#allocation2 + $0x111] sm:$0xff]
      %v1851 = vld [vmem:[#allocation2 + $0x141] sm:$0xff]
      %v1852 = vld [vmem:[#allocation2 + $0x151] sm:$0xff]
      %v1853 = vld [vmem:[#allocation2 + $0x161] sm:$0xff]
      %v1854 = vld [vmem:[#allocation2 + $0x171] sm:$0xff]
      %v1855 = vld [vmem:[#allocation2 + $0x181] sm:$0xff]
      %v1856 = vld [vmem:[#allocation2 + $0x191] sm:$0xff]
      %v1857 = vld [vmem:[#allocation2 + $0x1a1] sm:$0xff]
      %v1858 = vld [vmem:[#allocation2 + $0x1b1] sm:$0xff]
      %v1859 = vpack.c.bf16 %v1835, %v1835
      %v1860 = vpack.c.bf16 %v1836, %v1836
      %v1861 = vpack.c.bf16 %v1837, %v1837
      %v1862 = vpack.c.bf16 %v1838, %v1838
      %v1863 = vpack.c.bf16 %v1839, %v1839
      %v1864 = vpack.c.bf16 %v1840, %v1840
      %v1865 = vpack.c.bf16 %v1841, %v1841
      %v1866 = vpack.c.bf16 %v1842, %v1842
      %v1867 = vpack.c.bf16 %v1843, %v1843
      %v1868 = vpack.c.bf16 %v1844, %v1844
      %v1869 = vpack.c.bf16 %v1845, %v1845
      %v1870 = vpack.c.bf16 %v1846, %v1846
      %v1871 = vpack.c.bf16 %v1847, %v1847
      %v1872 = vpack.c.bf16 %v1848, %v1848
      %v1873 = vpack.c.bf16 %v1849, %v1849
      %v1874 = vpack.c.bf16 %v1850, %v1850
      %v1875 = vpack.c.bf16 %v1851, %v1851
      %v1876 = vpack.c.bf16 %v1852, %v1852
      %v1877 = vpack.c.bf16 %v1853, %v1853
      %v1878 = vpack.c.bf16 %v1854, %v1854
      %v1879 = vpack.c.bf16 %v1855, %v1855
      %v1880 = vpack.c.bf16 %v1856, %v1856
      %v1881 = vpack.c.bf16 %v1857, %v1857
      %v1882 = vpack.c.bf16 %v1858, %v1858
      %v1907 = vunpack.c.l.b16 %v1859
      %v1908 = vunpack.c.l.b16 %v1860
      %v1909 = vunpack.c.l.b16 %v1861
      %v1910 = vunpack.c.l.b16 %v1862
      %v1911 = vunpack.c.l.b16 %v1863
      %v1912 = vunpack.c.l.b16 %v1864
      %v1913 = vunpack.c.l.b16 %v1865
      %v1914 = vunpack.c.l.b16 %v1866
      %v1915 = vunpack.c.l.b16 %v1867
      %v1916 = vunpack.c.l.b16 %v1868
      %v1917 = vunpack.c.l.b16 %v1869
      %v1918 = vunpack.c.l.b16 %v1870
      %v1919 = vunpack.c.l.b16 %v1871
      %v1920 = vunpack.c.l.b16 %v1872
      %v1921 = vunpack.c.l.b16 %v1873
      %v1922 = vunpack.c.l.b16 %v1874
      %v1923 = vunpack.c.l.b16 %v1875
      %v1924 = vunpack.c.l.b16 %v1876
      %v1925 = vunpack.c.l.b16 %v1877
      %v1926 = vunpack.c.l.b16 %v1878
      %v1927 = vunpack.c.l.b16 %v1879
      %v1928 = vunpack.c.l.b16 %v1880
      %v1929 = vunpack.c.l.b16 %v1881
      %v1930 = vunpack.c.l.b16 %v1882
      %v1931 = vpack.c.b16 %v1908, %v1907
      %v1932 = vpack.c.b16 %v1910, %v1909
      %v1933 = vpack.c.b16 %v1912, %v1911
      %v1934 = vpack.c.b16 %v1914, %v1913
      %v1935 = vpack.c.b16 %v1916, %v1915
      %v1936 = vpack.c.b16 %v1918, %v1917
      %v1937 = vpack.c.b16 %v1920, %v1919
      %v1938 = vpack.c.b16 %v1922, %v1921
      %v1939 = vpack.c.b16 %v1924, %v1923
      %v1940 = vpack.c.b16 %v1926, %v1925
      %v1941 = vpack.c.b16 %v1928, %v1927
      %v1942 = vpack.c.b16 %v1930, %v1929
      %1955 = vst [vmem:[#allocation4 + $0x8] sm:$0xff] %v1931
      %1956 = vst [vmem:[#allocation4 + $0x50] sm:$0xff] %v1932
      %1957 = vst [vmem:[#allocation4 + $0x98] sm:$0xff] %v1933
      %1958 = vst [vmem:[#allocation4 + $0xe0] sm:$0xff] %v1934
      %1959 = vst [vmem:[#allocation4 + $0x128] sm:$0xff] %v1935
      %1960 = vst [vmem:[#allocation4 + $0x170] sm:$0xff] %v1936
      %1961 = vst [vmem:[#allocation4 + $0x1b8] sm:$0xff] %v1937
      %1962 = vst [vmem:[#allocation4 + $0x200] sm:$0xff] %v1938
      %1963 = vst [vmem:[#allocation4 + $0x248] sm:$0xff] %v1939
      %1964 = vst [vmem:[#allocation4 + $0x290] sm:$0xff] %v1940
      %1965 = vst [vmem:[#allocation4 + $0x2d8] sm:$0xff] %v1941
      %1966 = vst [vmem:[#allocation4 + $0x320] sm:$0xff] %v1942
      %v1967 = vld [vmem:[#allocation2 + $0x2] sm:$0xff]
      %v1968 = vld [vmem:[#allocation2 + $0x12] sm:$0xff]
      %v1969 = vld [vmem:[#allocation2 + $0x22] sm:$0xff]
      %v1970 = vld [vmem:[#allocation2 + $0x32] sm:$0xff]
      %v1971 = vld [vmem:[#allocation2 + $0x42] sm:$0xff]
      %v1972 = vld [vmem:[#allocation2 + $0x52] sm:$0xff]
      %v1973 = vld [vmem:[#allocation2 + $0x62] sm:$0xff]
      %v1974 = vld [vmem:[#allocation2 + $0x72] sm:$0xff]
      %v1975 = vld [vmem:[#allocation2 + $0xa2] sm:$0xff]
      %v1976 = vld [vmem:[#allocation2 + $0xb2] sm:$0xff]
      %v1977 = vld [vmem:[#allocation2 + $0xc2] sm:$0xff]
      %v1978 = vld [vmem:[#allocation2 + $0xd2] sm:$0xff]
      %v1979 = vld [vmem:[#allocation2 + $0xe2] sm:$0xff]
      %v1980 = vld [vmem:[#allocation2 + $0xf2] sm:$0xff]
      %v1981 = vld [vmem:[#allocation2 + $0x102] sm:$0xff]
      %v1982 = vld [vmem:[#allocation2 + $0x112] sm:$0xff]
      %v1983 = vld [vmem:[#allocation2 + $0x142] sm:$0xff]
      %v1984 = vld [vmem:[#allocation2 + $0x152] sm:$0xff]
      %v1985 = vld [vmem:[#allocation2 + $0x162] sm:$0xff]
      %v1986 = vld [vmem:[#allocation2 + $0x172] sm:$0xff]
      %v1987 = vld [vmem:[#allocation2 + $0x182] sm:$0xff]
      %v1988 = vld [vmem:[#allocation2 + $0x192] sm:$0xff]
      %v1989 = vld [vmem:[#allocation2 + $0x1a2] sm:$0xff]
      %v1990 = vld [vmem:[#allocation2 + $0x1b2] sm:$0xff]
      %v1991 = vpack.c.bf16 %v1967, %v1967
      %v1992 = vpack.c.bf16 %v1968, %v1968
      %v1993 = vpack.c.bf16 %v1969, %v1969
      %v1994 = vpack.c.bf16 %v1970, %v1970
      %v1995 = vpack.c.bf16 %v1971, %v1971
      %v1996 = vpack.c.bf16 %v1972, %v1972
      %v1997 = vpack.c.bf16 %v1973, %v1973
      %v1998 = vpack.c.bf16 %v1974, %v1974
      %v1999 = vpack.c.bf16 %v1975, %v1975
      %v2000 = vpack.c.bf16 %v1976, %v1976
      %v2001 = vpack.c.bf16 %v1977, %v1977
      %v2002 = vpack.c.bf16 %v1978, %v1978
      %v2003 = vpack.c.bf16 %v1979, %v1979
      %v2004 = vpack.c.bf16 %v1980, %v1980
      %v2005 = vpack.c.bf16 %v1981, %v1981
      %v2006 = vpack.c.bf16 %v1982, %v1982
      %v2007 = vpack.c.bf16 %v1983, %v1983
      %v2008 = vpack.c.bf16 %v1984, %v1984
      %v2009 = vpack.c.bf16 %v1985, %v1985
      %v2010 = vpack.c.bf16 %v1986, %v1986
      %v2011 = vpack.c.bf16 %v1987, %v1987
      %v2012 = vpack.c.bf16 %v1988, %v1988
      %v2013 = vpack.c.bf16 %v1989, %v1989
      %v2014 = vpack.c.bf16 %v1990, %v1990
      %v2039 = vunpack.c.l.b16 %v1991
      %v2040 = vunpack.c.l.b16 %v1992
      %v2041 = vunpack.c.l.b16 %v1993
      %v2042 = vunpack.c.l.b16 %v1994
      %v2043 = vunpack.c.l.b16 %v1995
      %v2044 = vunpack.c.l.b16 %v1996
      %v2045 = vunpack.c.l.b16 %v1997
      %v2046 = vunpack.c.l.b16 %v1998
      %v2047 = vunpack.c.l.b16 %v1999
      %v2048 = vunpack.c.l.b16 %v2000
      %v2049 = vunpack.c.l.b16 %v2001
      %v2050 = vunpack.c.l.b16 %v2002
      %v2051 = vunpack.c.l.b16 %v2003
      %v2052 = vunpack.c.l.b16 %v2004
      %v2053 = vunpack.c.l.b16 %v2005
      %v2054 = vunpack.c.l.b16 %v2006
      %v2055 = vunpack.c.l.b16 %v2007
      %v2056 = vunpack.c.l.b16 %v2008
      %v2057 = vunpack.c.l.b16 %v2009
      %v2058 = vunpack.c.l.b16 %v2010
      %v2059 = vunpack.c.l.b16 %v2011
      %v2060 = vunpack.c.l.b16 %v2012
      %v2061 = vunpack.c.l.b16 %v2013
      %v2062 = vunpack.c.l.b16 %v2014
      %v2063 = vpack.c.b16 %v2040, %v2039
      %v2064 = vpack.c.b16 %v2042, %v2041
      %v2065 = vpack.c.b16 %v2044, %v2043
      %v2066 = vpack.c.b16 %v2046, %v2045
      %v2067 = vpack.c.b16 %v2048, %v2047
      %v2068 = vpack.c.b16 %v2050, %v2049
      %v2069 = vpack.c.b16 %v2052, %v2051
      %v2070 = vpack.c.b16 %v2054, %v2053
      %v2071 = vpack.c.b16 %v2056, %v2055
      %v2072 = vpack.c.b16 %v2058, %v2057
      %v2073 = vpack.c.b16 %v2060, %v2059
      %v2074 = vpack.c.b16 %v2062, %v2061
      %2087 = vst [vmem:[#allocation4 + $0x10] sm:$0xff] %v2063
      %2088 = vst [vmem:[#allocation4 + $0x58] sm:$0xff] %v2064
      %2089 = vst [vmem:[#allocation4 + $0xa0] sm:$0xff] %v2065
      %2090 = vst [vmem:[#allocation4 + $0xe8] sm:$0xff] %v2066
      %2091 = vst [vmem:[#allocation4 + $0x130] sm:$0xff] %v2067
      %2092 = vst [vmem:[#allocation4 + $0x178] sm:$0xff] %v2068
      %2093 = vst [vmem:[#allocation4 + $0x1c0] sm:$0xff] %v2069
      %2094 = vst [vmem:[#allocation4 + $0x208] sm:$0xff] %v2070
      %2095 = vst [vmem:[#allocation4 + $0x250] sm:$0xff] %v2071
      %2096 = vst [vmem:[#allocation4 + $0x298] sm:$0xff] %v2072
      %2097 = vst [vmem:[#allocation4 + $0x2e0] sm:$0xff] %v2073
      %2098 = vst [vmem:[#allocation4 + $0x328] sm:$0xff] %v2074
      %v2099 = vld [vmem:[%s1678] sm:$0xff]
      %v2100 = vld [vmem:[%s1678 + $0x10] sm:$0xff]
      %v2101 = vld [vmem:[%s1678 + $0x20] sm:$0xff]
      %v2102 = vld [vmem:[%s1678 + $0x30] sm:$0xff]
      %v2103 = vld [vmem:[%s1678 + $0x40] sm:$0xff]
      %v2104 = vld [vmem:[%s1678 + $0x50] sm:$0xff]
      %v2105 = vld [vmem:[%s1678 + $0x60] sm:$0xff]
      %v2106 = vld [vmem:[%s1678 + $0x70] sm:$0xff]
      %v2107 = vld [vmem:[%s1678 + $0xa0] sm:$0xff]
      %v2108 = vld [vmem:[%s1678 + $0xb0] sm:$0xff]
      %v2109 = vld [vmem:[%s1678 + $0xc0] sm:$0xff]
      %v2110 = vld [vmem:[%s1678 + $0xd0] sm:$0xff]
      %v2111 = vld [vmem:[%s1678 + $0xe0] sm:$0xff]
      %v2112 = vld [vmem:[%s1678 + $0xf0] sm:$0xff]
      %v2113 = vld [vmem:[%s1678 + $0x100] sm:$0xff]
      %v2114 = vld [vmem:[%s1678 + $0x110] sm:$0xff]
      %v2115 = vld [vmem:[%s1678 + $0x140] sm:$0xff]
      %v2116 = vld [vmem:[%s1678 + $0x150] sm:$0xff]
      %v2117 = vld [vmem:[%s1678 + $0x160] sm:$0xff]
      %v2118 = vld [vmem:[%s1678 + $0x170] sm:$0xff]
      %v2119 = vld [vmem:[%s1678 + $0x180] sm:$0xff]
      %v2120 = vld [vmem:[%s1678 + $0x190] sm:$0xff]
      %v2121 = vld [vmem:[%s1678 + $0x1a0] sm:$0xff]
      %v2122 = vld [vmem:[%s1678 + $0x1b0] sm:$0xff]
      %v2123 = vpack.c.bf16 %v2099, %v2099
      %v2124 = vpack.c.bf16 %v2100, %v2100
      %v2125 = vpack.c.bf16 %v2101, %v2101
      %v2126 = vpack.c.bf16 %v2102, %v2102
      %v2127 = vpack.c.bf16 %v2103, %v2103
      %v2128 = vpack.c.bf16 %v2104, %v2104
      %v2129 = vpack.c.bf16 %v2105, %v2105
      %v2130 = vpack.c.bf16 %v2106, %v2106
      %v2131 = vpack.c.bf16 %v2107, %v2107
      %v2132 = vpack.c.bf16 %v2108, %v2108
      %v2133 = vpack.c.bf16 %v2109, %v2109
      %v2134 = vpack.c.bf16 %v2110, %v2110
      %v2135 = vpack.c.bf16 %v2111, %v2111
      %v2136 = vpack.c.bf16 %v2112, %v2112
      %v2137 = vpack.c.bf16 %v2113, %v2113
      %v2138 = vpack.c.bf16 %v2114, %v2114
      %v2139 = vpack.c.bf16 %v2115, %v2115
      %v2140 = vpack.c.bf16 %v2116, %v2116
      %v2141 = vpack.c.bf16 %v2117, %v2117
      %v2142 = vpack.c.bf16 %v2118, %v2118
      %v2143 = vpack.c.bf16 %v2119, %v2119
      %v2144 = vpack.c.bf16 %v2120, %v2120
      %v2145 = vpack.c.bf16 %v2121, %v2121
      %v2146 = vpack.c.bf16 %v2122, %v2122
      %v2171 = vunpack.c.l.b16 %v2123
      %v2172 = vunpack.c.l.b16 %v2124
      %v2173 = vunpack.c.l.b16 %v2125
      %v2174 = vunpack.c.l.b16 %v2126
      %v2175 = vunpack.c.l.b16 %v2127
      %v2176 = vunpack.c.l.b16 %v2128
      %v2177 = vunpack.c.l.b16 %v2129
      %v2178 = vunpack.c.l.b16 %v2130
      %v2179 = vunpack.c.l.b16 %v2131
      %v2180 = vunpack.c.l.b16 %v2132
      %v2181 = vunpack.c.l.b16 %v2133
      %v2182 = vunpack.c.l.b16 %v2134
      %v2183 = vunpack.c.l.b16 %v2135
      %v2184 = vunpack.c.l.b16 %v2136
      %v2185 = vunpack.c.l.b16 %v2137
      %v2186 = vunpack.c.l.b16 %v2138
      %v2187 = vunpack.c.l.b16 %v2139
      %v2188 = vunpack.c.l.b16 %v2140
      %v2189 = vunpack.c.l.b16 %v2141
      %v2190 = vunpack.c.l.b16 %v2142
      %v2191 = vunpack.c.l.b16 %v2143
      %v2192 = vunpack.c.l.b16 %v2144
      %v2193 = vunpack.c.l.b16 %v2145
      %v2194 = vunpack.c.l.b16 %v2146
      %v2195 = vpack.c.b16 %v2172, %v2171
      %v2196 = vpack.c.b16 %v2174, %v2173
      %v2197 = vpack.c.b16 %v2176, %v2175
      %v2198 = vpack.c.b16 %v2178, %v2177
      %v2199 = vpack.c.b16 %v2180, %v2179
      %v2200 = vpack.c.b16 %v2182, %v2181
      %v2201 = vpack.c.b16 %v2184, %v2183
      %v2202 = vpack.c.b16 %v2186, %v2185
      %v2203 = vpack.c.b16 %v2188, %v2187
      %v2204 = vpack.c.b16 %v2190, %v2189
      %v2205 = vpack.c.b16 %v2192, %v2191
      %v2206 = vpack.c.b16 %v2194, %v2193
      %2219 = vst [vmem:[#allocation4 + $0x18] sm:$0xff] %v2195
      %2220 = vst [vmem:[#allocation4 + $0x60] sm:$0xff] %v2196
      %2221 = vst [vmem:[#allocation4 + $0xa8] sm:$0xff] %v2197
      %2222 = vst [vmem:[#allocation4 + $0xf0] sm:$0xff] %v2198
      %2223 = vst [vmem:[#allocation4 + $0x138] sm:$0xff] %v2199
      %2224 = vst [vmem:[#allocation4 + $0x180] sm:$0xff] %v2200
      %2225 = vst [vmem:[#allocation4 + $0x1c8] sm:$0xff] %v2201
      %2226 = vst [vmem:[#allocation4 + $0x210] sm:$0xff] %v2202
      %2227 = vst [vmem:[#allocation4 + $0x258] sm:$0xff] %v2203
      %2228 = vst [vmem:[#allocation4 + $0x2a0] sm:$0xff] %v2204
      %2229 = vst [vmem:[#allocation4 + $0x2e8] sm:$0xff] %v2205
      %2230 = vst [vmem:[#allocation4 + $0x330] sm:$0xff] %v2206
      %v2231 = vld [vmem:[%s1678 + $0x1] sm:$0xff]
      %v2232 = vld [vmem:[%s1678 + $0x11] sm:$0xff]
      %v2233 = vld [vmem:[%s1678 + $0x21] sm:$0xff]
      %v2234 = vld [vmem:[%s1678 + $0x31] sm:$0xff]
      %v2235 = vld [vmem:[%s1678 + $0x41] sm:$0xff]
      %v2236 = vld [vmem:[%s1678 + $0x51] sm:$0xff]
      %v2237 = vld [vmem:[%s1678 + $0x61] sm:$0xff]
      %v2238 = vld [vmem:[%s1678 + $0x71] sm:$0xff]
      %v2239 = vld [vmem:[%s1678 + $0xa1] sm:$0xff]
      %v2240 = vld [vmem:[%s1678 + $0xb1] sm:$0xff]
      %v2241 = vld [vmem:[%s1678 + $0xc1] sm:$0xff]
      %v2242 = vld [vmem:[%s1678 + $0xd1] sm:$0xff]
      %v2243 = vld [vmem:[%s1678 + $0xe1] sm:$0xff]
      %v2244 = vld [vmem:[%s1678 + $0xf1] sm:$0xff]
      %v2245 = vld [vmem:[%s1678 + $0x101] sm:$0xff]
      %v2246 = vld [vmem:[%s1678 + $0x111] sm:$0xff]
      %v2247 = vld [vmem:[%s1678 + $0x141] sm:$0xff]
      %v2248 = vld [vmem:[%s1678 + $0x151] sm:$0xff]
      %v2249 = vld [vmem:[%s1678 + $0x161] sm:$0xff]
      %v2250 = vld [vmem:[%s1678 + $0x171] sm:$0xff]
      %v2251 = vld [vmem:[%s1678 + $0x181] sm:$0xff]
      %v2252 = vld [vmem:[%s1678 + $0x191] sm:$0xff]
      %v2253 = vld [vmem:[%s1678 + $0x1a1] sm:$0xff]
      %v2254 = vld [vmem:[%s1678 + $0x1b1] sm:$0xff]
      %v2255 = vpack.c.bf16 %v2231, %v2231
      %v2256 = vpack.c.bf16 %v2232, %v2232
      %v2257 = vpack.c.bf16 %v2233, %v2233
      %v2258 = vpack.c.bf16 %v2234, %v2234
      %v2259 = vpack.c.bf16 %v2235, %v2235
      %v2260 = vpack.c.bf16 %v2236, %v2236
      %v2261 = vpack.c.bf16 %v2237, %v2237
      %v2262 = vpack.c.bf16 %v2238, %v2238
      %v2263 = vpack.c.bf16 %v2239, %v2239
      %v2264 = vpack.c.bf16 %v2240, %v2240
      %v2265 = vpack.c.bf16 %v2241, %v2241
      %v2266 = vpack.c.bf16 %v2242, %v2242
      %v2267 = vpack.c.bf16 %v2243, %v2243
      %v2268 = vpack.c.bf16 %v2244, %v2244
      %v2269 = vpack.c.bf16 %v2245, %v2245
      %v2270 = vpack.c.bf16 %v2246, %v2246
      %v2271 = vpack.c.bf16 %v2247, %v2247
      %v2272 = vpack.c.bf16 %v2248, %v2248
      %v2273 = vpack.c.bf16 %v2249, %v2249
      %v2274 = vpack.c.bf16 %v2250, %v2250
      %v2275 = vpack.c.bf16 %v2251, %v2251
      %v2276 = vpack.c.bf16 %v2252, %v2252
      %v2277 = vpack.c.bf16 %v2253, %v2253
      %v2278 = vpack.c.bf16 %v2254, %v2254
      %v2303 = vunpack.c.l.b16 %v2255
      %v2304 = vunpack.c.l.b16 %v2256
      %v2305 = vunpack.c.l.b16 %v2257
      %v2306 = vunpack.c.l.b16 %v2258
      %v2307 = vunpack.c.l.b16 %v2259
      %v2308 = vunpack.c.l.b16 %v2260
      %v2309 = vunpack.c.l.b16 %v2261
      %v2310 = vunpack.c.l.b16 %v2262
      %v2311 = vunpack.c.l.b16 %v2263
      %v2312 = vunpack.c.l.b16 %v2264
      %v2313 = vunpack.c.l.b16 %v2265
      %v2314 = vunpack.c.l.b16 %v2266
      %v2315 = vunpack.c.l.b16 %v2267
      %v2316 = vunpack.c.l.b16 %v2268
      %v2317 = vunpack.c.l.b16 %v2269
      %v2318 = vunpack.c.l.b16 %v2270
      %v2319 = vunpack.c.l.b16 %v2271
      %v2320 = vunpack.c.l.b16 %v2272
      %v2321 = vunpack.c.l.b16 %v2273
      %v2322 = vunpack.c.l.b16 %v2274
      %v2323 = vunpack.c.l.b16 %v2275
      %v2324 = vunpack.c.l.b16 %v2276
      %v2325 = vunpack.c.l.b16 %v2277
      %v2326 = vunpack.c.l.b16 %v2278
      %v2327 = vpack.c.b16 %v2304, %v2303
      %v2328 = vpack.c.b16 %v2306, %v2305
      %v2329 = vpack.c.b16 %v2308, %v2307
      %v2330 = vpack.c.b16 %v2310, %v2309
      %v2331 = vpack.c.b16 %v2312, %v2311
      %v2332 = vpack.c.b16 %v2314, %v2313
      %v2333 = vpack.c.b16 %v2316, %v2315
      %v2334 = vpack.c.b16 %v2318, %v2317
      %v2335 = vpack.c.b16 %v2320, %v2319
      %v2336 = vpack.c.b16 %v2322, %v2321
      %v2337 = vpack.c.b16 %v2324, %v2323
      %v2338 = vpack.c.b16 %v2326, %v2325
      %2351 = vst [vmem:[#allocation4 + $0x20] sm:$0xff] %v2327
      %2352 = vst [vmem:[#allocation4 + $0x68] sm:$0xff] %v2328
      %2353 = vst [vmem:[#allocation4 + $0xb0] sm:$0xff] %v2329
      %2354 = vst [vmem:[#allocation4 + $0xf8] sm:$0xff] %v2330
      %2355 = vst [vmem:[#allocation4 + $0x140] sm:$0xff] %v2331
      %2356 = vst [vmem:[#allocation4 + $0x188] sm:$0xff] %v2332
      %2357 = vst [vmem:[#allocation4 + $0x1d0] sm:$0xff] %v2333
      %2358 = vst [vmem:[#allocation4 + $0x218] sm:$0xff] %v2334
      %2359 = vst [vmem:[#allocation4 + $0x260] sm:$0xff] %v2335
      %2360 = vst [vmem:[#allocation4 + $0x2a8] sm:$0xff] %v2336
      %2361 = vst [vmem:[#allocation4 + $0x2f0] sm:$0xff] %v2337
      %2362 = vst [vmem:[#allocation4 + $0x338] sm:$0xff] %v2338
      %v2363 = vld [vmem:[%s1678 + $0x2] sm:$0xff]
      %v2364 = vld [vmem:[%s1678 + $0x12] sm:$0xff]
      %v2365 = vld [vmem:[%s1678 + $0x22] sm:$0xff]
      %v2366 = vld [vmem:[%s1678 + $0x32] sm:$0xff]
      %v2367 = vld [vmem:[%s1678 + $0x42] sm:$0xff]
      %v2368 = vld [vmem:[%s1678 + $0x52] sm:$0xff]
      %v2369 = vld [vmem:[%s1678 + $0x62] sm:$0xff]
      %v2370 = vld [vmem:[%s1678 + $0x72] sm:$0xff]
      %v2371 = vld [vmem:[%s1678 + $0xa2] sm:$0xff]
      %v2372 = vld [vmem:[%s1678 + $0xb2] sm:$0xff]
      %v2373 = vld [vmem:[%s1678 + $0xc2] sm:$0xff]
      %v2374 = vld [vmem:[%s1678 + $0xd2] sm:$0xff]
      %v2375 = vld [vmem:[%s1678 + $0xe2] sm:$0xff]
      %v2376 = vld [vmem:[%s1678 + $0xf2] sm:$0xff]
      %v2377 = vld [vmem:[%s1678 + $0x102] sm:$0xff]
      %v2378 = vld [vmem:[%s1678 + $0x112] sm:$0xff]
      %v2379 = vld [vmem:[%s1678 + $0x142] sm:$0xff]
      %v2380 = vld [vmem:[%s1678 + $0x152] sm:$0xff]
      %v2381 = vld [vmem:[%s1678 + $0x162] sm:$0xff]
      %v2382 = vld [vmem:[%s1678 + $0x172] sm:$0xff]
      %v2383 = vld [vmem:[%s1678 + $0x182] sm:$0xff]
      %v2384 = vld [vmem:[%s1678 + $0x192] sm:$0xff]
      %v2385 = vld [vmem:[%s1678 + $0x1a2] sm:$0xff]
      %v2386 = vld [vmem:[%s1678 + $0x1b2] sm:$0xff]
      %v2387 = vpack.c.bf16 %v2363, %v2363
      %v2388 = vpack.c.bf16 %v2364, %v2364
      %v2389 = vpack.c.bf16 %v2365, %v2365
      %v2390 = vpack.c.bf16 %v2366, %v2366
      %v2391 = vpack.c.bf16 %v2367, %v2367
      %v2392 = vpack.c.bf16 %v2368, %v2368
      %v2393 = vpack.c.bf16 %v2369, %v2369
      %v2394 = vpack.c.bf16 %v2370, %v2370
      %v2395 = vpack.c.bf16 %v2371, %v2371
      %v2396 = vpack.c.bf16 %v2372, %v2372
      %v2397 = vpack.c.bf16 %v2373, %v2373
      %v2398 = vpack.c.bf16 %v2374, %v2374
      %v2399 = vpack.c.bf16 %v2375, %v2375
      %v2400 = vpack.c.bf16 %v2376, %v2376
      %v2401 = vpack.c.bf16 %v2377, %v2377
      %v2402 = vpack.c.bf16 %v2378, %v2378
      %v2403 = vpack.c.bf16 %v2379, %v2379
      %v2404 = vpack.c.bf16 %v2380, %v2380
      %v2405 = vpack.c.bf16 %v2381, %v2381
      %v2406 = vpack.c.bf16 %v2382, %v2382
      %v2407 = vpack.c.bf16 %v2383, %v2383
      %v2408 = vpack.c.bf16 %v2384, %v2384
      %v2409 = vpack.c.bf16 %v2385, %v2385
      %v2410 = vpack.c.bf16 %v2386, %v2386
      %v2435 = vunpack.c.l.b16 %v2387
      %v2436 = vunpack.c.l.b16 %v2388
      %v2437 = vunpack.c.l.b16 %v2389
      %v2438 = vunpack.c.l.b16 %v2390
      %v2439 = vunpack.c.l.b16 %v2391
      %v2440 = vunpack.c.l.b16 %v2392
      %v2441 = vunpack.c.l.b16 %v2393
      %v2442 = vunpack.c.l.b16 %v2394
      %v2443 = vunpack.c.l.b16 %v2395
      %v2444 = vunpack.c.l.b16 %v2396
      %v2445 = vunpack.c.l.b16 %v2397
      %v2446 = vunpack.c.l.b16 %v2398
      %v2447 = vunpack.c.l.b16 %v2399
      %v2448 = vunpack.c.l.b16 %v2400
      %v2449 = vunpack.c.l.b16 %v2401
      %v2450 = vunpack.c.l.b16 %v2402
      %v2451 = vunpack.c.l.b16 %v2403
      %v2452 = vunpack.c.l.b16 %v2404
      %v2453 = vunpack.c.l.b16 %v2405
      %v2454 = vunpack.c.l.b16 %v2406
      %v2455 = vunpack.c.l.b16 %v2407
      %v2456 = vunpack.c.l.b16 %v2408
      %v2457 = vunpack.c.l.b16 %v2409
      %v2458 = vunpack.c.l.b16 %v2410
      %v2459 = vpack.c.b16 %v2436, %v2435
      %v2460 = vpack.c.b16 %v2438, %v2437
      %v2461 = vpack.c.b16 %v2440, %v2439
      %v2462 = vpack.c.b16 %v2442, %v2441
      %v2463 = vpack.c.b16 %v2444, %v2443
      %v2464 = vpack.c.b16 %v2446, %v2445
      %v2465 = vpack.c.b16 %v2448, %v2447
      %v2466 = vpack.c.b16 %v2450, %v2449
      %v2467 = vpack.c.b16 %v2452, %v2451
      %v2468 = vpack.c.b16 %v2454, %v2453
      %v2469 = vpack.c.b16 %v2456, %v2455
      %v2470 = vpack.c.b16 %v2458, %v2457
      %2483 = vst [vmem:[#allocation4 + $0x28] sm:$0xff] %v2459
      %2484 = vst [vmem:[#allocation4 + $0x70] sm:$0xff] %v2460
      %2485 = vst [vmem:[#allocation4 + $0xb8] sm:$0xff] %v2461
      %2486 = vst [vmem:[#allocation4 + $0x100] sm:$0xff] %v2462
      %2487 = vst [vmem:[#allocation4 + $0x148] sm:$0xff] %v2463
      %2488 = vst [vmem:[#allocation4 + $0x190] sm:$0xff] %v2464
      %2489 = vst [vmem:[#allocation4 + $0x1d8] sm:$0xff] %v2465
      %2490 = vst [vmem:[#allocation4 + $0x220] sm:$0xff] %v2466
      %2491 = vst [vmem:[#allocation4 + $0x268] sm:$0xff] %v2467
      %2492 = vst [vmem:[#allocation4 + $0x2b0] sm:$0xff] %v2468
      %2493 = vst [vmem:[#allocation4 + $0x2f8] sm:$0xff] %v2469
      %2494 = vst [vmem:[#allocation4 + $0x340] sm:$0xff] %v2470
      %s2495 = scalar_lea.vmem [#allocation2], 32
      %v2496 = vld [vmem:[%s2495] sm:$0xff]
      %v2497 = vld [vmem:[%s2495 + $0x10] sm:$0xff]
      %v2498 = vld [vmem:[%s2495 + $0x20] sm:$0xff]
      %v2499 = vld [vmem:[%s2495 + $0x30] sm:$0xff]
      %v2500 = vld [vmem:[%s2495 + $0x40] sm:$0xff]
      %v2501 = vld [vmem:[%s2495 + $0x50] sm:$0xff]
      %v2502 = vld [vmem:[%s2495 + $0x60] sm:$0xff]
      %v2503 = vld [vmem:[%s2495 + $0x70] sm:$0xff]
      %v2504 = vld [vmem:[%s2495 + $0xa0] sm:$0xff]
      %v2505 = vld [vmem:[%s2495 + $0xb0] sm:$0xff]
      %v2506 = vld [vmem:[%s2495 + $0xc0] sm:$0xff]
      %v2507 = vld [vmem:[%s2495 + $0xd0] sm:$0xff]
      %v2508 = vld [vmem:[%s2495 + $0xe0] sm:$0xff]
      %v2509 = vld [vmem:[%s2495 + $0xf0] sm:$0xff]
      %v2510 = vld [vmem:[%s2495 + $0x100] sm:$0xff]
      %v2511 = vld [vmem:[%s2495 + $0x110] sm:$0xff]
      %v2512 = vld [vmem:[%s2495 + $0x140] sm:$0xff]
      %v2513 = vld [vmem:[%s2495 + $0x150] sm:$0xff]
      %v2514 = vld [vmem:[%s2495 + $0x160] sm:$0xff]
      %v2515 = vld [vmem:[%s2495 + $0x170] sm:$0xff]
      %v2516 = vld [vmem:[%s2495 + $0x180] sm:$0xff]
      %v2517 = vld [vmem:[%s2495 + $0x190] sm:$0xff]
      %v2518 = vld [vmem:[%s2495 + $0x1a0] sm:$0xff]
      %v2519 = vld [vmem:[%s2495 + $0x1b0] sm:$0xff]
      %v2520 = vpack.c.bf16 %v2496, %v2496
      %v2521 = vpack.c.bf16 %v2497, %v2497
      %v2522 = vpack.c.bf16 %v2498, %v2498
      %v2523 = vpack.c.bf16 %v2499, %v2499
      %v2524 = vpack.c.bf16 %v2500, %v2500
      %v2525 = vpack.c.bf16 %v2501, %v2501
      %v2526 = vpack.c.bf16 %v2502, %v2502
      %v2527 = vpack.c.bf16 %v2503, %v2503
      %v2528 = vpack.c.bf16 %v2504, %v2504
      %v2529 = vpack.c.bf16 %v2505, %v2505
      %v2530 = vpack.c.bf16 %v2506, %v2506
      %v2531 = vpack.c.bf16 %v2507, %v2507
      %v2532 = vpack.c.bf16 %v2508, %v2508
      %v2533 = vpack.c.bf16 %v2509, %v2509
      %v2534 = vpack.c.bf16 %v2510, %v2510
      %v2535 = vpack.c.bf16 %v2511, %v2511
      %v2536 = vpack.c.bf16 %v2512, %v2512
      %v2537 = vpack.c.bf16 %v2513, %v2513
      %v2538 = vpack.c.bf16 %v2514, %v2514
      %v2539 = vpack.c.bf16 %v2515, %v2515
      %v2540 = vpack.c.bf16 %v2516, %v2516
      %v2541 = vpack.c.bf16 %v2517, %v2517
      %v2542 = vpack.c.bf16 %v2518, %v2518
      %v2543 = vpack.c.bf16 %v2519, %v2519
      %v2568 = vunpack.c.l.b16 %v2520
      %v2569 = vunpack.c.l.b16 %v2521
      %v2570 = vunpack.c.l.b16 %v2522
      %v2571 = vunpack.c.l.b16 %v2523
      %v2572 = vunpack.c.l.b16 %v2524
      %v2573 = vunpack.c.l.b16 %v2525
      %v2574 = vunpack.c.l.b16 %v2526
      %v2575 = vunpack.c.l.b16 %v2527
      %v2576 = vunpack.c.l.b16 %v2528
      %v2577 = vunpack.c.l.b16 %v2529
      %v2578 = vunpack.c.l.b16 %v2530
      %v2579 = vunpack.c.l.b16 %v2531
      %v2580 = vunpack.c.l.b16 %v2532
      %v2581 = vunpack.c.l.b16 %v2533
      %v2582 = vunpack.c.l.b16 %v2534
      %v2583 = vunpack.c.l.b16 %v2535
      %v2584 = vunpack.c.l.b16 %v2536
      %v2585 = vunpack.c.l.b16 %v2537
      %v2586 = vunpack.c.l.b16 %v2538
      %v2587 = vunpack.c.l.b16 %v2539
      %v2588 = vunpack.c.l.b16 %v2540
      %v2589 = vunpack.c.l.b16 %v2541
      %v2590 = vunpack.c.l.b16 %v2542
      %v2591 = vunpack.c.l.b16 %v2543
      %v2592 = vpack.c.b16 %v2569, %v2568
      %v2593 = vpack.c.b16 %v2571, %v2570
      %v2594 = vpack.c.b16 %v2573, %v2572
      %v2595 = vpack.c.b16 %v2575, %v2574
      %v2596 = vpack.c.b16 %v2577, %v2576
      %v2597 = vpack.c.b16 %v2579, %v2578
      %v2598 = vpack.c.b16 %v2581, %v2580
      %v2599 = vpack.c.b16 %v2583, %v2582
      %v2600 = vpack.c.b16 %v2585, %v2584
      %v2601 = vpack.c.b16 %v2587, %v2586
      %v2602 = vpack.c.b16 %v2589, %v2588
      %v2603 = vpack.c.b16 %v2591, %v2590
      %2616 = vst [vmem:[#allocation4 + $0x30] sm:$0xff] %v2592
      %2617 = vst [vmem:[#allocation4 + $0x78] sm:$0xff] %v2593
      %2618 = vst [vmem:[#allocation4 + $0xc0] sm:$0xff] %v2594
      %2619 = vst [vmem:[#allocation4 + $0x108] sm:$0xff] %v2595
      %2620 = vst [vmem:[#allocation4 + $0x150] sm:$0xff] %v2596
      %2621 = vst [vmem:[#allocation4 + $0x198] sm:$0xff] %v2597
      %2622 = vst [vmem:[#allocation4 + $0x1e0] sm:$0xff] %v2598
      %2623 = vst [vmem:[#allocation4 + $0x228] sm:$0xff] %v2599
      %2624 = vst [vmem:[#allocation4 + $0x270] sm:$0xff] %v2600
      %2625 = vst [vmem:[#allocation4 + $0x2b8] sm:$0xff] %v2601
      %2626 = vst [vmem:[#allocation4 + $0x300] sm:$0xff] %v2602
      %2627 = vst [vmem:[#allocation4 + $0x348] sm:$0xff] %v2603
      %v2628 = vld [vmem:[%s2495 + $0x1] sm:$0xff]
      %v2629 = vld [vmem:[%s2495 + $0x11] sm:$0xff]
      %v2630 = vld [vmem:[%s2495 + $0x21] sm:$0xff]
      %v2631 = vld [vmem:[%s2495 + $0x31] sm:$0xff]
      %v2632 = vld [vmem:[%s2495 + $0x41] sm:$0xff]
      %v2633 = vld [vmem:[%s2495 + $0x51] sm:$0xff]
      %v2634 = vld [vmem:[%s2495 + $0x61] sm:$0xff]
      %v2635 = vld [vmem:[%s2495 + $0x71] sm:$0xff]
      %v2636 = vld [vmem:[%s2495 + $0xa1] sm:$0xff]
      %v2637 = vld [vmem:[%s2495 + $0xb1] sm:$0xff]
      %v2638 = vld [vmem:[%s2495 + $0xc1] sm:$0xff]
      %v2639 = vld [vmem:[%s2495 + $0xd1] sm:$0xff]
      %v2640 = vld [vmem:[%s2495 + $0xe1] sm:$0xff]
      %v2641 = vld [vmem:[%s2495 + $0xf1] sm:$0xff]
      %v2642 = vld [vmem:[%s2495 + $0x101] sm:$0xff]
      %v2643 = vld [vmem:[%s2495 + $0x111] sm:$0xff]
      %v2644 = vld [vmem:[%s2495 + $0x141] sm:$0xff]
      %v2645 = vld [vmem:[%s2495 + $0x151] sm:$0xff]
      %v2646 = vld [vmem:[%s2495 + $0x161] sm:$0xff]
      %v2647 = vld [vmem:[%s2495 + $0x171] sm:$0xff]
      %v2648 = vld [vmem:[%s2495 + $0x181] sm:$0xff]
      %v2649 = vld [vmem:[%s2495 + $0x191] sm:$0xff]
      %v2650 = vld [vmem:[%s2495 + $0x1a1] sm:$0xff]
      %v2651 = vld [vmem:[%s2495 + $0x1b1] sm:$0xff]
      %v2652 = vpack.c.bf16 %v2628, %v2628
      %v2653 = vpack.c.bf16 %v2629, %v2629
      %v2654 = vpack.c.bf16 %v2630, %v2630
      %v2655 = vpack.c.bf16 %v2631, %v2631
      %v2656 = vpack.c.bf16 %v2632, %v2632
      %v2657 = vpack.c.bf16 %v2633, %v2633
      %v2658 = vpack.c.bf16 %v2634, %v2634
      %v2659 = vpack.c.bf16 %v2635, %v2635
      %v2660 = vpack.c.bf16 %v2636, %v2636
      %v2661 = vpack.c.bf16 %v2637, %v2637
      %v2662 = vpack.c.bf16 %v2638, %v2638
      %v2663 = vpack.c.bf16 %v2639, %v2639
      %v2664 = vpack.c.bf16 %v2640, %v2640
      %v2665 = vpack.c.bf16 %v2641, %v2641
      %v2666 = vpack.c.bf16 %v2642, %v2642
      %v2667 = vpack.c.bf16 %v2643, %v2643
      %v2668 = vpack.c.bf16 %v2644, %v2644
      %v2669 = vpack.c.bf16 %v2645, %v2645
      %v2670 = vpack.c.bf16 %v2646, %v2646
      %v2671 = vpack.c.bf16 %v2647, %v2647
      %v2672 = vpack.c.bf16 %v2648, %v2648
      %v2673 = vpack.c.bf16 %v2649, %v2649
      %v2674 = vpack.c.bf16 %v2650, %v2650
      %v2675 = vpack.c.bf16 %v2651, %v2651
      %v2700 = vunpack.c.l.b16 %v2652
      %v2701 = vunpack.c.l.b16 %v2653
      %v2702 = vunpack.c.l.b16 %v2654
      %v2703 = vunpack.c.l.b16 %v2655
      %v2704 = vunpack.c.l.b16 %v2656
      %v2705 = vunpack.c.l.b16 %v2657
      %v2706 = vunpack.c.l.b16 %v2658
      %v2707 = vunpack.c.l.b16 %v2659
      %v2708 = vunpack.c.l.b16 %v2660
      %v2709 = vunpack.c.l.b16 %v2661
      %v2710 = vunpack.c.l.b16 %v2662
      %v2711 = vunpack.c.l.b16 %v2663
      %v2712 = vunpack.c.l.b16 %v2664
      %v2713 = vunpack.c.l.b16 %v2665
      %v2714 = vunpack.c.l.b16 %v2666
      %v2715 = vunpack.c.l.b16 %v2667
      %v2716 = vunpack.c.l.b16 %v2668
      %v2717 = vunpack.c.l.b16 %v2669
      %v2718 = vunpack.c.l.b16 %v2670
      %v2719 = vunpack.c.l.b16 %v2671
      %v2720 = vunpack.c.l.b16 %v2672
      %v2721 = vunpack.c.l.b16 %v2673
      %v2722 = vunpack.c.l.b16 %v2674
      %v2723 = vunpack.c.l.b16 %v2675
      %v2724 = vpack.c.b16 %v2701, %v2700
      %v2725 = vpack.c.b16 %v2703, %v2702
      %v2726 = vpack.c.b16 %v2705, %v2704
      %v2727 = vpack.c.b16 %v2707, %v2706
      %v2728 = vpack.c.b16 %v2709, %v2708
      %v2729 = vpack.c.b16 %v2711, %v2710
      %v2730 = vpack.c.b16 %v2713, %v2712
      %v2731 = vpack.c.b16 %v2715, %v2714
      %v2732 = vpack.c.b16 %v2717, %v2716
      %v2733 = vpack.c.b16 %v2719, %v2718
      %v2734 = vpack.c.b16 %v2721, %v2720
      %v2735 = vpack.c.b16 %v2723, %v2722
      %2748 = vst [vmem:[#allocation4 + $0x38] sm:$0xff] %v2724
      %2749 = vst [vmem:[#allocation4 + $0x80] sm:$0xff] %v2725
      %2750 = vst [vmem:[#allocation4 + $0xc8] sm:$0xff] %v2726
      %2751 = vst [vmem:[#allocation4 + $0x110] sm:$0xff] %v2727
      %2752 = vst [vmem:[#allocation4 + $0x158] sm:$0xff] %v2728
      %2753 = vst [vmem:[#allocation4 + $0x1a0] sm:$0xff] %v2729
      %2754 = vst [vmem:[#allocation4 + $0x1e8] sm:$0xff] %v2730
      %2755 = vst [vmem:[#allocation4 + $0x230] sm:$0xff] %v2731
      %2756 = vst [vmem:[#allocation4 + $0x278] sm:$0xff] %v2732
      %2757 = vst [vmem:[#allocation4 + $0x2c0] sm:$0xff] %v2733
      %2758 = vst [vmem:[#allocation4 + $0x308] sm:$0xff] %v2734
      %2759 = vst [vmem:[#allocation4 + $0x350] sm:$0xff] %v2735
      %v2760 = vld [vmem:[%s2495 + $0x2] sm:$0xff]
      %v2761 = vld [vmem:[%s2495 + $0x12] sm:$0xff]
      %v2762 = vld [vmem:[%s2495 + $0x22] sm:$0xff]
      %v2763 = vld [vmem:[%s2495 + $0x32] sm:$0xff]
      %v2764 = vld [vmem:[%s2495 + $0x42] sm:$0xff]
      %v2765 = vld [vmem:[%s2495 + $0x52] sm:$0xff]
      %v2766 = vld [vmem:[%s2495 + $0x62] sm:$0xff]
      %v2767 = vld [vmem:[%s2495 + $0x72] sm:$0xff]
      %v2768 = vld [vmem:[%s2495 + $0xa2] sm:$0xff]
      %v2769 = vld [vmem:[%s2495 + $0xb2] sm:$0xff]
      %v2770 = vld [vmem:[%s2495 + $0xc2] sm:$0xff]
      %v2771 = vld [vmem:[%s2495 + $0xd2] sm:$0xff]
      %v2772 = vld [vmem:[%s2495 + $0xe2] sm:$0xff]
      %v2773 = vld [vmem:[%s2495 + $0xf2] sm:$0xff]
      %v2774 = vld [vmem:[%s2495 + $0x102] sm:$0xff]
      %v2775 = vld [vmem:[%s2495 + $0x112] sm:$0xff]
      %v2776 = vld [vmem:[%s2495 + $0x142] sm:$0xff]
      %v2777 = vld [vmem:[%s2495 + $0x152] sm:$0xff]
      %v2778 = vld [vmem:[%s2495 + $0x162] sm:$0xff]
      %v2779 = vld [vmem:[%s2495 + $0x172] sm:$0xff]
      %v2780 = vld [vmem:[%s2495 + $0x182] sm:$0xff]
      %v2781 = vld [vmem:[%s2495 + $0x192] sm:$0xff]
      %v2782 = vld [vmem:[%s2495 + $0x1a2] sm:$0xff]
      %v2783 = vld [vmem:[%s2495 + $0x1b2] sm:$0xff]
      %v2784 = vpack.c.bf16 %v2760, %v2760
      %v2785 = vpack.c.bf16 %v2761, %v2761
      %v2786 = vpack.c.bf16 %v2762, %v2762
      %v2787 = vpack.c.bf16 %v2763, %v2763
      %v2788 = vpack.c.bf16 %v2764, %v2764
      %v2789 = vpack.c.bf16 %v2765, %v2765
      %v2790 = vpack.c.bf16 %v2766, %v2766
      %v2791 = vpack.c.bf16 %v2767, %v2767
      %v2792 = vpack.c.bf16 %v2768, %v2768
      %v2793 = vpack.c.bf16 %v2769, %v2769
      %v2794 = vpack.c.bf16 %v2770, %v2770
      %v2795 = vpack.c.bf16 %v2771, %v2771
      %v2796 = vpack.c.bf16 %v2772, %v2772
      %v2797 = vpack.c.bf16 %v2773, %v2773
      %v2798 = vpack.c.bf16 %v2774, %v2774
      %v2799 = vpack.c.bf16 %v2775, %v2775
      %v2800 = vpack.c.bf16 %v2776, %v2776
      %v2801 = vpack.c.bf16 %v2777, %v2777
      %v2802 = vpack.c.bf16 %v2778, %v2778
      %v2803 = vpack.c.bf16 %v2779, %v2779
      %v2804 = vpack.c.bf16 %v2780, %v2780
      %v2805 = vpack.c.bf16 %v2781, %v2781
      %v2806 = vpack.c.bf16 %v2782, %v2782
      %v2807 = vpack.c.bf16 %v2783, %v2783
      %v2832 = vunpack.c.l.b16 %v2784
      %v2833 = vunpack.c.l.b16 %v2785
      %v2834 = vunpack.c.l.b16 %v2786
      %v2835 = vunpack.c.l.b16 %v2787
      %v2836 = vunpack.c.l.b16 %v2788
      %v2837 = vunpack.c.l.b16 %v2789
      %v2838 = vunpack.c.l.b16 %v2790
      %v2839 = vunpack.c.l.b16 %v2791
      %v2840 = vunpack.c.l.b16 %v2792
      %v2841 = vunpack.c.l.b16 %v2793
      %v2842 = vunpack.c.l.b16 %v2794
      %v2843 = vunpack.c.l.b16 %v2795
      %v2844 = vunpack.c.l.b16 %v2796
      %v2845 = vunpack.c.l.b16 %v2797
      %v2846 = vunpack.c.l.b16 %v2798
      %v2847 = vunpack.c.l.b16 %v2799
      %v2848 = vunpack.c.l.b16 %v2800
      %v2849 = vunpack.c.l.b16 %v2801
      %v2850 = vunpack.c.l.b16 %v2802
      %v2851 = vunpack.c.l.b16 %v2803
      %v2852 = vunpack.c.l.b16 %v2804
      %v2853 = vunpack.c.l.b16 %v2805
      %v2854 = vunpack.c.l.b16 %v2806
      %v2855 = vunpack.c.l.b16 %v2807
      %v2856 = vpack.c.b16 %v2833, %v2832
      %v2857 = vpack.c.b16 %v2835, %v2834
      %v2858 = vpack.c.b16 %v2837, %v2836
      %v2859 = vpack.c.b16 %v2839, %v2838
      %v2860 = vpack.c.b16 %v2841, %v2840
      %v2861 = vpack.c.b16 %v2843, %v2842
      %v2862 = vpack.c.b16 %v2845, %v2844
      %v2863 = vpack.c.b16 %v2847, %v2846
      %v2864 = vpack.c.b16 %v2849, %v2848
      %v2865 = vpack.c.b16 %v2851, %v2850
      %v2866 = vpack.c.b16 %v2853, %v2852
      %v2867 = vpack.c.b16 %v2855, %v2854
      %2880 = vst [vmem:[#allocation4 + $0x40] sm:$0xff] %v2856
      %2881 = vst [vmem:[#allocation4 + $0x88] sm:$0xff] %v2857
      %2882 = vst [vmem:[#allocation4 + $0xd0] sm:$0xff] %v2858
      %2883 = vst [vmem:[#allocation4 + $0x118] sm:$0xff] %v2859
      %2884 = vst [vmem:[#allocation4 + $0x160] sm:$0xff] %v2860
      %2885 = vst [vmem:[#allocation4 + $0x1a8] sm:$0xff] %v2861
      %2886 = vst [vmem:[#allocation4 + $0x1f0] sm:$0xff] %v2862
      %2887 = vst [vmem:[#allocation4 + $0x238] sm:$0xff] %v2863
      %2888 = vst [vmem:[#allocation4 + $0x280] sm:$0xff] %v2864
      %2889 = vst [vmem:[#allocation4 + $0x2c8] sm:$0xff] %v2865
      %2890 = vst [vmem:[#allocation4 + $0x310] sm:$0xff] %v2866
      %2891 = vst [vmem:[#allocation4 + $0x358] sm:$0xff] %v2867
      %v2892 = vld [vmem:[#allocation4] sm:$0xff]
      %v2893 = vld [vmem:[#allocation4 + $0x8] sm:$0xff]
      %v2894 = vld [vmem:[#allocation4 + $0x10] sm:$0xff]
      %v2895 = vld [vmem:[#allocation4 + $0x18] sm:$0xff]
      %v2896 = vld [vmem:[#allocation4 + $0x20] sm:$0xff]
      %v2897 = vld [vmem:[#allocation4 + $0x28] sm:$0xff]
      %v2898 = vld [vmem:[#allocation4 + $0x30] sm:$0xff]
      %v2899 = vld [vmem:[#allocation4 + $0x38] sm:$0xff]
      %v2900 = vld [vmem:[#allocation4 + $0x40] sm:$0xff]
      %v2901 = vld [vmem:[#allocation4 + $0x48] sm:$0xff]
      %v2902 = vld [vmem:[#allocation4 + $0x50] sm:$0xff]
      %v2903 = vld [vmem:[#allocation4 + $0x58] sm:$0xff]
      %v2904 = vld [vmem:[#allocation4 + $0x60] sm:$0xff]
      %v2905 = vld [vmem:[#allocation4 + $0x68] sm:$0xff]
      %v2906 = vld [vmem:[#allocation4 + $0x70] sm:$0xff]
      %v2907 = vld [vmem:[#allocation4 + $0x78] sm:$0xff]
      %v2908 = vld [vmem:[#allocation4 + $0x80] sm:$0xff]
      %v2909 = vld [vmem:[#allocation4 + $0x88] sm:$0xff]
      %v2910 = vld [vmem:[#allocation4 + $0x90] sm:$0xff]
      %v2911 = vld [vmem:[#allocation4 + $0x98] sm:$0xff]
      %v2912 = vld [vmem:[#allocation4 + $0xa0] sm:$0xff]
      %v2913 = vld [vmem:[#allocation4 + $0xa8] sm:$0xff]
      %v2914 = vld [vmem:[#allocation4 + $0xb0] sm:$0xff]
      %v2915 = vld [vmem:[#allocation4 + $0xb8] sm:$0xff]
      %v2916 = vld [vmem:[#allocation4 + $0xc0] sm:$0xff]
      %v2917 = vld [vmem:[#allocation4 + $0xc8] sm:$0xff]
      %v2918 = vld [vmem:[#allocation4 + $0xd0] sm:$0xff]
      %v2919 = vld [vmem:[#allocation4 + $0xd8] sm:$0xff]
      %v2920 = vld [vmem:[#allocation4 + $0xe0] sm:$0xff]
      %v2921 = vld [vmem:[#allocation4 + $0xe8] sm:$0xff]
      %v2922 = vld [vmem:[#allocation4 + $0xf0] sm:$0xff]
      %v2923 = vld [vmem:[#allocation4 + $0xf8] sm:$0xff]
      %v2924 = vld [vmem:[#allocation4 + $0x100] sm:$0xff]
      %v2925 = vld [vmem:[#allocation4 + $0x108] sm:$0xff]
      %v2926 = vld [vmem:[#allocation4 + $0x110] sm:$0xff]
      %v2927 = vld [vmem:[#allocation4 + $0x118] sm:$0xff]
      %v2928 = vld [vmem:[#allocation4 + $0x120] sm:$0xff]
      %v2929 = vld [vmem:[#allocation4 + $0x128] sm:$0xff]
      %v2930 = vld [vmem:[#allocation4 + $0x130] sm:$0xff]
      %v2931 = vld [vmem:[#allocation4 + $0x138] sm:$0xff]
      %v2932 = vld [vmem:[#allocation4 + $0x140] sm:$0xff]
      %v2933 = vld [vmem:[#allocation4 + $0x148] sm:$0xff]
      %v2934 = vld [vmem:[#allocation4 + $0x150] sm:$0xff]
      %v2935 = vld [vmem:[#allocation4 + $0x158] sm:$0xff]
      %v2936 = vld [vmem:[#allocation4 + $0x160] sm:$0xff]
      %v2937 = vld [vmem:[#allocation4 + $0x168] sm:$0xff]
      %v2938 = vld [vmem:[#allocation4 + $0x170] sm:$0xff]
      %v2939 = vld [vmem:[#allocation4 + $0x178] sm:$0xff]
      %v2940 = vld [vmem:[#allocation4 + $0x180] sm:$0xff]
      %v2941 = vld [vmem:[#allocation4 + $0x188] sm:$0xff]
      %v2942 = vld [vmem:[#allocation4 + $0x190] sm:$0xff]
      %v2943 = vld [vmem:[#allocation4 + $0x198] sm:$0xff]
      %v2944 = vld [vmem:[#allocation4 + $0x1a0] sm:$0xff]
      %v2945 = vld [vmem:[#allocation4 + $0x1a8] sm:$0xff]
      %v2946 = vld [vmem:[#allocation4 + $0x1b0] sm:$0xff]
      %v2947 = vld [vmem:[#allocation4 + $0x1b8] sm:$0xff]
      %v2948 = vld [vmem:[#allocation4 + $0x1c0] sm:$0xff]
      %v2949 = vld [vmem:[#allocation4 + $0x1c8] sm:$0xff]
      %v2950 = vld [vmem:[#allocation4 + $0x1d0] sm:$0xff]
      %v2951 = vld [vmem:[#allocation4 + $0x1d8] sm:$0xff]
      %v2952 = vld [vmem:[#allocation4 + $0x1e0] sm:$0xff]
      %v2953 = vld [vmem:[#allocation4 + $0x1e8] sm:$0xff]
      %v2954 = vld [vmem:[#allocation4 + $0x1f0] sm:$0xff]
      %v2955 = vld [vmem:[#allocation4 + $0x1f8] sm:$0xff]
      %v2956 = vld [vmem:[#allocation4 + $0x200] sm:$0xff]
      %v2957 = vld [vmem:[#allocation4 + $0x208] sm:$0xff]
      %v2958 = vld [vmem:[#allocation4 + $0x210] sm:$0xff]
      %v2959 = vld [vmem:[#allocation4 + $0x218] sm:$0xff]
      %v2960 = vld [vmem:[#allocation4 + $0x220] sm:$0xff]
      %v2961 = vld [vmem:[#allocation4 + $0x228] sm:$0xff]
      %v2962 = vld [vmem:[#allocation4 + $0x230] sm:$0xff]
      %v2963 = vld [vmem:[#allocation4 + $0x238] sm:$0xff]
      %v2964 = vld [vmem:[#allocation4 + $0x240] sm:$0xff]
      %v2965 = vld [vmem:[#allocation4 + $0x248] sm:$0xff]
      %v2966 = vld [vmem:[#allocation4 + $0x250] sm:$0xff]
      %v2967 = vld [vmem:[#allocation4 + $0x258] sm:$0xff]
      %v2968 = vld [vmem:[#allocation4 + $0x260] sm:$0xff]
      %v2969 = vld [vmem:[#allocation4 + $0x268] sm:$0xff]
      %v2970 = vld [vmem:[#allocation4 + $0x270] sm:$0xff]
      %v2971 = vld [vmem:[#allocation4 + $0x278] sm:$0xff]
      %v2972 = vld [vmem:[#allocation4 + $0x280] sm:$0xff]
      %v2973 = vld [vmem:[#allocation4 + $0x288] sm:$0xff]
      %v2974 = vld [vmem:[#allocation4 + $0x290] sm:$0xff]
      %v2975 = vld [vmem:[#allocation4 + $0x298] sm:$0xff]
      %v2976 = vld [vmem:[#allocation4 + $0x2a0] sm:$0xff]
      %v2977 = vld [vmem:[#allocation4 + $0x2a8] sm:$0xff]
      %v2978 = vld [vmem:[#allocation4 + $0x2b0] sm:$0xff]
      %v2979 = vld [vmem:[#allocation4 + $0x2b8] sm:$0xff]
      %v2980 = vld [vmem:[#allocation4 + $0x2c0] sm:$0xff]
      %v2981 = vld [vmem:[#allocation4 + $0x2c8] sm:$0xff]
      %v2982 = vld [vmem:[#allocation4 + $0x2d0] sm:$0xff]
      %v2983 = vld [vmem:[#allocation4 + $0x2d8] sm:$0xff]
      %v2984 = vld [vmem:[#allocation4 + $0x2e0] sm:$0xff]
      %v2985 = vld [vmem:[#allocation4 + $0x2e8] sm:$0xff]
      %v2986 = vld [vmem:[#allocation4 + $0x2f0] sm:$0xff]
      %v2987 = vld [vmem:[#allocation4 + $0x2f8] sm:$0xff]
      %v2988 = vld [vmem:[#allocation4 + $0x300] sm:$0xff]
      %v2989 = vld [vmem:[#allocation4 + $0x308] sm:$0xff]
      %v2990 = vld [vmem:[#allocation4 + $0x310] sm:$0xff]
      %v2991 = vld [vmem:[#allocation4 + $0x318] sm:$0xff]
      %v2992 = vld [vmem:[#allocation4 + $0x320] sm:$0xff]
      %v2993 = vld [vmem:[#allocation4 + $0x328] sm:$0xff]
      %v2994 = vld [vmem:[#allocation4 + $0x330] sm:$0xff]
      %v2995 = vld [vmem:[#allocation4 + $0x338] sm:$0xff]
      %v2996 = vld [vmem:[#allocation4 + $0x340] sm:$0xff]
      %v2997 = vld [vmem:[#allocation4 + $0x348] sm:$0xff]
      %v2998 = vld [vmem:[#allocation4 + $0x350] sm:$0xff]
      %v2999 = vld [vmem:[#allocation4 + $0x358] sm:$0xff]
      %v3000 = vld [vmem:[%s2] sm:$0xf]
      %v3001 = vld [vmem:[%s2 + $0x4] sm:$0xf]
      %v3002 = vld [vmem:[%s2 + $0x8] sm:$0xf]
      %v3003 = vld [vmem:[%s2 + $0xc] sm:$0xf]
      %v3004 = vld [vmem:[%s2 + $0x10] sm:$0xf]
      %v3005 = vld [vmem:[%s2 + $0x14] sm:$0xf]
      %v3006 = vld [vmem:[%s2 + $0x18] sm:$0xf]
      %v3007 = vld [vmem:[%s2 + $0x1c] sm:$0xf]
      %v3008 = vld [vmem:[%s2 + $0x20] sm:$0xf]
      %v3009 = vld [vmem:[%s2 + $0x24] sm:$0xf]
      %v3010 = vld [vmem:[%s2 + $0x28] sm:$0xf]
      %v3011 = vld [vmem:[%s2 + $0x2c] sm:$0xf]
      %v3012 = vld [vmem:[%s2 + $0x30] sm:$0xf]
      %v3013 = vld [vmem:[%s2 + $0x34] sm:$0xf]
      %v3014 = vld [vmem:[%s2 + $0x38] sm:$0xf]
      %v3015 = vld [vmem:[%s2 + $0x3c] sm:$0xf]
      %v3016 = vld [vmem:[%s2 + $0x40] sm:$0xf]
      %v3017 = vld [vmem:[%s2 + $0x44] sm:$0xf]
      %v3018 = vld [vmem:[%s2 + $0x48] sm:$0xf]
      %v3019 = vld [vmem:[%s2 + $0x4c] sm:$0xf]
      %v3020 = vld [vmem:[%s2 + $0x50] sm:$0xf]
      %v3021 = vld [vmem:[%s2 + $0x54] sm:$0xf]
      %v3022 = vld [vmem:[%s2 + $0x58] sm:$0xf]
      %v3023 = vld [vmem:[%s2 + $0x5c] sm:$0xf]
      %v3024 = vld [vmem:[%s2 + $0x60] sm:$0xf]
      %v3025 = vld [vmem:[%s2 + $0x64] sm:$0xf]
      %v3026 = vld [vmem:[%s2 + $0x68] sm:$0xf]
      %v3027 = vld [vmem:[%s2 + $0x6c] sm:$0xf]
      %v3028 = vld [vmem:[%s2 + $0x70] sm:$0xf]
      %v3029 = vld [vmem:[%s2 + $0x74] sm:$0xf]
      %v3030 = vld [vmem:[%s2 + $0x78] sm:$0xf]
      %v3031 = vld [vmem:[%s2 + $0x7c] sm:$0xf]
      %v3032 = vld [vmem:[%s2 + $0x80] sm:$0xf]
      %v3033 = vld [vmem:[%s2 + $0x84] sm:$0xf]
      %v3034 = vld [vmem:[%s2 + $0x88] sm:$0xf]
      %v3035 = vld [vmem:[%s2 + $0x8c] sm:$0xf]
      %v3036 = vld [vmem:[%s2 + $0x90] sm:$0xf]
      %v3037 = vld [vmem:[%s2 + $0x94] sm:$0xf]
      %v3038 = vld [vmem:[%s2 + $0x98] sm:$0xf]
      %v3039 = vld [vmem:[%s2 + $0x9c] sm:$0xf]
      %v3040 = vld [vmem:[%s2 + $0xa0] sm:$0xf]
      %v3041 = vld [vmem:[%s2 + $0xa4] sm:$0xf]
      %v3042 = vld [vmem:[%s2 + $0xa8] sm:$0xf]
      %v3043 = vld [vmem:[%s2 + $0xac] sm:$0xf]
      %v3044 = vld [vmem:[%s2 + $0xb0] sm:$0xf]
      %v3045 = vld [vmem:[%s2 + $0xb4] sm:$0xf]
      %v3046 = vld [vmem:[%s2 + $0xb8] sm:$0xf]
      %v3047 = vld [vmem:[%s2 + $0xbc] sm:$0xf]
      %v3048 = vld [vmem:[%s2 + $0xc0] sm:$0xf]
      %v3049 = vld [vmem:[%s2 + $0xc4] sm:$0xf]
      %v3050 = vld [vmem:[%s2 + $0xc8] sm:$0xf]
      %v3051 = vld [vmem:[%s2 + $0xcc] sm:$0xf]
      %v3052 = vld [vmem:[%s2 + $0xd0] sm:$0xf]
      %v3053 = vld [vmem:[%s2 + $0xd4] sm:$0xf]
      %v3054 = vld [vmem:[%s2 + $0xd8] sm:$0xf]
      %v3055 = vld [vmem:[%s2 + $0xdc] sm:$0xf]
      %v3056 = vld [vmem:[%s2 + $0xe0] sm:$0xf]
      %v3057 = vld [vmem:[%s2 + $0xe4] sm:$0xf]
      %v3058 = vld [vmem:[%s2 + $0xe8] sm:$0xf]
      %v3059 = vld [vmem:[%s2 + $0xec] sm:$0xf]
      %v3060 = vld [vmem:[%s2 + $0xf0] sm:$0xf]
      %v3061 = vld [vmem:[%s2 + $0xf4] sm:$0xf]
      %v3062 = vld [vmem:[%s2 + $0xf8] sm:$0xf]
      %v3063 = vld [vmem:[%s2 + $0xfc] sm:$0xf]
      %v3064 = vld [vmem:[%s2 + $0x100] sm:$0xf]
      %v3065 = vld [vmem:[%s2 + $0x104] sm:$0xf]
      %v3066 = vld [vmem:[%s2 + $0x108] sm:$0xf]
      %v3067 = vld [vmem:[%s2 + $0x10c] sm:$0xf]
      %v3068 = vld [vmem:[%s2 + $0x110] sm:$0xf]
      %v3069 = vld [vmem:[%s2 + $0x114] sm:$0xf]
      %v3070 = vld [vmem:[%s2 + $0x118] sm:$0xf]
      %v3071 = vld [vmem:[%s2 + $0x11c] sm:$0xf]
      %v3072 = vld [vmem:[%s2 + $0x120] sm:$0xf]
      %v3073 = vld [vmem:[%s2 + $0x124] sm:$0xf]
      %v3074 = vld [vmem:[%s2 + $0x128] sm:$0xf]
      %v3075 = vld [vmem:[%s2 + $0x12c] sm:$0xf]
      %v3076 = vld [vmem:[%s2 + $0x130] sm:$0xf]
      %v3077 = vld [vmem:[%s2 + $0x134] sm:$0xf]
      %v3078 = vld [vmem:[%s2 + $0x138] sm:$0xf]
      %v3079 = vld [vmem:[%s2 + $0x13c] sm:$0xf]
      %v3080 = vld [vmem:[%s2 + $0x140] sm:$0xf]
      %v3081 = vld [vmem:[%s2 + $0x144] sm:$0xf]
      %v3082 = vld [vmem:[%s2 + $0x148] sm:$0xf]
      %v3083 = vld [vmem:[%s2 + $0x14c] sm:$0xf]
      %v3084 = vld [vmem:[%s2 + $0x150] sm:$0xf]
      %v3085 = vld [vmem:[%s2 + $0x154] sm:$0xf]
      %v3086 = vld [vmem:[%s2 + $0x158] sm:$0xf]
      %v3087 = vld [vmem:[%s2 + $0x15c] sm:$0xf]
      %v3088 = vld [vmem:[%s2 + $0x160] sm:$0xf]
      %v3089 = vld [vmem:[%s2 + $0x164] sm:$0xf]
      %v3090 = vld [vmem:[%s2 + $0x168] sm:$0xf]
      %v3091 = vld [vmem:[%s2 + $0x16c] sm:$0xf]
      %v3092 = vld [vmem:[%s2 + $0x170] sm:$0xf]
      %v3093 = vld [vmem:[%s2 + $0x174] sm:$0xf]
      %v3094 = vld [vmem:[%s2 + $0x178] sm:$0xf]
      %v3095 = vld [vmem:[%s2 + $0x17c] sm:$0xf]
      %v3096 = vld [vmem:[%s2 + $0x180] sm:$0xf]
      %v3097 = vld [vmem:[%s2 + $0x184] sm:$0xf]
      %v3098 = vld [vmem:[%s2 + $0x188] sm:$0xf]
      %v3099 = vld [vmem:[%s2 + $0x18c] sm:$0xf]
      %v3100 = vld [vmem:[%s2 + $0x190] sm:$0xf]
      %v3101 = vld [vmem:[%s2 + $0x194] sm:$0xf]
      %v3102 = vld [vmem:[%s2 + $0x198] sm:$0xf]
      %v3103 = vld [vmem:[%s2 + $0x19c] sm:$0xf]
      %v3104 = vld [vmem:[%s2 + $0x1a0] sm:$0xf]
      %v3105 = vld [vmem:[%s2 + $0x1a4] sm:$0xf]
      %v3106 = vld [vmem:[%s2 + $0x1a8] sm:$0xf]
      %v3107 = vld [vmem:[%s2 + $0x1ac] sm:$0xf]
      %v3108 = vld [vmem:[%s2 + $0x1b0] sm:$0xf]
      %v3109 = vld [vmem:[%s2 + $0x1b4] sm:$0xf]
      %v3110 = vld [vmem:[%s2 + $0x1b8] sm:$0xf]
      %v3111 = vld [vmem:[%s2 + $0x1bc] sm:$0xf]
      %v3112 = vld [vmem:[%s2 + $0x1c0] sm:$0xf]
      %v3113 = vld [vmem:[%s2 + $0x1c4] sm:$0xf]
      %v3114 = vld [vmem:[%s2 + $0x1c8] sm:$0xf]
      %v3115 = vld [vmem:[%s2 + $0x1cc] sm:$0xf]
      %v3116 = vld [vmem:[%s2 + $0x1d0] sm:$0xf]
      %v3117 = vld [vmem:[%s2 + $0x1d4] sm:$0xf]
      %v3118 = vld [vmem:[%s2 + $0x1d8] sm:$0xf]
      %v3119 = vld [vmem:[%s2 + $0x1dc] sm:$0xf]
      %v3120 = vld [vmem:[%s2 + $0x1e0] sm:$0xf]
      %v3121 = vld [vmem:[%s2 + $0x1e4] sm:$0xf]
      %v3122 = vld [vmem:[%s2 + $0x1e8] sm:$0xf]
      %v3123 = vld [vmem:[%s2 + $0x1ec] sm:$0xf]
      %v3124 = vld [vmem:[%s2 + $0x1f0] sm:$0xf]
      %v3125 = vld [vmem:[%s2 + $0x1f4] sm:$0xf]
      %v3126 = vld [vmem:[%s2 + $0x1f8] sm:$0xf]
      %v3127 = vld [vmem:[%s2 + $0x1fc] sm:$0xf]
      %v3128 = vld [vmem:[%s2 + $0x200] sm:$0xf]
      %v3129 = vld [vmem:[%s2 + $0x204] sm:$0xf]
      %v3130 = vld [vmem:[%s2 + $0x208] sm:$0xf]
      %v3131 = vld [vmem:[%s2 + $0x20c] sm:$0xf]
      %v3132 = vld [vmem:[%s2 + $0x210] sm:$0xf]
      %v3133 = vld [vmem:[%s2 + $0x214] sm:$0xf]
      %v3134 = vld [vmem:[%s2 + $0x218] sm:$0xf]
      %v3135 = vld [vmem:[%s2 + $0x21c] sm:$0xf]
      %v3136 = vld [vmem:[%s2 + $0x220] sm:$0xf]
      %v3137 = vld [vmem:[%s2 + $0x224] sm:$0xf]
      %v3138 = vld [vmem:[%s2 + $0x228] sm:$0xf]
      %v3139 = vld [vmem:[%s2 + $0x22c] sm:$0xf]
      %v3140 = vld [vmem:[%s2 + $0x230] sm:$0xf]
      %v3141 = vld [vmem:[%s2 + $0x234] sm:$0xf]
      %v3142 = vld [vmem:[%s2 + $0x238] sm:$0xf]
      %v3143 = vld [vmem:[%s2 + $0x23c] sm:$0xf]
      %v3144 = vlaneseq
      %v3145 = vshrl.u32 %v3144, 7
      %v3146 = vsub.s32 0, %v3145
      %v3147 = vrot.slane %v1580, %v3146
      %v3292 = vunpack.c.l.b16 %v3000
      %v3293 = vunpack.c.l.b16 %v3001
      %v3294 = vunpack.c.l.b16 %v3002
      %v3295 = vunpack.c.l.b16 %v3003
      %v3296 = vunpack.c.l.b16 %v3004
      %v3297 = vunpack.c.l.b16 %v3005
      %v3298 = vunpack.c.l.b16 %v3006
      %v3299 = vunpack.c.l.b16 %v3007
      %v3300 = vunpack.c.l.b16 %v3008
      %v3301 = vunpack.c.l.b16 %v3009
      %v3302 = vunpack.c.l.b16 %v3010
      %v3303 = vunpack.c.l.b16 %v3011
      %v3304 = vunpack.c.l.b16 %v3012
      %v3305 = vunpack.c.l.b16 %v3013
      %v3306 = vunpack.c.l.b16 %v3014
      %v3307 = vunpack.c.l.b16 %v3015
      %v3308 = vunpack.c.l.b16 %v3016
      %v3309 = vunpack.c.l.b16 %v3017
      %v3310 = vunpack.c.l.b16 %v3018
      %v3311 = vunpack.c.l.b16 %v3019
      %v3312 = vunpack.c.l.b16 %v3020
      %v3313 = vunpack.c.l.b16 %v3021
      %v3314 = vunpack.c.l.b16 %v3022
      %v3315 = vunpack.c.l.b16 %v3023
      %v3316 = vunpack.c.l.b16 %v3024
      %v3317 = vunpack.c.l.b16 %v3025
      %v3318 = vunpack.c.l.b16 %v3026
      %v3319 = vunpack.c.l.b16 %v3027
      %v3320 = vunpack.c.l.b16 %v3028
      %v3321 = vunpack.c.l.b16 %v3029
      %v3322 = vunpack.c.l.b16 %v3030
      %v3323 = vunpack.c.l.b16 %v3031
      %v3324 = vunpack.c.l.b16 %v3032
      %v3325 = vunpack.c.l.b16 %v3033
      %v3326 = vunpack.c.l.b16 %v3034
      %v3327 = vunpack.c.l.b16 %v3035
      %v3328 = vunpack.c.l.b16 %v3036
      %v3329 = vunpack.c.l.b16 %v3037
      %v3330 = vunpack.c.l.b16 %v3038
      %v3331 = vunpack.c.l.b16 %v3039
      %v3332 = vunpack.c.l.b16 %v3040
      %v3333 = vunpack.c.l.b16 %v3041
      %v3334 = vunpack.c.l.b16 %v3042
      %v3335 = vunpack.c.l.b16 %v3043
      %v3336 = vunpack.c.l.b16 %v3044
      %v3337 = vunpack.c.l.b16 %v3045
      %v3338 = vunpack.c.l.b16 %v3046
      %v3339 = vunpack.c.l.b16 %v3047
      %v3340 = vunpack.c.l.b16 %v3048
      %v3341 = vunpack.c.l.b16 %v3049
      %v3342 = vunpack.c.l.b16 %v3050
      %v3343 = vunpack.c.l.b16 %v3051
      %v3344 = vunpack.c.l.b16 %v3052
      %v3345 = vunpack.c.l.b16 %v3053
      %v3346 = vunpack.c.l.b16 %v3054
      %v3347 = vunpack.c.l.b16 %v3055
      %v3348 = vunpack.c.l.b16 %v3056
      %v3349 = vunpack.c.l.b16 %v3057
      %v3350 = vunpack.c.l.b16 %v3058
      %v3351 = vunpack.c.l.b16 %v3059
      %v3352 = vunpack.c.l.b16 %v3060
      %v3353 = vunpack.c.l.b16 %v3061
      %v3354 = vunpack.c.l.b16 %v3062
      %v3355 = vunpack.c.l.b16 %v3063
      %v3356 = vunpack.c.l.b16 %v3064
      %v3357 = vunpack.c.l.b16 %v3065
      %v3358 = vunpack.c.l.b16 %v3066
      %v3359 = vunpack.c.l.b16 %v3067
      %v3360 = vunpack.c.l.b16 %v3068
      %v3361 = vunpack.c.l.b16 %v3069
      %v3362 = vunpack.c.l.b16 %v3070
      %v3363 = vunpack.c.l.b16 %v3071
      %v3364 = vunpack.c.l.b16 %v3072
      %v3365 = vunpack.c.l.b16 %v3073
      %v3366 = vunpack.c.l.b16 %v3074
      %v3367 = vunpack.c.l.b16 %v3075
      %v3368 = vunpack.c.l.b16 %v3076
      %v3369 = vunpack.c.l.b16 %v3077
      %v3370 = vunpack.c.l.b16 %v3078
      %v3371 = vunpack.c.l.b16 %v3079
      %v3372 = vunpack.c.l.b16 %v3080
      %v3373 = vunpack.c.l.b16 %v3081
      %v3374 = vunpack.c.l.b16 %v3082
      %v3375 = vunpack.c.l.b16 %v3083
      %v3376 = vunpack.c.l.b16 %v3084
      %v3377 = vunpack.c.l.b16 %v3085
      %v3378 = vunpack.c.l.b16 %v3086
      %v3379 = vunpack.c.l.b16 %v3087
      %v3380 = vunpack.c.l.b16 %v3088
      %v3381 = vunpack.c.l.b16 %v3089
      %v3382 = vunpack.c.l.b16 %v3090
      %v3383 = vunpack.c.l.b16 %v3091
      %v3384 = vunpack.c.l.b16 %v3092
      %v3385 = vunpack.c.l.b16 %v3093
      %v3386 = vunpack.c.l.b16 %v3094
      %v3387 = vunpack.c.l.b16 %v3095
      %v3388 = vunpack.c.l.b16 %v3096
      %v3389 = vunpack.c.l.b16 %v3097
      %v3390 = vunpack.c.l.b16 %v3098
      %v3391 = vunpack.c.l.b16 %v3099
      %v3392 = vunpack.c.l.b16 %v3100
      %v3393 = vunpack.c.l.b16 %v3101
      %v3394 = vunpack.c.l.b16 %v3102
      %v3395 = vunpack.c.l.b16 %v3103
      %v3396 = vunpack.c.l.b16 %v3104
      %v3397 = vunpack.c.l.b16 %v3105
      %v3398 = vunpack.c.l.b16 %v3106
      %v3399 = vunpack.c.l.b16 %v3107
      %v3400 = vunpack.c.l.b16 %v3108
      %v3401 = vunpack.c.l.b16 %v3109
      %v3402 = vunpack.c.l.b16 %v3110
      %v3403 = vunpack.c.l.b16 %v3111
      %v3404 = vunpack.c.l.b16 %v3112
      %v3405 = vunpack.c.l.b16 %v3113
      %v3406 = vunpack.c.l.b16 %v3114
      %v3407 = vunpack.c.l.b16 %v3115
      %v3408 = vunpack.c.l.b16 %v3116
      %v3409 = vunpack.c.l.b16 %v3117
      %v3410 = vunpack.c.l.b16 %v3118
      %v3411 = vunpack.c.l.b16 %v3119
      %v3412 = vunpack.c.l.b16 %v3120
      %v3413 = vunpack.c.l.b16 %v3121
      %v3414 = vunpack.c.l.b16 %v3122
      %v3415 = vunpack.c.l.b16 %v3123
      %v3416 = vunpack.c.l.b16 %v3124
      %v3417 = vunpack.c.l.b16 %v3125
      %v3418 = vunpack.c.l.b16 %v3126
      %v3419 = vunpack.c.l.b16 %v3127
      %v3420 = vunpack.c.l.b16 %v3128
      %v3421 = vunpack.c.l.b16 %v3129
      %v3422 = vunpack.c.l.b16 %v3130
      %v3423 = vunpack.c.l.b16 %v3131
      %v3424 = vunpack.c.l.b16 %v3132
      %v3425 = vunpack.c.l.b16 %v3133
      %v3426 = vunpack.c.l.b16 %v3134
      %v3427 = vunpack.c.l.b16 %v3135
      %v3428 = vunpack.c.l.b16 %v3136
      %v3429 = vunpack.c.l.b16 %v3137
      %v3430 = vunpack.c.l.b16 %v3138
      %v3431 = vunpack.c.l.b16 %v3139
      %v3432 = vunpack.c.l.b16 %v3140
      %v3433 = vunpack.c.l.b16 %v3141
      %v3434 = vunpack.c.l.b16 %v3142
      %v3435 = vunpack.c.l.b16 %v3143
      %v3436 = vpack.c.b16 %v3293, %v3292
      %v3437 = vpack.c.b16 %v3295, %v3294
      %v3438 = vpack.c.b16 %v3297, %v3296
      %v3439 = vpack.c.b16 %v3299, %v3298
      %v3440 = vpack.c.b16 %v3301, %v3300
      %v3441 = vpack.c.b16 %v3303, %v3302
      %v3442 = vpack.c.b16 %v3305, %v3304
      %v3443 = vpack.c.b16 %v3307, %v3306
      %v3444 = vpack.c.b16 %v3309, %v3308
      %v3445 = vpack.c.b16 %v3311, %v3310
      %v3446 = vpack.c.b16 %v3313, %v3312
      %v3447 = vpack.c.b16 %v3315, %v3314
      %v3448 = vpack.c.b16 %v3317, %v3316
      %v3449 = vpack.c.b16 %v3319, %v3318
      %v3450 = vpack.c.b16 %v3321, %v3320
      %v3451 = vpack.c.b16 %v3323, %v3322
      %v3452 = vpack.c.b16 %v3325, %v3324
      %v3453 = vpack.c.b16 %v3327, %v3326
      %v3454 = vpack.c.b16 %v3329, %v3328
      %v3455 = vpack.c.b16 %v3331, %v3330
      %v3456 = vpack.c.b16 %v3333, %v3332
      %v3457 = vpack.c.b16 %v3335, %v3334
      %v3458 = vpack.c.b16 %v3337, %v3336
      %v3459 = vpack.c.b16 %v3339, %v3338
      %v3460 = vpack.c.b16 %v3341, %v3340
      %v3461 = vpack.c.b16 %v3343, %v3342
      %v3462 = vpack.c.b16 %v3345, %v3344
      %v3463 = vpack.c.b16 %v3347, %v3346
      %v3464 = vpack.c.b16 %v3349, %v3348
      %v3465 = vpack.c.b16 %v3351, %v3350
      %v3466 = vpack.c.b16 %v3353, %v3352
      %v3467 = vpack.c.b16 %v3355, %v3354
      %v3468 = vpack.c.b16 %v3357, %v3356
      %v3469 = vpack.c.b16 %v3359, %v3358
      %v3470 = vpack.c.b16 %v3361, %v3360
      %v3471 = vpack.c.b16 %v3363, %v3362
      %v3472 = vpack.c.b16 %v3365, %v3364
      %v3473 = vpack.c.b16 %v3367, %v3366
      %v3474 = vpack.c.b16 %v3369, %v3368
      %v3475 = vpack.c.b16 %v3371, %v3370
      %v3476 = vpack.c.b16 %v3373, %v3372
      %v3477 = vpack.c.b16 %v3375, %v3374
      %v3478 = vpack.c.b16 %v3377, %v3376
      %v3479 = vpack.c.b16 %v3379, %v3378
      %v3480 = vpack.c.b16 %v3381, %v3380
      %v3481 = vpack.c.b16 %v3383, %v3382
      %v3482 = vpack.c.b16 %v3385, %v3384
      %v3483 = vpack.c.b16 %v3387, %v3386
      %v3484 = vpack.c.b16 %v3389, %v3388
      %v3485 = vpack.c.b16 %v3391, %v3390
      %v3486 = vpack.c.b16 %v3393, %v3392
      %v3487 = vpack.c.b16 %v3395, %v3394
      %v3488 = vpack.c.b16 %v3397, %v3396
      %v3489 = vpack.c.b16 %v3399, %v3398
      %v3490 = vpack.c.b16 %v3401, %v3400
      %v3491 = vpack.c.b16 %v3403, %v3402
      %v3492 = vpack.c.b16 %v3405, %v3404
      %v3493 = vpack.c.b16 %v3407, %v3406
      %v3494 = vpack.c.b16 %v3409, %v3408
      %v3495 = vpack.c.b16 %v3411, %v3410
      %v3496 = vpack.c.b16 %v3413, %v3412
      %v3497 = vpack.c.b16 %v3415, %v3414
      %v3498 = vpack.c.b16 %v3417, %v3416
      %v3499 = vpack.c.b16 %v3419, %v3418
      %v3500 = vpack.c.b16 %v3421, %v3420
      %v3501 = vpack.c.b16 %v3423, %v3422
      %v3502 = vpack.c.b16 %v3425, %v3424
      %v3503 = vpack.c.b16 %v3427, %v3426
      %v3504 = vpack.c.b16 %v3429, %v3428
      %v3505 = vpack.c.b16 %v3431, %v3430
      %v3506 = vpack.c.b16 %v3433, %v3432
      %v3507 = vpack.c.b16 %v3435, %v3434
      %3580 = vmatprep.subr.bf16.mxu0 0
      %3581 = vmatpush1.bf16.msra.mxu0 %v3436
      %3582 = vmatprep.subr.bf16.mxu0 0
      %3583 = vmatpush1.bf16.msra.mxu0 %v3437
      %3584 = vmatprep.subr.bf16.mxu0 0
      %3585 = vmatpush1.bf16.msra.mxu0 %v3438
      %3586 = vmatprep.subr.bf16.mxu0 0
      %3587 = vmatpush1.bf16.msra.mxu0 %v3439
      %3588 = vmatprep.subr.bf16.mxu0 0
      %3589 = vmatpush1.bf16.msra.mxu0 %v3440
      %3590 = vmatprep.subr.bf16.mxu0 0
      %3591 = vmatpush1.bf16.msra.mxu0 %v3441
      %3592 = vmatprep.subr.bf16.mxu0 0
      %3593 = vmatpush1.bf16.msra.mxu0 %v3442
      %3594 = vmatprep.subr.bf16.mxu0 0
      %3595 = vmatpush1.bf16.msra.mxu0 %v3443
      %3596 = vmatprep.subr.bf16.mxu0 0
      %3597 = vmatpush1.bf16.msra.mxu0 %v3444
      %3598 = vmatprep.subr.bf16.mxu0 0
      %3599 = vmatpush1.bf16.msra.mxu0 %v3445
      %3600 = vmatprep.subr.bf16.mxu0 0
      %3601 = vmatpush1.bf16.msra.mxu0 %v3446
      %3602 = vmatprep.subr.bf16.mxu0 0
      %3603 = vmatpush1.bf16.msra.mxu0 %v3447
      %3604 = vmatprep.subr.bf16.mxu0 0
      %3605 = vmatpush1.bf16.msra.mxu0 %v3448
      %3606 = vmatprep.subr.bf16.mxu0 0
      %3607 = vmatpush1.bf16.msra.mxu0 %v3449
      %3608 = vmatprep.subr.bf16.mxu0 0
      %3609 = vmatpush1.bf16.msra.mxu0 %v3450
      %3610 = vmatprep.subr.bf16.mxu0 0
      %3611 = vmatpush1.bf16.msra.mxu0 %v3451
      %3612 = vmatprep.mubr.bf16.mxu0 %v2893
      %3613 = vmatmul.mubr.bf16.gmra.mrb[0].mxu0 %v2892
      %v3614 = vpop.f32.mrb[0].mxu0
      %v3615 = vadd.f32 %v3147, %v3614
      %v3616 = vpop.f32.mrb[0].mxu0
      %v3617 = vpop.f32.mrb[0].mxu0
      %v3618 = vadd.f32 %v3147, %v3617
      %v3619 = vpop.f32.mrb[0].mxu0
      %3620 = vmatprep.mubr.bf16.mxu0 %v2902
      %3621 = vmatmul.mubr.bf16.gmra.mrb[0].mxu0 %v2901
      %v3622 = vpop.f32.mrb[0].mxu0
      %v3623 = vadd.f32 %v3147, %v3622
      %v3624 = vpop.f32.mrb[0].mxu0
      %v3625 = vpop.f32.mrb[0].mxu0
      %v3626 = vadd.f32 %v3147, %v3625
      %v3627 = vpop.f32.mrb[0].mxu0
      %3628 = vmatprep.mubr.bf16.mxu0 %v2911
      %3629 = vmatmul.mubr.bf16.gmra.mrb[0].mxu0 %v2910
      %v3630 = vpop.f32.mrb[0].mxu0
      %v3631 = vadd.f32 %v3147, %v3630
      %v3632 = vpop.f32.mrb[0].mxu0
      %v3633 = vpop.f32.mrb[0].mxu0
      %v3634 = vadd.f32 %v3147, %v3633
      %v3635 = vpop.f32.mrb[0].mxu0
      %3636 = vmatprep.mubr.bf16.mxu0 %v2920
      %3637 = vmatmul.mubr.bf16.gmra.mrb[0].mxu0 %v2919
      %v3638 = vpop.f32.mrb[0].mxu0
      %v3639 = vadd.f32 %v3147, %v3638
      %v3640 = vpop.f32.mrb[0].mxu0
      %v3641 = vpop.f32.mrb[0].mxu0
      %v3642 = vadd.f32 %v3147, %v3641
      %v3643 = vpop.f32.mrb[0].mxu0
      %3644 = vmatprep.mubr.bf16.mxu0 %v2929
      %3645 = vmatmul.mubr.bf16.gmra.mrb[0].mxu0 %v2928
      %v3646 = vpop.f32.mrb[0].mxu0
      %v3647 = vadd.f32 %v3147, %v3646
      %v3648 = vpop.f32.mrb[0].mxu0
      %v3649 = vpop.f32.mrb[0].mxu0
      %v3650 = vadd.f32 %v3147, %v3649
      %v3651 = vpop.f32.mrb[0].mxu0
      %3652 = vmatprep.mubr.bf16.mxu0 %v2938
      %3653 = vmatmul.mubr.bf16.gmra.mrb[0].mxu0 %v2937
      %v3654 = vpop.f32.mrb[0].mxu0
      %v3655 = vadd.f32 %v3147, %v3654
      %v3656 = vpop.f32.mrb[0].mxu0
      %v3657 = vpop.f32.mrb[0].mxu0
      %v3658 = vadd.f32 %v3147, %v3657
      %v3659 = vpop.f32.mrb[0].mxu0
      %3660 = vmatprep.mubr.bf16.mxu0 %v2947
      %3661 = vmatmul.mubr.bf16.gmra.mrb[0].mxu0 %v2946
      %v3662 = vpop.f32.mrb[0].mxu0
      %v3663 = vadd.f32 %v3147, %v3662
      %v3664 = vpop.f32.mrb[0].mxu0
      %v3665 = vpop.f32.mrb[0].mxu0
      %v3666 = vadd.f32 %v3147, %v3665
      %v3667 = vpop.f32.mrb[0].mxu0
      %3668 = vmatprep.mubr.bf16.mxu0 %v2956
      %3669 = vmatmul.mubr.bf16.gmra.mrb[0].mxu0 %v2955
      %v3670 = vpop.f32.mrb[0].mxu0
      %v3671 = vadd.f32 %v3147, %v3670
      %v3672 = vpop.f32.mrb[0].mxu0
      %v3673 = vpop.f32.mrb[0].mxu0
      %v3674 = vadd.f32 %v3147, %v3673
      %v3675 = vpop.f32.mrb[0].mxu0
      %3676 = vmatprep.mubr.bf16.mxu0 %v2965
      %3677 = vmatmul.mubr.bf16.gmra.mrb[0].mxu0 %v2964
      %v3678 = vpop.f32.mrb[0].mxu0
      %v3679 = vadd.f32 %v3147, %v3678
      %v3680 = vpop.f32.mrb[0].mxu0
      %v3681 = vpop.f32.mrb[0].mxu0
      %v3682 = vadd.f32 %v3147, %v3681
      %v3683 = vpop.f32.mrb[0].mxu0
      %3684 = vmatprep.mubr.bf16.mxu0 %v2974
      %3685 = vmatmul.mubr.bf16.gmra.mrb[0].mxu0 %v2973
      %v3686 = vpop.f32.mrb[0].mxu0
      %v3687 = vadd.f32 %v3147, %v3686
      %v3688 = vpop.f32.mrb[0].mxu0
      %v3689 = vpop.f32.mrb[0].mxu0
      %v3690 = vadd.f32 %v3147, %v3689
      %v3691 = vpop.f32.mrb[0].mxu0
      %3692 = vmatprep.mubr.bf16.mxu0 %v2983
      %3693 = vmatmul.mubr.bf16.gmra.mrb[0].mxu0 %v2982
      %v3694 = vpop.f32.mrb[0].mxu0
      %v3695 = vadd.f32 %v3147, %v3694
      %v3696 = vpop.f32.mrb[0].mxu0
      %v3697 = vpop.f32.mrb[0].mxu0
      %v3698 = vadd.f32 %v3147, %v3697
      %v3699 = vpop.f32.mrb[0].mxu0
      %3700 = vmatprep.mubr.bf16.mxu0 %v2992
      %3701 = vmatmul.mubr.bf16.gmra.mrb[0].mxu0 %v2991
      %v3702 = vpop.f32.mrb[0].mxu0
      %v3703 = vadd.f32 %v3147, %v3702
      %v3704 = vpop.f32.mrb[0].mxu0
      %v3705 = vpop.f32.mrb[0].mxu0
      %v3706 = vadd.f32 %v3147, %v3705
      %v3707 = vpop.f32.mrb[0].mxu0
      %3708 = vdwg.mxu0
      %3709 = vmatprep.subr.bf16.mxu0 0
      %3710 = vmatpush1.bf16.msra.mxu0 %v3452
      %3711 = vmatprep.subr.bf16.mxu0 0
      %3712 = vmatpush1.bf16.msra.mxu0 %v3453
      %3713 = vmatprep.subr.bf16.mxu0 0
      %3714 = vmatpush1.bf16.msra.mxu0 %v3454
      %3715 = vmatprep.subr.bf16.mxu0 0
      %3716 = vmatpush1.bf16.msra.mxu0 %v3455
      %3717 = vmatprep.subr.bf16.mxu0 0
      %3718 = vmatpush1.bf16.msra.mxu0 %v3456
      %3719 = vmatprep.subr.bf16.mxu0 0
      %3720 = vmatpush1.bf16.msra.mxu0 %v3457
      %3721 = vmatprep.subr.bf16.mxu0 0
      %3722 = vmatpush1.bf16.msra.mxu0 %v3458
      %3723 = vmatprep.subr.bf16.mxu0 0
      %3724 = vmatpush1.bf16.msra.mxu0 %v3459
      %3725 = vmatprep.subr.bf16.mxu0 0
      %3726 = vmatpush1.bf16.msra.mxu0 %v3460
      %3727 = vmatprep.subr.bf16.mxu0 0
      %3728 = vmatpush1.bf16.msra.mxu0 %v3461
      %3729 = vmatprep.subr.bf16.mxu0 0
      %3730 = vmatpush1.bf16.msra.mxu0 %v3462
      %3731 = vmatprep.subr.bf16.mxu0 0
      %3732 = vmatpush1.bf16.msra.mxu0 %v3463
      %3733 = vmatprep.subr.bf16.mxu0 0
      %3734 = vmatpush1.bf16.msra.mxu0 %v3464
      %3735 = vmatprep.subr.bf16.mxu0 0
      %3736 = vmatpush1.bf16.msra.mxu0 %v3465
      %3737 = vmatprep.subr.bf16.mxu0 0
      %3738 = vmatpush1.bf16.msra.mxu0 %v3466
      %3739 = vmatprep.subr.bf16.mxu0 0
      %3740 = vmatpush1.bf16.msra.mxu0 %v3467
      %3741 = vmatprep.mubr.bf16.mxu0 %v2895
      %3742 = vmatmul.mubr.bf16.gmra.mrb[0].mxu0 %v2894
      %v3743 = vpop.f32.mrb[0].mxu0
      %v3744 = vadd.f32 %v3615, %v3743
      %v3745 = vpop.f32.mrb[0].mxu0
      %v3746 = vpop.f32.mrb[0].mxu0
      %v3747 = vadd.f32 %v3618, %v3746
      %v3748 = vpop.f32.mrb[0].mxu0
      %3749 = vmatprep.mubr.bf16.mxu0 %v2904
      %3750 = vmatmul.mubr.bf16.gmra.mrb[0].mxu0 %v2903
      %v3751 = vpop.f32.mrb[0].mxu0
      %v3752 = vadd.f32 %v3623, %v3751
      %v3753 = vpop.f32.mrb[0].mxu0
      %v3754 = vpop.f32.mrb[0].mxu0
      %v3755 = vadd.f32 %v3626, %v3754
      %v3756 = vpop.f32.mrb[0].mxu0
      %3757 = vmatprep.mubr.bf16.mxu0 %v2913
      %3758 = vmatmul.mubr.bf16.gmra.mrb[0].mxu0 %v2912
      %v3759 = vpop.f32.mrb[0].mxu0
      %v3760 = vadd.f32 %v3631, %v3759
      %v3761 = vpop.f32.mrb[0].mxu0
      %v3762 = vpop.f32.mrb[0].mxu0
      %v3763 = vadd.f32 %v3634, %v3762
      %v3764 = vpop.f32.mrb[0].mxu0
      %3765 = vmatprep.mubr.bf16.mxu0 %v2922
      %3766 = vmatmul.mubr.bf16.gmra.mrb[0].mxu0 %v2921
      %v3767 = vpop.f32.mrb[0].mxu0
      %v3768 = vadd.f32 %v3639, %v3767
      %v3769 = vpop.f32.mrb[0].mxu0
      %v3770 = vpop.f32.mrb[0].mxu0
      %v3771 = vadd.f32 %v3642, %v3770
      %v3772 = vpop.f32.mrb[0].mxu0
      %3773 = vmatprep.mubr.bf16.mxu0 %v2931
      %3774 = vmatmul.mubr.bf16.gmra.mrb[0].mxu0 %v2930
      %v3775 = vpop.f32.mrb[0].mxu0
      %v3776 = vadd.f32 %v3647, %v3775
      %v3777 = vpop.f32.mrb[0].mxu0
      %v3778 = vpop.f32.mrb[0].mxu0
      %v3779 = vadd.f32 %v3650, %v3778
      %v3780 = vpop.f32.mrb[0].mxu0
      %3781 = vmatprep.mubr.bf16.mxu0 %v2940
      %3782 = vmatmul.mubr.bf16.gmra.mrb[0].mxu0 %v2939
      %v3783 = vpop.f32.mrb[0].mxu0
      %v3784 = vadd.f32 %v3655, %v3783
      %v3785 = vpop.f32.mrb[0].mxu0
      %v3786 = vpop.f32.mrb[0].mxu0
      %v3787 = vadd.f32 %v3658, %v3786
      %v3788 = vpop.f32.mrb[0].mxu0
      %3789 = vmatprep.mubr.bf16.mxu0 %v2949
      %3790 = vmatmul.mubr.bf16.gmra.mrb[0].mxu0 %v2948
      %v3791 = vpop.f32.mrb[0].mxu0
      %v3792 = vadd.f32 %v3663, %v3791
      %v3793 = vpop.f32.mrb[0].mxu0
      %v3794 = vpop.f32.mrb[0].mxu0
      %v3795 = vadd.f32 %v3666, %v3794
      %v3796 = vpop.f32.mrb[0].mxu0
      %3797 = vmatprep.mubr.bf16.mxu0 %v2958
      %3798 = vmatmul.mubr.bf16.gmra.mrb[0].mxu0 %v2957
      %v3799 = vpop.f32.mrb[0].mxu0
      %v3800 = vadd.f32 %v3671, %v3799
      %v3801 = vpop.f32.mrb[0].mxu0
      %v3802 = vpop.f32.mrb[0].mxu0
      %v3803 = vadd.f32 %v3674, %v3802
      %v3804 = vpop.f32.mrb[0].mxu0
      %3805 = vmatprep.mubr.bf16.mxu0 %v2967
      %3806 = vmatmul.mubr.bf16.gmra.mrb[0].mxu0 %v2966
      %v3807 = vpop.f32.mrb[0].mxu0
      %v3808 = vadd.f32 %v3679, %v3807
      %v3809 = vpop.f32.mrb[0].mxu0
      %v3810 = vpop.f32.mrb[0].mxu0
      %v3811 = vadd.f32 %v3682, %v3810
      %v3812 = vpop.f32.mrb[0].mxu0
      %3813 = vmatprep.mubr.bf16.mxu0 %v2976
      %3814 = vmatmul.mubr.bf16.gmra.mrb[0].mxu0 %v2975
      %v3815 = vpop.f32.mrb[0].mxu0
      %v3816 = vadd.f32 %v3687, %v3815
      %v3817 = vpop.f32.mrb[0].mxu0
      %v3818 = vpop.f32.mrb[0].mxu0
      %v3819 = vadd.f32 %v3690, %v3818
      %v3820 = vpop.f32.mrb[0].mxu0
      %3821 = vmatprep.mubr.bf16.mxu0 %v2985
      %3822 = vmatmul.mubr.bf16.gmra.mrb[0].mxu0 %v2984
      %v3823 = vpop.f32.mrb[0].mxu0
      %v3824 = vadd.f32 %v3695, %v3823
      %v3825 = vpop.f32.mrb[0].mxu0
      %v3826 = vpop.f32.mrb[0].mxu0
      %v3827 = vadd.f32 %v3698, %v3826
      %v3828 = vpop.f32.mrb[0].mxu0
      %3829 = vmatprep.mubr.bf16.mxu0 %v2994
      %3830 = vmatmul.mubr.bf16.gmra.mrb[0].mxu0 %v2993
      %v3831 = vpop.f32.mrb[0].mxu0
      %v3832 = vadd.f32 %v3703, %v3831
      %v3833 = vpop.f32.mrb[0].mxu0
      %v3834 = vpop.f32.mrb[0].mxu0
      %v3835 = vadd.f32 %v3706, %v3834
      %v3836 = vpop.f32.mrb[0].mxu0
      %3837 = vdwg.mxu0
      %3838 = vmatprep.subr.bf16.mxu0 0
      %3839 = vmatpush1.bf16.msra.mxu0 %v3468
      %3840 = vmatprep.subr.bf16.mxu0 0
      %3841 = vmatpush1.bf16.msra.mxu0 %v3469
      %3842 = vmatprep.subr.bf16.mxu0 0
      %3843 = vmatpush1.bf16.msra.mxu0 %v3470
      %3844 = vmatprep.subr.bf16.mxu0 0
      %3845 = vmatpush1.bf16.msra.mxu0 %v3471
      %3846 = vmatprep.subr.bf16.mxu0 0
      %3847 = vmatpush1.bf16.msra.mxu0 %v3472
      %3848 = vmatprep.subr.bf16.mxu0 0
      %3849 = vmatpush1.bf16.msra.mxu0 %v3473
      %3850 = vmatprep.subr.bf16.mxu0 0
      %3851 = vmatpush1.bf16.msra.mxu0 %v3474
      %3852 = vmatprep.subr.bf16.mxu0 0
      %3853 = vmatpush1.bf16.msra.mxu0 %v3475
      %3854 = vmatprep.subr.bf16.mxu0 0
      %3855 = vmatpush1.bf16.msra.mxu0 %v3476
      %3856 = vmatprep.subr.bf16.mxu0 0
      %3857 = vmatpush1.bf16.msra.mxu0 %v3477
      %3858 = vmatprep.subr.bf16.mxu0 0
      %3859 = vmatpush1.bf16.msra.mxu0 %v3478
      %3860 = vmatprep.subr.bf16.mxu0 0
      %3861 = vmatpush1.bf16.msra.mxu0 %v3479
      %3862 = vmatprep.subr.bf16.mxu0 0
      %3863 = vmatpush1.bf16.msra.mxu0 %v3480
      %3864 = vmatprep.subr.bf16.mxu0 0
      %3865 = vmatpush1.bf16.msra.mxu0 %v3481
      %3866 = vmatprep.subr.bf16.mxu0 0
      %3867 = vmatpush1.bf16.msra.mxu0 %v3482
      %3868 = vmatprep.subr.bf16.mxu0 0
      %3869 = vmatpush1.bf16.msra.mxu0 %v3483
      %3870 = vmatprep.mubr.bf16.mxu0 %v2897
      %3871 = vmatmul.mubr.bf16.gmra.mrb[0].mxu0 %v2896
      %v3872 = vpop.f32.mrb[0].mxu0
      %v3873 = vadd.f32 %v3744, %v3872
      %v3874 = vpop.f32.mrb[0].mxu0
      %v3875 = vpop.f32.mrb[0].mxu0
      %v3876 = vadd.f32 %v3747, %v3875
      %v3877 = vpop.f32.mrb[0].mxu0
      %3878 = vmatprep.mubr.bf16.mxu0 %v2906
      %3879 = vmatmul.mubr.bf16.gmra.mrb[0].mxu0 %v2905
      %v3880 = vpop.f32.mrb[0].mxu0
      %v3881 = vadd.f32 %v3752, %v3880
      %v3882 = vpop.f32.mrb[0].mxu0
      %v3883 = vpop.f32.mrb[0].mxu0
      %v3884 = vadd.f32 %v3755, %v3883
      %v3885 = vpop.f32.mrb[0].mxu0
      %3886 = vmatprep.mubr.bf16.mxu0 %v2915
      %3887 = vmatmul.mubr.bf16.gmra.mrb[0].mxu0 %v2914
      %v3888 = vpop.f32.mrb[0].mxu0
      %v3889 = vadd.f32 %v3760, %v3888
      %v3890 = vpop.f32.mrb[0].mxu0
      %v3891 = vpop.f32.mrb[0].mxu0
      %v3892 = vadd.f32 %v3763, %v3891
      %v3893 = vpop.f32.mrb[0].mxu0
      %3894 = vmatprep.mubr.bf16.mxu0 %v2924
      %3895 = vmatmul.mubr.bf16.gmra.mrb[0].mxu0 %v2923
      %v3896 = vpop.f32.mrb[0].mxu0
      %v3897 = vadd.f32 %v3768, %v3896
      %v3898 = vpop.f32.mrb[0].mxu0
      %v3899 = vpop.f32.mrb[0].mxu0
      %v3900 = vadd.f32 %v3771, %v3899
      %v3901 = vpop.f32.mrb[0].mxu0
      %3902 = vmatprep.mubr.bf16.mxu0 %v2933
      %3903 = vmatmul.mubr.bf16.gmra.mrb[0].mxu0 %v2932
      %v3904 = vpop.f32.mrb[0].mxu0
      %v3905 = vadd.f32 %v3776, %v3904
      %v3906 = vpop.f32.mrb[0].mxu0
      %v3907 = vpop.f32.mrb[0].mxu0
      %v3908 = vadd.f32 %v3779, %v3907
      %v3909 = vpop.f32.mrb[0].mxu0
      %3910 = vmatprep.mubr.bf16.mxu0 %v2942
      %3911 = vmatmul.mubr.bf16.gmra.mrb[0].mxu0 %v2941
      %v3912 = vpop.f32.mrb[0].mxu0
      %v3913 = vadd.f32 %v3784, %v3912
      %v3914 = vpop.f32.mrb[0].mxu0
      %v3915 = vpop.f32.mrb[0].mxu0
      %v3916 = vadd.f32 %v3787, %v3915
      %v3917 = vpop.f32.mrb[0].mxu0
      %3918 = vmatprep.mubr.bf16.mxu0 %v2951
      %3919 = vmatmul.mubr.bf16.gmra.mrb[0].mxu0 %v2950
      %v3920 = vpop.f32.mrb[0].mxu0
      %v3921 = vadd.f32 %v3792, %v3920
      %v3922 = vpop.f32.mrb[0].mxu0
      %v3923 = vpop.f32.mrb[0].mxu0
      %v3924 = vadd.f32 %v3795, %v3923
      %v3925 = vpop.f32.mrb[0].mxu0
      %3926 = vmatprep.mubr.bf16.mxu0 %v2960
      %3927 = vmatmul.mubr.bf16.gmra.mrb[0].mxu0 %v2959
      %v3928 = vpop.f32.mrb[0].mxu0
      %v3929 = vadd.f32 %v3800, %v3928
      %v3930 = vpop.f32.mrb[0].mxu0
      %v3931 = vpop.f32.mrb[0].mxu0
      %v3932 = vadd.f32 %v3803, %v3931
      %v3933 = vpop.f32.mrb[0].mxu0
      %3934 = vmatprep.mubr.bf16.mxu0 %v2969
      %3935 = vmatmul.mubr.bf16.gmra.mrb[0].mxu0 %v2968
      %v3936 = vpop.f32.mrb[0].mxu0
      %v3937 = vadd.f32 %v3808, %v3936
      %v3938 = vpop.f32.mrb[0].mxu0
      %v3939 = vpop.f32.mrb[0].mxu0
      %v3940 = vadd.f32 %v3811, %v3939
      %v3941 = vpop.f32.mrb[0].mxu0
      %3942 = vmatprep.mubr.bf16.mxu0 %v2978
      %3943 = vmatmul.mubr.bf16.gmra.mrb[0].mxu0 %v2977
      %v3944 = vpop.f32.mrb[0].mxu0
      %v3945 = vadd.f32 %v3816, %v3944
      %v3946 = vpop.f32.mrb[0].mxu0
      %v3947 = vpop.f32.mrb[0].mxu0
      %v3948 = vadd.f32 %v3819, %v3947
      %v3949 = vpop.f32.mrb[0].mxu0
      %3950 = vmatprep.mubr.bf16.mxu0 %v2987
      %3951 = vmatmul.mubr.bf16.gmra.mrb[0].mxu0 %v2986
      %v3952 = vpop.f32.mrb[0].mxu0
      %v3953 = vadd.f32 %v3824, %v3952
      %v3954 = vpop.f32.mrb[0].mxu0
      %v3955 = vpop.f32.mrb[0].mxu0
      %v3956 = vadd.f32 %v3827, %v3955
      %v3957 = vpop.f32.mrb[0].mxu0
      %3958 = vmatprep.mubr.bf16.mxu0 %v2996
      %3959 = vmatmul.mubr.bf16.gmra.mrb[0].mxu0 %v2995
      %v3960 = vpop.f32.mrb[0].mxu0
      %v3961 = vadd.f32 %v3832, %v3960
      %v3962 = vpop.f32.mrb[0].mxu0
      %v3963 = vpop.f32.mrb[0].mxu0
      %v3964 = vadd.f32 %v3835, %v3963
      %v3965 = vpop.f32.mrb[0].mxu0
      %3966 = vdwg.mxu0
      %3967 = vmatprep.subr.bf16.mxu0 0
      %3968 = vmatpush1.bf16.msra.mxu0 %v3484
      %3969 = vmatprep.subr.bf16.mxu0 0
      %3970 = vmatpush1.bf16.msra.mxu0 %v3485
      %3971 = vmatprep.subr.bf16.mxu0 0
      %3972 = vmatpush1.bf16.msra.mxu0 %v3486
      %3973 = vmatprep.subr.bf16.mxu0 0
      %3974 = vmatpush1.bf16.msra.mxu0 %v3487
      %3975 = vmatprep.subr.bf16.mxu0 0
      %3976 = vmatpush1.bf16.msra.mxu0 %v3488
      %3977 = vmatprep.subr.bf16.mxu0 0
      %3978 = vmatpush1.bf16.msra.mxu0 %v3489
      %3979 = vmatprep.subr.bf16.mxu0 0
      %3980 = vmatpush1.bf16.msra.mxu0 %v3490
      %3981 = vmatprep.subr.bf16.mxu0 0
      %3982 = vmatpush1.bf16.msra.mxu0 %v3491
      %3983 = vmatprep.subr.bf16.mxu0 0
      %3984 = vmatpush1.bf16.msra.mxu0 %v3492
      %3985 = vmatprep.subr.bf16.mxu0 0
      %3986 = vmatpush1.bf16.msra.mxu0 %v3493
      %3987 = vmatprep.subr.bf16.mxu0 0
      %3988 = vmatpush1.bf16.msra.mxu0 %v3494
      %3989 = vmatprep.subr.bf16.mxu0 0
      %3990 = vmatpush1.bf16.msra.mxu0 %v3495
      %3991 = vmatprep.subr.bf16.mxu0 0
      %3992 = vmatpush1.bf16.msra.mxu0 %v3496
      %3993 = vmatprep.subr.bf16.mxu0 0
      %3994 = vmatpush1.bf16.msra.mxu0 %v3497
      %3995 = vmatprep.subr.bf16.mxu0 0
      %3996 = vmatpush1.bf16.msra.mxu0 %v3498
      %3997 = vmatprep.subr.bf16.mxu0 0
      %3998 = vmatpush1.bf16.msra.mxu0 %v3499
      %3999 = vmatprep.mubr.bf16.mxu0 %v2899
      %4000 = vmatmul.mubr.bf16.gmra.mrb[0].mxu0 %v2898
      %v4001 = vpop.f32.mrb[0].mxu0
      %v4002 = vadd.f32 %v3873, %v4001
      %v4003 = vpop.f32.mrb[0].mxu0
      %v4004 = vpop.f32.mrb[0].mxu0
      %v4005 = vadd.f32 %v3876, %v4004
      %v4006 = vpop.f32.mrb[0].mxu0
      %4007 = vmatprep.mubr.bf16.mxu0 %v2908
      %4008 = vmatmul.mubr.bf16.gmra.mrb[0].mxu0 %v2907
      %v4009 = vpop.f32.mrb[0].mxu0
      %v4010 = vadd.f32 %v3881, %v4009
      %v4011 = vpop.f32.mrb[0].mxu0
      %v4012 = vpop.f32.mrb[0].mxu0
      %v4013 = vadd.f32 %v3884, %v4012
      %v4014 = vpop.f32.mrb[0].mxu0
      %4015 = vmatprep.mubr.bf16.mxu0 %v2917
      %4016 = vmatmul.mubr.bf16.gmra.mrb[0].mxu0 %v2916
      %v4017 = vpop.f32.mrb[0].mxu0
      %v4018 = vadd.f32 %v3889, %v4017
      %v4019 = vpop.f32.mrb[0].mxu0
      %v4020 = vpop.f32.mrb[0].mxu0
      %v4021 = vadd.f32 %v3892, %v4020
      %v4022 = vpop.f32.mrb[0].mxu0
      %4023 = vmatprep.mubr.bf16.mxu0 %v2926
      %4024 = vmatmul.mubr.bf16.gmra.mrb[0].mxu0 %v2925
      %v4025 = vpop.f32.mrb[0].mxu0
      %v4026 = vadd.f32 %v3897, %v4025
      %v4027 = vpop.f32.mrb[0].mxu0
      %v4028 = vpop.f32.mrb[0].mxu0
      %v4029 = vadd.f32 %v3900, %v4028
      %v4030 = vpop.f32.mrb[0].mxu0
      %4031 = vmatprep.mubr.bf16.mxu0 %v2935
      %4032 = vmatmul.mubr.bf16.gmra.mrb[0].mxu0 %v2934
      %v4033 = vpop.f32.mrb[0].mxu0
      %v4034 = vadd.f32 %v3905, %v4033
      %v4035 = vpop.f32.mrb[0].mxu0
      %v4036 = vpop.f32.mrb[0].mxu0
      %v4037 = vadd.f32 %v3908, %v4036
      %v4038 = vpop.f32.mrb[0].mxu0
      %4039 = vmatprep.mubr.bf16.mxu0 %v2944
      %4040 = vmatmul.mubr.bf16.gmra.mrb[0].mxu0 %v2943
      %v4041 = vpop.f32.mrb[0].mxu0
      %v4042 = vadd.f32 %v3913, %v4041
      %v4043 = vpop.f32.mrb[0].mxu0
      %v4044 = vpop.f32.mrb[0].mxu0
      %v4045 = vadd.f32 %v3916, %v4044
      %v4046 = vpop.f32.mrb[0].mxu0
      %4047 = vmatprep.mubr.bf16.mxu0 %v2953
      %4048 = vmatmul.mubr.bf16.gmra.mrb[0].mxu0 %v2952
      %v4049 = vpop.f32.mrb[0].mxu0
      %v4050 = vadd.f32 %v3921, %v4049
      %v4051 = vpop.f32.mrb[0].mxu0
      %v4052 = vpop.f32.mrb[0].mxu0
      %v4053 = vadd.f32 %v3924, %v4052
      %v4054 = vpop.f32.mrb[0].mxu0
      %4055 = vmatprep.mubr.bf16.mxu0 %v2962
      %4056 = vmatmul.mubr.bf16.gmra.mrb[0].mxu0 %v2961
      %v4057 = vpop.f32.mrb[0].mxu0
      %v4058 = vadd.f32 %v3929, %v4057
      %v4059 = vpop.f32.mrb[0].mxu0
      %v4060 = vpop.f32.mrb[0].mxu0
      %v4061 = vadd.f32 %v3932, %v4060
      %v4062 = vpop.f32.mrb[0].mxu0
      %4063 = vmatprep.mubr.bf16.mxu0 %v2971
      %4064 = vmatmul.mubr.bf16.gmra.mrb[0].mxu0 %v2970
      %v4065 = vpop.f32.mrb[0].mxu0
      %v4066 = vadd.f32 %v3937, %v4065
      %v4067 = vpop.f32.mrb[0].mxu0
      %v4068 = vpop.f32.mrb[0].mxu0
      %v4069 = vadd.f32 %v3940, %v4068
      %v4070 = vpop.f32.mrb[0].mxu0
      %4071 = vmatprep.mubr.bf16.mxu0 %v2980
      %4072 = vmatmul.mubr.bf16.gmra.mrb[0].mxu0 %v2979
      %v4073 = vpop.f32.mrb[0].mxu0
      %v4074 = vadd.f32 %v3945, %v4073
      %v4075 = vpop.f32.mrb[0].mxu0
      %v4076 = vpop.f32.mrb[0].mxu0
      %v4077 = vadd.f32 %v3948, %v4076
      %v4078 = vpop.f32.mrb[0].mxu0
      %4079 = vmatprep.mubr.bf16.mxu0 %v2989
      %4080 = vmatmul.mubr.bf16.gmra.mrb[0].mxu0 %v2988
      %v4081 = vpop.f32.mrb[0].mxu0
      %v4082 = vadd.f32 %v3953, %v4081
      %v4083 = vpop.f32.mrb[0].mxu0
      %v4084 = vpop.f32.mrb[0].mxu0
      %v4085 = vadd.f32 %v3956, %v4084
      %v4086 = vpop.f32.mrb[0].mxu0
      %4087 = vmatprep.mubr.bf16.mxu0 %v2998
      %4088 = vmatmul.mubr.bf16.gmra.mrb[0].mxu0 %v2997
      %v4089 = vpop.f32.mrb[0].mxu0
      %v4090 = vadd.f32 %v3961, %v4089
      %v4091 = vpop.f32.mrb[0].mxu0
      %v4092 = vpop.f32.mrb[0].mxu0
      %v4093 = vadd.f32 %v3964, %v4092
      %v4094 = vpop.f32.mrb[0].mxu0
      %4095 = vdwg.mxu0
      %4096 = vmatprep.subr.bf16.mxu0 0
      %4097 = vmatpush1.bf16.msra.mxu0 %v3500
      %4098 = vmatprep.subr.bf16.mxu0 0
      %4099 = vmatpush1.bf16.msra.mxu0 %v3501
      %4100 = vmatprep.subr.bf16.mxu0 0
      %4101 = vmatpush1.bf16.msra.mxu0 %v3502
      %4102 = vmatprep.subr.bf16.mxu0 0
      %4103 = vmatpush1.bf16.msra.mxu0 %v3503
      %4104 = vmatprep.subr.bf16.mxu0 0
      %4105 = vmatpush1.bf16.msra.mxu0 %v3504
      %4106 = vmatprep.subr.bf16.mxu0 0
      %4107 = vmatpush1.bf16.msra.mxu0 %v3505
      %4108 = vmatprep.subr.bf16.mxu0 0
      %4109 = vmatpush1.bf16.msra.mxu0 %v3506
      %4110 = vmatprep.subr.bf16.mxu0 0
      %4111 = vmatpush1.bf16.msra.mxu0 %v3507
      %4112 = vmatprep.subr.bf16.mxu0 0
      %4113 = vmatpush1.bf16.msra.mxu0 0
      %4114 = vmatprep.subr.bf16.mxu0 0
      %4115 = vmatpush1.bf16.msra.mxu0 0
      %4116 = vmatprep.subr.bf16.mxu0 0
      %4117 = vmatpush1.bf16.msra.mxu0 0
      %4118 = vmatprep.subr.bf16.mxu0 0
      %4119 = vmatpush1.bf16.msra.mxu0 0
      %4120 = vmatprep.subr.bf16.mxu0 0
      %4121 = vmatpush1.bf16.msra.mxu0 0
      %4122 = vmatprep.subr.bf16.mxu0 0
      %4123 = vmatpush1.bf16.msra.mxu0 0
      %4124 = vmatprep.subr.bf16.mxu0 0
      %4125 = vmatpush1.bf16.msra.mxu0 0
      %4126 = vmatprep.subr.bf16.mxu0 0
      %4127 = vmatpush1.bf16.msra.mxu0 0
      %4128 = vmatprep.mubr.bf16.mxu0 0
      %4129 = vmatmul.mubr.bf16.gmra.mrb[0].mxu0 %v2900
      %v4130 = vpop.f32.mrb[0].mxu0
      %v4131 = vadd.f32 %v4002, %v4130
      %v4132 = vpop.f32.mrb[0].mxu0
      %v4133 = vpop.f32.mrb[0].mxu0
      %v4134 = vadd.f32 %v4005, %v4133
      %v4135 = vpop.f32.mrb[0].mxu0
      %4136 = vmatprep.mubr.bf16.mxu0 0
      %4137 = vmatmul.mubr.bf16.gmra.mrb[0].mxu0 %v2909
      %v4138 = vpop.f32.mrb[0].mxu0
      %v4139 = vadd.f32 %v4010, %v4138
      %v4140 = vpop.f32.mrb[0].mxu0
      %v4141 = vpop.f32.mrb[0].mxu0
      %v4142 = vadd.f32 %v4013, %v4141
      %v4143 = vpop.f32.mrb[0].mxu0
      %4144 = vmatprep.mubr.bf16.mxu0 0
      %4145 = vmatmul.mubr.bf16.gmra.mrb[0].mxu0 %v2918
      %v4146 = vpop.f32.mrb[0].mxu0
      %v4147 = vadd.f32 %v4018, %v4146
      %v4148 = vpop.f32.mrb[0].mxu0
      %v4149 = vpop.f32.mrb[0].mxu0
      %v4150 = vadd.f32 %v4021, %v4149
      %v4151 = vpop.f32.mrb[0].mxu0
      %4152 = vmatprep.mubr.bf16.mxu0 0
      %4153 = vmatmul.mubr.bf16.gmra.mrb[0].mxu0 %v2927
      %v4154 = vpop.f32.mrb[0].mxu0
      %v4155 = vadd.f32 %v4026, %v4154
      %v4156 = vpop.f32.mrb[0].mxu0
      %v4157 = vpop.f32.mrb[0].mxu0
      %v4158 = vadd.f32 %v4029, %v4157
      %v4159 = vpop.f32.mrb[0].mxu0
      %4160 = vmatprep.mubr.bf16.mxu0 0
      %4161 = vmatmul.mubr.bf16.gmra.mrb[0].mxu0 %v2936
      %v4162 = vpop.f32.mrb[0].mxu0
      %v4163 = vadd.f32 %v4034, %v4162
      %v4164 = vpop.f32.mrb[0].mxu0
      %v4165 = vpop.f32.mrb[0].mxu0
      %v4166 = vadd.f32 %v4037, %v4165
      %v4167 = vpop.f32.mrb[0].mxu0
      %4168 = vmatprep.mubr.bf16.mxu0 0
      %4169 = vmatmul.mubr.bf16.gmra.mrb[0].mxu0 %v2945
      %v4170 = vpop.f32.mrb[0].mxu0
      %v4171 = vadd.f32 %v4042, %v4170
      %v4172 = vpop.f32.mrb[0].mxu0
      %v4173 = vpop.f32.mrb[0].mxu0
      %v4174 = vadd.f32 %v4045, %v4173
      %v4175 = vpop.f32.mrb[0].mxu0
      %4176 = vmatprep.mubr.bf16.mxu0 0
      %4177 = vmatmul.mubr.bf16.gmra.mrb[0].mxu0 %v2954
      %v4178 = vpop.f32.mrb[0].mxu0
      %v4179 = vadd.f32 %v4050, %v4178
      %v4180 = vpop.f32.mrb[0].mxu0
      %v4181 = vpop.f32.mrb[0].mxu0
      %v4182 = vadd.f32 %v4053, %v4181
      %v4183 = vpop.f32.mrb[0].mxu0
      %4184 = vmatprep.mubr.bf16.mxu0 0
      %4185 = vmatmul.mubr.bf16.gmra.mrb[0].mxu0 %v2963
      %v4186 = vpop.f32.mrb[0].mxu0
      %v4187 = vadd.f32 %v4058, %v4186
      %v4188 = vpop.f32.mrb[0].mxu0
      %v4189 = vpop.f32.mrb[0].mxu0
      %v4190 = vadd.f32 %v4061, %v4189
      %v4191 = vpop.f32.mrb[0].mxu0
      %4192 = vmatprep.mubr.bf16.mxu0 0
      %4193 = vmatmul.mubr.bf16.gmra.mrb[0].mxu0 %v2972
      %v4194 = vpop.f32.mrb[0].mxu0
      %v4195 = vadd.f32 %v4066, %v4194
      %v4196 = vpop.f32.mrb[0].mxu0
      %v4197 = vpop.f32.mrb[0].mxu0
      %v4198 = vadd.f32 %v4069, %v4197
      %v4199 = vpop.f32.mrb[0].mxu0
      %4200 = vmatprep.mubr.bf16.mxu0 0
      %4201 = vmatmul.mubr.bf16.gmra.mrb[0].mxu0 %v2981
      %v4202 = vpop.f32.mrb[0].mxu0
      %v4203 = vadd.f32 %v4074, %v4202
      %v4204 = vpop.f32.mrb[0].mxu0
      %v4205 = vpop.f32.mrb[0].mxu0
      %v4206 = vadd.f32 %v4077, %v4205
      %v4207 = vpop.f32.mrb[0].mxu0
      %4208 = vmatprep.mubr.bf16.mxu0 0
      %4209 = vmatmul.mubr.bf16.gmra.mrb[0].mxu0 %v2990
      %v4210 = vpop.f32.mrb[0].mxu0
      %v4211 = vadd.f32 %v4082, %v4210
      %v4212 = vpop.f32.mrb[0].mxu0
      %v4213 = vpop.f32.mrb[0].mxu0
      %v4214 = vadd.f32 %v4085, %v4213
      %v4215 = vpop.f32.mrb[0].mxu0
      %4216 = vmatprep.mubr.bf16.mxu0 0
      %4217 = vmatmul.mubr.bf16.gmra.mrb[0].mxu0 %v2999
      %v4218 = vpop.f32.mrb[0].mxu0
      %v4219 = vadd.f32 %v4090, %v4218
      %v4220 = vpop.f32.mrb[0].mxu0
      %v4221 = vpop.f32.mrb[0].mxu0
      %v4222 = vadd.f32 %v4093, %v4221
      %v4223 = vpop.f32.mrb[0].mxu0
      %4224 = vdwg.mxu0
      %v4225 = vmax.f32 %v4131, 0.0
      %v4226 = vmax.f32 %v4134, 0.0
      %v4227 = vmax.f32 %v4139, 0.0
      %v4228 = vmax.f32 %v4142, 0.0
      %v4229 = vmax.f32 %v4147, 0.0
      %v4230 = vmax.f32 %v4150, 0.0
      %v4231 = vmax.f32 %v4155, 0.0
      %v4232 = vmax.f32 %v4158, 0.0
      %v4233 = vmax.f32 %v4163, 0.0
      %v4234 = vmax.f32 %v4166, 0.0
      %v4235 = vmax.f32 %v4171, 0.0
      %v4236 = vmax.f32 %v4174, 0.0
      %v4237 = vmax.f32 %v4179, 0.0
      %v4238 = vmax.f32 %v4182, 0.0
      %v4239 = vmax.f32 %v4187, 0.0
      %v4240 = vmax.f32 %v4190, 0.0
      %v4241 = vmax.f32 %v4195, 0.0
      %v4242 = vmax.f32 %v4198, 0.0
      %v4243 = vmax.f32 %v4203, 0.0
      %v4244 = vmax.f32 %v4206, 0.0
      %v4245 = vmax.f32 %v4211, 0.0
      %v4246 = vmax.f32 %v4214, 0.0
      %v4247 = vmax.f32 %v4219, 0.0
      %v4248 = vmax.f32 %v4222, 0.0
      %v4249 = vld [vmem:[%s9 + $0x1] sm:$0x1]
      %v4250 = vlaneseq
      %v4251 = vshrl.u32 %v4250, 7
      %v4252 = vsub.s32 0, %v4251
      %v4253 = vrot.slane %v4249, %v4252
      %v4254 = vmul.f32 %v4225, %v4253
      %v4255 = vmul.f32 %v4226, %v4253
      %v4256 = vmul.f32 %v4227, %v4253
      %v4257 = vmul.f32 %v4228, %v4253
      %v4258 = vmul.f32 %v4229, %v4253
      %v4259 = vmul.f32 %v4230, %v4253
      %v4260 = vmul.f32 %v4231, %v4253
      %v4261 = vmul.f32 %v4232, %v4253
      %v4262 = vmul.f32 %v4233, %v4253
      %v4263 = vmul.f32 %v4234, %v4253
      %v4264 = vmul.f32 %v4235, %v4253
      %v4265 = vmul.f32 %v4236, %v4253
      %v4266 = vmul.f32 %v4237, %v4253
      %v4267 = vmul.f32 %v4238, %v4253
      %v4268 = vmul.f32 %v4239, %v4253
      %v4269 = vmul.f32 %v4240, %v4253
      %v4270 = vmul.f32 %v4241, %v4253
      %v4271 = vmul.f32 %v4242, %v4253
      %v4272 = vmul.f32 %v4243, %v4253
      %v4273 = vmul.f32 %v4244, %v4253
      %v4274 = vmul.f32 %v4245, %v4253
      %v4275 = vmul.f32 %v4246, %v4253
      %v4276 = vmul.f32 %v4247, %v4253
      %v4277 = vmul.f32 %v4248, %v4253
      %v4278 = vld [vmem:[%s9 + $0x2] sm:$0x1]
      %v4279 = vlaneseq
      %v4280 = vshrl.u32 %v4279, 7
      %v4281 = vsub.s32 0, %v4280
      %v4282 = vrot.slane %v4278, %v4281
      %v4283 = vadd.f32 %v4254, %v4282
      %v4284 = vadd.f32 %v4255, %v4282
      %v4285 = vadd.f32 %v4256, %v4282
      %v4286 = vadd.f32 %v4257, %v4282
      %v4287 = vadd.f32 %v4258, %v4282
      %v4288 = vadd.f32 %v4259, %v4282
      %v4289 = vadd.f32 %v4260, %v4282
      %v4290 = vadd.f32 %v4261, %v4282
      %v4291 = vadd.f32 %v4262, %v4282
      %v4292 = vadd.f32 %v4263, %v4282
      %v4293 = vadd.f32 %v4264, %v4282
      %v4294 = vadd.f32 %v4265, %v4282
      %v4295 = vadd.f32 %v4266, %v4282
      %v4296 = vadd.f32 %v4267, %v4282
      %v4297 = vadd.f32 %v4268, %v4282
      %v4298 = vadd.f32 %v4269, %v4282
      %v4299 = vadd.f32 %v4270, %v4282
      %v4300 = vadd.f32 %v4271, %v4282
      %v4301 = vadd.f32 %v4272, %v4282
      %v4302 = vadd.f32 %v4273, %v4282
      %v4303 = vadd.f32 %v4274, %v4282
      %v4304 = vadd.f32 %v4275, %v4282
      %v4305 = vadd.f32 %v4276, %v4282
      %v4306 = vadd.f32 %v4277, %v4282
      %v4307 = vld [vmem:[%s10] ss:$8 sm:$0x3]
      %4308 = vst [vmem:[#allocation3] sm:$0xff] 0.0
      %4309 = vst [vmem:[#allocation3 + $0x8] sm:$0x3] 0.0
      %4310 = vst [vmem:[#allocation3 + $0xa0] sm:$0xff] 0.0
      %4311 = vst [vmem:[#allocation3 + $0xa8] sm:$0x3] 0.0
      %4312 = vst [vmem:[#allocation3 + $0x140] sm:$0xff] 0.0
      %4313 = vst [vmem:[#allocation3 + $0x148] sm:$0x3] 0.0
      %s4314 = scalar_lea.vmem [#allocation3], 144
      %4315 = vst [vmem:[%s4314] sm:$0xff] 0.0
      %4316 = vst [vmem:[%s4314 + $0x8] sm:$0x3] 0.0
      %4317 = vst [vmem:[%s4314 + $0xa0] sm:$0xff] 0.0
      %4318 = vst [vmem:[%s4314 + $0xa8] sm:$0x3] 0.0
      %4319 = vst [vmem:[%s4314 + $0x140] sm:$0xff] 0.0
      %4320 = vst [vmem:[%s4314 + $0x148] sm:$0x3] 0.0
      %4321 = vst [vmem:[#allocation3] sm:$0x1] 0.0
      %4322 = vst [vmem:[#allocation3 + $0x10] sm:$0x1] 0.0
      %4323 = vst [vmem:[#allocation3 + $0x20] sm:$0x1] 0.0
      %4324 = vst [vmem:[#allocation3 + $0x30] sm:$0x1] 0.0
      %4325 = vst [vmem:[#allocation3 + $0x40] sm:$0x1] 0.0
      %4326 = vst [vmem:[#allocation3 + $0x50] sm:$0x1] 0.0
      %4327 = vst [vmem:[#allocation3 + $0x60] sm:$0x1] 0.0
      %4328 = vst [vmem:[#allocation3 + $0x70] sm:$0x1] 0.0
      %4329 = vst [vmem:[#allocation3 + $0x80] sm:$0x1] 0.0
      %4330 = vst [vmem:[#allocation3 + $0x90] sm:$0x1] 0.0
      %4331 = vst [vmem:[#allocation3 + $0xa0] sm:$0x1] 0.0
      %4332 = vst [vmem:[#allocation3 + $0xb0] sm:$0x1] 0.0
      %4333 = vst [vmem:[#allocation3 + $0xc0] sm:$0x1] 0.0
      %4334 = vst [vmem:[#allocation3 + $0xd0] sm:$0x1] 0.0
      %4335 = vst [vmem:[#allocation3 + $0xe0] sm:$0x1] 0.0
      %4336 = vst [vmem:[#allocation3 + $0xf0] sm:$0x1] 0.0
      %4337 = vst [vmem:[#allocation3 + $0x100] sm:$0x1] 0.0
      %4338 = vst [vmem:[#allocation3 + $0x110] sm:$0x1] 0.0
      %4339 = vst [vmem:[#allocation3 + $0x120] sm:$0x1] 0.0
      %4340 = vst [vmem:[#allocation3 + $0x130] sm:$0x1] 0.0
      %4341 = vst [vmem:[#allocation3 + $0x140] sm:$0x1] 0.0
      %4342 = vst [vmem:[#allocation3 + $0x150] sm:$0x1] 0.0
      %4343 = vst [vmem:[#allocation3 + $0x160] sm:$0x1] 0.0
      %4344 = vst [vmem:[#allocation3 + $0x170] sm:$0x1] 0.0
      %4345 = vst [vmem:[#allocation3 + $0x180] sm:$0x1] 0.0
      %4346 = vst [vmem:[#allocation3 + $0x190] sm:$0x1] 0.0
      %4347 = vst [vmem:[#allocation3 + $0x1a0] sm:$0x1] 0.0
      %4348 = vst [vmem:[#allocation3 + $0x1b0] sm:$0x1] 0.0
      %4349 = vst [vmem:[#allocation3 + $0x1c0] sm:$0x1] 0.0
      %4350 = vst [vmem:[#allocation3 + $0x1d0] sm:$0x1] 0.0
      %4351 = vst [vmem:[#allocation3 + $0x9] sm:$0x1] 0.0
      %4352 = vst [vmem:[#allocation3 + $0x19] sm:$0x1] 0.0
      %4353 = vst [vmem:[#allocation3 + $0x29] sm:$0x1] 0.0
      %4354 = vst [vmem:[#allocation3 + $0x39] sm:$0x1] 0.0
      %4355 = vst [vmem:[#allocation3 + $0x49] sm:$0x1] 0.0
      %4356 = vst [vmem:[#allocation3 + $0x59] sm:$0x1] 0.0
      %4357 = vst [vmem:[#allocation3 + $0x69] sm:$0x1] 0.0
      %4358 = vst [vmem:[#allocation3 + $0x79] sm:$0x1] 0.0
      %4359 = vst [vmem:[#allocation3 + $0x89] sm:$0x1] 0.0
      %4360 = vst [vmem:[#allocation3 + $0x99] sm:$0x1] 0.0
      %4361 = vst [vmem:[#allocation3 + $0xa9] sm:$0x1] 0.0
      %4362 = vst [vmem:[#allocation3 + $0xb9] sm:$0x1] 0.0
      %4363 = vst [vmem:[#allocation3 + $0xc9] sm:$0x1] 0.0
      %4364 = vst [vmem:[#allocation3 + $0xd9] sm:$0x1] 0.0
      %4365 = vst [vmem:[#allocation3 + $0xe9] sm:$0x1] 0.0
      %4366 = vst [vmem:[#allocation3 + $0xf9] sm:$0x1] 0.0
      %4367 = vst [vmem:[#allocation3 + $0x109] sm:$0x1] 0.0
      %4368 = vst [vmem:[#allocation3 + $0x119] sm:$0x1] 0.0
      %4369 = vst [vmem:[#allocation3 + $0x129] sm:$0x1] 0.0
      %4370 = vst [vmem:[#allocation3 + $0x139] sm:$0x1] 0.0
      %4371 = vst [vmem:[#allocation3 + $0x149] sm:$0x1] 0.0
      %4372 = vst [vmem:[#allocation3 + $0x159] sm:$0x1] 0.0
      %4373 = vst [vmem:[#allocation3 + $0x169] sm:$0x1] 0.0
      %4374 = vst [vmem:[#allocation3 + $0x179] sm:$0x1] 0.0
      %4375 = vst [vmem:[#allocation3 + $0x189] sm:$0x1] 0.0
      %4376 = vst [vmem:[#allocation3 + $0x199] sm:$0x1] 0.0
      %4377 = vst [vmem:[#allocation3 + $0x1a9] sm:$0x1] 0.0
      %4378 = vst [vmem:[#allocation3 + $0x1b9] sm:$0x1] 0.0
      %4379 = vst [vmem:[#allocation3 + $0x1c9] sm:$0x1] 0.0
      %4380 = vst [vmem:[#allocation3 + $0x1d9] sm:$0x1] 0.0
      %s4381 = scalar_lea.vmem [#allocation3], 16
      %4382 = vst [vmem:[%s4381 + $0x1] sm:$0xff] %v4283
      %4383 = vst [vmem:[%s4381 + $0x11] sm:$0xff] %v4284
      %4384 = vst [vmem:[%s4381 + $0x21] sm:$0xff] %v4285
      %4385 = vst [vmem:[%s4381 + $0x31] sm:$0xff] %v4286
      %4386 = vst [vmem:[%s4381 + $0x41] sm:$0xff] %v4287
      %4387 = vst [vmem:[%s4381 + $0x51] sm:$0xff] %v4288
      %4388 = vst [vmem:[%s4381 + $0x61] sm:$0xff] %v4289
      %4389 = vst [vmem:[%s4381 + $0x71] sm:$0xff] %v4290
      %4390 = vst [vmem:[%s4381 + $0xa1] sm:$0xff] %v4291
      %4391 = vst [vmem:[%s4381 + $0xb1] sm:$0xff] %v4292
      %4392 = vst [vmem:[%s4381 + $0xc1] sm:$0xff] %v4293
      %4393 = vst [vmem:[%s4381 + $0xd1] sm:$0xff] %v4294
      %4394 = vst [vmem:[%s4381 + $0xe1] sm:$0xff] %v4295
      %4395 = vst [vmem:[%s4381 + $0xf1] sm:$0xff] %v4296
      %4396 = vst [vmem:[%s4381 + $0x101] sm:$0xff] %v4297
      %4397 = vst [vmem:[%s4381 + $0x111] sm:$0xff] %v4298
      %4398 = vst [vmem:[%s4381 + $0x141] sm:$0xff] %v4299
      %4399 = vst [vmem:[%s4381 + $0x151] sm:$0xff] %v4300
      %4400 = vst [vmem:[%s4381 + $0x161] sm:$0xff] %v4301
      %4401 = vst [vmem:[%s4381 + $0x171] sm:$0xff] %v4302
      %4402 = vst [vmem:[%s4381 + $0x181] sm:$0xff] %v4303
      %4403 = vst [vmem:[%s4381 + $0x191] sm:$0xff] %v4304
      %4404 = vst [vmem:[%s4381 + $0x1a1] sm:$0xff] %v4305
      %4405 = vst [vmem:[%s4381 + $0x1b1] sm:$0xff] %v4306
      %v4406 = vld [vmem:[#allocation3] sm:$0xff]
      %v4407 = vld [vmem:[#allocation3 + $0x10] sm:$0xff]
      %v4408 = vld [vmem:[#allocation3 + $0x20] sm:$0xff]
      %v4409 = vld [vmem:[#allocation3 + $0x30] sm:$0xff]
      %v4410 = vld [vmem:[#allocation3 + $0x40] sm:$0xff]
      %v4411 = vld [vmem:[#allocation3 + $0x50] sm:$0xff]
      %v4412 = vld [vmem:[#allocation3 + $0x60] sm:$0xff]
      %v4413 = vld [vmem:[#allocation3 + $0x70] sm:$0xff]
      %v4414 = vld [vmem:[#allocation3 + $0xa0] sm:$0xff]
      %v4415 = vld [vmem:[#allocation3 + $0xb0] sm:$0xff]
      %v4416 = vld [vmem:[#allocation3 + $0xc0] sm:$0xff]
      %v4417 = vld [vmem:[#allocation3 + $0xd0] sm:$0xff]
      %v4418 = vld [vmem:[#allocation3 + $0xe0] sm:$0xff]
      %v4419 = vld [vmem:[#allocation3 + $0xf0] sm:$0xff]
      %v4420 = vld [vmem:[#allocation3 + $0x100] sm:$0xff]
      %v4421 = vld [vmem:[#allocation3 + $0x110] sm:$0xff]
      %v4422 = vld [vmem:[#allocation3 + $0x140] sm:$0xff]
      %v4423 = vld [vmem:[#allocation3 + $0x150] sm:$0xff]
      %v4424 = vld [vmem:[#allocation3 + $0x160] sm:$0xff]
      %v4425 = vld [vmem:[#allocation3 + $0x170] sm:$0xff]
      %v4426 = vld [vmem:[#allocation3 + $0x180] sm:$0xff]
      %v4427 = vld [vmem:[#allocation3 + $0x190] sm:$0xff]
      %v4428 = vld [vmem:[#allocation3 + $0x1a0] sm:$0xff]
      %v4429 = vld [vmem:[#allocation3 + $0x1b0] sm:$0xff]
      %v4430 = vpack.c.bf16 %v4406, %v4406
      %v4431 = vpack.c.bf16 %v4407, %v4407
      %v4432 = vpack.c.bf16 %v4408, %v4408
      %v4433 = vpack.c.bf16 %v4409, %v4409
      %v4434 = vpack.c.bf16 %v4410, %v4410
      %v4435 = vpack.c.bf16 %v4411, %v4411
      %v4436 = vpack.c.bf16 %v4412, %v4412
      %v4437 = vpack.c.bf16 %v4413, %v4413
      %v4438 = vpack.c.bf16 %v4414, %v4414
      %v4439 = vpack.c.bf16 %v4415, %v4415
      %v4440 = vpack.c.bf16 %v4416, %v4416
      %v4441 = vpack.c.bf16 %v4417, %v4417
      %v4442 = vpack.c.bf16 %v4418, %v4418
      %v4443 = vpack.c.bf16 %v4419, %v4419
      %v4444 = vpack.c.bf16 %v4420, %v4420
      %v4445 = vpack.c.bf16 %v4421, %v4421
      %v4446 = vpack.c.bf16 %v4422, %v4422
      %v4447 = vpack.c.bf16 %v4423, %v4423
      %v4448 = vpack.c.bf16 %v4424, %v4424
      %v4449 = vpack.c.bf16 %v4425, %v4425
      %v4450 = vpack.c.bf16 %v4426, %v4426
      %v4451 = vpack.c.bf16 %v4427, %v4427
      %v4452 = vpack.c.bf16 %v4428, %v4428
      %v4453 = vpack.c.bf16 %v4429, %v4429
      %v4478 = vunpack.c.l.b16 %v4430
      %v4479 = vunpack.c.l.b16 %v4431
      %v4480 = vunpack.c.l.b16 %v4432
      %v4481 = vunpack.c.l.b16 %v4433
      %v4482 = vunpack.c.l.b16 %v4434
      %v4483 = vunpack.c.l.b16 %v4435
      %v4484 = vunpack.c.l.b16 %v4436
      %v4485 = vunpack.c.l.b16 %v4437
      %v4486 = vunpack.c.l.b16 %v4438
      %v4487 = vunpack.c.l.b16 %v4439
      %v4488 = vunpack.c.l.b16 %v4440
      %v4489 = vunpack.c.l.b16 %v4441
      %v4490 = vunpack.c.l.b16 %v4442
      %v4491 = vunpack.c.l.b16 %v4443
      %v4492 = vunpack.c.l.b16 %v4444
      %v4493 = vunpack.c.l.b16 %v4445
      %v4494 = vunpack.c.l.b16 %v4446
      %v4495 = vunpack.c.l.b16 %v4447
      %v4496 = vunpack.c.l.b16 %v4448
      %v4497 = vunpack.c.l.b16 %v4449
      %v4498 = vunpack.c.l.b16 %v4450
      %v4499 = vunpack.c.l.b16 %v4451
      %v4500 = vunpack.c.l.b16 %v4452
      %v4501 = vunpack.c.l.b16 %v4453
      %v4502 = vpack.c.b16 %v4479, %v4478
      %v4503 = vpack.c.b16 %v4481, %v4480
      %v4504 = vpack.c.b16 %v4483, %v4482
      %v4505 = vpack.c.b16 %v4485, %v4484
      %v4506 = vpack.c.b16 %v4487, %v4486
      %v4507 = vpack.c.b16 %v4489, %v4488
      %v4508 = vpack.c.b16 %v4491, %v4490
      %v4509 = vpack.c.b16 %v4493, %v4492
      %v4510 = vpack.c.b16 %v4495, %v4494
      %v4511 = vpack.c.b16 %v4497, %v4496
      %v4512 = vpack.c.b16 %v4499, %v4498
      %v4513 = vpack.c.b16 %v4501, %v4500
      %4526 = vst [vmem:[#allocation4] sm:$0xff] %v4502
      %4527 = vst [vmem:[#allocation4 + $0x48] sm:$0xff] %v4503
      %4528 = vst [vmem:[#allocation4 + $0x90] sm:$0xff] %v4504
      %4529 = vst [vmem:[#allocation4 + $0xd8] sm:$0xff] %v4505
      %4530 = vst [vmem:[#allocation4 + $0x120] sm:$0xff] %v4506
      %4531 = vst [vmem:[#allocation4 + $0x168] sm:$0xff] %v4507
      %4532 = vst [vmem:[#allocation4 + $0x1b0] sm:$0xff] %v4508
      %4533 = vst [vmem:[#allocation4 + $0x1f8] sm:$0xff] %v4509
      %4534 = vst [vmem:[#allocation4 + $0x240] sm:$0xff] %v4510
      %4535 = vst [vmem:[#allocation4 + $0x288] sm:$0xff] %v4511
      %4536 = vst [vmem:[#allocation4 + $0x2d0] sm:$0xff] %v4512
      %4537 = vst [vmem:[#allocation4 + $0x318] sm:$0xff] %v4513
      %v4538 = vld [vmem:[#allocation3 + $0x1] sm:$0xff]
      %v4539 = vld [vmem:[#allocation3 + $0x11] sm:$0xff]
      %v4540 = vld [vmem:[#allocation3 + $0x21] sm:$0xff]
      %v4541 = vld [vmem:[#allocation3 + $0x31] sm:$0xff]
      %v4542 = vld [vmem:[#allocation3 + $0x41] sm:$0xff]
      %v4543 = vld [vmem:[#allocation3 + $0x51] sm:$0xff]
      %v4544 = vld [vmem:[#allocation3 + $0x61] sm:$0xff]
      %v4545 = vld [vmem:[#allocation3 + $0x71] sm:$0xff]
      %v4546 = vld [vmem:[#allocation3 + $0xa1] sm:$0xff]
      %v4547 = vld [vmem:[#allocation3 + $0xb1] sm:$0xff]
      %v4548 = vld [vmem:[#allocation3 + $0xc1] sm:$0xff]
      %v4549 = vld [vmem:[#allocation3 + $0xd1] sm:$0xff]
      %v4550 = vld [vmem:[#allocation3 + $0xe1] sm:$0xff]
      %v4551 = vld [vmem:[#allocation3 + $0xf1] sm:$0xff]
      %v4552 = vld [vmem:[#allocation3 + $0x101] sm:$0xff]
      %v4553 = vld [vmem:[#allocation3 + $0x111] sm:$0xff]
      %v4554 = vld [vmem:[#allocation3 + $0x141] sm:$0xff]
      %v4555 = vld [vmem:[#allocation3 + $0x151] sm:$0xff]
      %v4556 = vld [vmem:[#allocation3 + $0x161] sm:$0xff]
      %v4557 = vld [vmem:[#allocation3 + $0x171] sm:$0xff]
      %v4558 = vld [vmem:[#allocation3 + $0x181] sm:$0xff]
      %v4559 = vld [vmem:[#allocation3 + $0x191] sm:$0xff]
      %v4560 = vld [vmem:[#allocation3 + $0x1a1] sm:$0xff]
      %v4561 = vld [vmem:[#allocation3 + $0x1b1] sm:$0xff]
      %v4562 = vpack.c.bf16 %v4538, %v4538
      %v4563 = vpack.c.bf16 %v4539, %v4539
      %v4564 = vpack.c.bf16 %v4540, %v4540
      %v4565 = vpack.c.bf16 %v4541, %v4541
      %v4566 = vpack.c.bf16 %v4542, %v4542
      %v4567 = vpack.c.bf16 %v4543, %v4543
      %v4568 = vpack.c.bf16 %v4544, %v4544
      %v4569 = vpack.c.bf16 %v4545, %v4545
      %v4570 = vpack.c.bf16 %v4546, %v4546
      %v4571 = vpack.c.bf16 %v4547, %v4547
      %v4572 = vpack.c.bf16 %v4548, %v4548
      %v4573 = vpack.c.bf16 %v4549, %v4549
      %v4574 = vpack.c.bf16 %v4550, %v4550
      %v4575 = vpack.c.bf16 %v4551, %v4551
      %v4576 = vpack.c.bf16 %v4552, %v4552
      %v4577 = vpack.c.bf16 %v4553, %v4553
      %v4578 = vpack.c.bf16 %v4554, %v4554
      %v4579 = vpack.c.bf16 %v4555, %v4555
      %v4580 = vpack.c.bf16 %v4556, %v4556
      %v4581 = vpack.c.bf16 %v4557, %v4557
      %v4582 = vpack.c.bf16 %v4558, %v4558
      %v4583 = vpack.c.bf16 %v4559, %v4559
      %v4584 = vpack.c.bf16 %v4560, %v4560
      %v4585 = vpack.c.bf16 %v4561, %v4561
      %v4610 = vunpack.c.l.b16 %v4562
      %v4611 = vunpack.c.l.b16 %v4563
      %v4612 = vunpack.c.l.b16 %v4564
      %v4613 = vunpack.c.l.b16 %v4565
      %v4614 = vunpack.c.l.b16 %v4566
      %v4615 = vunpack.c.l.b16 %v4567
      %v4616 = vunpack.c.l.b16 %v4568
      %v4617 = vunpack.c.l.b16 %v4569
      %v4618 = vunpack.c.l.b16 %v4570
      %v4619 = vunpack.c.l.b16 %v4571
      %v4620 = vunpack.c.l.b16 %v4572
      %v4621 = vunpack.c.l.b16 %v4573
      %v4622 = vunpack.c.l.b16 %v4574
      %v4623 = vunpack.c.l.b16 %v4575
      %v4624 = vunpack.c.l.b16 %v4576
      %v4625 = vunpack.c.l.b16 %v4577
      %v4626 = vunpack.c.l.b16 %v4578
      %v4627 = vunpack.c.l.b16 %v4579
      %v4628 = vunpack.c.l.b16 %v4580
      %v4629 = vunpack.c.l.b16 %v4581
      %v4630 = vunpack.c.l.b16 %v4582
      %v4631 = vunpack.c.l.b16 %v4583
      %v4632 = vunpack.c.l.b16 %v4584
      %v4633 = vunpack.c.l.b16 %v4585
      %v4634 = vpack.c.b16 %v4611, %v4610
      %v4635 = vpack.c.b16 %v4613, %v4612
      %v4636 = vpack.c.b16 %v4615, %v4614
      %v4637 = vpack.c.b16 %v4617, %v4616
      %v4638 = vpack.c.b16 %v4619, %v4618
      %v4639 = vpack.c.b16 %v4621, %v4620
      %v4640 = vpack.c.b16 %v4623, %v4622
      %v4641 = vpack.c.b16 %v4625, %v4624
      %v4642 = vpack.c.b16 %v4627, %v4626
      %v4643 = vpack.c.b16 %v4629, %v4628
      %v4644 = vpack.c.b16 %v4631, %v4630
      %v4645 = vpack.c.b16 %v4633, %v4632
      %4658 = vst [vmem:[#allocation4 + $0x8] sm:$0xff] %v4634
      %4659 = vst [vmem:[#allocation4 + $0x50] sm:$0xff] %v4635
      %4660 = vst [vmem:[#allocation4 + $0x98] sm:$0xff] %v4636
      %4661 = vst [vmem:[#allocation4 + $0xe0] sm:$0xff] %v4637
      %4662 = vst [vmem:[#allocation4 + $0x128] sm:$0xff] %v4638
      %4663 = vst [vmem:[#allocation4 + $0x170] sm:$0xff] %v4639
      %4664 = vst [vmem:[#allocation4 + $0x1b8] sm:$0xff] %v4640
      %4665 = vst [vmem:[#allocation4 + $0x200] sm:$0xff] %v4641
      %4666 = vst [vmem:[#allocation4 + $0x248] sm:$0xff] %v4642
      %4667 = vst [vmem:[#allocation4 + $0x290] sm:$0xff] %v4643
      %4668 = vst [vmem:[#allocation4 + $0x2d8] sm:$0xff] %v4644
      %4669 = vst [vmem:[#allocation4 + $0x320] sm:$0xff] %v4645
      %v4670 = vld [vmem:[#allocation3 + $0x2] sm:$0xff]
      %v4671 = vld [vmem:[#allocation3 + $0x12] sm:$0xff]
      %v4672 = vld [vmem:[#allocation3 + $0x22] sm:$0xff]
      %v4673 = vld [vmem:[#allocation3 + $0x32] sm:$0xff]
      %v4674 = vld [vmem:[#allocation3 + $0x42] sm:$0xff]
      %v4675 = vld [vmem:[#allocation3 + $0x52] sm:$0xff]
      %v4676 = vld [vmem:[#allocation3 + $0x62] sm:$0xff]
      %v4677 = vld [vmem:[#allocation3 + $0x72] sm:$0xff]
      %v4678 = vld [vmem:[#allocation3 + $0xa2] sm:$0xff]
      %v4679 = vld [vmem:[#allocation3 + $0xb2] sm:$0xff]
      %v4680 = vld [vmem:[#allocation3 + $0xc2] sm:$0xff]
      %v4681 = vld [vmem:[#allocation3 + $0xd2] sm:$0xff]
      %v4682 = vld [vmem:[#allocation3 + $0xe2] sm:$0xff]
      %v4683 = vld [vmem:[#allocation3 + $0xf2] sm:$0xff]
      %v4684 = vld [vmem:[#allocation3 + $0x102] sm:$0xff]
      %v4685 = vld [vmem:[#allocation3 + $0x112] sm:$0xff]
      %v4686 = vld [vmem:[#allocation3 + $0x142] sm:$0xff]
      %v4687 = vld [vmem:[#allocation3 + $0x152] sm:$0xff]
      %v4688 = vld [vmem:[#allocation3 + $0x162] sm:$0xff]
      %v4689 = vld [vmem:[#allocation3 + $0x172] sm:$0xff]
      %v4690 = vld [vmem:[#allocation3 + $0x182] sm:$0xff]
      %v4691 = vld [vmem:[#allocation3 + $0x192] sm:$0xff]
      %v4692 = vld [vmem:[#allocation3 + $0x1a2] sm:$0xff]
      %v4693 = vld [vmem:[#allocation3 + $0x1b2] sm:$0xff]
      %v4694 = vpack.c.bf16 %v4670, %v4670
      %v4695 = vpack.c.bf16 %v4671, %v4671
      %v4696 = vpack.c.bf16 %v4672, %v4672
      %v4697 = vpack.c.bf16 %v4673, %v4673
      %v4698 = vpack.c.bf16 %v4674, %v4674
      %v4699 = vpack.c.bf16 %v4675, %v4675
      %v4700 = vpack.c.bf16 %v4676, %v4676
      %v4701 = vpack.c.bf16 %v4677, %v4677
      %v4702 = vpack.c.bf16 %v4678, %v4678
      %v4703 = vpack.c.bf16 %v4679, %v4679
      %v4704 = vpack.c.bf16 %v4680, %v4680
      %v4705 = vpack.c.bf16 %v4681, %v4681
      %v4706 = vpack.c.bf16 %v4682, %v4682
      %v4707 = vpack.c.bf16 %v4683, %v4683
      %v4708 = vpack.c.bf16 %v4684, %v4684
      %v4709 = vpack.c.bf16 %v4685, %v4685
      %v4710 = vpack.c.bf16 %v4686, %v4686
      %v4711 = vpack.c.bf16 %v4687, %v4687
      %v4712 = vpack.c.bf16 %v4688, %v4688
      %v4713 = vpack.c.bf16 %v4689, %v4689
      %v4714 = vpack.c.bf16 %v4690, %v4690
      %v4715 = vpack.c.bf16 %v4691, %v4691
      %v4716 = vpack.c.bf16 %v4692, %v4692
      %v4717 = vpack.c.bf16 %v4693, %v4693
      %v4742 = vunpack.c.l.b16 %v4694
      %v4743 = vunpack.c.l.b16 %v4695
      %v4744 = vunpack.c.l.b16 %v4696
      %v4745 = vunpack.c.l.b16 %v4697
      %v4746 = vunpack.c.l.b16 %v4698
      %v4747 = vunpack.c.l.b16 %v4699
      %v4748 = vunpack.c.l.b16 %v4700
      %v4749 = vunpack.c.l.b16 %v4701
      %v4750 = vunpack.c.l.b16 %v4702
      %v4751 = vunpack.c.l.b16 %v4703
      %v4752 = vunpack.c.l.b16 %v4704
      %v4753 = vunpack.c.l.b16 %v4705
      %v4754 = vunpack.c.l.b16 %v4706
      %v4755 = vunpack.c.l.b16 %v4707
      %v4756 = vunpack.c.l.b16 %v4708
      %v4757 = vunpack.c.l.b16 %v4709
      %v4758 = vunpack.c.l.b16 %v4710
      %v4759 = vunpack.c.l.b16 %v4711
      %v4760 = vunpack.c.l.b16 %v4712
      %v4761 = vunpack.c.l.b16 %v4713
      %v4762 = vunpack.c.l.b16 %v4714
      %v4763 = vunpack.c.l.b16 %v4715
      %v4764 = vunpack.c.l.b16 %v4716
      %v4765 = vunpack.c.l.b16 %v4717
      %v4766 = vpack.c.b16 %v4743, %v4742
      %v4767 = vpack.c.b16 %v4745, %v4744
      %v4768 = vpack.c.b16 %v4747, %v4746
      %v4769 = vpack.c.b16 %v4749, %v4748
      %v4770 = vpack.c.b16 %v4751, %v4750
      %v4771 = vpack.c.b16 %v4753, %v4752
      %v4772 = vpack.c.b16 %v4755, %v4754
      %v4773 = vpack.c.b16 %v4757, %v4756
      %v4774 = vpack.c.b16 %v4759, %v4758
      %v4775 = vpack.c.b16 %v4761, %v4760
      %v4776 = vpack.c.b16 %v4763, %v4762
      %v4777 = vpack.c.b16 %v4765, %v4764
      %4790 = vst [vmem:[#allocation4 + $0x10] sm:$0xff] %v4766
      %4791 = vst [vmem:[#allocation4 + $0x58] sm:$0xff] %v4767
      %4792 = vst [vmem:[#allocation4 + $0xa0] sm:$0xff] %v4768
      %4793 = vst [vmem:[#allocation4 + $0xe8] sm:$0xff] %v4769
      %4794 = vst [vmem:[#allocation4 + $0x130] sm:$0xff] %v4770
      %4795 = vst [vmem:[#allocation4 + $0x178] sm:$0xff] %v4771
      %4796 = vst [vmem:[#allocation4 + $0x1c0] sm:$0xff] %v4772
      %4797 = vst [vmem:[#allocation4 + $0x208] sm:$0xff] %v4773
      %4798 = vst [vmem:[#allocation4 + $0x250] sm:$0xff] %v4774
      %4799 = vst [vmem:[#allocation4 + $0x298] sm:$0xff] %v4775
      %4800 = vst [vmem:[#allocation4 + $0x2e0] sm:$0xff] %v4776
      %4801 = vst [vmem:[#allocation4 + $0x328] sm:$0xff] %v4777
      %v4802 = vld [vmem:[%s4381] sm:$0xff]
      %v4803 = vld [vmem:[%s4381 + $0x10] sm:$0xff]
      %v4804 = vld [vmem:[%s4381 + $0x20] sm:$0xff]
      %v4805 = vld [vmem:[%s4381 + $0x30] sm:$0xff]
      %v4806 = vld [vmem:[%s4381 + $0x40] sm:$0xff]
      %v4807 = vld [vmem:[%s4381 + $0x50] sm:$0xff]
      %v4808 = vld [vmem:[%s4381 + $0x60] sm:$0xff]
      %v4809 = vld [vmem:[%s4381 + $0x70] sm:$0xff]
      %v4810 = vld [vmem:[%s4381 + $0xa0] sm:$0xff]
      %v4811 = vld [vmem:[%s4381 + $0xb0] sm:$0xff]
      %v4812 = vld [vmem:[%s4381 + $0xc0] sm:$0xff]
      %v4813 = vld [vmem:[%s4381 + $0xd0] sm:$0xff]
      %v4814 = vld [vmem:[%s4381 + $0xe0] sm:$0xff]
      %v4815 = vld [vmem:[%s4381 + $0xf0] sm:$0xff]
      %v4816 = vld [vmem:[%s4381 + $0x100] sm:$0xff]
      %v4817 = vld [vmem:[%s4381 + $0x110] sm:$0xff]
      %v4818 = vld [vmem:[%s4381 + $0x140] sm:$0xff]
      %v4819 = vld [vmem:[%s4381 + $0x150] sm:$0xff]
      %v4820 = vld [vmem:[%s4381 + $0x160] sm:$0xff]
      %v4821 = vld [vmem:[%s4381 + $0x170] sm:$0xff]
      %v4822 = vld [vmem:[%s4381 + $0x180] sm:$0xff]
      %v4823 = vld [vmem:[%s4381 + $0x190] sm:$0xff]
      %v4824 = vld [vmem:[%s4381 + $0x1a0] sm:$0xff]
      %v4825 = vld [vmem:[%s4381 + $0x1b0] sm:$0xff]
      %v4826 = vpack.c.bf16 %v4802, %v4802
      %v4827 = vpack.c.bf16 %v4803, %v4803
      %v4828 = vpack.c.bf16 %v4804, %v4804
      %v4829 = vpack.c.bf16 %v4805, %v4805
      %v4830 = vpack.c.bf16 %v4806, %v4806
      %v4831 = vpack.c.bf16 %v4807, %v4807
      %v4832 = vpack.c.bf16 %v4808, %v4808
      %v4833 = vpack.c.bf16 %v4809, %v4809
      %v4834 = vpack.c.bf16 %v4810, %v4810
      %v4835 = vpack.c.bf16 %v4811, %v4811
      %v4836 = vpack.c.bf16 %v4812, %v4812
      %v4837 = vpack.c.bf16 %v4813, %v4813
      %v4838 = vpack.c.bf16 %v4814, %v4814
      %v4839 = vpack.c.bf16 %v4815, %v4815
      %v4840 = vpack.c.bf16 %v4816, %v4816
      %v4841 = vpack.c.bf16 %v4817, %v4817
      %v4842 = vpack.c.bf16 %v4818, %v4818
      %v4843 = vpack.c.bf16 %v4819, %v4819
      %v4844 = vpack.c.bf16 %v4820, %v4820
      %v4845 = vpack.c.bf16 %v4821, %v4821
      %v4846 = vpack.c.bf16 %v4822, %v4822
      %v4847 = vpack.c.bf16 %v4823, %v4823
      %v4848 = vpack.c.bf16 %v4824, %v4824
      %v4849 = vpack.c.bf16 %v4825, %v4825
      %v4874 = vunpack.c.l.b16 %v4826
      %v4875 = vunpack.c.l.b16 %v4827
      %v4876 = vunpack.c.l.b16 %v4828
      %v4877 = vunpack.c.l.b16 %v4829
      %v4878 = vunpack.c.l.b16 %v4830
      %v4879 = vunpack.c.l.b16 %v4831
      %v4880 = vunpack.c.l.b16 %v4832
      %v4881 = vunpack.c.l.b16 %v4833
      %v4882 = vunpack.c.l.b16 %v4834
      %v4883 = vunpack.c.l.b16 %v4835
      %v4884 = vunpack.c.l.b16 %v4836
      %v4885 = vunpack.c.l.b16 %v4837
      %v4886 = vunpack.c.l.b16 %v4838
      %v4887 = vunpack.c.l.b16 %v4839
      %v4888 = vunpack.c.l.b16 %v4840
      %v4889 = vunpack.c.l.b16 %v4841
      %v4890 = vunpack.c.l.b16 %v4842
      %v4891 = vunpack.c.l.b16 %v4843
      %v4892 = vunpack.c.l.b16 %v4844
      %v4893 = vunpack.c.l.b16 %v4845
      %v4894 = vunpack.c.l.b16 %v4846
      %v4895 = vunpack.c.l.b16 %v4847
      %v4896 = vunpack.c.l.b16 %v4848
      %v4897 = vunpack.c.l.b16 %v4849
      %v4898 = vpack.c.b16 %v4875, %v4874
      %v4899 = vpack.c.b16 %v4877, %v4876
      %v4900 = vpack.c.b16 %v4879, %v4878
      %v4901 = vpack.c.b16 %v4881, %v4880
      %v4902 = vpack.c.b16 %v4883, %v4882
      %v4903 = vpack.c.b16 %v4885, %v4884
      %v4904 = vpack.c.b16 %v4887, %v4886
      %v4905 = vpack.c.b16 %v4889, %v4888
      %v4906 = vpack.c.b16 %v4891, %v4890
      %v4907 = vpack.c.b16 %v4893, %v4892
      %v4908 = vpack.c.b16 %v4895, %v4894
      %v4909 = vpack.c.b16 %v4897, %v4896
      %4922 = vst [vmem:[#allocation4 + $0x18] sm:$0xff] %v4898
      %4923 = vst [vmem:[#allocation4 + $0x60] sm:$0xff] %v4899
      %4924 = vst [vmem:[#allocation4 + $0xa8] sm:$0xff] %v4900
      %4925 = vst [vmem:[#allocation4 + $0xf0] sm:$0xff] %v4901
      %4926 = vst [vmem:[#allocation4 + $0x138] sm:$0xff] %v4902
      %4927 = vst [vmem:[#allocation4 + $0x180] sm:$0xff] %v4903
      %4928 = vst [vmem:[#allocation4 + $0x1c8] sm:$0xff] %v4904
      %4929 = vst [vmem:[#allocation4 + $0x210] sm:$0xff] %v4905
      %4930 = vst [vmem:[#allocation4 + $0x258] sm:$0xff] %v4906
      %4931 = vst [vmem:[#allocation4 + $0x2a0] sm:$0xff] %v4907
      %4932 = vst [vmem:[#allocation4 + $0x2e8] sm:$0xff] %v4908
      %4933 = vst [vmem:[#allocation4 + $0x330] sm:$0xff] %v4909
      %v4934 = vld [vmem:[%s4381 + $0x1] sm:$0xff]
      %v4935 = vld [vmem:[%s4381 + $0x11] sm:$0xff]
      %v4936 = vld [vmem:[%s4381 + $0x21] sm:$0xff]
      %v4937 = vld [vmem:[%s4381 + $0x31] sm:$0xff]
      %v4938 = vld [vmem:[%s4381 + $0x41] sm:$0xff]
      %v4939 = vld [vmem:[%s4381 + $0x51] sm:$0xff]
      %v4940 = vld [vmem:[%s4381 + $0x61] sm:$0xff]
      %v4941 = vld [vmem:[%s4381 + $0x71] sm:$0xff]
      %v4942 = vld [vmem:[%s4381 + $0xa1] sm:$0xff]
      %v4943 = vld [vmem:[%s4381 + $0xb1] sm:$0xff]
      %v4944 = vld [vmem:[%s4381 + $0xc1] sm:$0xff]
      %v4945 = vld [vmem:[%s4381 + $0xd1] sm:$0xff]
      %v4946 = vld [vmem:[%s4381 + $0xe1] sm:$0xff]
      %v4947 = vld [vmem:[%s4381 + $0xf1] sm:$0xff]
      %v4948 = vld [vmem:[%s4381 + $0x101] sm:$0xff]
      %v4949 = vld [vmem:[%s4381 + $0x111] sm:$0xff]
      %v4950 = vld [vmem:[%s4381 + $0x141] sm:$0xff]
      %v4951 = vld [vmem:[%s4381 + $0x151] sm:$0xff]
      %v4952 = vld [vmem:[%s4381 + $0x161] sm:$0xff]
      %v4953 = vld [vmem:[%s4381 + $0x171] sm:$0xff]
      %v4954 = vld [vmem:[%s4381 + $0x181] sm:$0xff]
      %v4955 = vld [vmem:[%s4381 + $0x191] sm:$0xff]
      %v4956 = vld [vmem:[%s4381 + $0x1a1] sm:$0xff]
      %v4957 = vld [vmem:[%s4381 + $0x1b1] sm:$0xff]
      %v4958 = vpack.c.bf16 %v4934, %v4934
      %v4959 = vpack.c.bf16 %v4935, %v4935
      %v4960 = vpack.c.bf16 %v4936, %v4936
      %v4961 = vpack.c.bf16 %v4937, %v4937
      %v4962 = vpack.c.bf16 %v4938, %v4938
      %v4963 = vpack.c.bf16 %v4939, %v4939
      %v4964 = vpack.c.bf16 %v4940, %v4940
      %v4965 = vpack.c.bf16 %v4941, %v4941
      %v4966 = vpack.c.bf16 %v4942, %v4942
      %v4967 = vpack.c.bf16 %v4943, %v4943
      %v4968 = vpack.c.bf16 %v4944, %v4944
      %v4969 = vpack.c.bf16 %v4945, %v4945
      %v4970 = vpack.c.bf16 %v4946, %v4946
      %v4971 = vpack.c.bf16 %v4947, %v4947
      %v4972 = vpack.c.bf16 %v4948, %v4948
      %v4973 = vpack.c.bf16 %v4949, %v4949
      %v4974 = vpack.c.bf16 %v4950, %v4950
      %v4975 = vpack.c.bf16 %v4951, %v4951
      %v4976 = vpack.c.bf16 %v4952, %v4952
      %v4977 = vpack.c.bf16 %v4953, %v4953
      %v4978 = vpack.c.bf16 %v4954, %v4954
      %v4979 = vpack.c.bf16 %v4955, %v4955
      %v4980 = vpack.c.bf16 %v4956, %v4956
      %v4981 = vpack.c.bf16 %v4957, %v4957
      %v5006 = vunpack.c.l.b16 %v4958
      %v5007 = vunpack.c.l.b16 %v4959
      %v5008 = vunpack.c.l.b16 %v4960
      %v5009 = vunpack.c.l.b16 %v4961
      %v5010 = vunpack.c.l.b16 %v4962
      %v5011 = vunpack.c.l.b16 %v4963
      %v5012 = vunpack.c.l.b16 %v4964
      %v5013 = vunpack.c.l.b16 %v4965
      %v5014 = vunpack.c.l.b16 %v4966
      %v5015 = vunpack.c.l.b16 %v4967
      %v5016 = vunpack.c.l.b16 %v4968
      %v5017 = vunpack.c.l.b16 %v4969
      %v5018 = vunpack.c.l.b16 %v4970
      %v5019 = vunpack.c.l.b16 %v4971
      %v5020 = vunpack.c.l.b16 %v4972
      %v5021 = vunpack.c.l.b16 %v4973
      %v5022 = vunpack.c.l.b16 %v4974
      %v5023 = vunpack.c.l.b16 %v4975
      %v5024 = vunpack.c.l.b16 %v4976
      %v5025 = vunpack.c.l.b16 %v4977
      %v5026 = vunpack.c.l.b16 %v4978
      %v5027 = vunpack.c.l.b16 %v4979
      %v5028 = vunpack.c.l.b16 %v4980
      %v5029 = vunpack.c.l.b16 %v4981
      %v5030 = vpack.c.b16 %v5007, %v5006
      %v5031 = vpack.c.b16 %v5009, %v5008
      %v5032 = vpack.c.b16 %v5011, %v5010
      %v5033 = vpack.c.b16 %v5013, %v5012
      %v5034 = vpack.c.b16 %v5015, %v5014
      %v5035 = vpack.c.b16 %v5017, %v5016
      %v5036 = vpack.c.b16 %v5019, %v5018
      %v5037 = vpack.c.b16 %v5021, %v5020
      %v5038 = vpack.c.b16 %v5023, %v5022
      %v5039 = vpack.c.b16 %v5025, %v5024
      %v5040 = vpack.c.b16 %v5027, %v5026
      %v5041 = vpack.c.b16 %v5029, %v5028
      %5054 = vst [vmem:[#allocation4 + $0x20] sm:$0xff] %v5030
      %5055 = vst [vmem:[#allocation4 + $0x68] sm:$0xff] %v5031
      %5056 = vst [vmem:[#allocation4 + $0xb0] sm:$0xff] %v5032
      %5057 = vst [vmem:[#allocation4 + $0xf8] sm:$0xff] %v5033
      %5058 = vst [vmem:[#allocation4 + $0x140] sm:$0xff] %v5034
      %5059 = vst [vmem:[#allocation4 + $0x188] sm:$0xff] %v5035
      %5060 = vst [vmem:[#allocation4 + $0x1d0] sm:$0xff] %v5036
      %5061 = vst [vmem:[#allocation4 + $0x218] sm:$0xff] %v5037
      %5062 = vst [vmem:[#allocation4 + $0x260] sm:$0xff] %v5038
      %5063 = vst [vmem:[#allocation4 + $0x2a8] sm:$0xff] %v5039
      %5064 = vst [vmem:[#allocation4 + $0x2f0] sm:$0xff] %v5040
      %5065 = vst [vmem:[#allocation4 + $0x338] sm:$0xff] %v5041
      %v5066 = vld [vmem:[%s4381 + $0x2] sm:$0xff]
      %v5067 = vld [vmem:[%s4381 + $0x12] sm:$0xff]
      %v5068 = vld [vmem:[%s4381 + $0x22] sm:$0xff]
      %v5069 = vld [vmem:[%s4381 + $0x32] sm:$0xff]
      %v5070 = vld [vmem:[%s4381 + $0x42] sm:$0xff]
      %v5071 = vld [vmem:[%s4381 + $0x52] sm:$0xff]
      %v5072 = vld [vmem:[%s4381 + $0x62] sm:$0xff]
      %v5073 = vld [vmem:[%s4381 + $0x72] sm:$0xff]
      %v5074 = vld [vmem:[%s4381 + $0xa2] sm:$0xff]
      %v5075 = vld [vmem:[%s4381 + $0xb2] sm:$0xff]
      %v5076 = vld [vmem:[%s4381 + $0xc2] sm:$0xff]
      %v5077 = vld [vmem:[%s4381 + $0xd2] sm:$0xff]
      %v5078 = vld [vmem:[%s4381 + $0xe2] sm:$0xff]
      %v5079 = vld [vmem:[%s4381 + $0xf2] sm:$0xff]
      %v5080 = vld [vmem:[%s4381 + $0x102] sm:$0xff]
      %v5081 = vld [vmem:[%s4381 + $0x112] sm:$0xff]
      %v5082 = vld [vmem:[%s4381 + $0x142] sm:$0xff]
      %v5083 = vld [vmem:[%s4381 + $0x152] sm:$0xff]
      %v5084 = vld [vmem:[%s4381 + $0x162] sm:$0xff]
      %v5085 = vld [vmem:[%s4381 + $0x172] sm:$0xff]
      %v5086 = vld [vmem:[%s4381 + $0x182] sm:$0xff]
      %v5087 = vld [vmem:[%s4381 + $0x192] sm:$0xff]
      %v5088 = vld [vmem:[%s4381 + $0x1a2] sm:$0xff]
      %v5089 = vld [vmem:[%s4381 + $0x1b2] sm:$0xff]
      %v5090 = vpack.c.bf16 %v5066, %v5066
      %v5091 = vpack.c.bf16 %v5067, %v5067
      %v5092 = vpack.c.bf16 %v5068, %v5068
      %v5093 = vpack.c.bf16 %v5069, %v5069
      %v5094 = vpack.c.bf16 %v5070, %v5070
      %v5095 = vpack.c.bf16 %v5071, %v5071
      %v5096 = vpack.c.bf16 %v5072, %v5072
      %v5097 = vpack.c.bf16 %v5073, %v5073
      %v5098 = vpack.c.bf16 %v5074, %v5074
      %v5099 = vpack.c.bf16 %v5075, %v5075
      %v5100 = vpack.c.bf16 %v5076, %v5076
      %v5101 = vpack.c.bf16 %v5077, %v5077
      %v5102 = vpack.c.bf16 %v5078, %v5078
      %v5103 = vpack.c.bf16 %v5079, %v5079
      %v5104 = vpack.c.bf16 %v5080, %v5080
      %v5105 = vpack.c.bf16 %v5081, %v5081
      %v5106 = vpack.c.bf16 %v5082, %v5082
      %v5107 = vpack.c.bf16 %v5083, %v5083
      %v5108 = vpack.c.bf16 %v5084, %v5084
      %v5109 = vpack.c.bf16 %v5085, %v5085
      %v5110 = vpack.c.bf16 %v5086, %v5086
      %v5111 = vpack.c.bf16 %v5087, %v5087
      %v5112 = vpack.c.bf16 %v5088, %v5088
      %v5113 = vpack.c.bf16 %v5089, %v5089
      %v5138 = vunpack.c.l.b16 %v5090
      %v5139 = vunpack.c.l.b16 %v5091
      %v5140 = vunpack.c.l.b16 %v5092
      %v5141 = vunpack.c.l.b16 %v5093
      %v5142 = vunpack.c.l.b16 %v5094
      %v5143 = vunpack.c.l.b16 %v5095
      %v5144 = vunpack.c.l.b16 %v5096
      %v5145 = vunpack.c.l.b16 %v5097
      %v5146 = vunpack.c.l.b16 %v5098
      %v5147 = vunpack.c.l.b16 %v5099
      %v5148 = vunpack.c.l.b16 %v5100
      %v5149 = vunpack.c.l.b16 %v5101
      %v5150 = vunpack.c.l.b16 %v5102
      %v5151 = vunpack.c.l.b16 %v5103
      %v5152 = vunpack.c.l.b16 %v5104
      %v5153 = vunpack.c.l.b16 %v5105
      %v5154 = vunpack.c.l.b16 %v5106
      %v5155 = vunpack.c.l.b16 %v5107
      %v5156 = vunpack.c.l.b16 %v5108
      %v5157 = vunpack.c.l.b16 %v5109
      %v5158 = vunpack.c.l.b16 %v5110
      %v5159 = vunpack.c.l.b16 %v5111
      %v5160 = vunpack.c.l.b16 %v5112
      %v5161 = vunpack.c.l.b16 %v5113
      %v5162 = vpack.c.b16 %v5139, %v5138
      %v5163 = vpack.c.b16 %v5141, %v5140
      %v5164 = vpack.c.b16 %v5143, %v5142
      %v5165 = vpack.c.b16 %v5145, %v5144
      %v5166 = vpack.c.b16 %v5147, %v5146
      %v5167 = vpack.c.b16 %v5149, %v5148
      %v5168 = vpack.c.b16 %v5151, %v5150
      %v5169 = vpack.c.b16 %v5153, %v5152
      %v5170 = vpack.c.b16 %v5155, %v5154
      %v5171 = vpack.c.b16 %v5157, %v5156
      %v5172 = vpack.c.b16 %v5159, %v5158
      %v5173 = vpack.c.b16 %v5161, %v5160
      %5186 = vst [vmem:[#allocation4 + $0x28] sm:$0xff] %v5162
      %5187 = vst [vmem:[#allocation4 + $0x70] sm:$0xff] %v5163
      %5188 = vst [vmem:[#allocation4 + $0xb8] sm:$0xff] %v5164
      %5189 = vst [vmem:[#allocation4 + $0x100] sm:$0xff] %v5165
      %5190 = vst [vmem:[#allocation4 + $0x148] sm:$0xff] %v5166
      %5191 = vst [vmem:[#allocation4 + $0x190] sm:$0xff] %v5167
      %5192 = vst [vmem:[#allocation4 + $0x1d8] sm:$0xff] %v5168
      %5193 = vst [vmem:[#allocation4 + $0x220] sm:$0xff] %v5169
      %5194 = vst [vmem:[#allocation4 + $0x268] sm:$0xff] %v5170
      %5195 = vst [vmem:[#allocation4 + $0x2b0] sm:$0xff] %v5171
      %5196 = vst [vmem:[#allocation4 + $0x2f8] sm:$0xff] %v5172
      %5197 = vst [vmem:[#allocation4 + $0x340] sm:$0xff] %v5173
      %s5198 = scalar_lea.vmem [#allocation3], 32
      %v5199 = vld [vmem:[%s5198] sm:$0xff]
      %v5200 = vld [vmem:[%s5198 + $0x10] sm:$0xff]
      %v5201 = vld [vmem:[%s5198 + $0x20] sm:$0xff]
      %v5202 = vld [vmem:[%s5198 + $0x30] sm:$0xff]
      %v5203 = vld [vmem:[%s5198 + $0x40] sm:$0xff]
      %v5204 = vld [vmem:[%s5198 + $0x50] sm:$0xff]
      %v5205 = vld [vmem:[%s5198 + $0x60] sm:$0xff]
      %v5206 = vld [vmem:[%s5198 + $0x70] sm:$0xff]
      %v5207 = vld [vmem:[%s5198 + $0xa0] sm:$0xff]
      %v5208 = vld [vmem:[%s5198 + $0xb0] sm:$0xff]
      %v5209 = vld [vmem:[%s5198 + $0xc0] sm:$0xff]
      %v5210 = vld [vmem:[%s5198 + $0xd0] sm:$0xff]
      %v5211 = vld [vmem:[%s5198 + $0xe0] sm:$0xff]
      %v5212 = vld [vmem:[%s5198 + $0xf0] sm:$0xff]
      %v5213 = vld [vmem:[%s5198 + $0x100] sm:$0xff]
      %v5214 = vld [vmem:[%s5198 + $0x110] sm:$0xff]
      %v5215 = vld [vmem:[%s5198 + $0x140] sm:$0xff]
      %v5216 = vld [vmem:[%s5198 + $0x150] sm:$0xff]
      %v5217 = vld [vmem:[%s5198 + $0x160] sm:$0xff]
      %v5218 = vld [vmem:[%s5198 + $0x170] sm:$0xff]
      %v5219 = vld [vmem:[%s5198 + $0x180] sm:$0xff]
      %v5220 = vld [vmem:[%s5198 + $0x190] sm:$0xff]
      %v5221 = vld [vmem:[%s5198 + $0x1a0] sm:$0xff]
      %v5222 = vld [vmem:[%s5198 + $0x1b0] sm:$0xff]
      %v5223 = vpack.c.bf16 %v5199, %v5199
      %v5224 = vpack.c.bf16 %v5200, %v5200
      %v5225 = vpack.c.bf16 %v5201, %v5201
      %v5226 = vpack.c.bf16 %v5202, %v5202
      %v5227 = vpack.c.bf16 %v5203, %v5203
      %v5228 = vpack.c.bf16 %v5204, %v5204
      %v5229 = vpack.c.bf16 %v5205, %v5205
      %v5230 = vpack.c.bf16 %v5206, %v5206
      %v5231 = vpack.c.bf16 %v5207, %v5207
      %v5232 = vpack.c.bf16 %v5208, %v5208
      %v5233 = vpack.c.bf16 %v5209, %v5209
      %v5234 = vpack.c.bf16 %v5210, %v5210
      %v5235 = vpack.c.bf16 %v5211, %v5211
      %v5236 = vpack.c.bf16 %v5212, %v5212
      %v5237 = vpack.c.bf16 %v5213, %v5213
      %v5238 = vpack.c.bf16 %v5214, %v5214
      %v5239 = vpack.c.bf16 %v5215, %v5215
      %v5240 = vpack.c.bf16 %v5216, %v5216
      %v5241 = vpack.c.bf16 %v5217, %v5217
      %v5242 = vpack.c.bf16 %v5218, %v5218
      %v5243 = vpack.c.bf16 %v5219, %v5219
      %v5244 = vpack.c.bf16 %v5220, %v5220
      %v5245 = vpack.c.bf16 %v5221, %v5221
      %v5246 = vpack.c.bf16 %v5222, %v5222
      %v5271 = vunpack.c.l.b16 %v5223
      %v5272 = vunpack.c.l.b16 %v5224
      %v5273 = vunpack.c.l.b16 %v5225
      %v5274 = vunpack.c.l.b16 %v5226
      %v5275 = vunpack.c.l.b16 %v5227
      %v5276 = vunpack.c.l.b16 %v5228
      %v5277 = vunpack.c.l.b16 %v5229
      %v5278 = vunpack.c.l.b16 %v5230
      %v5279 = vunpack.c.l.b16 %v5231
      %v5280 = vunpack.c.l.b16 %v5232
      %v5281 = vunpack.c.l.b16 %v5233
      %v5282 = vunpack.c.l.b16 %v5234
      %v5283 = vunpack.c.l.b16 %v5235
      %v5284 = vunpack.c.l.b16 %v5236
      %v5285 = vunpack.c.l.b16 %v5237
      %v5286 = vunpack.c.l.b16 %v5238
      %v5287 = vunpack.c.l.b16 %v5239
      %v5288 = vunpack.c.l.b16 %v5240
      %v5289 = vunpack.c.l.b16 %v5241
      %v5290 = vunpack.c.l.b16 %v5242
      %v5291 = vunpack.c.l.b16 %v5243
      %v5292 = vunpack.c.l.b16 %v5244
      %v5293 = vunpack.c.l.b16 %v5245
      %v5294 = vunpack.c.l.b16 %v5246
      %v5295 = vpack.c.b16 %v5272, %v5271
      %v5296 = vpack.c.b16 %v5274, %v5273
      %v5297 = vpack.c.b16 %v5276, %v5275
      %v5298 = vpack.c.b16 %v5278, %v5277
      %v5299 = vpack.c.b16 %v5280, %v5279
      %v5300 = vpack.c.b16 %v5282, %v5281
      %v5301 = vpack.c.b16 %v5284, %v5283
      %v5302 = vpack.c.b16 %v5286, %v5285
      %v5303 = vpack.c.b16 %v5288, %v5287
      %v5304 = vpack.c.b16 %v5290, %v5289
      %v5305 = vpack.c.b16 %v5292, %v5291
      %v5306 = vpack.c.b16 %v5294, %v5293
      %5319 = vst [vmem:[#allocation4 + $0x30] sm:$0xff] %v5295
      %5320 = vst [vmem:[#allocation4 + $0x78] sm:$0xff] %v5296
      %5321 = vst [vmem:[#allocation4 + $0xc0] sm:$0xff] %v5297
      %5322 = vst [vmem:[#allocation4 + $0x108] sm:$0xff] %v5298
      %5323 = vst [vmem:[#allocation4 + $0x150] sm:$0xff] %v5299
      %5324 = vst [vmem:[#allocation4 + $0x198] sm:$0xff] %v5300
      %5325 = vst [vmem:[#allocation4 + $0x1e0] sm:$0xff] %v5301
      %5326 = vst [vmem:[#allocation4 + $0x228] sm:$0xff] %v5302
      %5327 = vst [vmem:[#allocation4 + $0x270] sm:$0xff] %v5303
      %5328 = vst [vmem:[#allocation4 + $0x2b8] sm:$0xff] %v5304
      %5329 = vst [vmem:[#allocation4 + $0x300] sm:$0xff] %v5305
      %5330 = vst [vmem:[#allocation4 + $0x348] sm:$0xff] %v5306
      %v5331 = vld [vmem:[%s5198 + $0x1] sm:$0xff]
      %v5332 = vld [vmem:[%s5198 + $0x11] sm:$0xff]
      %v5333 = vld [vmem:[%s5198 + $0x21] sm:$0xff]
      %v5334 = vld [vmem:[%s5198 + $0x31] sm:$0xff]
      %v5335 = vld [vmem:[%s5198 + $0x41] sm:$0xff]
      %v5336 = vld [vmem:[%s5198 + $0x51] sm:$0xff]
      %v5337 = vld [vmem:[%s5198 + $0x61] sm:$0xff]
      %v5338 = vld [vmem:[%s5198 + $0x71] sm:$0xff]
      %v5339 = vld [vmem:[%s5198 + $0xa1] sm:$0xff]
      %v5340 = vld [vmem:[%s5198 + $0xb1] sm:$0xff]
      %v5341 = vld [vmem:[%s5198 + $0xc1] sm:$0xff]
      %v5342 = vld [vmem:[%s5198 + $0xd1] sm:$0xff]
      %v5343 = vld [vmem:[%s5198 + $0xe1] sm:$0xff]
      %v5344 = vld [vmem:[%s5198 + $0xf1] sm:$0xff]
      %v5345 = vld [vmem:[%s5198 + $0x101] sm:$0xff]
      %v5346 = vld [vmem:[%s5198 + $0x111] sm:$0xff]
      %v5347 = vld [vmem:[%s5198 + $0x141] sm:$0xff]
      %v5348 = vld [vmem:[%s5198 + $0x151] sm:$0xff]
      %v5349 = vld [vmem:[%s5198 + $0x161] sm:$0xff]
      %v5350 = vld [vmem:[%s5198 + $0x171] sm:$0xff]
      %v5351 = vld [vmem:[%s5198 + $0x181] sm:$0xff]
      %v5352 = vld [vmem:[%s5198 + $0x191] sm:$0xff]
      %v5353 = vld [vmem:[%s5198 + $0x1a1] sm:$0xff]
      %v5354 = vld [vmem:[%s5198 + $0x1b1] sm:$0xff]
      %v5355 = vpack.c.bf16 %v5331, %v5331
      %v5356 = vpack.c.bf16 %v5332, %v5332
      %v5357 = vpack.c.bf16 %v5333, %v5333
      %v5358 = vpack.c.bf16 %v5334, %v5334
      %v5359 = vpack.c.bf16 %v5335, %v5335
      %v5360 = vpack.c.bf16 %v5336, %v5336
      %v5361 = vpack.c.bf16 %v5337, %v5337
      %v5362 = vpack.c.bf16 %v5338, %v5338
      %v5363 = vpack.c.bf16 %v5339, %v5339
      %v5364 = vpack.c.bf16 %v5340, %v5340
      %v5365 = vpack.c.bf16 %v5341, %v5341
      %v5366 = vpack.c.bf16 %v5342, %v5342
      %v5367 = vpack.c.bf16 %v5343, %v5343
      %v5368 = vpack.c.bf16 %v5344, %v5344
      %v5369 = vpack.c.bf16 %v5345, %v5345
      %v5370 = vpack.c.bf16 %v5346, %v5346
      %v5371 = vpack.c.bf16 %v5347, %v5347
      %v5372 = vpack.c.bf16 %v5348, %v5348
      %v5373 = vpack.c.bf16 %v5349, %v5349
      %v5374 = vpack.c.bf16 %v5350, %v5350
      %v5375 = vpack.c.bf16 %v5351, %v5351
      %v5376 = vpack.c.bf16 %v5352, %v5352
      %v5377 = vpack.c.bf16 %v5353, %v5353
      %v5378 = vpack.c.bf16 %v5354, %v5354
      %v5403 = vunpack.c.l.b16 %v5355
      %v5404 = vunpack.c.l.b16 %v5356
      %v5405 = vunpack.c.l.b16 %v5357
      %v5406 = vunpack.c.l.b16 %v5358
      %v5407 = vunpack.c.l.b16 %v5359
      %v5408 = vunpack.c.l.b16 %v5360
      %v5409 = vunpack.c.l.b16 %v5361
      %v5410 = vunpack.c.l.b16 %v5362
      %v5411 = vunpack.c.l.b16 %v5363
      %v5412 = vunpack.c.l.b16 %v5364
      %v5413 = vunpack.c.l.b16 %v5365
      %v5414 = vunpack.c.l.b16 %v5366
      %v5415 = vunpack.c.l.b16 %v5367
      %v5416 = vunpack.c.l.b16 %v5368
      %v5417 = vunpack.c.l.b16 %v5369
      %v5418 = vunpack.c.l.b16 %v5370
      %v5419 = vunpack.c.l.b16 %v5371
      %v5420 = vunpack.c.l.b16 %v5372
      %v5421 = vunpack.c.l.b16 %v5373
      %v5422 = vunpack.c.l.b16 %v5374
      %v5423 = vunpack.c.l.b16 %v5375
      %v5424 = vunpack.c.l.b16 %v5376
      %v5425 = vunpack.c.l.b16 %v5377
      %v5426 = vunpack.c.l.b16 %v5378
      %v5427 = vpack.c.b16 %v5404, %v5403
      %v5428 = vpack.c.b16 %v5406, %v5405
      %v5429 = vpack.c.b16 %v5408, %v5407
      %v5430 = vpack.c.b16 %v5410, %v5409
      %v5431 = vpack.c.b16 %v5412, %v5411
      %v5432 = vpack.c.b16 %v5414, %v5413
      %v5433 = vpack.c.b16 %v5416, %v5415
      %v5434 = vpack.c.b16 %v5418, %v5417
      %v5435 = vpack.c.b16 %v5420, %v5419
      %v5436 = vpack.c.b16 %v5422, %v5421
      %v5437 = vpack.c.b16 %v5424, %v5423
      %v5438 = vpack.c.b16 %v5426, %v5425
      %5451 = vst [vmem:[#allocation4 + $0x38] sm:$0xff] %v5427
      %5452 = vst [vmem:[#allocation4 + $0x80] sm:$0xff] %v5428
      %5453 = vst [vmem:[#allocation4 + $0xc8] sm:$0xff] %v5429
      %5454 = vst [vmem:[#allocation4 + $0x110] sm:$0xff] %v5430
      %5455 = vst [vmem:[#allocation4 + $0x158] sm:$0xff] %v5431
      %5456 = vst [vmem:[#allocation4 + $0x1a0] sm:$0xff] %v5432
      %5457 = vst [vmem:[#allocation4 + $0x1e8] sm:$0xff] %v5433
      %5458 = vst [vmem:[#allocation4 + $0x230] sm:$0xff] %v5434
      %5459 = vst [vmem:[#allocation4 + $0x278] sm:$0xff] %v5435
      %5460 = vst [vmem:[#allocation4 + $0x2c0] sm:$0xff] %v5436
      %5461 = vst [vmem:[#allocation4 + $0x308] sm:$0xff] %v5437
      %5462 = vst [vmem:[#allocation4 + $0x350] sm:$0xff] %v5438
      %v5463 = vld [vmem:[%s5198 + $0x2] sm:$0xff]
      %v5464 = vld [vmem:[%s5198 + $0x12] sm:$0xff]
      %v5465 = vld [vmem:[%s5198 + $0x22] sm:$0xff]
      %v5466 = vld [vmem:[%s5198 + $0x32] sm:$0xff]
      %v5467 = vld [vmem:[%s5198 + $0x42] sm:$0xff]
      %v5468 = vld [vmem:[%s5198 + $0x52] sm:$0xff]
      %v5469 = vld [vmem:[%s5198 + $0x62] sm:$0xff]
      %v5470 = vld [vmem:[%s5198 + $0x72] sm:$0xff]
      %v5471 = vld [vmem:[%s5198 + $0xa2] sm:$0xff]
      %v5472 = vld [vmem:[%s5198 + $0xb2] sm:$0xff]
      %v5473 = vld [vmem:[%s5198 + $0xc2] sm:$0xff]
      %v5474 = vld [vmem:[%s5198 + $0xd2] sm:$0xff]
      %v5475 = vld [vmem:[%s5198 + $0xe2] sm:$0xff]
      %v5476 = vld [vmem:[%s5198 + $0xf2] sm:$0xff]
      %v5477 = vld [vmem:[%s5198 + $0x102] sm:$0xff]
      %v5478 = vld [vmem:[%s5198 + $0x112] sm:$0xff]
      %v5479 = vld [vmem:[%s5198 + $0x142] sm:$0xff]
      %v5480 = vld [vmem:[%s5198 + $0x152] sm:$0xff]
      %v5481 = vld [vmem:[%s5198 + $0x162] sm:$0xff]
      %v5482 = vld [vmem:[%s5198 + $0x172] sm:$0xff]
      %v5483 = vld [vmem:[%s5198 + $0x182] sm:$0xff]
      %v5484 = vld [vmem:[%s5198 + $0x192] sm:$0xff]
      %v5485 = vld [vmem:[%s5198 + $0x1a2] sm:$0xff]
      %v5486 = vld [vmem:[%s5198 + $0x1b2] sm:$0xff]
      %v5487 = vpack.c.bf16 %v5463, %v5463
      %v5488 = vpack.c.bf16 %v5464, %v5464
      %v5489 = vpack.c.bf16 %v5465, %v5465
      %v5490 = vpack.c.bf16 %v5466, %v5466
      %v5491 = vpack.c.bf16 %v5467, %v5467
      %v5492 = vpack.c.bf16 %v5468, %v5468
      %v5493 = vpack.c.bf16 %v5469, %v5469
      %v5494 = vpack.c.bf16 %v5470, %v5470
      %v5495 = vpack.c.bf16 %v5471, %v5471
      %v5496 = vpack.c.bf16 %v5472, %v5472
      %v5497 = vpack.c.bf16 %v5473, %v5473
      %v5498 = vpack.c.bf16 %v5474, %v5474
      %v5499 = vpack.c.bf16 %v5475, %v5475
      %v5500 = vpack.c.bf16 %v5476, %v5476
      %v5501 = vpack.c.bf16 %v5477, %v5477
      %v5502 = vpack.c.bf16 %v5478, %v5478
      %v5503 = vpack.c.bf16 %v5479, %v5479
      %v5504 = vpack.c.bf16 %v5480, %v5480
      %v5505 = vpack.c.bf16 %v5481, %v5481
      %v5506 = vpack.c.bf16 %v5482, %v5482
      %v5507 = vpack.c.bf16 %v5483, %v5483
      %v5508 = vpack.c.bf16 %v5484, %v5484
      %v5509 = vpack.c.bf16 %v5485, %v5485
      %v5510 = vpack.c.bf16 %v5486, %v5486
      %v5535 = vunpack.c.l.b16 %v5487
      %v5536 = vunpack.c.l.b16 %v5488
      %v5537 = vunpack.c.l.b16 %v5489
      %v5538 = vunpack.c.l.b16 %v5490
      %v5539 = vunpack.c.l.b16 %v5491
      %v5540 = vunpack.c.l.b16 %v5492
      %v5541 = vunpack.c.l.b16 %v5493
      %v5542 = vunpack.c.l.b16 %v5494
      %v5543 = vunpack.c.l.b16 %v5495
      %v5544 = vunpack.c.l.b16 %v5496
      %v5545 = vunpack.c.l.b16 %v5497
      %v5546 = vunpack.c.l.b16 %v5498
      %v5547 = vunpack.c.l.b16 %v5499
      %v5548 = vunpack.c.l.b16 %v5500
      %v5549 = vunpack.c.l.b16 %v5501
      %v5550 = vunpack.c.l.b16 %v5502
      %v5551 = vunpack.c.l.b16 %v5503
      %v5552 = vunpack.c.l.b16 %v5504
      %v5553 = vunpack.c.l.b16 %v5505
      %v5554 = vunpack.c.l.b16 %v5506
      %v5555 = vunpack.c.l.b16 %v5507
      %v5556 = vunpack.c.l.b16 %v5508
      %v5557 = vunpack.c.l.b16 %v5509
      %v5558 = vunpack.c.l.b16 %v5510
      %v5559 = vpack.c.b16 %v5536, %v5535
      %v5560 = vpack.c.b16 %v5538, %v5537
      %v5561 = vpack.c.b16 %v5540, %v5539
      %v5562 = vpack.c.b16 %v5542, %v5541
      %v5563 = vpack.c.b16 %v5544, %v5543
      %v5564 = vpack.c.b16 %v5546, %v5545
      %v5565 = vpack.c.b16 %v5548, %v5547
      %v5566 = vpack.c.b16 %v5550, %v5549
      %v5567 = vpack.c.b16 %v5552, %v5551
      %v5568 = vpack.c.b16 %v5554, %v5553
      %v5569 = vpack.c.b16 %v5556, %v5555
      %v5570 = vpack.c.b16 %v5558, %v5557
      %5583 = vst [vmem:[#allocation4 + $0x40] sm:$0xff] %v5559
      %5584 = vst [vmem:[#allocation4 + $0x88] sm:$0xff] %v5560
      %5585 = vst [vmem:[#allocation4 + $0xd0] sm:$0xff] %v5561
      %5586 = vst [vmem:[#allocation4 + $0x118] sm:$0xff] %v5562
      %5587 = vst [vmem:[#allocation4 + $0x160] sm:$0xff] %v5563
      %5588 = vst [vmem:[#allocation4 + $0x1a8] sm:$0xff] %v5564
      %5589 = vst [vmem:[#allocation4 + $0x1f0] sm:$0xff] %v5565
      %5590 = vst [vmem:[#allocation4 + $0x238] sm:$0xff] %v5566
      %5591 = vst [vmem:[#allocation4 + $0x280] sm:$0xff] %v5567
      %5592 = vst [vmem:[#allocation4 + $0x2c8] sm:$0xff] %v5568
      %5593 = vst [vmem:[#allocation4 + $0x310] sm:$0xff] %v5569
      %5594 = vst [vmem:[#allocation4 + $0x358] sm:$0xff] %v5570
      %v5595 = vld [vmem:[#allocation4] sm:$0xff]
      %v5596 = vld [vmem:[#allocation4 + $0x8] sm:$0xff]
      %v5597 = vld [vmem:[#allocation4 + $0x10] sm:$0xff]
      %v5598 = vld [vmem:[#allocation4 + $0x18] sm:$0xff]
      %v5599 = vld [vmem:[#allocation4 + $0x20] sm:$0xff]
      %v5600 = vld [vmem:[#allocation4 + $0x28] sm:$0xff]
      %v5601 = vld [vmem:[#allocation4 + $0x30] sm:$0xff]
      %v5602 = vld [vmem:[#allocation4 + $0x38] sm:$0xff]
      %v5603 = vld [vmem:[#allocation4 + $0x40] sm:$0xff]
      %v5604 = vld [vmem:[#allocation4 + $0x48] sm:$0xff]
      %v5605 = vld [vmem:[#allocation4 + $0x50] sm:$0xff]
      %v5606 = vld [vmem:[#allocation4 + $0x58] sm:$0xff]
      %v5607 = vld [vmem:[#allocation4 + $0x60] sm:$0xff]
      %v5608 = vld [vmem:[#allocation4 + $0x68] sm:$0xff]
      %v5609 = vld [vmem:[#allocation4 + $0x70] sm:$0xff]
      %v5610 = vld [vmem:[#allocation4 + $0x78] sm:$0xff]
      %v5611 = vld [vmem:[#allocation4 + $0x80] sm:$0xff]
      %v5612 = vld [vmem:[#allocation4 + $0x88] sm:$0xff]
      %v5613 = vld [vmem:[#allocation4 + $0x90] sm:$0xff]
      %v5614 = vld [vmem:[#allocation4 + $0x98] sm:$0xff]
      %v5615 = vld [vmem:[#allocation4 + $0xa0] sm:$0xff]
      %v5616 = vld [vmem:[#allocation4 + $0xa8] sm:$0xff]
      %v5617 = vld [vmem:[#allocation4 + $0xb0] sm:$0xff]
      %v5618 = vld [vmem:[#allocation4 + $0xb8] sm:$0xff]
      %v5619 = vld [vmem:[#allocation4 + $0xc0] sm:$0xff]
      %v5620 = vld [vmem:[#allocation4 + $0xc8] sm:$0xff]
      %v5621 = vld [vmem:[#allocation4 + $0xd0] sm:$0xff]
      %v5622 = vld [vmem:[#allocation4 + $0xd8] sm:$0xff]
      %v5623 = vld [vmem:[#allocation4 + $0xe0] sm:$0xff]
      %v5624 = vld [vmem:[#allocation4 + $0xe8] sm:$0xff]
      %v5625 = vld [vmem:[#allocation4 + $0xf0] sm:$0xff]
      %v5626 = vld [vmem:[#allocation4 + $0xf8] sm:$0xff]
      %v5627 = vld [vmem:[#allocation4 + $0x100] sm:$0xff]
      %v5628 = vld [vmem:[#allocation4 + $0x108] sm:$0xff]
      %v5629 = vld [vmem:[#allocation4 + $0x110] sm:$0xff]
      %v5630 = vld [vmem:[#allocation4 + $0x118] sm:$0xff]
      %v5631 = vld [vmem:[#allocation4 + $0x120] sm:$0xff]
      %v5632 = vld [vmem:[#allocation4 + $0x128] sm:$0xff]
      %v5633 = vld [vmem:[#allocation4 + $0x130] sm:$0xff]
      %v5634 = vld [vmem:[#allocation4 + $0x138] sm:$0xff]
      %v5635 = vld [vmem:[#allocation4 + $0x140] sm:$0xff]
      %v5636 = vld [vmem:[#allocation4 + $0x148] sm:$0xff]
      %v5637 = vld [vmem:[#allocation4 + $0x150] sm:$0xff]
      %v5638 = vld [vmem:[#allocation4 + $0x158] sm:$0xff]
      %v5639 = vld [vmem:[#allocation4 + $0x160] sm:$0xff]
      %v5640 = vld [vmem:[#allocation4 + $0x168] sm:$0xff]
      %v5641 = vld [vmem:[#allocation4 + $0x170] sm:$0xff]
      %v5642 = vld [vmem:[#allocation4 + $0x178] sm:$0xff]
      %v5643 = vld [vmem:[#allocation4 + $0x180] sm:$0xff]
      %v5644 = vld [vmem:[#allocation4 + $0x188] sm:$0xff]
      %v5645 = vld [vmem:[#allocation4 + $0x190] sm:$0xff]
      %v5646 = vld [vmem:[#allocation4 + $0x198] sm:$0xff]
      %v5647 = vld [vmem:[#allocation4 + $0x1a0] sm:$0xff]
      %v5648 = vld [vmem:[#allocation4 + $0x1a8] sm:$0xff]
      %v5649 = vld [vmem:[#allocation4 + $0x1b0] sm:$0xff]
      %v5650 = vld [vmem:[#allocation4 + $0x1b8] sm:$0xff]
      %v5651 = vld [vmem:[#allocation4 + $0x1c0] sm:$0xff]
      %v5652 = vld [vmem:[#allocation4 + $0x1c8] sm:$0xff]
      %v5653 = vld [vmem:[#allocation4 + $0x1d0] sm:$0xff]
      %v5654 = vld [vmem:[#allocation4 + $0x1d8] sm:$0xff]
      %v5655 = vld [vmem:[#allocation4 + $0x1e0] sm:$0xff]
      %v5656 = vld [vmem:[#allocation4 + $0x1e8] sm:$0xff]
      %v5657 = vld [vmem:[#allocation4 + $0x1f0] sm:$0xff]
      %v5658 = vld [vmem:[#allocation4 + $0x1f8] sm:$0xff]
      %v5659 = vld [vmem:[#allocation4 + $0x200] sm:$0xff]
      %v5660 = vld [vmem:[#allocation4 + $0x208] sm:$0xff]
      %v5661 = vld [vmem:[#allocation4 + $0x210] sm:$0xff]
      %v5662 = vld [vmem:[#allocation4 + $0x218] sm:$0xff]
      %v5663 = vld [vmem:[#allocation4 + $0x220] sm:$0xff]
      %v5664 = vld [vmem:[#allocation4 + $0x228] sm:$0xff]
      %v5665 = vld [vmem:[#allocation4 + $0x230] sm:$0xff]
      %v5666 = vld [vmem:[#allocation4 + $0x238] sm:$0xff]
      %v5667 = vld [vmem:[#allocation4 + $0x240] sm:$0xff]
      %v5668 = vld [vmem:[#allocation4 + $0x248] sm:$0xff]
      %v5669 = vld [vmem:[#allocation4 + $0x250] sm:$0xff]
      %v5670 = vld [vmem:[#allocation4 + $0x258] sm:$0xff]
      %v5671 = vld [vmem:[#allocation4 + $0x260] sm:$0xff]
      %v5672 = vld [vmem:[#allocation4 + $0x268] sm:$0xff]
      %v5673 = vld [vmem:[#allocation4 + $0x270] sm:$0xff]
      %v5674 = vld [vmem:[#allocation4 + $0x278] sm:$0xff]
      %v5675 = vld [vmem:[#allocation4 + $0x280] sm:$0xff]
      %v5676 = vld [vmem:[#allocation4 + $0x288] sm:$0xff]
      %v5677 = vld [vmem:[#allocation4 + $0x290] sm:$0xff]
      %v5678 = vld [vmem:[#allocation4 + $0x298] sm:$0xff]
      %v5679 = vld [vmem:[#allocation4 + $0x2a0] sm:$0xff]
      %v5680 = vld [vmem:[#allocation4 + $0x2a8] sm:$0xff]
      %v5681 = vld [vmem:[#allocation4 + $0x2b0] sm:$0xff]
      %v5682 = vld [vmem:[#allocation4 + $0x2b8] sm:$0xff]
      %v5683 = vld [vmem:[#allocation4 + $0x2c0] sm:$0xff]
      %v5684 = vld [vmem:[#allocation4 + $0x2c8] sm:$0xff]
      %v5685 = vld [vmem:[#allocation4 + $0x2d0] sm:$0xff]
      %v5686 = vld [vmem:[#allocation4 + $0x2d8] sm:$0xff]
      %v5687 = vld [vmem:[#allocation4 + $0x2e0] sm:$0xff]
      %v5688 = vld [vmem:[#allocation4 + $0x2e8] sm:$0xff]
      %v5689 = vld [vmem:[#allocation4 + $0x2f0] sm:$0xff]
      %v5690 = vld [vmem:[#allocation4 + $0x2f8] sm:$0xff]
      %v5691 = vld [vmem:[#allocation4 + $0x300] sm:$0xff]
      %v5692 = vld [vmem:[#allocation4 + $0x308] sm:$0xff]
      %v5693 = vld [vmem:[#allocation4 + $0x310] sm:$0xff]
      %v5694 = vld [vmem:[#allocation4 + $0x318] sm:$0xff]
      %v5695 = vld [vmem:[#allocation4 + $0x320] sm:$0xff]
      %v5696 = vld [vmem:[#allocation4 + $0x328] sm:$0xff]
      %v5697 = vld [vmem:[#allocation4 + $0x330] sm:$0xff]
      %v5698 = vld [vmem:[#allocation4 + $0x338] sm:$0xff]
      %v5699 = vld [vmem:[#allocation4 + $0x340] sm:$0xff]
      %v5700 = vld [vmem:[#allocation4 + $0x348] sm:$0xff]
      %v5701 = vld [vmem:[#allocation4 + $0x350] sm:$0xff]
      %v5702 = vld [vmem:[#allocation4 + $0x358] sm:$0xff]
      %v5703 = vld [vmem:[%s3] sm:$0xff]
      %v5704 = vld [vmem:[%s3 + $0x8] sm:$0xff]
      %v5705 = vld [vmem:[%s3 + $0x10] sm:$0xff]
      %v5706 = vld [vmem:[%s3 + $0x18] sm:$0xff]
      %v5707 = vld [vmem:[%s3 + $0x20] sm:$0xff]
      %v5708 = vld [vmem:[%s3 + $0x28] sm:$0xff]
      %v5709 = vld [vmem:[%s3 + $0x30] sm:$0xff]
      %v5710 = vld [vmem:[%s3 + $0x38] sm:$0xff]
      %v5711 = vld [vmem:[%s3 + $0x40] sm:$0xff]
      %v5712 = vld [vmem:[%s3 + $0x48] sm:$0xff]
      %v5713 = vld [vmem:[%s3 + $0x50] sm:$0xff]
      %v5714 = vld [vmem:[%s3 + $0x58] sm:$0xff]
      %v5715 = vld [vmem:[%s3 + $0x60] sm:$0xff]
      %v5716 = vld [vmem:[%s3 + $0x68] sm:$0xff]
      %v5717 = vld [vmem:[%s3 + $0x70] sm:$0xff]
      %v5718 = vld [vmem:[%s3 + $0x78] sm:$0xff]
      %v5719 = vld [vmem:[%s3 + $0x80] sm:$0xff]
      %v5720 = vld [vmem:[%s3 + $0x88] sm:$0xff]
      %v5721 = vld [vmem:[%s3 + $0x90] sm:$0xff]
      %v5722 = vld [vmem:[%s3 + $0x98] sm:$0xff]
      %v5723 = vld [vmem:[%s3 + $0xa0] sm:$0xff]
      %v5724 = vld [vmem:[%s3 + $0xa8] sm:$0xff]
      %v5725 = vld [vmem:[%s3 + $0xb0] sm:$0xff]
      %v5726 = vld [vmem:[%s3 + $0xb8] sm:$0xff]
      %v5727 = vld [vmem:[%s3 + $0xc0] sm:$0xff]
      %v5728 = vld [vmem:[%s3 + $0xc8] sm:$0xff]
      %v5729 = vld [vmem:[%s3 + $0xd0] sm:$0xff]
      %v5730 = vld [vmem:[%s3 + $0xd8] sm:$0xff]
      %v5731 = vld [vmem:[%s3 + $0xe0] sm:$0xff]
      %v5732 = vld [vmem:[%s3 + $0xe8] sm:$0xff]
      %v5733 = vld [vmem:[%s3 + $0xf0] sm:$0xff]
      %v5734 = vld [vmem:[%s3 + $0xf8] sm:$0xff]
      %v5735 = vld [vmem:[%s3 + $0x100] sm:$0xff]
      %v5736 = vld [vmem:[%s3 + $0x108] sm:$0xff]
      %v5737 = vld [vmem:[%s3 + $0x110] sm:$0xff]
      %v5738 = vld [vmem:[%s3 + $0x118] sm:$0xff]
      %v5739 = vld [vmem:[%s3 + $0x120] sm:$0xff]
      %v5740 = vld [vmem:[%s3 + $0x128] sm:$0xff]
      %v5741 = vld [vmem:[%s3 + $0x130] sm:$0xff]
      %v5742 = vld [vmem:[%s3 + $0x138] sm:$0xff]
      %v5743 = vld [vmem:[%s3 + $0x140] sm:$0xff]
      %v5744 = vld [vmem:[%s3 + $0x148] sm:$0xff]
      %v5745 = vld [vmem:[%s3 + $0x150] sm:$0xff]
      %v5746 = vld [vmem:[%s3 + $0x158] sm:$0xff]
      %v5747 = vld [vmem:[%s3 + $0x160] sm:$0xff]
      %v5748 = vld [vmem:[%s3 + $0x168] sm:$0xff]
      %v5749 = vld [vmem:[%s3 + $0x170] sm:$0xff]
      %v5750 = vld [vmem:[%s3 + $0x178] sm:$0xff]
      %v5751 = vld [vmem:[%s3 + $0x180] sm:$0xff]
      %v5752 = vld [vmem:[%s3 + $0x188] sm:$0xff]
      %v5753 = vld [vmem:[%s3 + $0x190] sm:$0xff]
      %v5754 = vld [vmem:[%s3 + $0x198] sm:$0xff]
      %v5755 = vld [vmem:[%s3 + $0x1a0] sm:$0xff]
      %v5756 = vld [vmem:[%s3 + $0x1a8] sm:$0xff]
      %v5757 = vld [vmem:[%s3 + $0x1b0] sm:$0xff]
      %v5758 = vld [vmem:[%s3 + $0x1b8] sm:$0xff]
      %v5759 = vld [vmem:[%s3 + $0x1c0] sm:$0xff]
      %v5760 = vld [vmem:[%s3 + $0x1c8] sm:$0xff]
      %v5761 = vld [vmem:[%s3 + $0x1d0] sm:$0xff]
      %v5762 = vld [vmem:[%s3 + $0x1d8] sm:$0xff]
      %v5763 = vld [vmem:[%s3 + $0x1e0] sm:$0xff]
      %v5764 = vld [vmem:[%s3 + $0x1e8] sm:$0xff]
      %v5765 = vld [vmem:[%s3 + $0x1f0] sm:$0xff]
      %v5766 = vld [vmem:[%s3 + $0x1f8] sm:$0xff]
      %v5767 = vld [vmem:[%s3 + $0x200] sm:$0xff]
      %v5768 = vld [vmem:[%s3 + $0x208] sm:$0xff]
      %v5769 = vld [vmem:[%s3 + $0x210] sm:$0xff]
      %v5770 = vld [vmem:[%s3 + $0x218] sm:$0xff]
      %v5771 = vld [vmem:[%s3 + $0x220] sm:$0xff]
      %v5772 = vld [vmem:[%s3 + $0x228] sm:$0xff]
      %v5773 = vld [vmem:[%s3 + $0x230] sm:$0xff]
      %v5774 = vld [vmem:[%s3 + $0x238] sm:$0xff]
      %v5775 = vld [vmem:[%s3 + $0x240] sm:$0xff]
      %v5776 = vld [vmem:[%s3 + $0x248] sm:$0xff]
      %v5777 = vld [vmem:[%s3 + $0x250] sm:$0xff]
      %v5778 = vld [vmem:[%s3 + $0x258] sm:$0xff]
      %v5779 = vld [vmem:[%s3 + $0x260] sm:$0xff]
      %v5780 = vld [vmem:[%s3 + $0x268] sm:$0xff]
      %v5781 = vld [vmem:[%s3 + $0x270] sm:$0xff]
      %v5782 = vld [vmem:[%s3 + $0x278] sm:$0xff]
      %v5783 = vld [vmem:[%s3 + $0x280] sm:$0xff]
      %v5784 = vld [vmem:[%s3 + $0x288] sm:$0xff]
      %v5785 = vld [vmem:[%s3 + $0x290] sm:$0xff]
      %v5786 = vld [vmem:[%s3 + $0x298] sm:$0xff]
      %v5787 = vld [vmem:[%s3 + $0x2a0] sm:$0xff]
      %v5788 = vld [vmem:[%s3 + $0x2a8] sm:$0xff]
      %v5789 = vld [vmem:[%s3 + $0x2b0] sm:$0xff]
      %v5790 = vld [vmem:[%s3 + $0x2b8] sm:$0xff]
      %v5791 = vld [vmem:[%s3 + $0x2c0] sm:$0xff]
      %v5792 = vld [vmem:[%s3 + $0x2c8] sm:$0xff]
      %v5793 = vld [vmem:[%s3 + $0x2d0] sm:$0xff]
      %v5794 = vld [vmem:[%s3 + $0x2d8] sm:$0xff]
      %v5795 = vld [vmem:[%s3 + $0x2e0] sm:$0xff]
      %v5796 = vld [vmem:[%s3 + $0x2e8] sm:$0xff]
      %v5797 = vld [vmem:[%s3 + $0x2f0] sm:$0xff]
      %v5798 = vld [vmem:[%s3 + $0x2f8] sm:$0xff]
      %v5799 = vld [vmem:[%s3 + $0x300] sm:$0xff]
      %v5800 = vld [vmem:[%s3 + $0x308] sm:$0xff]
      %v5801 = vld [vmem:[%s3 + $0x310] sm:$0xff]
      %v5802 = vld [vmem:[%s3 + $0x318] sm:$0xff]
      %v5803 = vld [vmem:[%s3 + $0x320] sm:$0xff]
      %v5804 = vld [vmem:[%s3 + $0x328] sm:$0xff]
      %v5805 = vld [vmem:[%s3 + $0x330] sm:$0xff]
      %v5806 = vld [vmem:[%s3 + $0x338] sm:$0xff]
      %v5807 = vld [vmem:[%s3 + $0x340] sm:$0xff]
      %v5808 = vld [vmem:[%s3 + $0x348] sm:$0xff]
      %v5809 = vld [vmem:[%s3 + $0x350] sm:$0xff]
      %v5810 = vld [vmem:[%s3 + $0x358] sm:$0xff]
      %v5811 = vld [vmem:[%s3 + $0x360] sm:$0xff]
      %v5812 = vld [vmem:[%s3 + $0x368] sm:$0xff]
      %v5813 = vld [vmem:[%s3 + $0x370] sm:$0xff]
      %v5814 = vld [vmem:[%s3 + $0x378] sm:$0xff]
      %v5815 = vld [vmem:[%s3 + $0x380] sm:$0xff]
      %v5816 = vld [vmem:[%s3 + $0x388] sm:$0xff]
      %v5817 = vld [vmem:[%s3 + $0x390] sm:$0xff]
      %v5818 = vld [vmem:[%s3 + $0x398] sm:$0xff]
      %v5819 = vld [vmem:[%s3 + $0x3a0] sm:$0xff]
      %v5820 = vld [vmem:[%s3 + $0x3a8] sm:$0xff]
      %v5821 = vld [vmem:[%s3 + $0x3b0] sm:$0xff]
      %v5822 = vld [vmem:[%s3 + $0x3b8] sm:$0xff]
      %v5823 = vld [vmem:[%s3 + $0x3c0] sm:$0xff]
      %v5824 = vld [vmem:[%s3 + $0x3c8] sm:$0xff]
      %v5825 = vld [vmem:[%s3 + $0x3d0] sm:$0xff]
      %v5826 = vld [vmem:[%s3 + $0x3d8] sm:$0xff]
      %v5827 = vld [vmem:[%s3 + $0x3e0] sm:$0xff]
      %v5828 = vld [vmem:[%s3 + $0x3e8] sm:$0xff]
      %v5829 = vld [vmem:[%s3 + $0x3f0] sm:$0xff]
      %v5830 = vld [vmem:[%s3 + $0x3f8] sm:$0xff]
      %v5831 = vld [vmem:[%s3 + $0x400] sm:$0xff]
      %v5832 = vld [vmem:[%s3 + $0x408] sm:$0xff]
      %v5833 = vld [vmem:[%s3 + $0x410] sm:$0xff]
      %v5834 = vld [vmem:[%s3 + $0x418] sm:$0xff]
      %v5835 = vld [vmem:[%s3 + $0x420] sm:$0xff]
      %v5836 = vld [vmem:[%s3 + $0x428] sm:$0xff]
      %v5837 = vld [vmem:[%s3 + $0x430] sm:$0xff]
      %v5838 = vld [vmem:[%s3 + $0x438] sm:$0xff]
      %v5839 = vld [vmem:[%s3 + $0x440] sm:$0xff]
      %v5840 = vld [vmem:[%s3 + $0x448] sm:$0xff]
      %v5841 = vld [vmem:[%s3 + $0x450] sm:$0xff]
      %v5842 = vld [vmem:[%s3 + $0x458] sm:$0xff]
      %v5843 = vld [vmem:[%s3 + $0x460] sm:$0xff]
      %v5844 = vld [vmem:[%s3 + $0x468] sm:$0xff]
      %v5845 = vld [vmem:[%s3 + $0x470] sm:$0xff]
      %v5846 = vld [vmem:[%s3 + $0x478] sm:$0xff]
      %v5848 = vlaneseq
      %v5849 = vshrl.u32 %v5848, 7
      %v5850 = vsub.s32 0, %v5849
      %v5851 = vrot.slane %v4307, %v5850
      %v5852 = vlaneseq
      %v5853 = vshrl.u32 %v5852, 7
      %v5854 = vsub.s32 1, %v5853
      %v5855 = vrot.slane %v4307, %v5854
      %v6002 = vunpack.c.l.b16 %v5703
      %v6003 = vunpack.c.h.b16 %v5703
      %v6004 = vunpack.c.l.b16 %v5704
      %v6005 = vunpack.c.h.b16 %v5704
      %v6006 = vunpack.c.l.b16 %v5705
      %v6007 = vunpack.c.h.b16 %v5705
      %v6008 = vunpack.c.l.b16 %v5706
      %v6009 = vunpack.c.h.b16 %v5706
      %v6010 = vunpack.c.l.b16 %v5707
      %v6011 = vunpack.c.h.b16 %v5707
      %v6012 = vunpack.c.l.b16 %v5708
      %v6013 = vunpack.c.h.b16 %v5708
      %v6014 = vunpack.c.l.b16 %v5709
      %v6015 = vunpack.c.h.b16 %v5709
      %v6016 = vunpack.c.l.b16 %v5710
      %v6017 = vunpack.c.h.b16 %v5710
      %v6018 = vunpack.c.l.b16 %v5711
      %v6019 = vunpack.c.h.b16 %v5711
      %v6020 = vunpack.c.l.b16 %v5712
      %v6021 = vunpack.c.h.b16 %v5712
      %v6022 = vunpack.c.l.b16 %v5713
      %v6023 = vunpack.c.h.b16 %v5713
      %v6024 = vunpack.c.l.b16 %v5714
      %v6025 = vunpack.c.h.b16 %v5714
      %v6026 = vunpack.c.l.b16 %v5715
      %v6027 = vunpack.c.h.b16 %v5715
      %v6028 = vunpack.c.l.b16 %v5716
      %v6029 = vunpack.c.h.b16 %v5716
      %v6030 = vunpack.c.l.b16 %v5717
      %v6031 = vunpack.c.h.b16 %v5717
      %v6032 = vunpack.c.l.b16 %v5718
      %v6033 = vunpack.c.h.b16 %v5718
      %v6034 = vunpack.c.l.b16 %v5719
      %v6035 = vunpack.c.h.b16 %v5719
      %v6036 = vunpack.c.l.b16 %v5720
      %v6037 = vunpack.c.h.b16 %v5720
      %v6038 = vunpack.c.l.b16 %v5721
      %v6039 = vunpack.c.h.b16 %v5721
      %v6040 = vunpack.c.l.b16 %v5722
      %v6041 = vunpack.c.h.b16 %v5722
      %v6042 = vunpack.c.l.b16 %v5723
      %v6043 = vunpack.c.h.b16 %v5723
      %v6044 = vunpack.c.l.b16 %v5724
      %v6045 = vunpack.c.h.b16 %v5724
      %v6046 = vunpack.c.l.b16 %v5725
      %v6047 = vunpack.c.h.b16 %v5725
      %v6048 = vunpack.c.l.b16 %v5726
      %v6049 = vunpack.c.h.b16 %v5726
      %v6050 = vunpack.c.l.b16 %v5727
      %v6051 = vunpack.c.h.b16 %v5727
      %v6052 = vunpack.c.l.b16 %v5728
      %v6053 = vunpack.c.h.b16 %v5728
      %v6054 = vunpack.c.l.b16 %v5729
      %v6055 = vunpack.c.h.b16 %v5729
      %v6056 = vunpack.c.l.b16 %v5730
      %v6057 = vunpack.c.h.b16 %v5730
      %v6058 = vunpack.c.l.b16 %v5731
      %v6059 = vunpack.c.h.b16 %v5731
      %v6060 = vunpack.c.l.b16 %v5732
      %v6061 = vunpack.c.h.b16 %v5732
      %v6062 = vunpack.c.l.b16 %v5733
      %v6063 = vunpack.c.h.b16 %v5733
      %v6064 = vunpack.c.l.b16 %v5734
      %v6065 = vunpack.c.h.b16 %v5734
      %v6066 = vunpack.c.l.b16 %v5735
      %v6067 = vunpack.c.h.b16 %v5735
      %v6068 = vunpack.c.l.b16 %v5736
      %v6069 = vunpack.c.h.b16 %v5736
      %v6070 = vunpack.c.l.b16 %v5737
      %v6071 = vunpack.c.h.b16 %v5737
      %v6072 = vunpack.c.l.b16 %v5738
      %v6073 = vunpack.c.h.b16 %v5738
      %v6074 = vunpack.c.l.b16 %v5739
      %v6075 = vunpack.c.h.b16 %v5739
      %v6076 = vunpack.c.l.b16 %v5740
      %v6077 = vunpack.c.h.b16 %v5740
      %v6078 = vunpack.c.l.b16 %v5741
      %v6079 = vunpack.c.h.b16 %v5741
      %v6080 = vunpack.c.l.b16 %v5742
      %v6081 = vunpack.c.h.b16 %v5742
      %v6082 = vunpack.c.l.b16 %v5743
      %v6083 = vunpack.c.h.b16 %v5743
      %v6084 = vunpack.c.l.b16 %v5744
      %v6085 = vunpack.c.h.b16 %v5744
      %v6086 = vunpack.c.l.b16 %v5745
      %v6087 = vunpack.c.h.b16 %v5745
      %v6088 = vunpack.c.l.b16 %v5746
      %v6089 = vunpack.c.h.b16 %v5746
      %v6090 = vunpack.c.l.b16 %v5747
      %v6091 = vunpack.c.h.b16 %v5747
      %v6092 = vunpack.c.l.b16 %v5748
      %v6093 = vunpack.c.h.b16 %v5748
      %v6094 = vunpack.c.l.b16 %v5749
      %v6095 = vunpack.c.h.b16 %v5749
      %v6096 = vunpack.c.l.b16 %v5750
      %v6097 = vunpack.c.h.b16 %v5750
      %v6098 = vunpack.c.l.b16 %v5751
      %v6099 = vunpack.c.h.b16 %v5751
      %v6100 = vunpack.c.l.b16 %v5752
      %v6101 = vunpack.c.h.b16 %v5752
      %v6102 = vunpack.c.l.b16 %v5753
      %v6103 = vunpack.c.h.b16 %v5753
      %v6104 = vunpack.c.l.b16 %v5754
      %v6105 = vunpack.c.h.b16 %v5754
      %v6106 = vunpack.c.l.b16 %v5755
      %v6107 = vunpack.c.h.b16 %v5755
      %v6108 = vunpack.c.l.b16 %v5756
      %v6109 = vunpack.c.h.b16 %v5756
      %v6110 = vunpack.c.l.b16 %v5757
      %v6111 = vunpack.c.h.b16 %v5757
      %v6112 = vunpack.c.l.b16 %v5758
      %v6113 = vunpack.c.h.b16 %v5758
      %v6114 = vunpack.c.l.b16 %v5759
      %v6115 = vunpack.c.h.b16 %v5759
      %v6116 = vunpack.c.l.b16 %v5760
      %v6117 = vunpack.c.h.b16 %v5760
      %v6118 = vunpack.c.l.b16 %v5761
      %v6119 = vunpack.c.h.b16 %v5761
      %v6120 = vunpack.c.l.b16 %v5762
      %v6121 = vunpack.c.h.b16 %v5762
      %v6122 = vunpack.c.l.b16 %v5763
      %v6123 = vunpack.c.h.b16 %v5763
      %v6124 = vunpack.c.l.b16 %v5764
      %v6125 = vunpack.c.h.b16 %v5764
      %v6126 = vunpack.c.l.b16 %v5765
      %v6127 = vunpack.c.h.b16 %v5765
      %v6128 = vunpack.c.l.b16 %v5766
      %v6129 = vunpack.c.h.b16 %v5766
      %v6130 = vunpack.c.l.b16 %v5767
      %v6131 = vunpack.c.h.b16 %v5767
      %v6132 = vunpack.c.l.b16 %v5768
      %v6133 = vunpack.c.h.b16 %v5768
      %v6134 = vunpack.c.l.b16 %v5769
      %v6135 = vunpack.c.h.b16 %v5769
      %v6136 = vunpack.c.l.b16 %v5770
      %v6137 = vunpack.c.h.b16 %v5770
      %v6138 = vunpack.c.l.b16 %v5771
      %v6139 = vunpack.c.h.b16 %v5771
      %v6140 = vunpack.c.l.b16 %v5772
      %v6141 = vunpack.c.h.b16 %v5772
      %v6142 = vunpack.c.l.b16 %v5773
      %v6143 = vunpack.c.h.b16 %v5773
      %v6144 = vunpack.c.l.b16 %v5774
      %v6145 = vunpack.c.h.b16 %v5774
      %v6146 = vunpack.c.l.b16 %v5775
      %v6147 = vunpack.c.h.b16 %v5775
      %v6148 = vunpack.c.l.b16 %v5776
      %v6149 = vunpack.c.h.b16 %v5776
      %v6150 = vunpack.c.l.b16 %v5777
      %v6151 = vunpack.c.h.b16 %v5777
      %v6152 = vunpack.c.l.b16 %v5778
      %v6153 = vunpack.c.h.b16 %v5778
      %v6154 = vunpack.c.l.b16 %v5779
      %v6155 = vunpack.c.h.b16 %v5779
      %v6156 = vunpack.c.l.b16 %v5780
      %v6157 = vunpack.c.h.b16 %v5780
      %v6158 = vunpack.c.l.b16 %v5781
      %v6159 = vunpack.c.h.b16 %v5781
      %v6160 = vunpack.c.l.b16 %v5782
      %v6161 = vunpack.c.h.b16 %v5782
      %v6162 = vunpack.c.l.b16 %v5783
      %v6163 = vunpack.c.h.b16 %v5783
      %v6164 = vunpack.c.l.b16 %v5784
      %v6165 = vunpack.c.h.b16 %v5784
      %v6166 = vunpack.c.l.b16 %v5785
      %v6167 = vunpack.c.h.b16 %v5785
      %v6168 = vunpack.c.l.b16 %v5786
      %v6169 = vunpack.c.h.b16 %v5786
      %v6170 = vunpack.c.l.b16 %v5787
      %v6171 = vunpack.c.h.b16 %v5787
      %v6172 = vunpack.c.l.b16 %v5788
      %v6173 = vunpack.c.h.b16 %v5788
      %v6174 = vunpack.c.l.b16 %v5789
      %v6175 = vunpack.c.h.b16 %v5789
      %v6176 = vunpack.c.l.b16 %v5790
      %v6177 = vunpack.c.h.b16 %v5790
      %v6178 = vunpack.c.l.b16 %v5791
      %v6179 = vunpack.c.h.b16 %v5791
      %v6180 = vunpack.c.l.b16 %v5792
      %v6181 = vunpack.c.h.b16 %v5792
      %v6182 = vunpack.c.l.b16 %v5793
      %v6183 = vunpack.c.h.b16 %v5793
      %v6184 = vunpack.c.l.b16 %v5794
      %v6185 = vunpack.c.h.b16 %v5794
      %v6186 = vunpack.c.l.b16 %v5795
      %v6187 = vunpack.c.h.b16 %v5795
      %v6188 = vunpack.c.l.b16 %v5796
      %v6189 = vunpack.c.h.b16 %v5796
      %v6190 = vunpack.c.l.b16 %v5797
      %v6191 = vunpack.c.h.b16 %v5797
      %v6192 = vunpack.c.l.b16 %v5798
      %v6193 = vunpack.c.h.b16 %v5798
      %v6194 = vunpack.c.l.b16 %v5799
      %v6195 = vunpack.c.h.b16 %v5799
      %v6196 = vunpack.c.l.b16 %v5800
      %v6197 = vunpack.c.h.b16 %v5800
      %v6198 = vunpack.c.l.b16 %v5801
      %v6199 = vunpack.c.h.b16 %v5801
      %v6200 = vunpack.c.l.b16 %v5802
      %v6201 = vunpack.c.h.b16 %v5802
      %v6202 = vunpack.c.l.b16 %v5803
      %v6203 = vunpack.c.h.b16 %v5803
      %v6204 = vunpack.c.l.b16 %v5804
      %v6205 = vunpack.c.h.b16 %v5804
      %v6206 = vunpack.c.l.b16 %v5805
      %v6207 = vunpack.c.h.b16 %v5805
      %v6208 = vunpack.c.l.b16 %v5806
      %v6209 = vunpack.c.h.b16 %v5806
      %v6210 = vunpack.c.l.b16 %v5807
      %v6211 = vunpack.c.h.b16 %v5807
      %v6212 = vunpack.c.l.b16 %v5808
      %v6213 = vunpack.c.h.b16 %v5808
      %v6214 = vunpack.c.l.b16 %v5809
      %v6215 = vunpack.c.h.b16 %v5809
      %v6216 = vunpack.c.l.b16 %v5810
      %v6217 = vunpack.c.h.b16 %v5810
      %v6218 = vunpack.c.l.b16 %v5811
      %v6219 = vunpack.c.h.b16 %v5811
      %v6220 = vunpack.c.l.b16 %v5812
      %v6221 = vunpack.c.h.b16 %v5812
      %v6222 = vunpack.c.l.b16 %v5813
      %v6223 = vunpack.c.h.b16 %v5813
      %v6224 = vunpack.c.l.b16 %v5814
      %v6225 = vunpack.c.h.b16 %v5814
      %v6226 = vunpack.c.l.b16 %v5815
      %v6227 = vunpack.c.h.b16 %v5815
      %v6228 = vunpack.c.l.b16 %v5816
      %v6229 = vunpack.c.h.b16 %v5816
      %v6230 = vunpack.c.l.b16 %v5817
      %v6231 = vunpack.c.h.b16 %v5817
      %v6232 = vunpack.c.l.b16 %v5818
      %v6233 = vunpack.c.h.b16 %v5818
      %v6234 = vunpack.c.l.b16 %v5819
      %v6235 = vunpack.c.h.b16 %v5819
      %v6236 = vunpack.c.l.b16 %v5820
      %v6237 = vunpack.c.h.b16 %v5820
      %v6238 = vunpack.c.l.b16 %v5821
      %v6239 = vunpack.c.h.b16 %v5821
      %v6240 = vunpack.c.l.b16 %v5822
      %v6241 = vunpack.c.h.b16 %v5822
      %v6242 = vunpack.c.l.b16 %v5823
      %v6243 = vunpack.c.h.b16 %v5823
      %v6244 = vunpack.c.l.b16 %v5824
      %v6245 = vunpack.c.h.b16 %v5824
      %v6246 = vunpack.c.l.b16 %v5825
      %v6247 = vunpack.c.h.b16 %v5825
      %v6248 = vunpack.c.l.b16 %v5826
      %v6249 = vunpack.c.h.b16 %v5826
      %v6250 = vunpack.c.l.b16 %v5827
      %v6251 = vunpack.c.h.b16 %v5827
      %v6252 = vunpack.c.l.b16 %v5828
      %v6253 = vunpack.c.h.b16 %v5828
      %v6254 = vunpack.c.l.b16 %v5829
      %v6255 = vunpack.c.h.b16 %v5829
      %v6256 = vunpack.c.l.b16 %v5830
      %v6257 = vunpack.c.h.b16 %v5830
      %v6258 = vunpack.c.l.b16 %v5831
      %v6259 = vunpack.c.h.b16 %v5831
      %v6260 = vunpack.c.l.b16 %v5832
      %v6261 = vunpack.c.h.b16 %v5832
      %v6262 = vunpack.c.l.b16 %v5833
      %v6263 = vunpack.c.h.b16 %v5833
      %v6264 = vunpack.c.l.b16 %v5834
      %v6265 = vunpack.c.h.b16 %v5834
      %v6266 = vunpack.c.l.b16 %v5835
      %v6267 = vunpack.c.h.b16 %v5835
      %v6268 = vunpack.c.l.b16 %v5836
      %v6269 = vunpack.c.h.b16 %v5836
      %v6270 = vunpack.c.l.b16 %v5837
      %v6271 = vunpack.c.h.b16 %v5837
      %v6272 = vunpack.c.l.b16 %v5838
      %v6273 = vunpack.c.h.b16 %v5838
      %v6274 = vunpack.c.l.b16 %v5839
      %v6275 = vunpack.c.h.b16 %v5839
      %v6276 = vunpack.c.l.b16 %v5840
      %v6277 = vunpack.c.h.b16 %v5840
      %v6278 = vunpack.c.l.b16 %v5841
      %v6279 = vunpack.c.h.b16 %v5841
      %v6280 = vunpack.c.l.b16 %v5842
      %v6281 = vunpack.c.h.b16 %v5842
      %v6282 = vunpack.c.l.b16 %v5843
      %v6283 = vunpack.c.h.b16 %v5843
      %v6284 = vunpack.c.l.b16 %v5844
      %v6285 = vunpack.c.h.b16 %v5844
      %v6286 = vunpack.c.l.b16 %v5845
      %v6287 = vunpack.c.h.b16 %v5845
      %v6288 = vunpack.c.l.b16 %v5846
      %v6289 = vunpack.c.h.b16 %v5846
      %v6290 = vpack.c.b16 %v6004, %v6002
      %v6291 = vpack.c.b16 %v6005, %v6003
      %v6292 = vpack.c.b16 %v6008, %v6006
      %v6293 = vpack.c.b16 %v6009, %v6007
      %v6294 = vpack.c.b16 %v6012, %v6010
      %v6295 = vpack.c.b16 %v6013, %v6011
      %v6296 = vpack.c.b16 %v6016, %v6014
      %v6297 = vpack.c.b16 %v6017, %v6015
      %v6298 = vpack.c.b16 %v6020, %v6018
      %v6299 = vpack.c.b16 %v6021, %v6019
      %v6300 = vpack.c.b16 %v6024, %v6022
      %v6301 = vpack.c.b16 %v6025, %v6023
      %v6302 = vpack.c.b16 %v6028, %v6026
      %v6303 = vpack.c.b16 %v6029, %v6027
      %v6304 = vpack.c.b16 %v6032, %v6030
      %v6305 = vpack.c.b16 %v6033, %v6031
      %v6306 = vpack.c.b16 %v6036, %v6034
      %v6307 = vpack.c.b16 %v6037, %v6035
      %v6308 = vpack.c.b16 %v6040, %v6038
      %v6309 = vpack.c.b16 %v6041, %v6039
      %v6310 = vpack.c.b16 %v6044, %v6042
      %v6311 = vpack.c.b16 %v6045, %v6043
      %v6312 = vpack.c.b16 %v6048, %v6046
      %v6313 = vpack.c.b16 %v6049, %v6047
      %v6314 = vpack.c.b16 %v6052, %v6050
      %v6315 = vpack.c.b16 %v6053, %v6051
      %v6316 = vpack.c.b16 %v6056, %v6054
      %v6317 = vpack.c.b16 %v6057, %v6055
      %v6318 = vpack.c.b16 %v6060, %v6058
      %v6319 = vpack.c.b16 %v6061, %v6059
      %v6320 = vpack.c.b16 %v6064, %v6062
      %v6321 = vpack.c.b16 %v6065, %v6063
      %v6322 = vpack.c.b16 %v6068, %v6066
      %v6323 = vpack.c.b16 %v6069, %v6067
      %v6324 = vpack.c.b16 %v6072, %v6070
      %v6325 = vpack.c.b16 %v6073, %v6071
      %v6326 = vpack.c.b16 %v6076, %v6074
      %v6327 = vpack.c.b16 %v6077, %v6075
      %v6328 = vpack.c.b16 %v6080, %v6078
      %v6329 = vpack.c.b16 %v6081, %v6079
      %v6330 = vpack.c.b16 %v6084, %v6082
      %v6331 = vpack.c.b16 %v6085, %v6083
      %v6332 = vpack.c.b16 %v6088, %v6086
      %v6333 = vpack.c.b16 %v6089, %v6087
      %v6334 = vpack.c.b16 %v6092, %v6090
      %v6335 = vpack.c.b16 %v6093, %v6091
      %v6336 = vpack.c.b16 %v6096, %v6094
      %v6337 = vpack.c.b16 %v6097, %v6095
      %v6338 = vpack.c.b16 %v6100, %v6098
      %v6339 = vpack.c.b16 %v6101, %v6099
      %v6340 = vpack.c.b16 %v6104, %v6102
      %v6341 = vpack.c.b16 %v6105, %v6103
      %v6342 = vpack.c.b16 %v6108, %v6106
      %v6343 = vpack.c.b16 %v6109, %v6107
      %v6344 = vpack.c.b16 %v6112, %v6110
      %v6345 = vpack.c.b16 %v6113, %v6111
      %v6346 = vpack.c.b16 %v6116, %v6114
      %v6347 = vpack.c.b16 %v6117, %v6115
      %v6348 = vpack.c.b16 %v6120, %v6118
      %v6349 = vpack.c.b16 %v6121, %v6119
      %v6350 = vpack.c.b16 %v6124, %v6122
      %v6351 = vpack.c.b16 %v6125, %v6123
      %v6352 = vpack.c.b16 %v6128, %v6126
      %v6353 = vpack.c.b16 %v6129, %v6127
      %v6354 = vpack.c.b16 %v6132, %v6130
      %v6355 = vpack.c.b16 %v6133, %v6131
      %v6356 = vpack.c.b16 %v6136, %v6134
      %v6357 = vpack.c.b16 %v6137, %v6135
      %v6358 = vpack.c.b16 %v6140, %v6138
      %v6359 = vpack.c.b16 %v6141, %v6139
      %v6360 = vpack.c.b16 %v6144, %v6142
      %v6361 = vpack.c.b16 %v6145, %v6143
      %v6362 = vpack.c.b16 %v6148, %v6146
      %v6363 = vpack.c.b16 %v6149, %v6147
      %v6364 = vpack.c.b16 %v6152, %v6150
      %v6365 = vpack.c.b16 %v6153, %v6151
      %v6366 = vpack.c.b16 %v6156, %v6154
      %v6367 = vpack.c.b16 %v6157, %v6155
      %v6368 = vpack.c.b16 %v6160, %v6158
      %v6369 = vpack.c.b16 %v6161, %v6159
      %v6370 = vpack.c.b16 %v6164, %v6162
      %v6371 = vpack.c.b16 %v6165, %v6163
      %v6372 = vpack.c.b16 %v6168, %v6166
      %v6373 = vpack.c.b16 %v6169, %v6167
      %v6374 = vpack.c.b16 %v6172, %v6170
      %v6375 = vpack.c.b16 %v6173, %v6171
      %v6376 = vpack.c.b16 %v6176, %v6174
      %v6377 = vpack.c.b16 %v6177, %v6175
      %v6378 = vpack.c.b16 %v6180, %v6178
      %v6379 = vpack.c.b16 %v6181, %v6179
      %v6380 = vpack.c.b16 %v6184, %v6182
      %v6381 = vpack.c.b16 %v6185, %v6183
      %v6382 = vpack.c.b16 %v6188, %v6186
      %v6383 = vpack.c.b16 %v6189, %v6187
      %v6384 = vpack.c.b16 %v6192, %v6190
      %v6385 = vpack.c.b16 %v6193, %v6191
      %v6386 = vpack.c.b16 %v6196, %v6194
      %v6387 = vpack.c.b16 %v6197, %v6195
      %v6388 = vpack.c.b16 %v6200, %v6198
      %v6389 = vpack.c.b16 %v6201, %v6199
      %v6390 = vpack.c.b16 %v6204, %v6202
      %v6391 = vpack.c.b16 %v6205, %v6203
      %v6392 = vpack.c.b16 %v6208, %v6206
      %v6393 = vpack.c.b16 %v6209, %v6207
      %v6394 = vpack.c.b16 %v6212, %v6210
      %v6395 = vpack.c.b16 %v6213, %v6211
      %v6396 = vpack.c.b16 %v6216, %v6214
      %v6397 = vpack.c.b16 %v6217, %v6215
      %v6398 = vpack.c.b16 %v6220, %v6218
      %v6399 = vpack.c.b16 %v6221, %v6219
      %v6400 = vpack.c.b16 %v6224, %v6222
      %v6401 = vpack.c.b16 %v6225, %v6223
      %v6402 = vpack.c.b16 %v6228, %v6226
      %v6403 = vpack.c.b16 %v6229, %v6227
      %v6404 = vpack.c.b16 %v6232, %v6230
      %v6405 = vpack.c.b16 %v6233, %v6231
      %v6406 = vpack.c.b16 %v6236, %v6234
      %v6407 = vpack.c.b16 %v6237, %v6235
      %v6408 = vpack.c.b16 %v6240, %v6238
      %v6409 = vpack.c.b16 %v6241, %v6239
      %v6410 = vpack.c.b16 %v6244, %v6242
      %v6411 = vpack.c.b16 %v6245, %v6243
      %v6412 = vpack.c.b16 %v6248, %v6246
      %v6413 = vpack.c.b16 %v6249, %v6247
      %v6414 = vpack.c.b16 %v6252, %v6250
      %v6415 = vpack.c.b16 %v6253, %v6251
      %v6416 = vpack.c.b16 %v6256, %v6254
      %v6417 = vpack.c.b16 %v6257, %v6255
      %v6418 = vpack.c.b16 %v6260, %v6258
      %v6419 = vpack.c.b16 %v6261, %v6259
      %v6420 = vpack.c.b16 %v6264, %v6262
      %v6421 = vpack.c.b16 %v6265, %v6263
      %v6422 = vpack.c.b16 %v6268, %v6266
      %v6423 = vpack.c.b16 %v6269, %v6267
      %v6424 = vpack.c.b16 %v6272, %v6270
      %v6425 = vpack.c.b16 %v6273, %v6271
      %v6426 = vpack.c.b16 %v6276, %v6274
      %v6427 = vpack.c.b16 %v6277, %v6275
      %v6428 = vpack.c.b16 %v6280, %v6278
      %v6429 = vpack.c.b16 %v6281, %v6279
      %v6430 = vpack.c.b16 %v6284, %v6282
      %v6431 = vpack.c.b16 %v6285, %v6283
      %v6432 = vpack.c.b16 %v6288, %v6286
      %v6433 = vpack.c.b16 %v6289, %v6287
      %6578 = vmatprep.subr.bf16.mxu0 %v6291
      %6579 = vmatpush1.bf16.msra.mxu0 %v6290
      %6580 = vmatprep.subr.bf16.mxu0 %v6293
      %6581 = vmatpush1.bf16.msra.mxu0 %v6292
      %6582 = vmatprep.subr.bf16.mxu0 %v6295
      %6583 = vmatpush1.bf16.msra.mxu0 %v6294
      %6584 = vmatprep.subr.bf16.mxu0 %v6297
      %6585 = vmatpush1.bf16.msra.mxu0 %v6296
      %6586 = vmatprep.subr.bf16.mxu0 %v6299
      %6587 = vmatpush1.bf16.msra.mxu0 %v6298
      %6588 = vmatprep.subr.bf16.mxu0 %v6301
      %6589 = vmatpush1.bf16.msra.mxu0 %v6300
      %6590 = vmatprep.subr.bf16.mxu0 %v6303
      %6591 = vmatpush1.bf16.msra.mxu0 %v6302
      %6592 = vmatprep.subr.bf16.mxu0 %v6305
      %6593 = vmatpush1.bf16.msra.mxu0 %v6304
      %6594 = vmatprep.subr.bf16.mxu0 %v6307
      %6595 = vmatpush1.bf16.msra.mxu0 %v6306
      %6596 = vmatprep.subr.bf16.mxu0 %v6309
      %6597 = vmatpush1.bf16.msra.mxu0 %v6308
      %6598 = vmatprep.subr.bf16.mxu0 %v6311
      %6599 = vmatpush1.bf16.msra.mxu0 %v6310
      %6600 = vmatprep.subr.bf16.mxu0 %v6313
      %6601 = vmatpush1.bf16.msra.mxu0 %v6312
      %6602 = vmatprep.subr.bf16.mxu0 %v6315
      %6603 = vmatpush1.bf16.msra.mxu0 %v6314
      %6604 = vmatprep.subr.bf16.mxu0 %v6317
      %6605 = vmatpush1.bf16.msra.mxu0 %v6316
      %6606 = vmatprep.subr.bf16.mxu0 %v6319
      %6607 = vmatpush1.bf16.msra.mxu0 %v6318
      %6608 = vmatprep.subr.bf16.mxu0 %v6321
      %6609 = vmatpush1.bf16.msra.mxu0 %v6320
      %6610 = vmatprep.mubr.bf16.mxu0 %v5596
      %6611 = vmatmul.mubr.bf16.gmra.mrb[0].mxu0 %v5595
      %v6612 = vpop.f32.mrb[0].mxu0
      %v6613 = vadd.f32 %v5851, %v6612
      %v6614 = vpop.f32.mrb[0].mxu0
      %v6615 = vadd.f32 %v5855, %v6614
      %v6616 = vpop.f32.mrb[0].mxu0
      %v6617 = vadd.f32 %v5851, %v6616
      %v6618 = vpop.f32.mrb[0].mxu0
      %v6619 = vadd.f32 %v5855, %v6618
      %6620 = vmatprep.mubr.bf16.mxu0 %v5605
      %6621 = vmatmul.mubr.bf16.gmra.mrb[0].mxu0 %v5604
      %v6622 = vpop.f32.mrb[0].mxu0
      %v6623 = vadd.f32 %v5851, %v6622
      %v6624 = vpop.f32.mrb[0].mxu0
      %v6625 = vadd.f32 %v5855, %v6624
      %v6626 = vpop.f32.mrb[0].mxu0
      %v6627 = vadd.f32 %v5851, %v6626
      %v6628 = vpop.f32.mrb[0].mxu0
      %v6629 = vadd.f32 %v5855, %v6628
      %6630 = vmatprep.mubr.bf16.mxu0 %v5614
      %6631 = vmatmul.mubr.bf16.gmra.mrb[0].mxu0 %v5613
      %v6632 = vpop.f32.mrb[0].mxu0
      %v6633 = vadd.f32 %v5851, %v6632
      %v6634 = vpop.f32.mrb[0].mxu0
      %v6635 = vadd.f32 %v5855, %v6634
      %v6636 = vpop.f32.mrb[0].mxu0
      %v6637 = vadd.f32 %v5851, %v6636
      %v6638 = vpop.f32.mrb[0].mxu0
      %v6639 = vadd.f32 %v5855, %v6638
      %6640 = vmatprep.mubr.bf16.mxu0 %v5623
      %6641 = vmatmul.mubr.bf16.gmra.mrb[0].mxu0 %v5622
      %v6642 = vpop.f32.mrb[0].mxu0
      %v6643 = vadd.f32 %v5851, %v6642
      %v6644 = vpop.f32.mrb[0].mxu0
      %v6645 = vadd.f32 %v5855, %v6644
      %v6646 = vpop.f32.mrb[0].mxu0
      %v6647 = vadd.f32 %v5851, %v6646
      %v6648 = vpop.f32.mrb[0].mxu0
      %v6649 = vadd.f32 %v5855, %v6648
      %6650 = vmatprep.mubr.bf16.mxu0 %v5632
      %6651 = vmatmul.mubr.bf16.gmra.mrb[0].mxu0 %v5631
      %v6652 = vpop.f32.mrb[0].mxu0
      %v6653 = vadd.f32 %v5851, %v6652
      %v6654 = vpop.f32.mrb[0].mxu0
      %v6655 = vadd.f32 %v5855, %v6654
      %v6656 = vpop.f32.mrb[0].mxu0
      %v6657 = vadd.f32 %v5851, %v6656
      %v6658 = vpop.f32.mrb[0].mxu0
      %v6659 = vadd.f32 %v5855, %v6658
      %6660 = vmatprep.mubr.bf16.mxu0 %v5641
      %6661 = vmatmul.mubr.bf16.gmra.mrb[0].mxu0 %v5640
      %v6662 = vpop.f32.mrb[0].mxu0
      %v6663 = vadd.f32 %v5851, %v6662
      %v6664 = vpop.f32.mrb[0].mxu0
      %v6665 = vadd.f32 %v5855, %v6664
      %v6666 = vpop.f32.mrb[0].mxu0
      %v6667 = vadd.f32 %v5851, %v6666
      %v6668 = vpop.f32.mrb[0].mxu0
      %v6669 = vadd.f32 %v5855, %v6668
      %6670 = vmatprep.mubr.bf16.mxu0 %v5650
      %6671 = vmatmul.mubr.bf16.gmra.mrb[0].mxu0 %v5649
      %v6672 = vpop.f32.mrb[0].mxu0
      %v6673 = vadd.f32 %v5851, %v6672
      %v6674 = vpop.f32.mrb[0].mxu0
      %v6675 = vadd.f32 %v5855, %v6674
      %v6676 = vpop.f32.mrb[0].mxu0
      %v6677 = vadd.f32 %v5851, %v6676
      %v6678 = vpop.f32.mrb[0].mxu0
      %v6679 = vadd.f32 %v5855, %v6678
      %6680 = vmatprep.mubr.bf16.mxu0 %v5659
      %6681 = vmatmul.mubr.bf16.gmra.mrb[0].mxu0 %v5658
      %v6682 = vpop.f32.mrb[0].mxu0
      %v6683 = vadd.f32 %v5851, %v6682
      %v6684 = vpop.f32.mrb[0].mxu0
      %v6685 = vadd.f32 %v5855, %v6684
      %v6686 = vpop.f32.mrb[0].mxu0
      %v6687 = vadd.f32 %v5851, %v6686
      %v6688 = vpop.f32.mrb[0].mxu0
      %v6689 = vadd.f32 %v5855, %v6688
      %6690 = vmatprep.mubr.bf16.mxu0 %v5668
      %6691 = vmatmul.mubr.bf16.gmra.mrb[0].mxu0 %v5667
      %v6692 = vpop.f32.mrb[0].mxu0
      %v6693 = vadd.f32 %v5851, %v6692
      %v6694 = vpop.f32.mrb[0].mxu0
      %v6695 = vadd.f32 %v5855, %v6694
      %v6696 = vpop.f32.mrb[0].mxu0
      %v6697 = vadd.f32 %v5851, %v6696
      %v6698 = vpop.f32.mrb[0].mxu0
      %v6699 = vadd.f32 %v5855, %v6698
      %6700 = vmatprep.mubr.bf16.mxu0 %v5677
      %6701 = vmatmul.mubr.bf16.gmra.mrb[0].mxu0 %v5676
      %v6702 = vpop.f32.mrb[0].mxu0
      %v6703 = vadd.f32 %v5851, %v6702
      %v6704 = vpop.f32.mrb[0].mxu0
      %v6705 = vadd.f32 %v5855, %v6704
      %v6706 = vpop.f32.mrb[0].mxu0
      %v6707 = vadd.f32 %v5851, %v6706
      %v6708 = vpop.f32.mrb[0].mxu0
      %v6709 = vadd.f32 %v5855, %v6708
      %6710 = vmatprep.mubr.bf16.mxu0 %v5686
      %6711 = vmatmul.mubr.bf16.gmra.mrb[0].mxu0 %v5685
      %v6712 = vpop.f32.mrb[0].mxu0
      %v6713 = vadd.f32 %v5851, %v6712
      %v6714 = vpop.f32.mrb[0].mxu0
      %v6715 = vadd.f32 %v5855, %v6714
      %v6716 = vpop.f32.mrb[0].mxu0
      %v6717 = vadd.f32 %v5851, %v6716
      %v6718 = vpop.f32.mrb[0].mxu0
      %v6719 = vadd.f32 %v5855, %v6718
      %6720 = vmatprep.mubr.bf16.mxu0 %v5695
      %6721 = vmatmul.mubr.bf16.gmra.mrb[0].mxu0 %v5694
      %v6722 = vpop.f32.mrb[0].mxu0
      %v6723 = vadd.f32 %v5851, %v6722
      %v6724 = vpop.f32.mrb[0].mxu0
      %v6725 = vadd.f32 %v5855, %v6724
      %v6726 = vpop.f32.mrb[0].mxu0
      %v6727 = vadd.f32 %v5851, %v6726
      %v6728 = vpop.f32.mrb[0].mxu0
      %v6729 = vadd.f32 %v5855, %v6728
      %6730 = vdwg.mxu0
      %6731 = vmatprep.subr.bf16.mxu0 %v6323
      %6732 = vmatpush1.bf16.msra.mxu0 %v6322
      %6733 = vmatprep.subr.bf16.mxu0 %v6325
      %6734 = vmatpush1.bf16.msra.mxu0 %v6324
      %6735 = vmatprep.subr.bf16.mxu0 %v6327
      %6736 = vmatpush1.bf16.msra.mxu0 %v6326
      %6737 = vmatprep.subr.bf16.mxu0 %v6329
      %6738 = vmatpush1.bf16.msra.mxu0 %v6328
      %6739 = vmatprep.subr.bf16.mxu0 %v6331
      %6740 = vmatpush1.bf16.msra.mxu0 %v6330
      %6741 = vmatprep.subr.bf16.mxu0 %v6333
      %6742 = vmatpush1.bf16.msra.mxu0 %v6332
      %6743 = vmatprep.subr.bf16.mxu0 %v6335
      %6744 = vmatpush1.bf16.msra.mxu0 %v6334
      %6745 = vmatprep.subr.bf16.mxu0 %v6337
      %6746 = vmatpush1.bf16.msra.mxu0 %v6336
      %6747 = vmatprep.subr.bf16.mxu0 %v6339
      %6748 = vmatpush1.bf16.msra.mxu0 %v6338
      %6749 = vmatprep.subr.bf16.mxu0 %v6341
      %6750 = vmatpush1.bf16.msra.mxu0 %v6340
      %6751 = vmatprep.subr.bf16.mxu0 %v6343
      %6752 = vmatpush1.bf16.msra.mxu0 %v6342
      %6753 = vmatprep.subr.bf16.mxu0 %v6345
      %6754 = vmatpush1.bf16.msra.mxu0 %v6344
      %6755 = vmatprep.subr.bf16.mxu0 %v6347
      %6756 = vmatpush1.bf16.msra.mxu0 %v6346
      %6757 = vmatprep.subr.bf16.mxu0 %v6349
      %6758 = vmatpush1.bf16.msra.mxu0 %v6348
      %6759 = vmatprep.subr.bf16.mxu0 %v6351
      %6760 = vmatpush1.bf16.msra.mxu0 %v6350
      %6761 = vmatprep.subr.bf16.mxu0 %v6353
      %6762 = vmatpush1.bf16.msra.mxu0 %v6352
      %6763 = vmatprep.mubr.bf16.mxu0 %v5598
      %6764 = vmatmul.mubr.bf16.gmra.mrb[0].mxu0 %v5597
      %v6765 = vpop.f32.mrb[0].mxu0
      %v6766 = vadd.f32 %v6613, %v6765
      %v6767 = vpop.f32.mrb[0].mxu0
      %v6768 = vadd.f32 %v6615, %v6767
      %v6769 = vpop.f32.mrb[0].mxu0
      %v6770 = vadd.f32 %v6617, %v6769
      %v6771 = vpop.f32.mrb[0].mxu0
      %v6772 = vadd.f32 %v6619, %v6771
      %6773 = vmatprep.mubr.bf16.mxu0 %v5607
      %6774 = vmatmul.mubr.bf16.gmra.mrb[0].mxu0 %v5606
      %v6775 = vpop.f32.mrb[0].mxu0
      %v6776 = vadd.f32 %v6623, %v6775
      %v6777 = vpop.f32.mrb[0].mxu0
      %v6778 = vadd.f32 %v6625, %v6777
      %v6779 = vpop.f32.mrb[0].mxu0
      %v6780 = vadd.f32 %v6627, %v6779
      %v6781 = vpop.f32.mrb[0].mxu0
      %v6782 = vadd.f32 %v6629, %v6781
      %6783 = vmatprep.mubr.bf16.mxu0 %v5616
      %6784 = vmatmul.mubr.bf16.gmra.mrb[0].mxu0 %v5615
      %v6785 = vpop.f32.mrb[0].mxu0
      %v6786 = vadd.f32 %v6633, %v6785
      %v6787 = vpop.f32.mrb[0].mxu0
      %v6788 = vadd.f32 %v6635, %v6787
      %v6789 = vpop.f32.mrb[0].mxu0
      %v6790 = vadd.f32 %v6637, %v6789
      %v6791 = vpop.f32.mrb[0].mxu0
      %v6792 = vadd.f32 %v6639, %v6791
      %6793 = vmatprep.mubr.bf16.mxu0 %v5625
      %6794 = vmatmul.mubr.bf16.gmra.mrb[0].mxu0 %v5624
      %v6795 = vpop.f32.mrb[0].mxu0
      %v6796 = vadd.f32 %v6643, %v6795
      %v6797 = vpop.f32.mrb[0].mxu0
      %v6798 = vadd.f32 %v6645, %v6797
      %v6799 = vpop.f32.mrb[0].mxu0
      %v6800 = vadd.f32 %v6647, %v6799
      %v6801 = vpop.f32.mrb[0].mxu0
      %v6802 = vadd.f32 %v6649, %v6801
      %6803 = vmatprep.mubr.bf16.mxu0 %v5634
      %6804 = vmatmul.mubr.bf16.gmra.mrb[0].mxu0 %v5633
      %v6805 = vpop.f32.mrb[0].mxu0
      %v6806 = vadd.f32 %v6653, %v6805
      %v6807 = vpop.f32.mrb[0].mxu0
      %v6808 = vadd.f32 %v6655, %v6807
      %v6809 = vpop.f32.mrb[0].mxu0
      %v6810 = vadd.f32 %v6657, %v6809
      %v6811 = vpop.f32.mrb[0].mxu0
      %v6812 = vadd.f32 %v6659, %v6811
      %6813 = vmatprep.mubr.bf16.mxu0 %v5643
      %6814 = vmatmul.mubr.bf16.gmra.mrb[0].mxu0 %v5642
      %v6815 = vpop.f32.mrb[0].mxu0
      %v6816 = vadd.f32 %v6663, %v6815
      %v6817 = vpop.f32.mrb[0].mxu0
      %v6818 = vadd.f32 %v6665, %v6817
      %v6819 = vpop.f32.mrb[0].mxu0
      %v6820 = vadd.f32 %v6667, %v6819
      %v6821 = vpop.f32.mrb[0].mxu0
      %v6822 = vadd.f32 %v6669, %v6821
      %6823 = vmatprep.mubr.bf16.mxu0 %v5652
      %6824 = vmatmul.mubr.bf16.gmra.mrb[0].mxu0 %v5651
      %v6825 = vpop.f32.mrb[0].mxu0
      %v6826 = vadd.f32 %v6673, %v6825
      %v6827 = vpop.f32.mrb[0].mxu0
      %v6828 = vadd.f32 %v6675, %v6827
      %v6829 = vpop.f32.mrb[0].mxu0
      %v6830 = vadd.f32 %v6677, %v6829
      %v6831 = vpop.f32.mrb[0].mxu0
      %v6832 = vadd.f32 %v6679, %v6831
      %6833 = vmatprep.mubr.bf16.mxu0 %v5661
      %6834 = vmatmul.mubr.bf16.gmra.mrb[0].mxu0 %v5660
      %v6835 = vpop.f32.mrb[0].mxu0
      %v6836 = vadd.f32 %v6683, %v6835
      %v6837 = vpop.f32.mrb[0].mxu0
      %v6838 = vadd.f32 %v6685, %v6837
      %v6839 = vpop.f32.mrb[0].mxu0
      %v6840 = vadd.f32 %v6687, %v6839
      %v6841 = vpop.f32.mrb[0].mxu0
      %v6842 = vadd.f32 %v6689, %v6841
      %6843 = vmatprep.mubr.bf16.mxu0 %v5670
      %6844 = vmatmul.mubr.bf16.gmra.mrb[0].mxu0 %v5669
      %v6845 = vpop.f32.mrb[0].mxu0
      %v6846 = vadd.f32 %v6693, %v6845
      %v6847 = vpop.f32.mrb[0].mxu0
      %v6848 = vadd.f32 %v6695, %v6847
      %v6849 = vpop.f32.mrb[0].mxu0
      %v6850 = vadd.f32 %v6697, %v6849
      %v6851 = vpop.f32.mrb[0].mxu0
      %v6852 = vadd.f32 %v6699, %v6851
      %6853 = vmatprep.mubr.bf16.mxu0 %v5679
      %6854 = vmatmul.mubr.bf16.gmra.mrb[0].mxu0 %v5678
      %v6855 = vpop.f32.mrb[0].mxu0
      %v6856 = vadd.f32 %v6703, %v6855
      %v6857 = vpop.f32.mrb[0].mxu0
      %v6858 = vadd.f32 %v6705, %v6857
      %v6859 = vpop.f32.mrb[0].mxu0
      %v6860 = vadd.f32 %v6707, %v6859
      %v6861 = vpop.f32.mrb[0].mxu0
      %v6862 = vadd.f32 %v6709, %v6861
      %6863 = vmatprep.mubr.bf16.mxu0 %v5688
      %6864 = vmatmul.mubr.bf16.gmra.mrb[0].mxu0 %v5687
      %v6865 = vpop.f32.mrb[0].mxu0
      %v6866 = vadd.f32 %v6713, %v6865
      %v6867 = vpop.f32.mrb[0].mxu0
      %v6868 = vadd.f32 %v6715, %v6867
      %v6869 = vpop.f32.mrb[0].mxu0
      %v6870 = vadd.f32 %v6717, %v6869
      %v6871 = vpop.f32.mrb[0].mxu0
      %v6872 = vadd.f32 %v6719, %v6871
      %6873 = vmatprep.mubr.bf16.mxu0 %v5697
      %6874 = vmatmul.mubr.bf16.gmra.mrb[0].mxu0 %v5696
      %v6875 = vpop.f32.mrb[0].mxu0
      %v6876 = vadd.f32 %v6723, %v6875
      %v6877 = vpop.f32.mrb[0].mxu0
      %v6878 = vadd.f32 %v6725, %v6877
      %v6879 = vpop.f32.mrb[0].mxu0
      %v6880 = vadd.f32 %v6727, %v6879
      %v6881 = vpop.f32.mrb[0].mxu0
      %v6882 = vadd.f32 %v6729, %v6881
      %6883 = vdwg.mxu0
      %6884 = vmatprep.subr.bf16.mxu0 %v6355
      %6885 = vmatpush1.bf16.msra.mxu0 %v6354
      %6886 = vmatprep.subr.bf16.mxu0 %v6357
      %6887 = vmatpush1.bf16.msra.mxu0 %v6356
      %6888 = vmatprep.subr.bf16.mxu0 %v6359
      %6889 = vmatpush1.bf16.msra.mxu0 %v6358
      %6890 = vmatprep.subr.bf16.mxu0 %v6361
      %6891 = vmatpush1.bf16.msra.mxu0 %v6360
      %6892 = vmatprep.subr.bf16.mxu0 %v6363
      %6893 = vmatpush1.bf16.msra.mxu0 %v6362
      %6894 = vmatprep.subr.bf16.mxu0 %v6365
      %6895 = vmatpush1.bf16.msra.mxu0 %v6364
      %6896 = vmatprep.subr.bf16.mxu0 %v6367
      %6897 = vmatpush1.bf16.msra.mxu0 %v6366
      %6898 = vmatprep.subr.bf16.mxu0 %v6369
      %6899 = vmatpush1.bf16.msra.mxu0 %v6368
      %6900 = vmatprep.subr.bf16.mxu0 %v6371
      %6901 = vmatpush1.bf16.msra.mxu0 %v6370
      %6902 = vmatprep.subr.bf16.mxu0 %v6373
      %6903 = vmatpush1.bf16.msra.mxu0 %v6372
      %6904 = vmatprep.subr.bf16.mxu0 %v6375
      %6905 = vmatpush1.bf16.msra.mxu0 %v6374
      %6906 = vmatprep.subr.bf16.mxu0 %v6377
      %6907 = vmatpush1.bf16.msra.mxu0 %v6376
      %6908 = vmatprep.subr.bf16.mxu0 %v6379
      %6909 = vmatpush1.bf16.msra.mxu0 %v6378
      %6910 = vmatprep.subr.bf16.mxu0 %v6381
      %6911 = vmatpush1.bf16.msra.mxu0 %v6380
      %6912 = vmatprep.subr.bf16.mxu0 %v6383
      %6913 = vmatpush1.bf16.msra.mxu0 %v6382
      %6914 = vmatprep.subr.bf16.mxu0 %v6385
      %6915 = vmatpush1.bf16.msra.mxu0 %v6384
      %6916 = vmatprep.mubr.bf16.mxu0 %v5600
      %6917 = vmatmul.mubr.bf16.gmra.mrb[0].mxu0 %v5599
      %v6918 = vpop.f32.mrb[0].mxu0
      %v6919 = vadd.f32 %v6766, %v6918
      %v6920 = vpop.f32.mrb[0].mxu0
      %v6921 = vadd.f32 %v6768, %v6920
      %v6922 = vpop.f32.mrb[0].mxu0
      %v6923 = vadd.f32 %v6770, %v6922
      %v6924 = vpop.f32.mrb[0].mxu0
      %v6925 = vadd.f32 %v6772, %v6924
      %6926 = vmatprep.mubr.bf16.mxu0 %v5609
      %6927 = vmatmul.mubr.bf16.gmra.mrb[0].mxu0 %v5608
      %v6928 = vpop.f32.mrb[0].mxu0
      %v6929 = vadd.f32 %v6776, %v6928
      %v6930 = vpop.f32.mrb[0].mxu0
      %v6931 = vadd.f32 %v6778, %v6930
      %v6932 = vpop.f32.mrb[0].mxu0
      %v6933 = vadd.f32 %v6780, %v6932
      %v6934 = vpop.f32.mrb[0].mxu0
      %v6935 = vadd.f32 %v6782, %v6934
      %6936 = vmatprep.mubr.bf16.mxu0 %v5618
      %6937 = vmatmul.mubr.bf16.gmra.mrb[0].mxu0 %v5617
      %v6938 = vpop.f32.mrb[0].mxu0
      %v6939 = vadd.f32 %v6786, %v6938
      %v6940 = vpop.f32.mrb[0].mxu0
      %v6941 = vadd.f32 %v6788, %v6940
      %v6942 = vpop.f32.mrb[0].mxu0
      %v6943 = vadd.f32 %v6790, %v6942
      %v6944 = vpop.f32.mrb[0].mxu0
      %v6945 = vadd.f32 %v6792, %v6944
      %6946 = vmatprep.mubr.bf16.mxu0 %v5627
      %6947 = vmatmul.mubr.bf16.gmra.mrb[0].mxu0 %v5626
      %v6948 = vpop.f32.mrb[0].mxu0
      %v6949 = vadd.f32 %v6796, %v6948
      %v6950 = vpop.f32.mrb[0].mxu0
      %v6951 = vadd.f32 %v6798, %v6950
      %v6952 = vpop.f32.mrb[0].mxu0
      %v6953 = vadd.f32 %v6800, %v6952
      %v6954 = vpop.f32.mrb[0].mxu0
      %v6955 = vadd.f32 %v6802, %v6954
      %6956 = vmatprep.mubr.bf16.mxu0 %v5636
      %6957 = vmatmul.mubr.bf16.gmra.mrb[0].mxu0 %v5635
      %v6958 = vpop.f32.mrb[0].mxu0
      %v6959 = vadd.f32 %v6806, %v6958
      %v6960 = vpop.f32.mrb[0].mxu0
      %v6961 = vadd.f32 %v6808, %v6960
      %v6962 = vpop.f32.mrb[0].mxu0
      %v6963 = vadd.f32 %v6810, %v6962
      %v6964 = vpop.f32.mrb[0].mxu0
      %v6965 = vadd.f32 %v6812, %v6964
      %6966 = vmatprep.mubr.bf16.mxu0 %v5645
      %6967 = vmatmul.mubr.bf16.gmra.mrb[0].mxu0 %v5644
      %v6968 = vpop.f32.mrb[0].mxu0
      %v6969 = vadd.f32 %v6816, %v6968
      %v6970 = vpop.f32.mrb[0].mxu0
      %v6971 = vadd.f32 %v6818, %v6970
      %v6972 = vpop.f32.mrb[0].mxu0
      %v6973 = vadd.f32 %v6820, %v6972
      %v6974 = vpop.f32.mrb[0].mxu0
      %v6975 = vadd.f32 %v6822, %v6974
      %6976 = vmatprep.mubr.bf16.mxu0 %v5654
      %6977 = vmatmul.mubr.bf16.gmra.mrb[0].mxu0 %v5653
      %v6978 = vpop.f32.mrb[0].mxu0
      %v6979 = vadd.f32 %v6826, %v6978
      %v6980 = vpop.f32.mrb[0].mxu0
      %v6981 = vadd.f32 %v6828, %v6980
      %v6982 = vpop.f32.mrb[0].mxu0
      %v6983 = vadd.f32 %v6830, %v6982
      %v6984 = vpop.f32.mrb[0].mxu0
      %v6985 = vadd.f32 %v6832, %v6984
      %6986 = vmatprep.mubr.bf16.mxu0 %v5663
      %6987 = vmatmul.mubr.bf16.gmra.mrb[0].mxu0 %v5662
      %v6988 = vpop.f32.mrb[0].mxu0
      %v6989 = vadd.f32 %v6836, %v6988
      %v6990 = vpop.f32.mrb[0].mxu0
      %v6991 = vadd.f32 %v6838, %v6990
      %v6992 = vpop.f32.mrb[0].mxu0
      %v6993 = vadd.f32 %v6840, %v6992
      %v6994 = vpop.f32.mrb[0].mxu0
      %v6995 = vadd.f32 %v6842, %v6994
      %6996 = vmatprep.mubr.bf16.mxu0 %v5672
      %6997 = vmatmul.mubr.bf16.gmra.mrb[0].mxu0 %v5671
      %v6998 = vpop.f32.mrb[0].mxu0
      %v6999 = vadd.f32 %v6846, %v6998
      %v7000 = vpop.f32.mrb[0].mxu0
      %v7001 = vadd.f32 %v6848, %v7000
      %v7002 = vpop.f32.mrb[0].mxu0
      %v7003 = vadd.f32 %v6850, %v7002
      %v7004 = vpop.f32.mrb[0].mxu0
      %v7005 = vadd.f32 %v6852, %v7004
      %7006 = vmatprep.mubr.bf16.mxu0 %v5681
      %7007 = vmatmul.mubr.bf16.gmra.mrb[0].mxu0 %v5680
      %v7008 = vpop.f32.mrb[0].mxu0
      %v7009 = vadd.f32 %v6856, %v7008
      %v7010 = vpop.f32.mrb[0].mxu0
      %v7011 = vadd.f32 %v6858, %v7010
      %v7012 = vpop.f32.mrb[0].mxu0
      %v7013 = vadd.f32 %v6860, %v7012
      %v7014 = vpop.f32.mrb[0].mxu0
      %v7015 = vadd.f32 %v6862, %v7014
      %7016 = vmatprep.mubr.bf16.mxu0 %v5690
      %7017 = vmatmul.mubr.bf16.gmra.mrb[0].mxu0 %v5689
      %v7018 = vpop.f32.mrb[0].mxu0
      %v7019 = vadd.f32 %v6866, %v7018
      %v7020 = vpop.f32.mrb[0].mxu0
      %v7021 = vadd.f32 %v6868, %v7020
      %v7022 = vpop.f32.mrb[0].mxu0
      %v7023 = vadd.f32 %v6870, %v7022
      %v7024 = vpop.f32.mrb[0].mxu0
      %v7025 = vadd.f32 %v6872, %v7024
      %7026 = vmatprep.mubr.bf16.mxu0 %v5699
      %7027 = vmatmul.mubr.bf16.gmra.mrb[0].mxu0 %v5698
      %v7028 = vpop.f32.mrb[0].mxu0
      %v7029 = vadd.f32 %v6876, %v7028
      %v7030 = vpop.f32.mrb[0].mxu0
      %v7031 = vadd.f32 %v6878, %v7030
      %v7032 = vpop.f32.mrb[0].mxu0
      %v7033 = vadd.f32 %v6880, %v7032
      %v7034 = vpop.f32.mrb[0].mxu0
      %v7035 = vadd.f32 %v6882, %v7034
      %7036 = vdwg.mxu0
      %7037 = vmatprep.subr.bf16.mxu0 %v6387
      %7038 = vmatpush1.bf16.msra.mxu0 %v6386
      %7039 = vmatprep.subr.bf16.mxu0 %v6389
      %7040 = vmatpush1.bf16.msra.mxu0 %v6388
      %7041 = vmatprep.subr.bf16.mxu0 %v6391
      %7042 = vmatpush1.bf16.msra.mxu0 %v6390
      %7043 = vmatprep.subr.bf16.mxu0 %v6393
      %7044 = vmatpush1.bf16.msra.mxu0 %v6392
      %7045 = vmatprep.subr.bf16.mxu0 %v6395
      %7046 = vmatpush1.bf16.msra.mxu0 %v6394
      %7047 = vmatprep.subr.bf16.mxu0 %v6397
      %7048 = vmatpush1.bf16.msra.mxu0 %v6396
      %7049 = vmatprep.subr.bf16.mxu0 %v6399
      %7050 = vmatpush1.bf16.msra.mxu0 %v6398
      %7051 = vmatprep.subr.bf16.mxu0 %v6401
      %7052 = vmatpush1.bf16.msra.mxu0 %v6400
      %7053 = vmatprep.subr.bf16.mxu0 %v6403
      %7054 = vmatpush1.bf16.msra.mxu0 %v6402
      %7055 = vmatprep.subr.bf16.mxu0 %v6405
      %7056 = vmatpush1.bf16.msra.mxu0 %v6404
      %7057 = vmatprep.subr.bf16.mxu0 %v6407
      %7058 = vmatpush1.bf16.msra.mxu0 %v6406
      %7059 = vmatprep.subr.bf16.mxu0 %v6409
      %7060 = vmatpush1.bf16.msra.mxu0 %v6408
      %7061 = vmatprep.subr.bf16.mxu0 %v6411
      %7062 = vmatpush1.bf16.msra.mxu0 %v6410
      %7063 = vmatprep.subr.bf16.mxu0 %v6413
      %7064 = vmatpush1.bf16.msra.mxu0 %v6412
      %7065 = vmatprep.subr.bf16.mxu0 %v6415
      %7066 = vmatpush1.bf16.msra.mxu0 %v6414
      %7067 = vmatprep.subr.bf16.mxu0 %v6417
      %7068 = vmatpush1.bf16.msra.mxu0 %v6416
      %7069 = vmatprep.mubr.bf16.mxu0 %v5602
      %7070 = vmatmul.mubr.bf16.gmra.mrb[0].mxu0 %v5601
      %v7071 = vpop.f32.mrb[0].mxu0
      %v7072 = vadd.f32 %v6919, %v7071
      %v7073 = vpop.f32.mrb[0].mxu0
      %v7074 = vadd.f32 %v6921, %v7073
      %v7075 = vpop.f32.mrb[0].mxu0
      %v7076 = vadd.f32 %v6923, %v7075
      %v7077 = vpop.f32.mrb[0].mxu0
      %v7078 = vadd.f32 %v6925, %v7077
      %7079 = vmatprep.mubr.bf16.mxu0 %v5611
      %7080 = vmatmul.mubr.bf16.gmra.mrb[0].mxu0 %v5610
      %v7081 = vpop.f32.mrb[0].mxu0
      %v7082 = vadd.f32 %v6929, %v7081
      %v7083 = vpop.f32.mrb[0].mxu0
      %v7084 = vadd.f32 %v6931, %v7083
      %v7085 = vpop.f32.mrb[0].mxu0
      %v7086 = vadd.f32 %v6933, %v7085
      %v7087 = vpop.f32.mrb[0].mxu0
      %v7088 = vadd.f32 %v6935, %v7087
      %7089 = vmatprep.mubr.bf16.mxu0 %v5620
      %7090 = vmatmul.mubr.bf16.gmra.mrb[0].mxu0 %v5619
      %v7091 = vpop.f32.mrb[0].mxu0
      %v7092 = vadd.f32 %v6939, %v7091
      %v7093 = vpop.f32.mrb[0].mxu0
      %v7094 = vadd.f32 %v6941, %v7093
      %v7095 = vpop.f32.mrb[0].mxu0
      %v7096 = vadd.f32 %v6943, %v7095
      %v7097 = vpop.f32.mrb[0].mxu0
      %v7098 = vadd.f32 %v6945, %v7097
      %7099 = vmatprep.mubr.bf16.mxu0 %v5629
      %7100 = vmatmul.mubr.bf16.gmra.mrb[0].mxu0 %v5628
      %v7101 = vpop.f32.mrb[0].mxu0
      %v7102 = vadd.f32 %v6949, %v7101
      %v7103 = vpop.f32.mrb[0].mxu0
      %v7104 = vadd.f32 %v6951, %v7103
      %v7105 = vpop.f32.mrb[0].mxu0
      %v7106 = vadd.f32 %v6953, %v7105
      %v7107 = vpop.f32.mrb[0].mxu0
      %v7108 = vadd.f32 %v6955, %v7107
      %7109 = vmatprep.mubr.bf16.mxu0 %v5638
      %7110 = vmatmul.mubr.bf16.gmra.mrb[0].mxu0 %v5637
      %v7111 = vpop.f32.mrb[0].mxu0
      %v7112 = vadd.f32 %v6959, %v7111
      %v7113 = vpop.f32.mrb[0].mxu0
      %v7114 = vadd.f32 %v6961, %v7113
      %v7115 = vpop.f32.mrb[0].mxu0
      %v7116 = vadd.f32 %v6963, %v7115
      %v7117 = vpop.f32.mrb[0].mxu0
      %v7118 = vadd.f32 %v6965, %v7117
      %7119 = vmatprep.mubr.bf16.mxu0 %v5647
      %7120 = vmatmul.mubr.bf16.gmra.mrb[0].mxu0 %v5646
      %v7121 = vpop.f32.mrb[0].mxu0
      %v7122 = vadd.f32 %v6969, %v7121
      %v7123 = vpop.f32.mrb[0].mxu0
      %v7124 = vadd.f32 %v6971, %v7123
      %v7125 = vpop.f32.mrb[0].mxu0
      %v7126 = vadd.f32 %v6973, %v7125
      %v7127 = vpop.f32.mrb[0].mxu0
      %v7128 = vadd.f32 %v6975, %v7127
      %7129 = vmatprep.mubr.bf16.mxu0 %v5656
      %7130 = vmatmul.mubr.bf16.gmra.mrb[0].mxu0 %v5655
      %v7131 = vpop.f32.mrb[0].mxu0
      %v7132 = vadd.f32 %v6979, %v7131
      %v7133 = vpop.f32.mrb[0].mxu0
      %v7134 = vadd.f32 %v6981, %v7133
      %v7135 = vpop.f32.mrb[0].mxu0
      %v7136 = vadd.f32 %v6983, %v7135
      %v7137 = vpop.f32.mrb[0].mxu0
      %v7138 = vadd.f32 %v6985, %v7137
      %7139 = vmatprep.mubr.bf16.mxu0 %v5665
      %7140 = vmatmul.mubr.bf16.gmra.mrb[0].mxu0 %v5664
      %v7141 = vpop.f32.mrb[0].mxu0
      %v7142 = vadd.f32 %v6989, %v7141
      %v7143 = vpop.f32.mrb[0].mxu0
      %v7144 = vadd.f32 %v6991, %v7143
      %v7145 = vpop.f32.mrb[0].mxu0
      %v7146 = vadd.f32 %v6993, %v7145
      %v7147 = vpop.f32.mrb[0].mxu0
      %v7148 = vadd.f32 %v6995, %v7147
      %7149 = vmatprep.mubr.bf16.mxu0 %v5674
      %7150 = vmatmul.mubr.bf16.gmra.mrb[0].mxu0 %v5673
      %v7151 = vpop.f32.mrb[0].mxu0
      %v7152 = vadd.f32 %v6999, %v7151
      %v7153 = vpop.f32.mrb[0].mxu0
      %v7154 = vadd.f32 %v7001, %v7153
      %v7155 = vpop.f32.mrb[0].mxu0
      %v7156 = vadd.f32 %v7003, %v7155
      %v7157 = vpop.f32.mrb[0].mxu0
      %v7158 = vadd.f32 %v7005, %v7157
      %7159 = vmatprep.mubr.bf16.mxu0 %v5683
      %7160 = vmatmul.mubr.bf16.gmra.mrb[0].mxu0 %v5682
      %v7161 = vpop.f32.mrb[0].mxu0
      %v7162 = vadd.f32 %v7009, %v7161
      %v7163 = vpop.f32.mrb[0].mxu0
      %v7164 = vadd.f32 %v7011, %v7163
      %v7165 = vpop.f32.mrb[0].mxu0
      %v7166 = vadd.f32 %v7013, %v7165
      %v7167 = vpop.f32.mrb[0].mxu0
      %v7168 = vadd.f32 %v7015, %v7167
      %7169 = vmatprep.mubr.bf16.mxu0 %v5692
      %7170 = vmatmul.mubr.bf16.gmra.mrb[0].mxu0 %v5691
      %v7171 = vpop.f32.mrb[0].mxu0
      %v7172 = vadd.f32 %v7019, %v7171
      %v7173 = vpop.f32.mrb[0].mxu0
      %v7174 = vadd.f32 %v7021, %v7173
      %v7175 = vpop.f32.mrb[0].mxu0
      %v7176 = vadd.f32 %v7023, %v7175
      %v7177 = vpop.f32.mrb[0].mxu0
      %v7178 = vadd.f32 %v7025, %v7177
      %7179 = vmatprep.mubr.bf16.mxu0 %v5701
      %7180 = vmatmul.mubr.bf16.gmra.mrb[0].mxu0 %v5700
      %v7181 = vpop.f32.mrb[0].mxu0
      %v7182 = vadd.f32 %v7029, %v7181
      %v7183 = vpop.f32.mrb[0].mxu0
      %v7184 = vadd.f32 %v7031, %v7183
      %v7185 = vpop.f32.mrb[0].mxu0
      %v7186 = vadd.f32 %v7033, %v7185
      %v7187 = vpop.f32.mrb[0].mxu0
      %v7188 = vadd.f32 %v7035, %v7187
      %7189 = vdwg.mxu0
      %7190 = vmatprep.subr.bf16.mxu0 %v6419
      %7191 = vmatpush1.bf16.msra.mxu0 %v6418
      %7192 = vmatprep.subr.bf16.mxu0 %v6421
      %7193 = vmatpush1.bf16.msra.mxu0 %v6420
      %7194 = vmatprep.subr.bf16.mxu0 %v6423
      %7195 = vmatpush1.bf16.msra.mxu0 %v6422
      %7196 = vmatprep.subr.bf16.mxu0 %v6425
      %7197 = vmatpush1.bf16.msra.mxu0 %v6424
      %7198 = vmatprep.subr.bf16.mxu0 %v6427
      %7199 = vmatpush1.bf16.msra.mxu0 %v6426
      %7200 = vmatprep.subr.bf16.mxu0 %v6429
      %7201 = vmatpush1.bf16.msra.mxu0 %v6428
      %7202 = vmatprep.subr.bf16.mxu0 %v6431
      %7203 = vmatpush1.bf16.msra.mxu0 %v6430
      %7204 = vmatprep.subr.bf16.mxu0 %v6433
      %7205 = vmatpush1.bf16.msra.mxu0 %v6432
      %7206 = vmatprep.subr.bf16.mxu0 0
      %7207 = vmatpush1.bf16.msra.mxu0 0
      %7208 = vmatprep.subr.bf16.mxu0 0
      %7209 = vmatpush1.bf16.msra.mxu0 0
      %7210 = vmatprep.subr.bf16.mxu0 0
      %7211 = vmatpush1.bf16.msra.mxu0 0
      %7212 = vmatprep.subr.bf16.mxu0 0
      %7213 = vmatpush1.bf16.msra.mxu0 0
      %7214 = vmatprep.subr.bf16.mxu0 0
      %7215 = vmatpush1.bf16.msra.mxu0 0
      %7216 = vmatprep.subr.bf16.mxu0 0
      %7217 = vmatpush1.bf16.msra.mxu0 0
      %7218 = vmatprep.subr.bf16.mxu0 0
      %7219 = vmatpush1.bf16.msra.mxu0 0
      %7220 = vmatprep.subr.bf16.mxu0 0
      %7221 = vmatpush1.bf16.msra.mxu0 0
      %7222 = vmatprep.mubr.bf16.mxu0 0
      %7223 = vmatmul.mubr.bf16.gmra.mrb[0].mxu0 %v5603
      %v7224 = vpop.f32.mrb[0].mxu0
      %v7225 = vadd.f32 %v7072, %v7224
      %v7226 = vpop.f32.mrb[0].mxu0
      %v7227 = vadd.f32 %v7074, %v7226
      %v7228 = vpop.f32.mrb[0].mxu0
      %v7229 = vadd.f32 %v7076, %v7228
      %v7230 = vpop.f32.mrb[0].mxu0
      %v7231 = vadd.f32 %v7078, %v7230
      %7232 = vmatprep.mubr.bf16.mxu0 0
      %7233 = vmatmul.mubr.bf16.gmra.mrb[0].mxu0 %v5612
      %v7234 = vpop.f32.mrb[0].mxu0
      %v7235 = vadd.f32 %v7082, %v7234
      %v7236 = vpop.f32.mrb[0].mxu0
      %v7237 = vadd.f32 %v7084, %v7236
      %v7238 = vpop.f32.mrb[0].mxu0
      %v7239 = vadd.f32 %v7086, %v7238
      %v7240 = vpop.f32.mrb[0].mxu0
      %v7241 = vadd.f32 %v7088, %v7240
      %7242 = vmatprep.mubr.bf16.mxu0 0
      %7243 = vmatmul.mubr.bf16.gmra.mrb[0].mxu0 %v5621
      %v7244 = vpop.f32.mrb[0].mxu0
      %v7245 = vadd.f32 %v7092, %v7244
      %v7246 = vpop.f32.mrb[0].mxu0
      %v7247 = vadd.f32 %v7094, %v7246
      %v7248 = vpop.f32.mrb[0].mxu0
      %v7249 = vadd.f32 %v7096, %v7248
      %v7250 = vpop.f32.mrb[0].mxu0
      %v7251 = vadd.f32 %v7098, %v7250
      %7252 = vmatprep.mubr.bf16.mxu0 0
      %7253 = vmatmul.mubr.bf16.gmra.mrb[0].mxu0 %v5630
      %v7254 = vpop.f32.mrb[0].mxu0
      %v7255 = vadd.f32 %v7102, %v7254
      %v7256 = vpop.f32.mrb[0].mxu0
      %v7257 = vadd.f32 %v7104, %v7256
      %v7258 = vpop.f32.mrb[0].mxu0
      %v7259 = vadd.f32 %v7106, %v7258
      %v7260 = vpop.f32.mrb[0].mxu0
      %v7261 = vadd.f32 %v7108, %v7260
      %7262 = vmatprep.mubr.bf16.mxu0 0
      %7263 = vmatmul.mubr.bf16.gmra.mrb[0].mxu0 %v5639
      %v7264 = vpop.f32.mrb[0].mxu0
      %v7265 = vadd.f32 %v7112, %v7264
      %v7266 = vpop.f32.mrb[0].mxu0
      %v7267 = vadd.f32 %v7114, %v7266
      %v7268 = vpop.f32.mrb[0].mxu0
      %v7269 = vadd.f32 %v7116, %v7268
      %v7270 = vpop.f32.mrb[0].mxu0
      %v7271 = vadd.f32 %v7118, %v7270
      %7272 = vmatprep.mubr.bf16.mxu0 0
      %7273 = vmatmul.mubr.bf16.gmra.mrb[0].mxu0 %v5648
      %v7274 = vpop.f32.mrb[0].mxu0
      %v7275 = vadd.f32 %v7122, %v7274
      %v7276 = vpop.f32.mrb[0].mxu0
      %v7277 = vadd.f32 %v7124, %v7276
      %v7278 = vpop.f32.mrb[0].mxu0
      %v7279 = vadd.f32 %v7126, %v7278
      %v7280 = vpop.f32.mrb[0].mxu0
      %v7281 = vadd.f32 %v7128, %v7280
      %7282 = vmatprep.mubr.bf16.mxu0 0
      %7283 = vmatmul.mubr.bf16.gmra.mrb[0].mxu0 %v5657
      %v7284 = vpop.f32.mrb[0].mxu0
      %v7285 = vadd.f32 %v7132, %v7284
      %v7286 = vpop.f32.mrb[0].mxu0
      %v7287 = vadd.f32 %v7134, %v7286
      %v7288 = vpop.f32.mrb[0].mxu0
      %v7289 = vadd.f32 %v7136, %v7288
      %v7290 = vpop.f32.mrb[0].mxu0
      %v7291 = vadd.f32 %v7138, %v7290
      %7292 = vmatprep.mubr.bf16.mxu0 0
      %7293 = vmatmul.mubr.bf16.gmra.mrb[0].mxu0 %v5666
      %v7294 = vpop.f32.mrb[0].mxu0
      %v7295 = vadd.f32 %v7142, %v7294
      %v7296 = vpop.f32.mrb[0].mxu0
      %v7297 = vadd.f32 %v7144, %v7296
      %v7298 = vpop.f32.mrb[0].mxu0
      %v7299 = vadd.f32 %v7146, %v7298
      %v7300 = vpop.f32.mrb[0].mxu0
      %v7301 = vadd.f32 %v7148, %v7300
      %7302 = vmatprep.mubr.bf16.mxu0 0
      %7303 = vmatmul.mubr.bf16.gmra.mrb[0].mxu0 %v5675
      %v7304 = vpop.f32.mrb[0].mxu0
      %v7305 = vadd.f32 %v7152, %v7304
      %v7306 = vpop.f32.mrb[0].mxu0
      %v7307 = vadd.f32 %v7154, %v7306
      %v7308 = vpop.f32.mrb[0].mxu0
      %v7309 = vadd.f32 %v7156, %v7308
      %v7310 = vpop.f32.mrb[0].mxu0
      %v7311 = vadd.f32 %v7158, %v7310
      %7312 = vmatprep.mubr.bf16.mxu0 0
      %7313 = vmatmul.mubr.bf16.gmra.mrb[0].mxu0 %v5684
      %v7314 = vpop.f32.mrb[0].mxu0
      %v7315 = vadd.f32 %v7162, %v7314
      %v7316 = vpop.f32.mrb[0].mxu0
      %v7317 = vadd.f32 %v7164, %v7316
      %v7318 = vpop.f32.mrb[0].mxu0
      %v7319 = vadd.f32 %v7166, %v7318
      %v7320 = vpop.f32.mrb[0].mxu0
      %v7321 = vadd.f32 %v7168, %v7320
      %7322 = vmatprep.mubr.bf16.mxu0 0
      %7323 = vmatmul.mubr.bf16.gmra.mrb[0].mxu0 %v5693
      %v7324 = vpop.f32.mrb[0].mxu0
      %v7325 = vadd.f32 %v7172, %v7324
      %v7326 = vpop.f32.mrb[0].mxu0
      %v7327 = vadd.f32 %v7174, %v7326
      %v7328 = vpop.f32.mrb[0].mxu0
      %v7329 = vadd.f32 %v7176, %v7328
      %v7330 = vpop.f32.mrb[0].mxu0
      %v7331 = vadd.f32 %v7178, %v7330
      %7332 = vmatprep.mubr.bf16.mxu0 0
      %7333 = vmatmul.mubr.bf16.gmra.mrb[0].mxu0 %v5702
      %v7334 = vpop.f32.mrb[0].mxu0
      %v7335 = vadd.f32 %v7182, %v7334
      %v7336 = vpop.f32.mrb[0].mxu0
      %v7337 = vadd.f32 %v7184, %v7336
      %v7338 = vpop.f32.mrb[0].mxu0
      %v7339 = vadd.f32 %v7186, %v7338
      %v7340 = vpop.f32.mrb[0].mxu0
      %v7341 = vadd.f32 %v7188, %v7340
      %7342 = vdwg.mxu0
      %v7343 = vmax.f32 %v7225, 0.0
      %v7344 = vmax.f32 %v7227, 0.0
      %v7345 = vmax.f32 %v7229, 0.0
      %v7346 = vmax.f32 %v7231, 0.0
      %v7347 = vmax.f32 %v7235, 0.0
      %v7348 = vmax.f32 %v7237, 0.0
      %v7349 = vmax.f32 %v7239, 0.0
      %v7350 = vmax.f32 %v7241, 0.0
      %v7351 = vmax.f32 %v7245, 0.0
      %v7352 = vmax.f32 %v7247, 0.0
      %v7353 = vmax.f32 %v7249, 0.0
      %v7354 = vmax.f32 %v7251, 0.0
      %v7355 = vmax.f32 %v7255, 0.0
      %v7356 = vmax.f32 %v7257, 0.0
      %v7357 = vmax.f32 %v7259, 0.0
      %v7358 = vmax.f32 %v7261, 0.0
      %v7359 = vmax.f32 %v7265, 0.0
      %v7360 = vmax.f32 %v7267, 0.0
      %v7361 = vmax.f32 %v7269, 0.0
      %v7362 = vmax.f32 %v7271, 0.0
      %v7363 = vmax.f32 %v7275, 0.0
      %v7364 = vmax.f32 %v7277, 0.0
      %v7365 = vmax.f32 %v7279, 0.0
      %v7366 = vmax.f32 %v7281, 0.0
      %v7367 = vmax.f32 %v7285, 0.0
      %v7368 = vmax.f32 %v7287, 0.0
      %v7369 = vmax.f32 %v7289, 0.0
      %v7370 = vmax.f32 %v7291, 0.0
      %v7371 = vmax.f32 %v7295, 0.0
      %v7372 = vmax.f32 %v7297, 0.0
      %v7373 = vmax.f32 %v7299, 0.0
      %v7374 = vmax.f32 %v7301, 0.0
      %v7375 = vmax.f32 %v7305, 0.0
      %v7376 = vmax.f32 %v7307, 0.0
      %v7377 = vmax.f32 %v7309, 0.0
      %v7378 = vmax.f32 %v7311, 0.0
      %v7379 = vmax.f32 %v7315, 0.0
      %v7380 = vmax.f32 %v7317, 0.0
      %v7381 = vmax.f32 %v7319, 0.0
      %v7382 = vmax.f32 %v7321, 0.0
      %v7383 = vmax.f32 %v7325, 0.0
      %v7384 = vmax.f32 %v7327, 0.0
      %v7385 = vmax.f32 %v7329, 0.0
      %v7386 = vmax.f32 %v7331, 0.0
      %v7387 = vmax.f32 %v7335, 0.0
      %v7388 = vmax.f32 %v7337, 0.0
      %v7389 = vmax.f32 %v7339, 0.0
      %v7390 = vmax.f32 %v7341, 0.0
      %v7391 = vld [vmem:[%s6] sm:$0xff]
      %v7392 = vld [vmem:[%s6 + $0x8] sm:$0xff]
      %v7393 = vld [vmem:[%s6 + $0x10] sm:$0xff]
      %v7394 = vld [vmem:[%s6 + $0x18] sm:$0xff]
      %v7395 = vld [vmem:[%s6 + $0x20] sm:$0xff]
      %v7396 = vld [vmem:[%s6 + $0x28] sm:$0xff]
      %v7397 = vld [vmem:[%s6 + $0x30] sm:$0xff]
      %v7398 = vld [vmem:[%s6 + $0x38] sm:$0xff]
      %v7399 = vld [vmem:[%s6 + $0x40] sm:$0xff]
      %v7400 = vld [vmem:[%s6 + $0x48] sm:$0xff]
      %v7401 = vld [vmem:[%s6 + $0x50] sm:$0xff]
      %v7402 = vld [vmem:[%s6 + $0x58] sm:$0xff]
      %v7403 = vld [vmem:[%s6 + $0x60] sm:$0xff]
      %v7404 = vld [vmem:[%s6 + $0x68] sm:$0xff]
      %v7405 = vld [vmem:[%s6 + $0x70] sm:$0xff]
      %v7406 = vld [vmem:[%s6 + $0x78] sm:$0xff]
      %v7407 = vld [vmem:[%s6 + $0x80] sm:$0xff]
      %v7408 = vld [vmem:[%s6 + $0x88] sm:$0xff]
      %v7409 = vld [vmem:[%s6 + $0x90] sm:$0xff]
      %v7410 = vld [vmem:[%s6 + $0x98] sm:$0xff]
      %v7411 = vld [vmem:[%s6 + $0xa0] sm:$0xff]
      %v7412 = vld [vmem:[%s6 + $0xa8] sm:$0xff]
      %v7413 = vld [vmem:[%s6 + $0xb0] sm:$0xff]
      %v7414 = vld [vmem:[%s6 + $0xb8] sm:$0xff]
      %v7415 = vld [vmem:[%s6 + $0xc0] sm:$0xff]
      %v7416 = vld [vmem:[%s6 + $0xc8] sm:$0xff]
      %v7417 = vld [vmem:[%s6 + $0xd0] sm:$0xff]
      %v7418 = vld [vmem:[%s6 + $0xd8] sm:$0xff]
      %v7419 = vld [vmem:[%s6 + $0xe0] sm:$0xff]
      %v7420 = vld [vmem:[%s6 + $0xe8] sm:$0xff]
      %v7421 = vld [vmem:[%s6 + $0xf0] sm:$0xff]
      %v7422 = vld [vmem:[%s6 + $0xf8] sm:$0xff]
      %v7423 = vld [vmem:[%s10 + $0x1] ss:$0 sm:$0xff]
      %v7424 = vld [vmem:[%s7] sm:$0xff]
      %v7425 = vld [vmem:[%s7 + $0x8] sm:$0xff]
      %v7426 = vld [vmem:[%s7 + $0x10] sm:$0xff]
      %v7427 = vld [vmem:[%s7 + $0x18] sm:$0xff]
      %v7428 = vld [vmem:[%s7 + $0x20] sm:$0xff]
      %v7429 = vld [vmem:[%s7 + $0x28] sm:$0xff]
      %v7430 = vld [vmem:[%s7 + $0x30] sm:$0xff]
      %v7431 = vld [vmem:[%s7 + $0x38] sm:$0xff]
      %v7432 = vld [vmem:[%s7 + $0x40] sm:$0xff]
      %v7433 = vld [vmem:[%s7 + $0x48] sm:$0xff]
      %v7434 = vld [vmem:[%s7 + $0x50] sm:$0xff]
      %v7435 = vld [vmem:[%s7 + $0x58] sm:$0xff]
      %v7436 = vld [vmem:[%s7 + $0x60] sm:$0xff]
      %v7437 = vld [vmem:[%s7 + $0x68] sm:$0xff]
      %v7438 = vld [vmem:[%s7 + $0x70] sm:$0xff]
      %v7439 = vld [vmem:[%s7 + $0x78] sm:$0xff]
      %s7440 = scalar_lea.vmem %s10, 2
      %v7441 = vld [vmem:[%s7440] ss:$8 sm:$0x3]
      %v7442 = vadd.f32 %v7343, %v7345
      %v7443 = vadd.f32 %v7442, %v7347
      %v7444 = vadd.f32 %v7443, %v7349
      %v7445 = vadd.f32 %v7444, %v7351
      %v7446 = vadd.f32 %v7445, %v7353
      %v7447 = vadd.f32 %v7446, %v7355
      %v7448 = vadd.f32 %v7447, %v7357
      %v7449 = vrot.slane %v7448, 4
      %v7450 = vadd.f32 %v7448, %v7449
      %v7451 = vrot.slane %v7450, 2
      %v7452 = vadd.f32 %v7450, %v7451
      %v7453 = vrot.slane %v7452, 1
      %v7454 = vadd.f32 %v7452, %v7453
      %v7455 = vadd.f32 %v7344, %v7346
      %v7456 = vadd.f32 %v7455, %v7348
      %v7457 = vadd.f32 %v7456, %v7350
      %v7458 = vadd.f32 %v7457, %v7352
      %v7459 = vadd.f32 %v7458, %v7354
      %v7460 = vadd.f32 %v7459, %v7356
      %v7461 = vadd.f32 %v7460, %v7358
      %v7462 = vrot.slane %v7461, 4
      %v7463 = vadd.f32 %v7461, %v7462
      %v7464 = vrot.slane %v7463, 2
      %v7465 = vadd.f32 %v7463, %v7464
      %v7466 = vrot.slane %v7465, 1
      %v7467 = vadd.f32 %v7465, %v7466
      %v7468 = vadd.f32 %v7359, %v7361
      %v7469 = vadd.f32 %v7468, %v7363
      %v7470 = vadd.f32 %v7469, %v7365
      %v7471 = vadd.f32 %v7470, %v7367
      %v7472 = vadd.f32 %v7471, %v7369
      %v7473 = vadd.f32 %v7472, %v7371
      %v7474 = vadd.f32 %v7473, %v7373
      %v7475 = vrot.slane %v7474, 4
      %v7476 = vadd.f32 %v7474, %v7475
      %v7477 = vrot.slane %v7476, 2
      %v7478 = vadd.f32 %v7476, %v7477
      %v7479 = vrot.slane %v7478, 1
      %v7480 = vadd.f32 %v7478, %v7479
      %v7481 = vadd.f32 %v7360, %v7362
      %v7482 = vadd.f32 %v7481, %v7364
      %v7483 = vadd.f32 %v7482, %v7366
      %v7484 = vadd.f32 %v7483, %v7368
      %v7485 = vadd.f32 %v7484, %v7370
      %v7486 = vadd.f32 %v7485, %v7372
      %v7487 = vadd.f32 %v7486, %v7374
      %v7488 = vrot.slane %v7487, 4
      %v7489 = vadd.f32 %v7487, %v7488
      %v7490 = vrot.slane %v7489, 2
      %v7491 = vadd.f32 %v7489, %v7490
      %v7492 = vrot.slane %v7491, 1
      %v7493 = vadd.f32 %v7491, %v7492
      %v7494 = vadd.f32 %v7375, %v7377
      %v7495 = vadd.f32 %v7494, %v7379
      %v7496 = vadd.f32 %v7495, %v7381
      %v7497 = vadd.f32 %v7496, %v7383
      %v7498 = vadd.f32 %v7497, %v7385
      %v7499 = vadd.f32 %v7498, %v7387
      %v7500 = vadd.f32 %v7499, %v7389
      %v7501 = vrot.slane %v7500, 4
      %v7502 = vadd.f32 %v7500, %v7501
      %v7503 = vrot.slane %v7502, 2
      %v7504 = vadd.f32 %v7502, %v7503
      %v7505 = vrot.slane %v7504, 1
      %v7506 = vadd.f32 %v7504, %v7505
      %v7507 = vadd.f32 %v7376, %v7378
      %v7508 = vadd.f32 %v7507, %v7380
      %v7509 = vadd.f32 %v7508, %v7382
      %v7510 = vadd.f32 %v7509, %v7384
      %v7511 = vadd.f32 %v7510, %v7386
      %v7512 = vadd.f32 %v7511, %v7388
      %v7513 = vadd.f32 %v7512, %v7390
      %v7514 = vrot.slane %v7513, 4
      %v7515 = vadd.f32 %v7513, %v7514
      %v7516 = vrot.slane %v7515, 2
      %v7517 = vadd.f32 %v7515, %v7516
      %v7518 = vrot.slane %v7517, 1
      %v7519 = vadd.f32 %v7517, %v7518
      %v7520 = vmul.f32 %v7454, %v790
      %v7521 = vmul.f32 %v7467, %v790
      %v7522 = vmul.f32 %v7480, %v790
      %v7523 = vmul.f32 %v7493, %v790
      %v7524 = vmul.f32 %v7506, %v790
      %v7525 = vmul.f32 %v7519, %v790
      %v7526 = vmax.f32 %v7343, %v7345
      %v7527 = vmax.f32 %v7526, %v7347
      %v7528 = vmax.f32 %v7527, %v7349
      %v7529 = vmax.f32 %v7528, %v7351
      %v7530 = vmax.f32 %v7529, %v7353
      %v7531 = vmax.f32 %v7530, %v7355
      %v7532 = vmax.f32 %v7531, %v7357
      %v7533 = vrot.slane %v7532, 4
      %v7534 = vmax.f32 %v7532, %v7533
      %v7535 = vrot.slane %v7534, 2
      %v7536 = vmax.f32 %v7534, %v7535
      %v7537 = vrot.slane %v7536, 1
      %v7538 = vmax.f32 %v7536, %v7537
      %v7539 = vmax.f32 %v7344, %v7346
      %v7540 = vmax.f32 %v7539, %v7348
      %v7541 = vmax.f32 %v7540, %v7350
      %v7542 = vmax.f32 %v7541, %v7352
      %v7543 = vmax.f32 %v7542, %v7354
      %v7544 = vmax.f32 %v7543, %v7356
      %v7545 = vmax.f32 %v7544, %v7358
      %v7546 = vrot.slane %v7545, 4
      %v7547 = vmax.f32 %v7545, %v7546
      %v7548 = vrot.slane %v7547, 2
      %v7549 = vmax.f32 %v7547, %v7548
      %v7550 = vrot.slane %v7549, 1
      %v7551 = vmax.f32 %v7549, %v7550
      %v7552 = vmax.f32 %v7359, %v7361
      %v7553 = vmax.f32 %v7552, %v7363
      %v7554 = vmax.f32 %v7553, %v7365
      %v7555 = vmax.f32 %v7554, %v7367
      %v7556 = vmax.f32 %v7555, %v7369
      %v7557 = vmax.f32 %v7556, %v7371
      %v7558 = vmax.f32 %v7557, %v7373
      %v7559 = vrot.slane %v7558, 4
      %v7560 = vmax.f32 %v7558, %v7559
      %v7561 = vrot.slane %v7560, 2
      %v7562 = vmax.f32 %v7560, %v7561
      %v7563 = vrot.slane %v7562, 1
      %v7564 = vmax.f32 %v7562, %v7563
      %v7565 = vmax.f32 %v7360, %v7362
      %v7566 = vmax.f32 %v7565, %v7364
      %v7567 = vmax.f32 %v7566, %v7366
      %v7568 = vmax.f32 %v7567, %v7368
      %v7569 = vmax.f32 %v7568, %v7370
      %v7570 = vmax.f32 %v7569, %v7372
      %v7571 = vmax.f32 %v7570, %v7374
      %v7572 = vrot.slane %v7571, 4
      %v7573 = vmax.f32 %v7571, %v7572
      %v7574 = vrot.slane %v7573, 2
      %v7575 = vmax.f32 %v7573, %v7574
      %v7576 = vrot.slane %v7575, 1
      %v7577 = vmax.f32 %v7575, %v7576
      %v7578 = vmax.f32 %v7375, %v7377
      %v7579 = vmax.f32 %v7578, %v7379
      %v7580 = vmax.f32 %v7579, %v7381
      %v7581 = vmax.f32 %v7580, %v7383
      %v7582 = vmax.f32 %v7581, %v7385
      %v7583 = vmax.f32 %v7582, %v7387
      %v7584 = vmax.f32 %v7583, %v7389
      %v7585 = vrot.slane %v7584, 4
      %v7586 = vmax.f32 %v7584, %v7585
      %v7587 = vrot.slane %v7586, 2
      %v7588 = vmax.f32 %v7586, %v7587
      %v7589 = vrot.slane %v7588, 1
      %v7590 = vmax.f32 %v7588, %v7589
      %v7591 = vmax.f32 %v7376, %v7378
      %v7592 = vmax.f32 %v7591, %v7380
      %v7593 = vmax.f32 %v7592, %v7382
      %v7594 = vmax.f32 %v7593, %v7384
      %v7595 = vmax.f32 %v7594, %v7386
      %v7596 = vmax.f32 %v7595, %v7388
      %v7597 = vmax.f32 %v7596, %v7390
      %v7598 = vrot.slane %v7597, 4
      %v7599 = vmax.f32 %v7597, %v7598
      %v7600 = vrot.slane %v7599, 2
      %v7601 = vmax.f32 %v7599, %v7600
      %v7602 = vrot.slane %v7601, 1
      %v7603 = vmax.f32 %v7601, %v7602
      %v7610 = vsel %vm860, %v7522, %v7520
      %v7611 = vsel %vm862, %v7524, %v7610
      %v7612 = vsel %vm860, %v7523, %v7521
      %v7613 = vsel %vm862, %v7525, %v7612
      %v7622 = vsel %vm868, %v7564, %v7538
      %v7623 = vsel %vm870, %v7590, %v7622
      %v7624 = vsel %vm868, %v7577, %v7551
      %v7625 = vsel %vm870, %v7603, %v7624
      %v7628 = vsel %vm873, %v7611, %v7623
      %v7629 = vsel %vm873, %v7613, %v7625
      %7630 = vmatprep.subr.mxu0 0.0
      %7631 = vmatpush1.msra.mxu0 %v7391
      %7632 = vmatprep.subr.mxu0 0.0
      %7633 = vmatpush1.msra.mxu0 %v7392
      %7634 = vmatprep.subr.mxu0 0.0
      %7635 = vmatpush1.msra.mxu0 %v7393
      %7636 = vmatprep.subr.mxu0 0.0
      %7637 = vmatpush1.msra.mxu0 %v7394
      %7638 = vmatprep.subr.mxu0 0.0
      %7639 = vmatpush1.msra.mxu0 %v7395
      %7640 = vmatprep.subr.mxu0 0.0
      %7641 = vmatpush1.msra.mxu0 %v7396
      %7642 = vmatprep.subr.mxu0 0.0
      %7643 = vmatpush1.msra.mxu0 %v7397
      %7644 = vmatprep.subr.mxu0 0.0
      %7645 = vmatpush1.msra.mxu0 %v7398
      %7646 = vmatprep.subr.mxu0 0.0
      %7647 = vmatpush1.msra.mxu0 %v7399
      %7648 = vmatprep.subr.mxu0 0.0
      %7649 = vmatpush1.msra.mxu0 %v7400
      %7650 = vmatprep.subr.mxu0 0.0
      %7651 = vmatpush1.msra.mxu0 %v7401
      %7652 = vmatprep.subr.mxu0 0.0
      %7653 = vmatpush1.msra.mxu0 %v7402
      %7654 = vmatprep.subr.mxu0 0.0
      %7655 = vmatpush1.msra.mxu0 %v7403
      %7656 = vmatprep.subr.mxu0 0.0
      %7657 = vmatpush1.msra.mxu0 %v7404
      %7658 = vmatprep.subr.mxu0 0.0
      %7659 = vmatpush1.msra.mxu0 %v7405
      %7660 = vmatprep.subr.mxu0 0.0
      %7661 = vmatpush1.msra.mxu0 %v7406
      %7662 = vmatprep.subr.mxu0 0.0
      %7663 = vmatpush1.msra.mxu0 %v7407
      %7664 = vmatprep.subr.mxu0 0.0
      %7665 = vmatpush1.msra.mxu0 %v7408
      %7666 = vmatprep.subr.mxu0 0.0
      %7667 = vmatpush1.msra.mxu0 %v7409
      %7668 = vmatprep.subr.mxu0 0.0
      %7669 = vmatpush1.msra.mxu0 %v7410
      %7670 = vmatprep.subr.mxu0 0.0
      %7671 = vmatpush1.msra.mxu0 %v7411
      %7672 = vmatprep.subr.mxu0 0.0
      %7673 = vmatpush1.msra.mxu0 %v7412
      %7674 = vmatprep.subr.mxu0 0.0
      %7675 = vmatpush1.msra.mxu0 %v7413
      %7676 = vmatprep.subr.mxu0 0.0
      %7677 = vmatpush1.msra.mxu0 %v7414
      %7678 = vmatprep.subr.mxu0 0.0
      %7679 = vmatpush1.msra.mxu0 %v7415
      %7680 = vmatprep.subr.mxu0 0.0
      %7681 = vmatpush1.msra.mxu0 %v7416
      %7682 = vmatprep.subr.mxu0 0.0
      %7683 = vmatpush1.msra.mxu0 %v7417
      %7684 = vmatprep.subr.mxu0 0.0
      %7685 = vmatpush1.msra.mxu0 %v7418
      %7686 = vmatprep.subr.mxu0 0.0
      %7687 = vmatpush1.msra.mxu0 %v7419
      %7688 = vmatprep.subr.mxu0 0.0
      %7689 = vmatpush1.msra.mxu0 %v7420
      %7690 = vmatprep.subr.mxu0 0.0
      %7691 = vmatpush1.msra.mxu0 %v7421
      %7692 = vmatprep.subr.mxu0 0.0
      %7693 = vmatpush1.msra.mxu0 %v7422
      %7694 = vmatprep.mubr.f32.mxu0 %v7629
      %7695 = vmatmul.mubr.f32.gmra.mrb[0].mxu0 %v7628
      %v7696 = vpop.f32.mrb[0].mxu0
      %v7697 = vadd.f32 %v7423, %v7696
      %v7698 = vpop.f32.mrb[0].mxu0
      %7699 = vdwg.mxu0
      %v7700 = vmax.f32 %v7697, 0.0
      %v7702 = vlaneseq
      %v7703 = vshrl.u32 %v7702, 7
      %v7704 = vsub.s32 0, %v7703
      %v7705 = vrot.slane %v7441, %v7704
      %v7706 = vlaneseq
      %v7707 = vshrl.u32 %v7706, 7
      %v7708 = vsub.s32 1, %v7707
      %v7709 = vrot.slane %v7441, %v7708
      %v7713 = vsel %vm726, %v7700, 0
      %7715 = vmatprep.subr.mxu0 %v7425
      %7716 = vmatpush1.msra.mxu0 %v7424
      %7717 = vmatprep.subr.mxu0 %v7427
      %7718 = vmatpush1.msra.mxu0 %v7426
      %7719 = vmatprep.subr.mxu0 %v7429
      %7720 = vmatpush1.msra.mxu0 %v7428
      %7721 = vmatprep.subr.mxu0 %v7431
      %7722 = vmatpush1.msra.mxu0 %v7430
      %7723 = vmatprep.subr.mxu0 %v7433
      %7724 = vmatpush1.msra.mxu0 %v7432
      %7725 = vmatprep.subr.mxu0 %v7435
      %7726 = vmatpush1.msra.mxu0 %v7434
      %7727 = vmatprep.subr.mxu0 %v7437
      %7728 = vmatpush1.msra.mxu0 %v7436
      %7729 = vmatprep.subr.mxu0 %v7439
      %7730 = vmatpush1.msra.mxu0 %v7438
      %7731 = vmatprep.subr.mxu0 0.0
      %7732 = vmatpush1.msra.mxu0 0.0
      %7733 = vmatprep.subr.mxu0 0.0
      %7734 = vmatpush1.msra.mxu0 0.0
      %7735 = vmatprep.subr.mxu0 0.0
      %7736 = vmatpush1.msra.mxu0 0.0
      %7737 = vmatprep.subr.mxu0 0.0
      %7738 = vmatpush1.msra.mxu0 0.0
      %7739 = vmatprep.subr.mxu0 0.0
      %7740 = vmatpush1.msra.mxu0 0.0
      %7741 = vmatprep.subr.mxu0 0.0
      %7742 = vmatpush1.msra.mxu0 0.0
      %7743 = vmatprep.subr.mxu0 0.0
      %7744 = vmatpush1.msra.mxu0 0.0
      %7745 = vmatprep.subr.mxu0 0.0
      %7746 = vmatpush1.msra.mxu0 0.0
      %7747 = vmatprep.subr.mxu0 0.0
      %7748 = vmatpush1.msra.mxu0 0.0
      %7749 = vmatprep.subr.mxu0 0.0
      %7750 = vmatpush1.msra.mxu0 0.0
      %7751 = vmatprep.subr.mxu0 0.0
      %7752 = vmatpush1.msra.mxu0 0.0
      %7753 = vmatprep.subr.mxu0 0.0
      %7754 = vmatpush1.msra.mxu0 0.0
      %7755 = vmatprep.subr.mxu0 0.0
      %7756 = vmatpush1.msra.mxu0 0.0
      %7757 = vmatprep.subr.mxu0 0.0
      %7758 = vmatpush1.msra.mxu0 0.0
      %7759 = vmatprep.subr.mxu0 0.0
      %7760 = vmatpush1.msra.mxu0 0.0
      %7761 = vmatprep.subr.mxu0 0.0
      %7762 = vmatpush1.msra.mxu0 0.0
      %7763 = vmatprep.subr.mxu0 0.0
      %7764 = vmatpush1.msra.mxu0 0.0
      %7765 = vmatprep.subr.mxu0 0.0
      %7766 = vmatpush1.msra.mxu0 0.0
      %7767 = vmatprep.subr.mxu0 0.0
      %7768 = vmatpush1.msra.mxu0 0.0
      %7769 = vmatprep.subr.mxu0 0.0
      %7770 = vmatpush1.msra.mxu0 0.0
      %7771 = vmatprep.subr.mxu0 0.0
      %7772 = vmatpush1.msra.mxu0 0.0
      %7773 = vmatprep.subr.mxu0 0.0
      %7774 = vmatpush1.msra.mxu0 0.0
      %7775 = vmatprep.subr.mxu0 0.0
      %7776 = vmatpush1.msra.mxu0 0.0
      %7777 = vmatprep.subr.mxu0 0.0
      %7778 = vmatpush1.msra.mxu0 0.0
      %7779 = vmatprep.mubr.f32.mxu0 0.0
      %7780 = vmatmul.mubr.f32.gmra.mrb[0].mxu0 %v7713
      %v7781 = vpop.f32.mrb[0].mxu0
      %v7782 = vadd.f32 %v7705, %v7781
      %v7783 = vpop.f32.mrb[0].mxu0
      %v7784 = vadd.f32 %v7709, %v7783
      %7785 = vdwg.mxu0
      %v7786 = vxor.u32 %v7782, 2147483648
      %v7787 = vxor.u32 %v7784, 2147483648
      %v7788 = vmul.f32 %v7786, 1.442695
      %v7789 = vpow.pop %v7788
      %v7790 = vmul.f32 %v7787, 1.442695
      %v7791 = vpow.pop %v7790
      %v7792 = vadd.f32 %v7789, 1.0
      %v7793 = vadd.f32 %v7791, 1.0
      %v7794 = vrcp.pop %v7792
      %v7795 = vmul.f32 1.0, %v7794
      %v7796 = vrcp.pop %v7793
      %v7797 = vmul.f32 1.0, %v7796
      %v7800 = vrot.slane %v7795, 3
      %v7801 = vrot.slane %v7797, 3
      %v7804 = vadd.f32 %v7795, %v7800
      %v7805 = vadd.f32 %v7797, %v7801
      %v7808 = vcombine.low %v7804, %v7805
      %v7810 = vunpack.c.l.s4 1966171168
      %v7811 = vunpack.c.0.s8 %v7810
      %v7812 = vlaneseq
      %v7813 = vshrl.u32 %v7812, 7
      %v7814 = vsub.s32 %v7811, %v7813
      %v7815 = vrot.slane %v7808, %v7814
      %v7816 = vcombine.high %v7815, %v7815
      %v7818 = vunpack.c.l.s4 1966171168
      %v7819 = vunpack.c.0.s8 %v7818
      %v7820 = vlaneseq
      %v7821 = vshrl.u32 %v7820, 7
      %v7822 = vsub.s32 %v7819, %v7821
      %v7823 = vrot.slane %v7815, %v7822
      %v7825 = vunpack.c.l.s4 1966171168
      %v7826 = vunpack.c.0.s8 %v7825
      %v7827 = vlaneseq
      %v7828 = vshrl.u32 %v7827, 7
      %v7829 = vsub.s32 %v7826, %v7828
      %v7830 = vrot.slane %v7816, %v7829
      %v7831 = vcombine.high %v7823, %v7823
      %v7832 = vlaneseq
      %v7833 = vshrl.u32 %v7832, 7
      %v7834 = vsub.s32 0, %v7833
      %v7835 = vrot.slane %v7823, %v7834
      %v7836 = vlaneseq
      %v7837 = vshrl.u32 %v7836, 7
      %v7838 = vsub.s32 1, %v7837
      %v7839 = vrot.slane %v7823, %v7838
      %v7840 = vlaneseq
      %v7841 = vshrl.u32 %v7840, 7
      %v7842 = vsub.s32 0, %v7841
      %v7843 = vrot.slane %v7830, %v7842
      %v7844 = vlaneseq
      %v7845 = vshrl.u32 %v7844, 7
      %v7846 = vsub.s32 1, %v7845
      %v7847 = vrot.slane %v7830, %v7846
      %v7848 = vlaneseq
      %v7849 = vshrl.u32 %v7848, 7
      %v7850 = vsub.s32 0, %v7849
      %v7851 = vrot.slane %v7831, %v7850
      %v7852 = vlaneseq
      %v7853 = vshrl.u32 %v7852, 7
      %v7854 = vsub.s32 1, %v7853
      %v7855 = vrot.slane %v7831, %v7854
      %v7862 = vmul.f32 %v7343, %v7835
      %v7863 = vmul.f32 %v7344, %v7839
      %v7864 = vmul.f32 %v7345, %v7835
      %v7865 = vmul.f32 %v7346, %v7839
      %v7866 = vmul.f32 %v7347, %v7835
      %v7867 = vmul.f32 %v7348, %v7839
      %v7868 = vmul.f32 %v7349, %v7835
      %v7869 = vmul.f32 %v7350, %v7839
      %v7870 = vmul.f32 %v7351, %v7835
      %v7871 = vmul.f32 %v7352, %v7839
      %v7872 = vmul.f32 %v7353, %v7835
      %v7873 = vmul.f32 %v7354, %v7839
      %v7874 = vmul.f32 %v7355, %v7835
      %v7875 = vmul.f32 %v7356, %v7839
      %v7876 = vmul.f32 %v7357, %v7835
      %v7877 = vmul.f32 %v7358, %v7839
      %v7878 = vmul.f32 %v7359, %v7843
      %v7879 = vmul.f32 %v7360, %v7847
      %v7880 = vmul.f32 %v7361, %v7843
      %v7881 = vmul.f32 %v7362, %v7847
      %v7882 = vmul.f32 %v7363, %v7843
      %v7883 = vmul.f32 %v7364, %v7847
      %v7884 = vmul.f32 %v7365, %v7843
      %v7885 = vmul.f32 %v7366, %v7847
      %v7886 = vmul.f32 %v7367, %v7843
      %v7887 = vmul.f32 %v7368, %v7847
      %v7888 = vmul.f32 %v7369, %v7843
      %v7889 = vmul.f32 %v7370, %v7847
      %v7890 = vmul.f32 %v7371, %v7843
      %v7891 = vmul.f32 %v7372, %v7847
      %v7892 = vmul.f32 %v7373, %v7843
      %v7893 = vmul.f32 %v7374, %v7847
      %v7894 = vmul.f32 %v7375, %v7851
      %v7895 = vmul.f32 %v7376, %v7855
      %v7896 = vmul.f32 %v7377, %v7851
      %v7897 = vmul.f32 %v7378, %v7855
      %v7898 = vmul.f32 %v7379, %v7851
      %v7899 = vmul.f32 %v7380, %v7855
      %v7900 = vmul.f32 %v7381, %v7851
      %v7901 = vmul.f32 %v7382, %v7855
      %v7902 = vmul.f32 %v7383, %v7851
      %v7903 = vmul.f32 %v7384, %v7855
      %v7904 = vmul.f32 %v7385, %v7851
      %v7905 = vmul.f32 %v7386, %v7855
      %v7906 = vmul.f32 %v7387, %v7851
      %v7907 = vmul.f32 %v7388, %v7855
      %v7908 = vmul.f32 %v7389, %v7851
      %v7909 = vmul.f32 %v7390, %v7855
      %s7910 = scalar_lea.vmem %s10, 3
      %v7911 = vld [vmem:[%s7910] ss:$8 sm:$0x3]
      %s7912 = scalar_lea.vmem %s10, 4
      %v7913 = vld [vmem:[%s7912] ss:$8 sm:$0x3]
      %s7914 = scalar_lea.vmem %s10, 5
      %v7915 = vld [vmem:[%s7914] ss:$8 sm:$0x3]
      %v7916 = vld [vmem:[%s10 + $0x6] ss:$0 sm:$0xff]
      %v7918 = vlaneseq
      %v7919 = vshrl.u32 %v7918, 7
      %v7920 = vsub.s32 0, %v7919
      %v7921 = vrot.slane %v7911, %v7920
      %v7922 = vlaneseq
      %v7923 = vshrl.u32 %v7922, 7
      %v7924 = vsub.s32 1, %v7923
      %v7925 = vrot.slane %v7911, %v7924
      %v7928 = vmul.f32 %v7862, %v7921
      %v7929 = vmul.f32 %v7863, %v7925
      %v7930 = vmul.f32 %v7864, %v7921
      %v7931 = vmul.f32 %v7865, %v7925
      %v7932 = vmul.f32 %v7866, %v7921
      %v7933 = vmul.f32 %v7867, %v7925
      %v7934 = vmul.f32 %v7868, %v7921
      %v7935 = vmul.f32 %v7869, %v7925
      %v7936 = vmul.f32 %v7870, %v7921
      %v7937 = vmul.f32 %v7871, %v7925
      %v7938 = vmul.f32 %v7872, %v7921
      %v7939 = vmul.f32 %v7873, %v7925
      %v7940 = vmul.f32 %v7874, %v7921
      %v7941 = vmul.f32 %v7875, %v7925
      %v7942 = vmul.f32 %v7876, %v7921
      %v7943 = vmul.f32 %v7877, %v7925
      %v7944 = vmul.f32 %v7878, %v7921
      %v7945 = vmul.f32 %v7879, %v7925
      %v7946 = vmul.f32 %v7880, %v7921
      %v7947 = vmul.f32 %v7881, %v7925
      %v7948 = vmul.f32 %v7882, %v7921
      %v7949 = vmul.f32 %v7883, %v7925
      %v7950 = vmul.f32 %v7884, %v7921
      %v7951 = vmul.f32 %v7885, %v7925
      %v7952 = vmul.f32 %v7886, %v7921
      %v7953 = vmul.f32 %v7887, %v7925
      %v7954 = vmul.f32 %v7888, %v7921
      %v7955 = vmul.f32 %v7889, %v7925
      %v7956 = vmul.f32 %v7890, %v7921
      %v7957 = vmul.f32 %v7891, %v7925
      %v7958 = vmul.f32 %v7892, %v7921
      %v7959 = vmul.f32 %v7893, %v7925
      %v7960 = vmul.f32 %v7894, %v7921
      %v7961 = vmul.f32 %v7895, %v7925
      %v7962 = vmul.f32 %v7896, %v7921
      %v7963 = vmul.f32 %v7897, %v7925
      %v7964 = vmul.f32 %v7898, %v7921
      %v7965 = vmul.f32 %v7899, %v7925
      %v7966 = vmul.f32 %v7900, %v7921
      %v7967 = vmul.f32 %v7901, %v7925
      %v7968 = vmul.f32 %v7902, %v7921
      %v7969 = vmul.f32 %v7903, %v7925
      %v7970 = vmul.f32 %v7904, %v7921
      %v7971 = vmul.f32 %v7905, %v7925
      %v7972 = vmul.f32 %v7906, %v7921
      %v7973 = vmul.f32 %v7907, %v7925
      %v7974 = vmul.f32 %v7908, %v7921
      %v7975 = vmul.f32 %v7909, %v7925
      %v7977 = vlaneseq
      %v7978 = vshrl.u32 %v7977, 7
      %v7979 = vsub.s32 0, %v7978
      %v7980 = vrot.slane %v7913, %v7979
      %v7981 = vlaneseq
      %v7982 = vshrl.u32 %v7981, 7
      %v7983 = vsub.s32 1, %v7982
      %v7984 = vrot.slane %v7913, %v7983
      %v7987 = vadd.f32 %v7928, %v7980
      %v7988 = vadd.f32 %v7929, %v7984
      %v7989 = vadd.f32 %v7930, %v7980
      %v7990 = vadd.f32 %v7931, %v7984
      %v7991 = vadd.f32 %v7932, %v7980
      %v7992 = vadd.f32 %v7933, %v7984
      %v7993 = vadd.f32 %v7934, %v7980
      %v7994 = vadd.f32 %v7935, %v7984
      %v7995 = vadd.f32 %v7936, %v7980
      %v7996 = vadd.f32 %v7937, %v7984
      %v7997 = vadd.f32 %v7938, %v7980
      %v7998 = vadd.f32 %v7939, %v7984
      %v7999 = vadd.f32 %v7940, %v7980
      %v8000 = vadd.f32 %v7941, %v7984
      %v8001 = vadd.f32 %v7942, %v7980
      %v8002 = vadd.f32 %v7943, %v7984
      %v8003 = vadd.f32 %v7944, %v7980
      %v8004 = vadd.f32 %v7945, %v7984
      %v8005 = vadd.f32 %v7946, %v7980
      %v8006 = vadd.f32 %v7947, %v7984
      %v8007 = vadd.f32 %v7948, %v7980
      %v8008 = vadd.f32 %v7949, %v7984
      %v8009 = vadd.f32 %v7950, %v7980
      %v8010 = vadd.f32 %v7951, %v7984
      %v8011 = vadd.f32 %v7952, %v7980
      %v8012 = vadd.f32 %v7953, %v7984
      %v8013 = vadd.f32 %v7954, %v7980
      %v8014 = vadd.f32 %v7955, %v7984
      %v8015 = vadd.f32 %v7956, %v7980
      %v8016 = vadd.f32 %v7957, %v7984
      %v8017 = vadd.f32 %v7958, %v7980
      %v8018 = vadd.f32 %v7959, %v7984
      %v8019 = vadd.f32 %v7960, %v7980
      %v8020 = vadd.f32 %v7961, %v7984
      %v8021 = vadd.f32 %v7962, %v7980
      %v8022 = vadd.f32 %v7963, %v7984
      %v8023 = vadd.f32 %v7964, %v7980
      %v8024 = vadd.f32 %v7965, %v7984
      %v8025 = vadd.f32 %v7966, %v7980
      %v8026 = vadd.f32 %v7967, %v7984
      %v8027 = vadd.f32 %v7968, %v7980
      %v8028 = vadd.f32 %v7969, %v7984
      %v8029 = vadd.f32 %v7970, %v7980
      %v8030 = vadd.f32 %v7971, %v7984
      %v8031 = vadd.f32 %v7972, %v7980
      %v8032 = vadd.f32 %v7973, %v7984
      %v8033 = vadd.f32 %v7974, %v7980
      %v8034 = vadd.f32 %v7975, %v7984
      %v8036 = vlaneseq
      %v8037 = vshrl.u32 %v8036, 7
      %v8038 = vsub.s32 0, %v8037
      %v8039 = vrot.slane %v7915, %v8038
      %v8040 = vlaneseq
      %v8041 = vshrl.u32 %v8040, 7
      %v8042 = vsub.s32 1, %v8041
      %v8043 = vrot.slane %v7915, %v8042
      %v8046 = vmul.f32 %v7987, %v8039
      %v8047 = vmul.f32 %v7988, %v8043
      %v8048 = vmul.f32 %v7989, %v8039
      %v8049 = vmul.f32 %v7990, %v8043
      %v8050 = vmul.f32 %v7991, %v8039
      %v8051 = vmul.f32 %v7992, %v8043
      %v8052 = vmul.f32 %v7993, %v8039
      %v8053 = vmul.f32 %v7994, %v8043
      %v8054 = vmul.f32 %v7995, %v8039
      %v8055 = vmul.f32 %v7996, %v8043
      %v8056 = vmul.f32 %v7997, %v8039
      %v8057 = vmul.f32 %v7998, %v8043
      %v8058 = vmul.f32 %v7999, %v8039
      %v8059 = vmul.f32 %v8000, %v8043
      %v8060 = vmul.f32 %v8001, %v8039
      %v8061 = vmul.f32 %v8002, %v8043
      %v8062 = vmul.f32 %v8003, %v8039
      %v8063 = vmul.f32 %v8004, %v8043
      %v8064 = vmul.f32 %v8005, %v8039
      %v8065 = vmul.f32 %v8006, %v8043
      %v8066 = vmul.f32 %v8007, %v8039
      %v8067 = vmul.f32 %v8008, %v8043
      %v8068 = vmul.f32 %v8009, %v8039
      %v8069 = vmul.f32 %v8010, %v8043
      %v8070 = vmul.f32 %v8011, %v8039
      %v8071 = vmul.f32 %v8012, %v8043
      %v8072 = vmul.f32 %v8013, %v8039
      %v8073 = vmul.f32 %v8014, %v8043
      %v8074 = vmul.f32 %v8015, %v8039
      %v8075 = vmul.f32 %v8016, %v8043
      %v8076 = vmul.f32 %v8017, %v8039
      %v8077 = vmul.f32 %v8018, %v8043
      %v8078 = vmul.f32 %v8019, %v8039
      %v8079 = vmul.f32 %v8020, %v8043
      %v8080 = vmul.f32 %v8021, %v8039
      %v8081 = vmul.f32 %v8022, %v8043
      %v8082 = vmul.f32 %v8023, %v8039
      %v8083 = vmul.f32 %v8024, %v8043
      %v8084 = vmul.f32 %v8025, %v8039
      %v8085 = vmul.f32 %v8026, %v8043
      %v8086 = vmul.f32 %v8027, %v8039
      %v8087 = vmul.f32 %v8028, %v8043
      %v8088 = vmul.f32 %v8029, %v8039
      %v8089 = vmul.f32 %v8030, %v8043
      %v8090 = vmul.f32 %v8031, %v8039
      %v8091 = vmul.f32 %v8032, %v8043
      %v8092 = vmul.f32 %v8033, %v8039
      %v8093 = vmul.f32 %v8034, %v8043
      %v8094 = vadd.f32 %v8046, %v8047
      %8095 = vadd.xlane.f32.xlu0 %v8094
      %v8096 = vpop.xlane.xlu0 %8095
      %v8097 = vadd.f32 %v8048, %v8049
      %8098 = vadd.xlane.f32.xlu0 %v8097
      %v8099 = vpop.xlane.xlu0 %8098
      %v8100 = vadd.f32 %v8050, %v8051
      %8101 = vadd.xlane.f32.xlu0 %v8100
      %v8102 = vpop.xlane.xlu0 %8101
      %v8103 = vadd.f32 %v8052, %v8053
      %8104 = vadd.xlane.f32.xlu0 %v8103
      %v8105 = vpop.xlane.xlu0 %8104
      %v8106 = vadd.f32 %v8054, %v8055
      %8107 = vadd.xlane.f32.xlu0 %v8106
      %v8108 = vpop.xlane.xlu0 %8107
      %v8109 = vadd.f32 %v8056, %v8057
      %8110 = vadd.xlane.f32.xlu0 %v8109
      %v8111 = vpop.xlane.xlu0 %8110
      %v8112 = vadd.f32 %v8058, %v8059
      %8113 = vadd.xlane.f32.xlu0 %v8112
      %v8114 = vpop.xlane.xlu0 %8113
      %v8115 = vadd.f32 %v8060, %v8061
      %8116 = vadd.xlane.f32.xlu0 %v8115
      %v8117 = vpop.xlane.xlu0 %8116
      %v8118 = vadd.f32 %v8062, %v8063
      %8119 = vadd.xlane.f32.xlu0 %v8118
      %v8120 = vpop.xlane.xlu0 %8119
      %v8121 = vadd.f32 %v8064, %v8065
      %8122 = vadd.xlane.f32.xlu0 %v8121
      %v8123 = vpop.xlane.xlu0 %8122
      %v8124 = vadd.f32 %v8066, %v8067
      %8125 = vadd.xlane.f32.xlu0 %v8124
      %v8126 = vpop.xlane.xlu0 %8125
      %v8127 = vadd.f32 %v8068, %v8069
      %8128 = vadd.xlane.f32.xlu0 %v8127
      %v8129 = vpop.xlane.xlu0 %8128
      %v8130 = vadd.f32 %v8070, %v8071
      %8131 = vadd.xlane.f32.xlu0 %v8130
      %v8132 = vpop.xlane.xlu0 %8131
      %v8133 = vadd.f32 %v8072, %v8073
      %8134 = vadd.xlane.f32.xlu0 %v8133
      %v8135 = vpop.xlane.xlu0 %8134
      %v8136 = vadd.f32 %v8074, %v8075
      %8137 = vadd.xlane.f32.xlu0 %v8136
      %v8138 = vpop.xlane.xlu0 %8137
      %v8139 = vadd.f32 %v8076, %v8077
      %8140 = vadd.xlane.f32.xlu0 %v8139
      %v8141 = vpop.xlane.xlu0 %8140
      %v8142 = vadd.f32 %v8078, %v8079
      %8143 = vadd.xlane.f32.xlu0 %v8142
      %v8144 = vpop.xlane.xlu0 %8143
      %v8145 = vadd.f32 %v8080, %v8081
      %8146 = vadd.xlane.f32.xlu0 %v8145
      %v8147 = vpop.xlane.xlu0 %8146
      %v8148 = vadd.f32 %v8082, %v8083
      %8149 = vadd.xlane.f32.xlu0 %v8148
      %v8150 = vpop.xlane.xlu0 %8149
      %v8151 = vadd.f32 %v8084, %v8085
      %8152 = vadd.xlane.f32.xlu0 %v8151
      %v8153 = vpop.xlane.xlu0 %8152
      %v8154 = vadd.f32 %v8086, %v8087
      %8155 = vadd.xlane.f32.xlu0 %v8154
      %v8156 = vpop.xlane.xlu0 %8155
      %v8157 = vadd.f32 %v8088, %v8089
      %8158 = vadd.xlane.f32.xlu0 %v8157
      %v8159 = vpop.xlane.xlu0 %8158
      %v8160 = vadd.f32 %v8090, %v8091
      %8161 = vadd.xlane.f32.xlu0 %v8160
      %v8162 = vpop.xlane.xlu0 %8161
      %v8163 = vadd.f32 %v8092, %v8093
      %8164 = vadd.xlane.f32.xlu0 %v8163
      %v8165 = vpop.xlane.xlu0 %8164
      %v8166 = vadd.f32 %v8096, %v7916
      %v8167 = vadd.f32 %v8099, %v7916
      %v8168 = vadd.f32 %v8102, %v7916
      %v8169 = vadd.f32 %v8105, %v7916
      %v8170 = vadd.f32 %v8108, %v7916
      %v8171 = vadd.f32 %v8111, %v7916
      %v8172 = vadd.f32 %v8114, %v7916
      %v8173 = vadd.f32 %v8117, %v7916
      %v8174 = vadd.f32 %v8120, %v7916
      %v8175 = vadd.f32 %v8123, %v7916
      %v8176 = vadd.f32 %v8126, %v7916
      %v8177 = vadd.f32 %v8129, %v7916
      %v8178 = vadd.f32 %v8132, %v7916
      %v8179 = vadd.f32 %v8135, %v7916
      %v8180 = vadd.f32 %v8138, %v7916
      %v8181 = vadd.f32 %v8141, %v7916
      %v8182 = vadd.f32 %v8144, %v7916
      %v8183 = vadd.f32 %v8147, %v7916
      %v8184 = vadd.f32 %v8150, %v7916
      %v8185 = vadd.f32 %v8153, %v7916
      %v8186 = vadd.f32 %v8156, %v7916
      %v8187 = vadd.f32 %v8159, %v7916
      %v8188 = vadd.f32 %v8162, %v7916
      %v8189 = vadd.f32 %v8165, %v7916
      %v8190 = vxor.u32 %v8166, 2147483648
      %v8191 = vxor.u32 %v8167, 2147483648
      %v8192 = vxor.u32 %v8168, 2147483648
      %v8193 = vxor.u32 %v8169, 2147483648
      %v8194 = vxor.u32 %v8170, 2147483648
      %v8195 = vxor.u32 %v8171, 2147483648
      %v8196 = vxor.u32 %v8172, 2147483648
      %v8197 = vxor.u32 %v8173, 2147483648
      %v8198 = vxor.u32 %v8174, 2147483648
      %v8199 = vxor.u32 %v8175, 2147483648
      %v8200 = vxor.u32 %v8176, 2147483648
      %v8201 = vxor.u32 %v8177, 2147483648
      %v8202 = vxor.u32 %v8178, 2147483648
      %v8203 = vxor.u32 %v8179, 2147483648
      %v8204 = vxor.u32 %v8180, 2147483648
      %v8205 = vxor.u32 %v8181, 2147483648
      %v8206 = vxor.u32 %v8182, 2147483648
      %v8207 = vxor.u32 %v8183, 2147483648
      %v8208 = vxor.u32 %v8184, 2147483648
      %v8209 = vxor.u32 %v8185, 2147483648
      %v8210 = vxor.u32 %v8186, 2147483648
      %v8211 = vxor.u32 %v8187, 2147483648
      %v8212 = vxor.u32 %v8188, 2147483648
      %v8213 = vxor.u32 %v8189, 2147483648
      %v8214 = vmul.f32 %v8190, 1.442695
      %v8215 = vpow.pop %v8214
      %v8216 = vmul.f32 %v8191, 1.442695
      %v8217 = vpow.pop %v8216
      %v8218 = vmul.f32 %v8192, 1.442695
      %v8219 = vpow.pop %v8218
      %v8220 = vmul.f32 %v8193, 1.442695
      %v8221 = vpow.pop %v8220
      %v8222 = vmul.f32 %v8194, 1.442695
      %v8223 = vpow.pop %v8222
      %v8224 = vmul.f32 %v8195, 1.442695
      %v8225 = vpow.pop %v8224
      %v8226 = vmul.f32 %v8196, 1.442695
      %v8227 = vpow.pop %v8226
      %v8228 = vmul.f32 %v8197, 1.442695
      %v8229 = vpow.pop %v8228
      %v8230 = vmul.f32 %v8198, 1.442695
      %v8231 = vpow.pop %v8230
      %v8232 = vmul.f32 %v8199, 1.442695
      %v8233 = vpow.pop %v8232
      %v8234 = vmul.f32 %v8200, 1.442695
      %v8235 = vpow.pop %v8234
      %v8236 = vmul.f32 %v8201, 1.442695
      %v8237 = vpow.pop %v8236
      %v8238 = vmul.f32 %v8202, 1.442695
      %v8239 = vpow.pop %v8238
      %v8240 = vmul.f32 %v8203, 1.442695
      %v8241 = vpow.pop %v8240
      %v8242 = vmul.f32 %v8204, 1.442695
      %v8243 = vpow.pop %v8242
      %v8244 = vmul.f32 %v8205, 1.442695
      %v8245 = vpow.pop %v8244
      %v8246 = vmul.f32 %v8206, 1.442695
      %v8247 = vpow.pop %v8246
      %v8248 = vmul.f32 %v8207, 1.442695
      %v8249 = vpow.pop %v8248
      %v8250 = vmul.f32 %v8208, 1.442695
      %v8251 = vpow.pop %v8250
      %v8252 = vmul.f32 %v8209, 1.442695
      %v8253 = vpow.pop %v8252
      %v8254 = vmul.f32 %v8210, 1.442695
      %v8255 = vpow.pop %v8254
      %v8256 = vmul.f32 %v8211, 1.442695
      %v8257 = vpow.pop %v8256
      %v8258 = vmul.f32 %v8212, 1.442695
      %v8259 = vpow.pop %v8258
      %v8260 = vmul.f32 %v8213, 1.442695
      %v8261 = vpow.pop %v8260
      %v8262 = vadd.f32 %v8215, 1.0
      %v8263 = vadd.f32 %v8217, 1.0
      %v8264 = vadd.f32 %v8219, 1.0
      %v8265 = vadd.f32 %v8221, 1.0
      %v8266 = vadd.f32 %v8223, 1.0
      %v8267 = vadd.f32 %v8225, 1.0
      %v8268 = vadd.f32 %v8227, 1.0
      %v8269 = vadd.f32 %v8229, 1.0
      %v8270 = vadd.f32 %v8231, 1.0
      %v8271 = vadd.f32 %v8233, 1.0
      %v8272 = vadd.f32 %v8235, 1.0
      %v8273 = vadd.f32 %v8237, 1.0
      %v8274 = vadd.f32 %v8239, 1.0
      %v8275 = vadd.f32 %v8241, 1.0
      %v8276 = vadd.f32 %v8243, 1.0
      %v8277 = vadd.f32 %v8245, 1.0
      %v8278 = vadd.f32 %v8247, 1.0
      %v8279 = vadd.f32 %v8249, 1.0
      %v8280 = vadd.f32 %v8251, 1.0
      %v8281 = vadd.f32 %v8253, 1.0
      %v8282 = vadd.f32 %v8255, 1.0
      %v8283 = vadd.f32 %v8257, 1.0
      %v8284 = vadd.f32 %v8259, 1.0
      %v8285 = vadd.f32 %v8261, 1.0
      %v8286 = vrcp.pop %v8262
      %v8287 = vmul.f32 1.0, %v8286
      %v8288 = vrcp.pop %v8263
      %v8289 = vmul.f32 1.0, %v8288
      %v8290 = vrcp.pop %v8264
      %v8291 = vmul.f32 1.0, %v8290
      %v8292 = vrcp.pop %v8265
      %v8293 = vmul.f32 1.0, %v8292
      %v8294 = vrcp.pop %v8266
      %v8295 = vmul.f32 1.0, %v8294
      %v8296 = vrcp.pop %v8267
      %v8297 = vmul.f32 1.0, %v8296
      %v8298 = vrcp.pop %v8268
      %v8299 = vmul.f32 1.0, %v8298
      %v8300 = vrcp.pop %v8269
      %v8301 = vmul.f32 1.0, %v8300
      %v8302 = vrcp.pop %v8270
      %v8303 = vmul.f32 1.0, %v8302
      %v8304 = vrcp.pop %v8271
      %v8305 = vmul.f32 1.0, %v8304
      %v8306 = vrcp.pop %v8272
      %v8307 = vmul.f32 1.0, %v8306
      %v8308 = vrcp.pop %v8273
      %v8309 = vmul.f32 1.0, %v8308
      %v8310 = vrcp.pop %v8274
      %v8311 = vmul.f32 1.0, %v8310
      %v8312 = vrcp.pop %v8275
      %v8313 = vmul.f32 1.0, %v8312
      %v8314 = vrcp.pop %v8276
      %v8315 = vmul.f32 1.0, %v8314
      %v8316 = vrcp.pop %v8277
      %v8317 = vmul.f32 1.0, %v8316
      %v8318 = vrcp.pop %v8278
      %v8319 = vmul.f32 1.0, %v8318
      %v8320 = vrcp.pop %v8279
      %v8321 = vmul.f32 1.0, %v8320
      %v8322 = vrcp.pop %v8280
      %v8323 = vmul.f32 1.0, %v8322
      %v8324 = vrcp.pop %v8281
      %v8325 = vmul.f32 1.0, %v8324
      %v8326 = vrcp.pop %v8282
      %v8327 = vmul.f32 1.0, %v8326
      %v8328 = vrcp.pop %v8283
      %v8329 = vmul.f32 1.0, %v8328
      %v8330 = vrcp.pop %v8284
      %v8331 = vmul.f32 1.0, %v8330
      %v8332 = vrcp.pop %v8285
      %v8333 = vmul.f32 1.0, %v8332
      %8335 = vset.pattern.permute.xlu0 0
      %8336 = vperm.xlu0 %8335, %v8287
      %v8337 = vpop.permute.xlu0 %8336
      %8340 = vset.pattern.permute.xlu0 0
      %8341 = vperm.xlu0 %8340, %v8289
      %v8342 = vpop.permute.xlu0 %8341
      %8345 = vset.pattern.permute.xlu0 0
      %8346 = vperm.xlu0 %8345, %v8291
      %v8347 = vpop.permute.xlu0 %8346
      %8350 = vset.pattern.permute.xlu0 0
      %8351 = vperm.xlu0 %8350, %v8293
      %v8352 = vpop.permute.xlu0 %8351
      %8355 = vset.pattern.permute.xlu0 0
      %8356 = vperm.xlu0 %8355, %v8295
      %v8357 = vpop.permute.xlu0 %8356
      %8360 = vset.pattern.permute.xlu0 0
      %8361 = vperm.xlu0 %8360, %v8297
      %v8362 = vpop.permute.xlu0 %8361
      %8365 = vset.pattern.permute.xlu0 0
      %8366 = vperm.xlu0 %8365, %v8299
      %v8367 = vpop.permute.xlu0 %8366
      %8370 = vset.pattern.permute.xlu0 0
      %8371 = vperm.xlu0 %8370, %v8301
      %v8372 = vpop.permute.xlu0 %8371
      %8375 = vset.pattern.permute.xlu0 0
      %8376 = vperm.xlu0 %8375, %v8303
      %v8377 = vpop.permute.xlu0 %8376
      %8380 = vset.pattern.permute.xlu0 0
      %8381 = vperm.xlu0 %8380, %v8305
      %v8382 = vpop.permute.xlu0 %8381
      %8385 = vset.pattern.permute.xlu0 0
      %8386 = vperm.xlu0 %8385, %v8307
      %v8387 = vpop.permute.xlu0 %8386
      %8390 = vset.pattern.permute.xlu0 0
      %8391 = vperm.xlu0 %8390, %v8309
      %v8392 = vpop.permute.xlu0 %8391
      %8395 = vset.pattern.permute.xlu0 0
      %8396 = vperm.xlu0 %8395, %v8311
      %v8397 = vpop.permute.xlu0 %8396
      %8400 = vset.pattern.permute.xlu0 0
      %8401 = vperm.xlu0 %8400, %v8313
      %v8402 = vpop.permute.xlu0 %8401
      %8405 = vset.pattern.permute.xlu0 0
      %8406 = vperm.xlu0 %8405, %v8315
      %v8407 = vpop.permute.xlu0 %8406
      %8410 = vset.pattern.permute.xlu0 0
      %8411 = vperm.xlu0 %8410, %v8317
      %v8412 = vpop.permute.xlu0 %8411
      %8415 = vset.pattern.permute.xlu0 0
      %8416 = vperm.xlu0 %8415, %v8319
      %v8417 = vpop.permute.xlu0 %8416
      %8420 = vset.pattern.permute.xlu0 0
      %8421 = vperm.xlu0 %8420, %v8321
      %v8422 = vpop.permute.xlu0 %8421
      %8425 = vset.pattern.permute.xlu0 0
      %8426 = vperm.xlu0 %8425, %v8323
      %v8427 = vpop.permute.xlu0 %8426
      %8430 = vset.pattern.permute.xlu0 0
      %8431 = vperm.xlu0 %8430, %v8325
      %v8432 = vpop.permute.xlu0 %8431
      %8435 = vset.pattern.permute.xlu0 0
      %8436 = vperm.xlu0 %8435, %v8327
      %v8437 = vpop.permute.xlu0 %8436
      %8440 = vset.pattern.permute.xlu0 0
      %8441 = vperm.xlu0 %8440, %v8329
      %v8442 = vpop.permute.xlu0 %8441
      %8445 = vset.pattern.permute.xlu0 0
      %8446 = vperm.xlu0 %8445, %v8331
      %v8447 = vpop.permute.xlu0 %8446
      %8450 = vset.pattern.permute.xlu0 0
      %8451 = vperm.xlu0 %8450, %v8333
      %v8452 = vpop.permute.xlu0 %8451
      %v8454 = vmul.f32 %v7987, %v8337
      %v8455 = vmul.f32 %v7988, %v8337
      %v8456 = vmul.f32 %v7989, %v8342
      %v8457 = vmul.f32 %v7990, %v8342
      %v8458 = vmul.f32 %v7991, %v8347
      %v8459 = vmul.f32 %v7992, %v8347
      %v8460 = vmul.f32 %v7993, %v8352
      %v8461 = vmul.f32 %v7994, %v8352
      %v8462 = vmul.f32 %v7995, %v8357
      %v8463 = vmul.f32 %v7996, %v8357
      %v8464 = vmul.f32 %v7997, %v8362
      %v8465 = vmul.f32 %v7998, %v8362
      %v8466 = vmul.f32 %v7999, %v8367
      %v8467 = vmul.f32 %v8000, %v8367
      %v8468 = vmul.f32 %v8001, %v8372
      %v8469 = vmul.f32 %v8002, %v8372
      %v8470 = vmul.f32 %v8003, %v8377
      %v8471 = vmul.f32 %v8004, %v8377
      %v8472 = vmul.f32 %v8005, %v8382
      %v8473 = vmul.f32 %v8006, %v8382
      %v8474 = vmul.f32 %v8007, %v8387
      %v8475 = vmul.f32 %v8008, %v8387
      %v8476 = vmul.f32 %v8009, %v8392
      %v8477 = vmul.f32 %v8010, %v8392
      %v8478 = vmul.f32 %v8011, %v8397
      %v8479 = vmul.f32 %v8012, %v8397
      %v8480 = vmul.f32 %v8013, %v8402
      %v8481 = vmul.f32 %v8014, %v8402
      %v8482 = vmul.f32 %v8015, %v8407
      %v8483 = vmul.f32 %v8016, %v8407
      %v8484 = vmul.f32 %v8017, %v8412
      %v8485 = vmul.f32 %v8018, %v8412
      %v8486 = vmul.f32 %v8019, %v8417
      %v8487 = vmul.f32 %v8020, %v8417
      %v8488 = vmul.f32 %v8021, %v8422
      %v8489 = vmul.f32 %v8022, %v8422
      %v8490 = vmul.f32 %v8023, %v8427
      %v8491 = vmul.f32 %v8024, %v8427
      %v8492 = vmul.f32 %v8025, %v8432
      %v8493 = vmul.f32 %v8026, %v8432
      %v8494 = vmul.f32 %v8027, %v8437
      %v8495 = vmul.f32 %v8028, %v8437
      %v8496 = vmul.f32 %v8029, %v8442
      %v8497 = vmul.f32 %v8030, %v8442
      %v8498 = vmul.f32 %v8031, %v8447
      %v8499 = vmul.f32 %v8032, %v8447
      %v8500 = vmul.f32 %v8033, %v8452
      %v8501 = vmul.f32 %v8034, %v8452
      %v8502 = vadd.f32 %v8454, %v8456
      %v8503 = vadd.f32 %v8502, %v8458
      %v8504 = vadd.f32 %v8503, %v8460
      %v8505 = vadd.f32 %v8455, %v8457
      %v8506 = vadd.f32 %v8505, %v8459
      %v8507 = vadd.f32 %v8506, %v8461
      %v8508 = vadd.f32 %v8462, %v8464
      %v8509 = vadd.f32 %v8508, %v8466
      %v8510 = vadd.f32 %v8509, %v8468
      %v8511 = vadd.f32 %v8463, %v8465
      %v8512 = vadd.f32 %v8511, %v8467
      %v8513 = vadd.f32 %v8512, %v8469
      %v8514 = vadd.f32 %v8470, %v8472
      %v8515 = vadd.f32 %v8514, %v8474
      %v8516 = vadd.f32 %v8515, %v8476
      %v8517 = vadd.f32 %v8471, %v8473
      %v8518 = vadd.f32 %v8517, %v8475
      %v8519 = vadd.f32 %v8518, %v8477
      %v8520 = vadd.f32 %v8478, %v8480
      %v8521 = vadd.f32 %v8520, %v8482
      %v8522 = vadd.f32 %v8521, %v8484
      %v8523 = vadd.f32 %v8479, %v8481
      %v8524 = vadd.f32 %v8523, %v8483
      %v8525 = vadd.f32 %v8524, %v8485
      %v8526 = vadd.f32 %v8486, %v8488
      %v8527 = vadd.f32 %v8526, %v8490
      %v8528 = vadd.f32 %v8527, %v8492
      %v8529 = vadd.f32 %v8487, %v8489
      %v8530 = vadd.f32 %v8529, %v8491
      %v8531 = vadd.f32 %v8530, %v8493
      %v8532 = vadd.f32 %v8494, %v8496
      %v8533 = vadd.f32 %v8532, %v8498
      %v8534 = vadd.f32 %v8533, %v8500
      %v8535 = vadd.f32 %v8495, %v8497
      %v8536 = vadd.f32 %v8535, %v8499
      %v8537 = vadd.f32 %v8536, %v8501
      %v8538 = vrcp.pop 4.0
      %v8539 = vmul.f32 %v8504, %v8538
      %v8540 = vmul.f32 %v8507, %v8538
      %v8541 = vmul.f32 %v8510, %v8538
      %v8542 = vmul.f32 %v8513, %v8538
      %v8543 = vmul.f32 %v8516, %v8538
      %v8544 = vmul.f32 %v8519, %v8538
      %v8545 = vmul.f32 %v8522, %v8538
      %v8546 = vmul.f32 %v8525, %v8538
      %v8547 = vmul.f32 %v8528, %v8538
      %v8548 = vmul.f32 %v8531, %v8538
      %v8549 = vmul.f32 %v8534, %v8538
      %v8550 = vmul.f32 %v8537, %v8538
      %v8563 = vcombine.low %v8539, %v8540
      %v8564 = vcombine.high %v8539, %v8540
      %v8565 = vcombine.low %v8541, %v8542
      %v8566 = vcombine.high %v8541, %v8542
      %v8567 = vcombine.low %v8543, %v8544
      %v8568 = vcombine.high %v8543, %v8544
      %v8569 = vcombine.low %v8545, %v8546
      %v8570 = vcombine.high %v8545, %v8546
      %v8571 = vcombine.low %v8547, %v8548
      %v8572 = vcombine.high %v8547, %v8548
      %v8573 = vcombine.low %v8549, %v8550
      %v8574 = vcombine.high %v8549, %v8550
      %v8587 = vcombine.high %v8563, %v8563
      %v8588 = vcombine.high %v8564, %v8564
      %v8589 = vcombine.high %v8565, %v8565
      %v8590 = vcombine.high %v8566, %v8566
      %v8591 = vcombine.high %v8567, %v8567
      %v8592 = vcombine.high %v8568, %v8568
      %v8593 = vcombine.high %v8569, %v8569
      %v8594 = vcombine.high %v8570, %v8570
      %v8595 = vcombine.high %v8571, %v8571
      %v8596 = vcombine.high %v8572, %v8572
      %v8597 = vcombine.high %v8573, %v8573
      %v8598 = vcombine.high %v8574, %v8574
      %vm8611 = vcmask 1043456
      %v8612 = vsel %vm8611, %v8563, 0.0
      %v8613 = vrot.slane %v8612, 4
      %v8614 = vadd.f32 %v8612, %v8613
      %v8615 = vrot.slane %v8614, 2
      %v8616 = vadd.f32 %v8614, %v8615
      %v8617 = vrot.slane %v8616, 1
      %v8618 = vadd.f32 %v8616, %v8617
      %v8619 = vsel %vm8611, %v8587, 0.0
      %v8620 = vrot.slane %v8619, 4
      %v8621 = vadd.f32 %v8619, %v8620
      %v8622 = vrot.slane %v8621, 2
      %v8623 = vadd.f32 %v8621, %v8622
      %v8624 = vrot.slane %v8623, 1
      %v8625 = vadd.f32 %v8623, %v8624
      %v8626 = vsel %vm8611, %v8564, 0.0
      %v8627 = vrot.slane %v8626, 4
      %v8628 = vadd.f32 %v8626, %v8627
      %v8629 = vrot.slane %v8628, 2
      %v8630 = vadd.f32 %v8628, %v8629
      %v8631 = vrot.slane %v8630, 1
      %v8632 = vadd.f32 %v8630, %v8631
      %v8633 = vsel %vm8611, %v8588, 0.0
      %v8634 = vrot.slane %v8633, 4
      %v8635 = vadd.f32 %v8633, %v8634
      %v8636 = vrot.slane %v8635, 2
      %v8637 = vadd.f32 %v8635, %v8636
      %v8638 = vrot.slane %v8637, 1
      %v8639 = vadd.f32 %v8637, %v8638
      %v8640 = vsel %vm8611, %v8565, 0.0
      %v8641 = vrot.slane %v8640, 4
      %v8642 = vadd.f32 %v8640, %v8641
      %v8643 = vrot.slane %v8642, 2
      %v8644 = vadd.f32 %v8642, %v8643
      %v8645 = vrot.slane %v8644, 1
      %v8646 = vadd.f32 %v8644, %v8645
      %v8647 = vsel %vm8611, %v8589, 0.0
      %v8648 = vrot.slane %v8647, 4
      %v8649 = vadd.f32 %v8647, %v8648
      %v8650 = vrot.slane %v8649, 2
      %v8651 = vadd.f32 %v8649, %v8650
      %v8652 = vrot.slane %v8651, 1
      %v8653 = vadd.f32 %v8651, %v8652
      %v8654 = vsel %vm8611, %v8566, 0.0
      %v8655 = vrot.slane %v8654, 4
      %v8656 = vadd.f32 %v8654, %v8655
      %v8657 = vrot.slane %v8656, 2
      %v8658 = vadd.f32 %v8656, %v8657
      %v8659 = vrot.slane %v8658, 1
      %v8660 = vadd.f32 %v8658, %v8659
      %v8661 = vsel %vm8611, %v8590, 0.0
      %v8662 = vrot.slane %v8661, 4
      %v8663 = vadd.f32 %v8661, %v8662
      %v8664 = vrot.slane %v8663, 2
      %v8665 = vadd.f32 %v8663, %v8664
      %v8666 = vrot.slane %v8665, 1
      %v8667 = vadd.f32 %v8665, %v8666
      %v8668 = vsel %vm8611, %v8567, 0.0
      %v8669 = vrot.slane %v8668, 4
      %v8670 = vadd.f32 %v8668, %v8669
      %v8671 = vrot.slane %v8670, 2
      %v8672 = vadd.f32 %v8670, %v8671
      %v8673 = vrot.slane %v8672, 1
      %v8674 = vadd.f32 %v8672, %v8673
      %v8675 = vsel %vm8611, %v8591, 0.0
      %v8676 = vrot.slane %v8675, 4
      %v8677 = vadd.f32 %v8675, %v8676
      %v8678 = vrot.slane %v8677, 2
      %v8679 = vadd.f32 %v8677, %v8678
      %v8680 = vrot.slane %v8679, 1
      %v8681 = vadd.f32 %v8679, %v8680
      %v8682 = vsel %vm8611, %v8568, 0.0
      %v8683 = vrot.slane %v8682, 4
      %v8684 = vadd.f32 %v8682, %v8683
      %v8685 = vrot.slane %v8684, 2
      %v8686 = vadd.f32 %v8684, %v8685
      %v8687 = vrot.slane %v8686, 1
      %v8688 = vadd.f32 %v8686, %v8687
      %v8689 = vsel %vm8611, %v8592, 0.0
      %v8690 = vrot.slane %v8689, 4
      %v8691 = vadd.f32 %v8689, %v8690
      %v8692 = vrot.slane %v8691, 2
      %v8693 = vadd.f32 %v8691, %v8692
      %v8694 = vrot.slane %v8693, 1
      %v8695 = vadd.f32 %v8693, %v8694
      %v8696 = vsel %vm8611, %v8569, 0.0
      %v8697 = vrot.slane %v8696, 4
      %v8698 = vadd.f32 %v8696, %v8697
      %v8699 = vrot.slane %v8698, 2
      %v8700 = vadd.f32 %v8698, %v8699
      %v8701 = vrot.slane %v8700, 1
      %v8702 = vadd.f32 %v8700, %v8701
      %v8703 = vsel %vm8611, %v8593, 0.0
      %v8704 = vrot.slane %v8703, 4
      %v8705 = vadd.f32 %v8703, %v8704
      %v8706 = vrot.slane %v8705, 2
      %v8707 = vadd.f32 %v8705, %v8706
      %v8708 = vrot.slane %v8707, 1
      %v8709 = vadd.f32 %v8707, %v8708
      %v8710 = vsel %vm8611, %v8570, 0.0
      %v8711 = vrot.slane %v8710, 4
      %v8712 = vadd.f32 %v8710, %v8711
      %v8713 = vrot.slane %v8712, 2
      %v8714 = vadd.f32 %v8712, %v8713
      %v8715 = vrot.slane %v8714, 1
      %v8716 = vadd.f32 %v8714, %v8715
      %v8717 = vsel %vm8611, %v8594, 0.0
      %v8718 = vrot.slane %v8717, 4
      %v8719 = vadd.f32 %v8717, %v8718
      %v8720 = vrot.slane %v8719, 2
      %v8721 = vadd.f32 %v8719, %v8720
      %v8722 = vrot.slane %v8721, 1
      %v8723 = vadd.f32 %v8721, %v8722
      %v8724 = vsel %vm8611, %v8571, 0.0
      %v8725 = vrot.slane %v8724, 4
      %v8726 = vadd.f32 %v8724, %v8725
      %v8727 = vrot.slane %v8726, 2
      %v8728 = vadd.f32 %v8726, %v8727
      %v8729 = vrot.slane %v8728, 1
      %v8730 = vadd.f32 %v8728, %v8729
      %v8731 = vsel %vm8611, %v8595, 0.0
      %v8732 = vrot.slane %v8731, 4
      %v8733 = vadd.f32 %v8731, %v8732
      %v8734 = vrot.slane %v8733, 2
      %v8735 = vadd.f32 %v8733, %v8734
      %v8736 = vrot.slane %v8735, 1
      %v8737 = vadd.f32 %v8735, %v8736
      %v8738 = vsel %vm8611, %v8572, 0.0
      %v8739 = vrot.slane %v8738, 4
      %v8740 = vadd.f32 %v8738, %v8739
      %v8741 = vrot.slane %v8740, 2
      %v8742 = vadd.f32 %v8740, %v8741
      %v8743 = vrot.slane %v8742, 1
      %v8744 = vadd.f32 %v8742, %v8743
      %v8745 = vsel %vm8611, %v8596, 0.0
      %v8746 = vrot.slane %v8745, 4
      %v8747 = vadd.f32 %v8745, %v8746
      %v8748 = vrot.slane %v8747, 2
      %v8749 = vadd.f32 %v8747, %v8748
      %v8750 = vrot.slane %v8749, 1
      %v8751 = vadd.f32 %v8749, %v8750
      %v8752 = vsel %vm8611, %v8573, 0.0
      %v8753 = vrot.slane %v8752, 4
      %v8754 = vadd.f32 %v8752, %v8753
      %v8755 = vrot.slane %v8754, 2
      %v8756 = vadd.f32 %v8754, %v8755
      %v8757 = vrot.slane %v8756, 1
      %v8758 = vadd.f32 %v8756, %v8757
      %v8759 = vsel %vm8611, %v8597, 0.0
      %v8760 = vrot.slane %v8759, 4
      %v8761 = vadd.f32 %v8759, %v8760
      %v8762 = vrot.slane %v8761, 2
      %v8763 = vadd.f32 %v8761, %v8762
      %v8764 = vrot.slane %v8763, 1
      %v8765 = vadd.f32 %v8763, %v8764
      %v8766 = vsel %vm8611, %v8574, 0.0
      %v8767 = vrot.slane %v8766, 4
      %v8768 = vadd.f32 %v8766, %v8767
      %v8769 = vrot.slane %v8768, 2
      %v8770 = vadd.f32 %v8768, %v8769
      %v8771 = vrot.slane %v8770, 1
      %v8772 = vadd.f32 %v8770, %v8771
      %v8773 = vsel %vm8611, %v8598, 0.0
      %v8774 = vrot.slane %v8773, 4
      %v8775 = vadd.f32 %v8773, %v8774
      %v8776 = vrot.slane %v8775, 2
      %v8777 = vadd.f32 %v8775, %v8776
      %v8778 = vrot.slane %v8777, 1
      %v8779 = vadd.f32 %v8777, %v8778
      %v8780 = vmul.f32 %v8618, %v8538
      %v8781 = vmul.f32 %v8625, %v8538
      %v8782 = vmul.f32 %v8632, %v8538
      %v8783 = vmul.f32 %v8639, %v8538
      %v8784 = vmul.f32 %v8646, %v8538
      %v8785 = vmul.f32 %v8653, %v8538
      %v8786 = vmul.f32 %v8660, %v8538
      %v8787 = vmul.f32 %v8667, %v8538
      %v8788 = vmul.f32 %v8674, %v8538
      %v8789 = vmul.f32 %v8681, %v8538
      %v8790 = vmul.f32 %v8688, %v8538
      %v8791 = vmul.f32 %v8695, %v8538
      %v8792 = vmul.f32 %v8702, %v8538
      %v8793 = vmul.f32 %v8709, %v8538
      %v8794 = vmul.f32 %v8716, %v8538
      %v8795 = vmul.f32 %v8723, %v8538
      %v8796 = vmul.f32 %v8730, %v8538
      %v8797 = vmul.f32 %v8737, %v8538
      %v8798 = vmul.f32 %v8744, %v8538
      %v8799 = vmul.f32 %v8751, %v8538
      %v8800 = vmul.f32 %v8758, %v8538
      %v8801 = vmul.f32 %v8765, %v8538
      %v8802 = vmul.f32 %v8772, %v8538
      %v8803 = vmul.f32 %v8779, %v8538
      %v8828 = vcombine.low %v8780, %v8781
      %v8830 = vunpack.c.l.s4 1983009808
      %v8831 = vunpack.c.0.s8 %v8830
      %v8832 = vlaneseq
      %v8833 = vshrl.u32 %v8832, 7
      %v8834 = vsub.s32 %v8831, %v8833
      %v8835 = vrot.slane %v8828, %v8834
      %v8836 = vcombine.low %v8782, %v8783
      %v8838 = vunpack.c.l.s4 1983009808
      %v8839 = vunpack.c.0.s8 %v8838
      %v8840 = vlaneseq
      %v8841 = vshrl.u32 %v8840, 7
      %v8842 = vsub.s32 %v8839, %v8841
      %v8843 = vrot.slane %v8836, %v8842
      %v8844 = vcombine.low %v8784, %v8785
      %v8846 = vunpack.c.l.s4 1983009808
      %v8847 = vunpack.c.0.s8 %v8846
      %v8848 = vlaneseq
      %v8849 = vshrl.u32 %v8848, 7
      %v8850 = vsub.s32 %v8847, %v8849
      %v8851 = vrot.slane %v8844, %v8850
      %v8852 = vcombine.low %v8786, %v8787
      %v8854 = vunpack.c.l.s4 1983009808
      %v8855 = vunpack.c.0.s8 %v8854
      %v8856 = vlaneseq
      %v8857 = vshrl.u32 %v8856, 7
      %v8858 = vsub.s32 %v8855, %v8857
      %v8859 = vrot.slane %v8852, %v8858
      %v8860 = vcombine.low %v8788, %v8789
      %v8862 = vunpack.c.l.s4 1983009808
      %v8863 = vunpack.c.0.s8 %v8862
      %v8864 = vlaneseq
      %v8865 = vshrl.u32 %v8864, 7
      %v8866 = vsub.s32 %v8863, %v8865
      %v8867 = vrot.slane %v8860, %v8866
      %v8868 = vcombine.low %v8790, %v8791
      %v8870 = vunpack.c.l.s4 1983009808
      %v8871 = vunpack.c.0.s8 %v8870
      %v8872 = vlaneseq
      %v8873 = vshrl.u32 %v8872, 7
      %v8874 = vsub.s32 %v8871, %v8873
      %v8875 = vrot.slane %v8868, %v8874
      %v8876 = vcombine.low %v8792, %v8793
      %v8878 = vunpack.c.l.s4 1983009808
      %v8879 = vunpack.c.0.s8 %v8878
      %v8880 = vlaneseq
      %v8881 = vshrl.u32 %v8880, 7
      %v8882 = vsub.s32 %v8879, %v8881
      %v8883 = vrot.slane %v8876, %v8882
      %v8884 = vcombine.low %v8794, %v8795
      %v8886 = vunpack.c.l.s4 1983009808
      %v8887 = vunpack.c.0.s8 %v8886
      %v8888 = vlaneseq
      %v8889 = vshrl.u32 %v8888, 7
      %v8890 = vsub.s32 %v8887, %v8889
      %v8891 = vrot.slane %v8884, %v8890
      %v8892 = vcombine.low %v8796, %v8797
      %v8894 = vunpack.c.l.s4 1983009808
      %v8895 = vunpack.c.0.s8 %v8894
      %v8896 = vlaneseq
      %v8897 = vshrl.u32 %v8896, 7
      %v8898 = vsub.s32 %v8895, %v8897
      %v8899 = vrot.slane %v8892, %v8898
      %v8900 = vcombine.low %v8798, %v8799
      %v8902 = vunpack.c.l.s4 1983009808
      %v8903 = vunpack.c.0.s8 %v8902
      %v8904 = vlaneseq
      %v8905 = vshrl.u32 %v8904, 7
      %v8906 = vsub.s32 %v8903, %v8905
      %v8907 = vrot.slane %v8900, %v8906
      %v8908 = vcombine.low %v8800, %v8801
      %v8910 = vunpack.c.l.s4 1983009808
      %v8911 = vunpack.c.0.s8 %v8910
      %v8912 = vlaneseq
      %v8913 = vshrl.u32 %v8912, 7
      %v8914 = vsub.s32 %v8911, %v8913
      %v8915 = vrot.slane %v8908, %v8914
      %v8916 = vcombine.low %v8802, %v8803
      %v8918 = vunpack.c.l.s4 1983009808
      %v8919 = vunpack.c.0.s8 %v8918
      %v8920 = vlaneseq
      %v8921 = vshrl.u32 %v8920, 7
      %v8922 = vsub.s32 %v8919, %v8921
      %v8923 = vrot.slane %v8916, %v8922
      %v8924 = vsel %vm868, %v8835, %v8835
      %vm8925 = vcmask 1046534
      %v8926 = vsel %vm8925, %v8835, %v8924
      %v8927 = vrot.slane %v8843, 7
      %v8928 = vsel %vm860, %v8927, %v8926
      %vm8929 = vcmask 1043459
      %v8930 = vsel %vm8929, %v8927, %v8928
      %v8931 = vsel %vm870, %v8927, %v8930
      %vm8932 = vcmask 1047559
      %v8933 = vsel %vm8932, %v8927, %v8931
      %v8934 = vsel %vm868, %v8851, %v8851
      %v8935 = vsel %vm8925, %v8851, %v8934
      %v8936 = vrot.slane %v8859, 7
      %v8937 = vsel %vm860, %v8936, %v8935
      %v8938 = vsel %vm8929, %v8936, %v8937
      %v8939 = vsel %vm870, %v8936, %v8938
      %v8940 = vsel %vm8932, %v8936, %v8939
      %v8941 = vsel %vm868, %v8867, %v8867
      %v8942 = vsel %vm8925, %v8867, %v8941
      %v8943 = vrot.slane %v8875, 7
      %v8944 = vsel %vm860, %v8943, %v8942
      %v8945 = vsel %vm8929, %v8943, %v8944
      %v8946 = vsel %vm870, %v8943, %v8945
      %v8947 = vsel %vm8932, %v8943, %v8946
      %v8948 = vsel %vm868, %v8883, %v8883
      %v8949 = vsel %vm8925, %v8883, %v8948
      %v8950 = vrot.slane %v8891, 7
      %v8951 = vsel %vm860, %v8950, %v8949
      %v8952 = vsel %vm8929, %v8950, %v8951
      %v8953 = vsel %vm870, %v8950, %v8952
      %v8954 = vsel %vm8932, %v8950, %v8953
      %v8955 = vsel %vm868, %v8899, %v8899
      %v8956 = vsel %vm8925, %v8899, %v8955
      %v8957 = vrot.slane %v8907, 7
      %v8958 = vsel %vm860, %v8957, %v8956
      %v8959 = vsel %vm8929, %v8957, %v8958
      %v8960 = vsel %vm870, %v8957, %v8959
      %v8961 = vsel %vm8932, %v8957, %v8960
      %v8962 = vsel %vm868, %v8915, %v8915
      %v8963 = vsel %vm8925, %v8915, %v8962
      %v8964 = vrot.slane %v8923, 7
      %v8965 = vsel %vm860, %v8964, %v8963
      %v8966 = vsel %vm8929, %v8964, %v8965
      %v8967 = vsel %vm870, %v8964, %v8966
      %v8968 = vsel %vm8932, %v8964, %v8967
      %8975 = vst [vmem:[%s393] sm:$0xf] %v8933
      %8976 = vst [vmem:[%s393 + $0x4] sm:$0xf] %v8940
      %8977 = vst [vmem:[%s393 + $0x8] sm:$0xf] %v8947
      %8978 = vst [vmem:[%s393 + $0xc] sm:$0xf] %v8954
      %8979 = vst [vmem:[%s393 + $0x10] sm:$0xf] %v8961
      %8980 = vst [vmem:[%s393 + $0x14] sm:$0xf] %v8968
      %s8981 = smul.u32 3, %s22
      %p8982 = scmp.lt.s32.totalorder %s8981, 5
      %s8983 = scalar_select %p8982, %s8981, 5
      %s8984 = smul.addr %s8983, 4
      %s8985 = smul.addr %s8984, 2
      %s8986 = scalar_lea.vmem %s11, %s8985
      // Predicated region
      $region65: #{hybrid_cnn_forward.1} parent=63 // pred_check
        %p8987 = pneg %p276
      $region66: #{hybrid_cnn_forward.1} parent=63 // pred_check_branch
        %8989 = sbr.rel (%p8987) target = $region68
      $region67: #{hybrid_cnn_forward.1} parent=63 // pred_region
        %s8990 = smul.u32 3, %s22
      $region68: #{hybrid_cnn_forward.1} parent=63 // pred_fallthru
        _
    $region64: #{hybrid_cnn_forward.1} parent=5 // pred_fallthru
      _
    %p8991 = scmp.le.s32.totalorder 2, %s17
    // Predicated region
    $region69: #{hybrid_cnn_forward.1} parent=5 // pred_check
      %p8992 = pneg %p8991
    $region70: #{hybrid_cnn_forward.1} parent=5 // pred_check_branch
      %8994 = sbr.rel (%p8992) target = $region72
    $region71: #{hybrid_cnn_forward.1} parent=5 // pred_region
      %s8995 = ssub.s32 %s17, 2
      // Predicated region
      $region73: #{hybrid_cnn_forward.1} parent=71 // pred_check
        %p8996 = pneg %p282
      $region74: #{hybrid_cnn_forward.1} parent=71 // pred_check_branch
        %8998 = sbr.rel (%p8996) target = $region76
      $region75: #{hybrid_cnn_forward.1} parent=71 // pred_region
        %s8999 = smul.u32 3, %s23
        %p9000 = scmp.lt.s32.totalorder %s8999, 5
        %s9001 = scalar_select %p9000, %s8999, 5
        %s9002 = smul.addr %s9001, 4
        %s9003 = smul.addr %s9002, 2
        %s9004 = scalar_lea.vmem %s11, %s9003
      $region76: #{hybrid_cnn_forward.1} parent=71 // pred_fallthru
        _
    $region72: #{hybrid_cnn_forward.1} parent=5 // pred_fallthru
      _
  $region6: #{hybrid_cnn_forward.1} parent=0 // loop_footer
    %s21 = sadd.s32 1, %s17
  $region7: #{hybrid_cnn_forward.1} parent=0 // loop_footer_branch
    %16 = sbr.rel target = $region3
  $region8: #{hybrid_cnn_forward.1} parent=0 // loop_exit
    _

</llo_original>
